<compile_context>
chip_gen: v7x
topology: tpu7x:2x2x1
jax: 0.10.0
libtpu: 0.0.40
codegen_flags: <defaults>
</compile_context>

<pallas_src>
import jax
import jax.numpy as jnp
from jax.experimental import pallas as pl
from jax.experimental.pallas import tpu as pltpu

# ---- model hyperparameters (from VanillaCNN.__init__) ----
IN_CH = 3
OUT_CH = 32
K = 7                        # conv kernel size
POOL = 2                     # maxpool kernel / stride
OUT_SIZE = 10
H_IN = W_IN = 32             # implied by maxpool_out_size = 32*13*13 = 5408
H_CONV = H_IN - K + 1        # 26
P_POOL = H_CONV // POOL      # 13
FLAT = OUT_CH * P_POOL * P_POOL   # 5408

# ---- kernel tiling constants ----
B_TILE = 16                  # images per grid step
ROWS_PER_IMG = 16            # 13 pooled rows + 3 junk rows (sublane-aligned slab)
M_TILE = B_TILE * ROWS_PER_IMG    # 256 matmul rows -> fills the 256-row MXU
KDIM = IN_CH * 8 * W_IN      # 768 : k = (c, r = dy+ky in [0,8), w)
NCOL = OUT_CH * P_POOL       # 416 : (co, pw)
NPAD = 512                   # NCOL padded to a multiple of 128 (aligned lanes)
FCCOL = P_POOL * 16          # 208 : (ph, out padded to 16)
NOUT_PAD = 128               # FC output padded for a lane-dense store


def fused_cnn_kernel(xop_ref, convw_ref, convb_ref, fcw_ref, fcb_ref,
                     pmask_ref, fold_ref, out_ref):
    # xop_ref:   (M_TILE, KDIM)        bf16  precomputed conv operand (wrapper-built)
    # convw_ref: (4, KDIM, NPAD)       bf16  Toeplitz conv weight, one slab per pool offset
    # convb_ref: (1, NPAD)             f32   conv bias broadcast over (co, pw)
    # fcw_ref:   (NPAD, FCCOL)         bf16  permuted FC weight (cols = ph*16 + o)
    # fcb_ref:   (1, NOUT_PAD)         f32
    # pmask_ref: (M_TILE, FCCOL)       f32   0/1 mask: (col//16) == (row % 16)
    # fold_ref:  (FCCOL, NOUT_PAD)     f32   0/1 fold: (l % 16) == o
    # out_ref:   (B_TILE, NOUT_PAD)    f32
    x = xop_ref[...]                                            # (256, 768) bf16

    # conv for the 4 pool offsets = 4 N-chunks of the Toeplitz weight, combined
    # with a running elementwise max => fused 2x2 max-pool, small f32 live set.
    pooled = jnp.dot(x, convw_ref[0], preferred_element_type=jnp.float32)
    for q in range(1, POOL * POOL):                             # unrolled (3 iters)
        pooled = jnp.maximum(
            pooled,
            jnp.dot(x, convw_ref[q], preferred_element_type=jnp.float32))

    # bias after max (constant within pool window) + ReLU after max (monotonic):
    # exactly equivalent to Conv(+bias) -> ReLU -> MaxPool.  Do NOT "fix" order.
    pooled = jnp.maximum(pooled + convb_ref[...], 0.0)          # (256, 512) f32

    # fused FC: per-row partials against the ph-permuted weight; keep only the
    # lane group matching this row's ph slot.  Junk rows (local rows 13..15 of
    # each image) match no slot and are zeroed here -- required for correctness.
    partial = jnp.dot(pooled.astype(jnp.bfloat16), fcw_ref[...],
                      preferred_element_type=jnp.float32)       # (256, 208) f32
    masked = partial * pmask_ref[...]

    # sum the 16 rows of each image: lane dim (208) unchanged -> cheap sublane
    # regroup + reduction on otherwise-idle VPU/XLU slots (no selection matmul).
    per_img = masked.reshape(B_TILE, ROWS_PER_IMG, FCCOL).sum(axis=1)   # (16, 208)

    # fold the 13 ph lane-groups onto the padded output lanes, add FC bias.
    out = jnp.dot(per_img, fold_ref[...], preferred_element_type=jnp.float32)
    out_ref[...] = out + fcb_ref[...]                           # (16, 128) lane-dense


def _const_spec(shape):
    """BlockSpec for a grid-invariant input; single-buffered when supported."""
    idx = lambda t: (0,) * len(shape)
    if hasattr(pl, "Buffered"):
        try:
            return pl.BlockSpec(shape, idx, pipeline_mode=pl.Buffered(1))
        except TypeError:
            pass
    return pl.BlockSpec(shape, idx)


def vanilla_cnn_forward(x, conv_w, conv_b, fc_w, fc_b):
    """x: (N, 3, 32, 32); params in PyTorch shapes:
       conv_w (32,3,7,7), conv_b (32,), fc_w (10,5408), fc_b (10,)."""
    n = x.shape[0]
    n_tiles = -(-n // B_TILE)
    n_pad = n_tiles * B_TILE

    # ---- lane-dense conv operand built in the wrapper (no in-kernel im2col) ----
    # operand[(b, rr), (c, r, w)] = x[b, c, 2*rr + r, w], zero beyond the image.
    pad_h = 2 * (ROWS_PER_IMG - 1) + 8 - H_IN          # 6 zero rows below the image
    xf = jnp.pad(x.astype(jnp.float32),
                 ((0, n_pad - n), (0, 0), (0, pad_h), (0, 0)))
    xop = jnp.stack([xf[:, :, r:r + 2 * ROWS_PER_IMG:2, :] for r in range(8)],
                    axis=3)                            # (n_pad, 3, 16, 8, 32)
    xop = xop.transpose(0, 2, 1, 3, 4)                 # (b, rr, c, r, w)
    xop = xop.reshape(n_pad * ROWS_PER_IMG, KDIM).astype(jnp.bfloat16)

    # ---- trace-time Toeplitz expansion of the conv weight (tiny, once/call) ----
    cw = conv_w.astype(jnp.float32)                    # (32, 3, 7, 7)
    c_i = jnp.arange(IN_CH).reshape(IN_CH, 1, 1, 1, 1, 1, 1)
    r_i = jnp.arange(8).reshape(1, 8, 1, 1, 1, 1, 1)
    w_i = jnp.arange(W_IN).reshape(1, 1, W_IN, 1, 1, 1, 1)
    dy_i = jnp.arange(POOL).reshape(1, 1, 1, POOL, 1, 1, 1)
    dx_i = jnp.arange(POOL).reshape(1, 1, 1, 1, POOL, 1, 1)
    co_i = jnp.arange(OUT_CH).reshape(1, 1, 1, 1, 1, OUT_CH, 1)
    pw_i = jnp.arange(P_POOL).reshape(1, 1, 1, 1, 1, 1, P_POOL)
    ky = r_i - dy_i
    kx = w_i - 2 * pw_i - dx_i
    valid = (ky >= 0) & (ky < K) & (kx >= 0) & (kx < K)
    vals = cw[co_i, c_i, jnp.clip(ky, 0, K - 1), jnp.clip(kx, 0, K - 1)]
    vals = jnp.where(valid, vals, 0.0)                 # (3, 8, 32, 2, 2, 32, 13)
    vals = vals.reshape(KDIM, POOL * POOL, NCOL)
    vals = jnp.pad(vals, ((0, 0), (0, 0), (0, NPAD - NCOL)))
    convw_t = vals.transpose(1, 0, 2).astype(jnp.bfloat16)      # (4, 768, 512)

    convb_row = jnp.repeat(conv_b.astype(jnp.float32)[:, None], P_POOL, axis=1)
    convb_row = jnp.pad(convb_row.reshape(1, NCOL), ((0, 0), (0, NPAD - NCOL)))

    # ---- FC weight permuted to (co*13+pw, ph*16+o) ----
    g = fc_w.astype(jnp.float32).reshape(OUT_SIZE, OUT_CH, P_POOL, P_POOL)
    g = g.transpose(1, 3, 2, 0)                        # (co, pw, ph, o)
    g = g.reshape(NCOL, P_POOL, OUT_SIZE)
    g = jnp.pad(g, ((0, NPAD - NCOL), (0, 0), (0, 16 - OUT_SIZE)))
    fcw_t = g.reshape(NPAD, FCCOL).astype(jnp.bfloat16)

    fcb_row = jnp.pad(fc_b.astype(jnp.float32),
                      (0, NOUT_PAD - OUT_SIZE)).reshape(1, NOUT_PAD)

    # ---- grid-invariant selection constants (hoisted out of the kernel body) ----
    row = jnp.arange(M_TILE)[:, None] % ROWS_PER_IMG
    col = jnp.arange(FCCOL)[None, :] // 16
    pmask = (col == row).astype(jnp.float32)           # (256, 208); rows 13..15 all-zero
    fl = jnp.arange(FCCOL)[:, None] % 16
    fo = jnp.arange(NOUT_PAD)[None, :]
    fold = (fl == fo).astype(jnp.float32)              # (208, 128)

    out = pl.pallas_call(
        fused_cnn_kernel,
        out_shape=jax.ShapeDtypeStruct((n_pad, NOUT_PAD), jnp.float32),
        grid=(n_tiles,),
        in_specs=[
            pl.BlockSpec((M_TILE, KDIM), lambda t: (t, 0)),
            _const_spec((POOL * POOL, KDIM, NPAD)),
            _const_spec((1, NPAD)),
            _const_spec((NPAD, FCCOL)),
            _const_spec((1, NOUT_PAD)),
            _const_spec((M_TILE, FCCOL)),
            _const_spec((FCCOL, NOUT_PAD)),
        ],
        out_specs=pl.BlockSpec((B_TILE, NOUT_PAD), lambda t: (t, 0)),
        compiler_params=pltpu.CompilerParams(
            dimension_semantics=("parallel",),
            vmem_limit_bytes=32 * 1024 * 1024),
    )(xop, convw_t, convb_row, fcw_t, fcb_row, pmask, fold)

    return out[:n, :OUT_SIZE]


def reference_forward(x, conv_w, conv_b, fc_w, fc_b):
    conv = jax.lax.conv_general_dilated(
        x, conv_w, window_strides=(1, 1), padding="VALID",
        dimension_numbers=("NCHW", "OIHW", "NCHW"))
    conv = conv + conv_b[None, :, None, None]
    relu = jnp.maximum(conv, 0.0)
    pooled = jax.lax.reduce_window(
        relu, -jnp.inf, jax.lax.max,
        window_dimensions=(1, 1, POOL, POOL),
        window_strides=(1, 1, POOL, POOL),
        padding="VALID")
    hidden = pooled.reshape(x.shape[0], -1)
    return hidden @ fc_w.T + fc_b


if __name__ == "__main__":
    key = jax.random.PRNGKey(0)
    kx_, k1, k2, k3, k4 = jax.random.split(key, 5)

    batch = 2
    x = jax.random.normal(kx_, (batch, IN_CH, H_IN, W_IN), dtype=jnp.float32)

    # Deterministic parameter init (shapes match nn.Conv2d / nn.Linear).
    conv_w = jax.random.normal(k1, (OUT_CH, IN_CH, K, K), jnp.float32) * 0.05
    conv_b = jax.random.normal(k2, (OUT_CH,), jnp.float32) * 0.05
    fc_w = jax.random.normal(k3, (OUT_SIZE, FLAT), jnp.float32) * 0.02
    fc_b = jax.random.normal(k4, (OUT_SIZE,), jnp.float32) * 0.02

    fwd = jax.jit(vanilla_cnn_forward)
    out = jax.block_until_ready(fwd(x, conv_w, conv_b, fc_w, fc_b))
    ref = jax.block_until_ready(
        reference_forward(x, conv_w, conv_b, fc_w, fc_b))

    assert out.shape == (batch, OUT_SIZE), out.shape
    max_err = float(jnp.max(jnp.abs(out - ref)))
    # bf16 MXU inputs with f32 accumulation -> a few 1e-3 of absolute error.
    assert jnp.allclose(out, ref, atol=3e-2, rtol=3e-2), max_err
    print("KERNEL_OK")
</pallas_src>

<mosaic_0001>
module attributes {stable_mosaic.version = 11 : i64} {
  func.func @fused_cnn_kernel(%arg0: i32, %arg1: memref<256x768xbf16, #tpu.memory_space<vmem>>, %arg2: memref<4x768x512xbf16, #tpu.memory_space<vmem>>, %arg3: memref<1x512xf32, #tpu.memory_space<vmem>>, %arg4: memref<512x208xbf16, #tpu.memory_space<vmem>>, %arg5: memref<1x128xf32, #tpu.memory_space<vmem>>, %arg6: memref<256x208xf32, #tpu.memory_space<vmem>>, %arg7: memref<208x128xf32, #tpu.memory_space<vmem>>, %arg8: memref<16x128xf32, #tpu.memory_space<vmem>>) attributes {dimension_semantics = [#tpu.dimension_semantics<parallel>], iteration_bounds = array<i64: 1>, scalar_prefetch = 0 : i64, scratch_operands = 0 : i64, tpu.core_type = #tpu.core_type<tc>, window_params = [{transform_indices = @transform_0, window_bounds = array<i64: 256, 768>}, {pipeline_mode = #tpu.pipeline_mode<synchronous>, transform_indices = @transform_1, window_bounds = array<i64: 4, 768, 512>}, {pipeline_mode = #tpu.pipeline_mode<synchronous>, transform_indices = @transform_2, window_bounds = array<i64: 1, 512>}, {pipeline_mode = #tpu.pipeline_mode<synchronous>, transform_indices = @transform_3, window_bounds = array<i64: 512, 208>}, {pipeline_mode = #tpu.pipeline_mode<synchronous>, transform_indices = @transform_4, window_bounds = array<i64: 1, 128>}, {pipeline_mode = #tpu.pipeline_mode<synchronous>, transform_indices = @transform_5, window_bounds = array<i64: 256, 208>}, {pipeline_mode = #tpu.pipeline_mode<synchronous>, transform_indices = @transform_6, window_bounds = array<i64: 208, 128>}, {transform_indices = @transform_7, window_bounds = array<i64: 16, 128>}]} {
    %c0 = arith.constant 0 : index
    %c0_0 = arith.constant 0 : index
    %0 = vector.load %arg1[%c0, %c0_0] : memref<256x768xbf16, #tpu.memory_space<vmem>>, vector<256x768xbf16>
    %c0_1 = arith.constant 0 : index
    %c0_2 = arith.constant 0 : index
    %c0_3 = arith.constant 0 : index
    %1 = vector.load %arg2[%c0_1, %c0_2, %c0_3] : memref<4x768x512xbf16, #tpu.memory_space<vmem>>, vector<1x768x512xbf16>
    %2 = vector.shape_cast %1 : vector<1x768x512xbf16> to vector<768x512xbf16>
    %cst = arith.constant dense<0.000000e+00> : vector<256x512xf32>
    %3 = tpu.matmul %0, %2, %cst {dimension_numbers = #tpu.dot_dimension_numbers<[1], [0], [0], [1], [0, 0, 1, 1], [], []>} : vector<256x768xbf16>, vector<768x512xbf16>, vector<256x512xf32> -> vector<256x512xf32>
    %c1 = arith.constant 1 : index
    %c0_4 = arith.constant 0 : index
    %c0_5 = arith.constant 0 : index
    %4 = vector.load %arg2[%c1, %c0_4, %c0_5] : memref<4x768x512xbf16, #tpu.memory_space<vmem>>, vector<1x768x512xbf16>
    %5 = vector.shape_cast %4 : vector<1x768x512xbf16> to vector<768x512xbf16>
    %cst_6 = arith.constant dense<0.000000e+00> : vector<256x512xf32>
    %6 = tpu.matmul %0, %5, %cst_6 {dimension_numbers = #tpu.dot_dimension_numbers<[1], [0], [0], [1], [0, 0, 1, 1], [], []>} : vector<256x768xbf16>, vector<768x512xbf16>, vector<256x512xf32> -> vector<256x512xf32>
    %7 = arith.maximumf %3, %6 : vector<256x512xf32>
    %c2 = arith.constant 2 : index
    %c0_7 = arith.constant 0 : index
    %c0_8 = arith.constant 0 : index
    %8 = vector.load %arg2[%c2, %c0_7, %c0_8] : memref<4x768x512xbf16, #tpu.memory_space<vmem>>, vector<1x768x512xbf16>
    %9 = vector.shape_cast %8 : vector<1x768x512xbf16> to vector<768x512xbf16>
    %cst_9 = arith.constant dense<0.000000e+00> : vector<256x512xf32>
    %10 = tpu.matmul %0, %9, %cst_9 {dimension_numbers = #tpu.dot_dimension_numbers<[1], [0], [0], [1], [0, 0, 1, 1], [], []>} : vector<256x768xbf16>, vector<768x512xbf16>, vector<256x512xf32> -> vector<256x512xf32>
    %11 = arith.maximumf %7, %10 : vector<256x512xf32>
    %c3 = arith.constant 3 : index
    %c0_10 = arith.constant 0 : index
    %c0_11 = arith.constant 0 : index
    %12 = vector.load %arg2[%c3, %c0_10, %c0_11] : memref<4x768x512xbf16, #tpu.memory_space<vmem>>, vector<1x768x512xbf16>
    %13 = vector.shape_cast %12 : vector<1x768x512xbf16> to vector<768x512xbf16>
    %cst_12 = arith.constant dense<0.000000e+00> : vector<256x512xf32>
    %14 = tpu.matmul %0, %13, %cst_12 {dimension_numbers = #tpu.dot_dimension_numbers<[1], [0], [0], [1], [0, 0, 1, 1], [], []>} : vector<256x768xbf16>, vector<768x512xbf16>, vector<256x512xf32> -> vector<256x512xf32>
    %15 = arith.maximumf %11, %14 : vector<256x512xf32>
    %c0_13 = arith.constant 0 : index
    %c0_14 = arith.constant 0 : index
    %16 = vector.load %arg3[%c0_13, %c0_14] : memref<1x512xf32, #tpu.memory_space<vmem>>, vector<1x512xf32>
    %17 = vector.broadcast %16 : vector<1x512xf32> to vector<256x512xf32>
    %18 = arith.addf %15, %17 : vector<256x512xf32>
    %cst_15 = arith.constant 0.000000e+00 : f32
    %19 = vector.broadcast %cst_15 : f32 to vector<256x512xf32>
    %20 = arith.maximumf %18, %19 : vector<256x512xf32>
    %21 = arith.truncf %20 : vector<256x512xf32> to vector<256x512xbf16>
    %c0_16 = arith.constant 0 : index
    %c0_17 = arith.constant 0 : index
    %22 = vector.load %arg4[%c0_16, %c0_17] : memref<512x208xbf16, #tpu.memory_space<vmem>>, vector<512x208xbf16>
    %cst_18 = arith.constant dense<0.000000e+00> : vector<256x208xf32>
    %23 = tpu.matmul %21, %22, %cst_18 {dimension_numbers = #tpu.dot_dimension_numbers<[1], [0], [0], [1], [0, 0, 1, 1], [], []>} : vector<256x512xbf16>, vector<512x208xbf16>, vector<256x208xf32> -> vector<256x208xf32>
    %c0_19 = arith.constant 0 : index
    %c0_20 = arith.constant 0 : index
    %24 = vector.load %arg6[%c0_19, %c0_20] : memref<256x208xf32, #tpu.memory_space<vmem>>, vector<256x208xf32>
    %25 = arith.mulf %23, %24 : vector<256x208xf32>
    %26 = vector.shape_cast %25 : vector<256x208xf32> to vector<16x16x208xf32>
    %cst_21 = arith.constant dense<0.000000e+00> : vector<16x208xf32>
    %27 = vector.multi_reduction <add>, %26, %cst_21 [1] : vector<16x16x208xf32> to vector<16x208xf32>
    %c0_22 = arith.constant 0 : index
    %c0_23 = arith.constant 0 : index
    %28 = vector.load %arg7[%c0_22, %c0_23] : memref<208x128xf32, #tpu.memory_space<vmem>>, vector<208x128xf32>
    %cst_24 = arith.constant dense<0.000000e+00> : vector<16x128xf32>
    %29 = tpu.matmul %27, %28, %cst_24 {dimension_numbers = #tpu.dot_dimension_numbers<[1], [0], [0], [1], [0, 0, 1, 1], [], []>} : vector<16x208xf32>, vector<208x128xf32>, vector<16x128xf32> -> vector<16x128xf32>
    %c0_25 = arith.constant 0 : index
    %c0_26 = arith.constant 0 : index
    %30 = vector.load %arg5[%c0_25, %c0_26] : memref<1x128xf32, #tpu.memory_space<vmem>>, vector<1x128xf32>
    %31 = vector.broadcast %30 : vector<1x128xf32> to vector<16x128xf32>
    %32 = arith.addf %29, %31 : vector<16x128xf32>
    %c0_27 = arith.constant 0 : index
    %c0_28 = arith.constant 0 : index
    %33 = vector.load %arg8[%c0_27, %c0_28] : memref<16x128xf32, #tpu.memory_space<vmem>>, vector<16x128xf32>
    tpu.vector_store %arg8[%c0_27, %c0_28], %32 {strides = array<i32>} : memref<16x128xf32, #tpu.memory_space<vmem>>, vector<16x128xf32>,
    return
  }
  func.func @transform_0(%arg0: i32) -> (i32, i32) {
    %c0_i32 = arith.constant 0 : i32
    %c0_i32_0 = arith.constant 0 : i32
    return %arg0, %c0_i32 : i32, i32
  }
  func.func @transform_1(%arg0: i32) -> (i32, i32, i32) {
    %c0_i32 = arith.constant 0 : i32
    %c0_i32_0 = arith.constant 0 : i32
    %c0_i32_1 = arith.constant 0 : i32
    %c0_i32_2 = arith.constant 0 : i32
    return %c0_i32, %c0_i32_0, %c0_i32_1 : i32, i32, i32
  }
  func.func @transform_2(%arg0: i32) -> (i32, i32) {
    %c0_i32 = arith.constant 0 : i32
    %c0_i32_0 = arith.constant 0 : i32
    %c0_i32_1 = arith.constant 0 : i32
    return %c0_i32, %c0_i32_0 : i32, i32
  }
  func.func @transform_3(%arg0: i32) -> (i32, i32) {
    %c0_i32 = arith.constant 0 : i32
    %c0_i32_0 = arith.constant 0 : i32
    %c0_i32_1 = arith.constant 0 : i32
    return %c0_i32, %c0_i32_0 : i32, i32
  }
  func.func @transform_4(%arg0: i32) -> (i32, i32) {
    %c0_i32 = arith.constant 0 : i32
    %c0_i32_0 = arith.constant 0 : i32
    %c0_i32_1 = arith.constant 0 : i32
    return %c0_i32, %c0_i32_0 : i32, i32
  }
  func.func @transform_5(%arg0: i32) -> (i32, i32) {
    %c0_i32 = arith.constant 0 : i32
    %c0_i32_0 = arith.constant 0 : i32
    %c0_i32_1 = arith.constant 0 : i32
    return %c0_i32, %c0_i32_0 : i32, i32
  }
  func.func @transform_6(%arg0: i32) -> (i32, i32) {
    %c0_i32 = arith.constant 0 : i32
    %c0_i32_0 = arith.constant 0 : i32
    %c0_i32_1 = arith.constant 0 : i32
    return %c0_i32, %c0_i32_0 : i32, i32
  }
  func.func @transform_7(%arg0: i32) -> (i32, i32) {
    %c0_i32 = arith.constant 0 : i32
    %c0_i32_0 = arith.constant 0 : i32
    return %arg0, %c0_i32 : i32, i32
  }
}

</mosaic_0001>

<llo_original>
// kernel: vanilla_cnn_forward.1
$region0: #{vanilla_cnn_forward.1}
  #allocation0 [shape = 'u32[]', space=smem, size = 0x4, offset = 0x4, fixed_abs, tag = 'smem constant byte address 0x4 - core index']
  #allocation1 [shape = 'u32[144,128]{1,0:T(1,128)}', space=vmem, size = 0x12000, scoped, tag = 'internal scratch']
  %s0 = inlined_call_operand.vmem [shape: bf16[256,768], index: 0, kind: input, shape index: {}]
  %s1 = inlined_call_operand.vmem [shape: bf16[4,768,512], index: 1, kind: input, shape index: {}]
  %s2 = inlined_call_operand.vmem [shape: f32[1,512], index: 2, kind: input, shape index: {}]
  %s3 = inlined_call_operand.vmem [shape: bf16[512,208], index: 3, kind: input, shape index: {}]
  %s4 = inlined_call_operand.vmem [shape: f32[1,128], index: 4, kind: input, shape index: {}]
  %s5 = inlined_call_operand.vmem [shape: f32[256,208], index: 5, kind: input, shape index: {}]
  %s6 = inlined_call_operand.vmem [shape: f32[208,128], index: 6, kind: input, shape index: {}]
  %s7 = inlined_call_operand.vmem [shape: f32[16,128], index: 7, kind: output, shape index: {}]
  %s8 = sld [smem:[#allocation0]]
  $region38: #{vanilla_cnn_forward.1} parent=0
    _
  %s10 = ssub.s32 1, %s8
  %s11 = scalar_select 0, %s10, %s8
  // Predicated region
  $region2: #{vanilla_cnn_forward.1} parent=0 // pred_check
    _
  $region3: #{vanilla_cnn_forward.1} parent=0 // pred_check_branch
    %13 = sbr.rel (0) target = $region5
  $region4: #{vanilla_cnn_forward.1} parent=0 // pred_region
    _
  $region5: #{vanilla_cnn_forward.1} parent=0 // pred_fallthru
    _
  // Predicated region
  $region6: #{vanilla_cnn_forward.1} parent=0 // pred_check
    _
  $region7: #{vanilla_cnn_forward.1} parent=0 // pred_check_branch
    %15 = sbr.rel (0) target = $region9
  $region8: #{vanilla_cnn_forward.1} parent=0 // pred_region
    _
  $region9: #{vanilla_cnn_forward.1} parent=0 // pred_fallthru
    _
  // Predicated region
  $region10: #{vanilla_cnn_forward.1} parent=0 // pred_check
    _
  $region11: #{vanilla_cnn_forward.1} parent=0 // pred_check_branch
    %17 = sbr.rel (0) target = $region13
  $region12: #{vanilla_cnn_forward.1} parent=0 // pred_region
    _
  $region13: #{vanilla_cnn_forward.1} parent=0 // pred_fallthru
    _
  // Predicated region
  $region14: #{vanilla_cnn_forward.1} parent=0 // pred_check
    _
  $region15: #{vanilla_cnn_forward.1} parent=0 // pred_check_branch
    %19 = sbr.rel (0) target = $region17
  $region16: #{vanilla_cnn_forward.1} parent=0 // pred_region
    _
  $region17: #{vanilla_cnn_forward.1} parent=0 // pred_fallthru
    _
  // Predicated region
  $region18: #{vanilla_cnn_forward.1} parent=0 // pred_check
    _
  $region19: #{vanilla_cnn_forward.1} parent=0 // pred_check_branch
    %21 = sbr.rel (0) target = $region21
  $region20: #{vanilla_cnn_forward.1} parent=0 // pred_region
    _
  $region21: #{vanilla_cnn_forward.1} parent=0 // pred_fallthru
    _
  // Predicated region
  $region22: #{vanilla_cnn_forward.1} parent=0 // pred_check
    _
  $region23: #{vanilla_cnn_forward.1} parent=0 // pred_check_branch
    %23 = sbr.rel (0) target = $region25
  $region24: #{vanilla_cnn_forward.1} parent=0 // pred_region
    _
  $region25: #{vanilla_cnn_forward.1} parent=0 // pred_fallthru
    _
  // Predicated region
  $region26: #{vanilla_cnn_forward.1} parent=0 // pred_check
    _
  $region27: #{vanilla_cnn_forward.1} parent=0 // pred_check_branch
    %25 = sbr.rel (0) target = $region29
  $region28: #{vanilla_cnn_forward.1} parent=0 // pred_region
    _
  $region29: #{vanilla_cnn_forward.1} parent=0 // pred_fallthru
    _
  %v26 = vld [vmem:[%s0] sm:$0xff]
  %v27 = vld [vmem:[%s0 + $0x8] sm:$0xff]
  %v28 = vld [vmem:[%s0 + $0x10] sm:$0xff]
  %v29 = vld [vmem:[%s0 + $0x18] sm:$0xff]
  %v30 = vld [vmem:[%s0 + $0x20] sm:$0xff]
  %v31 = vld [vmem:[%s0 + $0x28] sm:$0xff]
  %v32 = vld [vmem:[%s0 + $0x30] sm:$0xff]
  %v33 = vld [vmem:[%s0 + $0x38] sm:$0xff]
  %v34 = vld [vmem:[%s0 + $0x40] sm:$0xff]
  %v35 = vld [vmem:[%s0 + $0x48] sm:$0xff]
  %v36 = vld [vmem:[%s0 + $0x50] sm:$0xff]
  %v37 = vld [vmem:[%s0 + $0x58] sm:$0xff]
  %v38 = vld [vmem:[%s0 + $0x60] sm:$0xff]
  %v39 = vld [vmem:[%s0 + $0x68] sm:$0xff]
  %v40 = vld [vmem:[%s0 + $0x70] sm:$0xff]
  %v41 = vld [vmem:[%s0 + $0x78] sm:$0xff]
  %v42 = vld [vmem:[%s0 + $0x80] sm:$0xff]
  %v43 = vld [vmem:[%s0 + $0x88] sm:$0xff]
  %v44 = vld [vmem:[%s0 + $0x90] sm:$0xff]
  %v45 = vld [vmem:[%s0 + $0x98] sm:$0xff]
  %v46 = vld [vmem:[%s0 + $0xa0] sm:$0xff]
  %v47 = vld [vmem:[%s0 + $0xa8] sm:$0xff]
  %v48 = vld [vmem:[%s0 + $0xb0] sm:$0xff]
  %v49 = vld [vmem:[%s0 + $0xb8] sm:$0xff]
  %v50 = vld [vmem:[%s0 + $0xc0] sm:$0xff]
  %v51 = vld [vmem:[%s0 + $0xc8] sm:$0xff]
  %v52 = vld [vmem:[%s0 + $0xd0] sm:$0xff]
  %v53 = vld [vmem:[%s0 + $0xd8] sm:$0xff]
  %v54 = vld [vmem:[%s0 + $0xe0] sm:$0xff]
  %v55 = vld [vmem:[%s0 + $0xe8] sm:$0xff]
  %v56 = vld [vmem:[%s0 + $0xf0] sm:$0xff]
  %v57 = vld [vmem:[%s0 + $0xf8] sm:$0xff]
  %v58 = vld [vmem:[%s0 + $0x100] sm:$0xff]
  %v59 = vld [vmem:[%s0 + $0x108] sm:$0xff]
  %v60 = vld [vmem:[%s0 + $0x110] sm:$0xff]
  %v61 = vld [vmem:[%s0 + $0x118] sm:$0xff]
  %v62 = vld [vmem:[%s0 + $0x120] sm:$0xff]
  %v63 = vld [vmem:[%s0 + $0x128] sm:$0xff]
  %v64 = vld [vmem:[%s0 + $0x130] sm:$0xff]
  %v65 = vld [vmem:[%s0 + $0x138] sm:$0xff]
  %v66 = vld [vmem:[%s0 + $0x140] sm:$0xff]
  %v67 = vld [vmem:[%s0 + $0x148] sm:$0xff]
  %v68 = vld [vmem:[%s0 + $0x150] sm:$0xff]
  %v69 = vld [vmem:[%s0 + $0x158] sm:$0xff]
  %v70 = vld [vmem:[%s0 + $0x160] sm:$0xff]
  %v71 = vld [vmem:[%s0 + $0x168] sm:$0xff]
  %v72 = vld [vmem:[%s0 + $0x170] sm:$0xff]
  %v73 = vld [vmem:[%s0 + $0x178] sm:$0xff]
  %v74 = vld [vmem:[%s0 + $0x180] sm:$0xff]
  %v75 = vld [vmem:[%s0 + $0x188] sm:$0xff]
  %v76 = vld [vmem:[%s0 + $0x190] sm:$0xff]
  %v77 = vld [vmem:[%s0 + $0x198] sm:$0xff]
  %v78 = vld [vmem:[%s0 + $0x1a0] sm:$0xff]
  %v79 = vld [vmem:[%s0 + $0x1a8] sm:$0xff]
  %v80 = vld [vmem:[%s0 + $0x1b0] sm:$0xff]
  %v81 = vld [vmem:[%s0 + $0x1b8] sm:$0xff]
  %v82 = vld [vmem:[%s0 + $0x1c0] sm:$0xff]
  %v83 = vld [vmem:[%s0 + $0x1c8] sm:$0xff]
  %v84 = vld [vmem:[%s0 + $0x1d0] sm:$0xff]
  %v85 = vld [vmem:[%s0 + $0x1d8] sm:$0xff]
  %v86 = vld [vmem:[%s0 + $0x1e0] sm:$0xff]
  %v87 = vld [vmem:[%s0 + $0x1e8] sm:$0xff]
  %v88 = vld [vmem:[%s0 + $0x1f0] sm:$0xff]
  %v89 = vld [vmem:[%s0 + $0x1f8] sm:$0xff]
  %v90 = vld [vmem:[%s0 + $0x200] sm:$0xff]
  %v91 = vld [vmem:[%s0 + $0x208] sm:$0xff]
  %v92 = vld [vmem:[%s0 + $0x210] sm:$0xff]
  %v93 = vld [vmem:[%s0 + $0x218] sm:$0xff]
  %v94 = vld [vmem:[%s0 + $0x220] sm:$0xff]
  %v95 = vld [vmem:[%s0 + $0x228] sm:$0xff]
  %v96 = vld [vmem:[%s0 + $0x230] sm:$0xff]
  %v97 = vld [vmem:[%s0 + $0x238] sm:$0xff]
  %v98 = vld [vmem:[%s0 + $0x240] sm:$0xff]
  %v99 = vld [vmem:[%s0 + $0x248] sm:$0xff]
  %v100 = vld [vmem:[%s0 + $0x250] sm:$0xff]
  %v101 = vld [vmem:[%s0 + $0x258] sm:$0xff]
  %v102 = vld [vmem:[%s0 + $0x260] sm:$0xff]
  %v103 = vld [vmem:[%s0 + $0x268] sm:$0xff]
  %v104 = vld [vmem:[%s0 + $0x270] sm:$0xff]
  %v105 = vld [vmem:[%s0 + $0x278] sm:$0xff]
  %v106 = vld [vmem:[%s0 + $0x280] sm:$0xff]
  %v107 = vld [vmem:[%s0 + $0x288] sm:$0xff]
  %v108 = vld [vmem:[%s0 + $0x290] sm:$0xff]
  %v109 = vld [vmem:[%s0 + $0x298] sm:$0xff]
  %v110 = vld [vmem:[%s0 + $0x2a0] sm:$0xff]
  %v111 = vld [vmem:[%s0 + $0x2a8] sm:$0xff]
  %v112 = vld [vmem:[%s0 + $0x2b0] sm:$0xff]
  %v113 = vld [vmem:[%s0 + $0x2b8] sm:$0xff]
  %v114 = vld [vmem:[%s0 + $0x2c0] sm:$0xff]
  %v115 = vld [vmem:[%s0 + $0x2c8] sm:$0xff]
  %v116 = vld [vmem:[%s0 + $0x2d0] sm:$0xff]
  %v117 = vld [vmem:[%s0 + $0x2d8] sm:$0xff]
  %v118 = vld [vmem:[%s0 + $0x2e0] sm:$0xff]
  %v119 = vld [vmem:[%s0 + $0x2e8] sm:$0xff]
  %v120 = vld [vmem:[%s0 + $0x2f0] sm:$0xff]
  %v121 = vld [vmem:[%s0 + $0x2f8] sm:$0xff]
  %v122 = vld [vmem:[%s1] sm:$0xff]
  %v123 = vld [vmem:[%s1 + $0x8] sm:$0xff]
  %v124 = vld [vmem:[%s1 + $0x10] sm:$0xff]
  %v125 = vld [vmem:[%s1 + $0x18] sm:$0xff]
  %v126 = vld [vmem:[%s1 + $0x20] sm:$0xff]
  %v127 = vld [vmem:[%s1 + $0x28] sm:$0xff]
  %v128 = vld [vmem:[%s1 + $0x30] sm:$0xff]
  %v129 = vld [vmem:[%s1 + $0x38] sm:$0xff]
  %v130 = vld [vmem:[%s1 + $0x40] sm:$0xff]
  %v131 = vld [vmem:[%s1 + $0x48] sm:$0xff]
  %v132 = vld [vmem:[%s1 + $0x50] sm:$0xff]
  %v133 = vld [vmem:[%s1 + $0x58] sm:$0xff]
  %v134 = vld [vmem:[%s1 + $0x60] sm:$0xff]
  %v135 = vld [vmem:[%s1 + $0x68] sm:$0xff]
  %v136 = vld [vmem:[%s1 + $0x70] sm:$0xff]
  %v137 = vld [vmem:[%s1 + $0x78] sm:$0xff]
  %v138 = vld [vmem:[%s1 + $0x80] sm:$0xff]
  %v139 = vld [vmem:[%s1 + $0x88] sm:$0xff]
  %v140 = vld [vmem:[%s1 + $0x90] sm:$0xff]
  %v141 = vld [vmem:[%s1 + $0x98] sm:$0xff]
  %v142 = vld [vmem:[%s1 + $0xa0] sm:$0xff]
  %v143 = vld [vmem:[%s1 + $0xa8] sm:$0xff]
  %v144 = vld [vmem:[%s1 + $0xb0] sm:$0xff]
  %v145 = vld [vmem:[%s1 + $0xb8] sm:$0xff]
  %v146 = vld [vmem:[%s1 + $0xc0] sm:$0xff]
  %v147 = vld [vmem:[%s1 + $0xc8] sm:$0xff]
  %v148 = vld [vmem:[%s1 + $0xd0] sm:$0xff]
  %v149 = vld [vmem:[%s1 + $0xd8] sm:$0xff]
  %v150 = vld [vmem:[%s1 + $0xe0] sm:$0xff]
  %v151 = vld [vmem:[%s1 + $0xe8] sm:$0xff]
  %v152 = vld [vmem:[%s1 + $0xf0] sm:$0xff]
  %v153 = vld [vmem:[%s1 + $0xf8] sm:$0xff]
  %v154 = vld [vmem:[%s1 + $0x100] sm:$0xff]
  %v155 = vld [vmem:[%s1 + $0x108] sm:$0xff]
  %v156 = vld [vmem:[%s1 + $0x110] sm:$0xff]
  %v157 = vld [vmem:[%s1 + $0x118] sm:$0xff]
  %v158 = vld [vmem:[%s1 + $0x120] sm:$0xff]
  %v159 = vld [vmem:[%s1 + $0x128] sm:$0xff]
  %v160 = vld [vmem:[%s1 + $0x130] sm:$0xff]
  %v161 = vld [vmem:[%s1 + $0x138] sm:$0xff]
  %v162 = vld [vmem:[%s1 + $0x140] sm:$0xff]
  %v163 = vld [vmem:[%s1 + $0x148] sm:$0xff]
  %v164 = vld [vmem:[%s1 + $0x150] sm:$0xff]
  %v165 = vld [vmem:[%s1 + $0x158] sm:$0xff]
  %v166 = vld [vmem:[%s1 + $0x160] sm:$0xff]
  %v167 = vld [vmem:[%s1 + $0x168] sm:$0xff]
  %v168 = vld [vmem:[%s1 + $0x170] sm:$0xff]
  %v169 = vld [vmem:[%s1 + $0x178] sm:$0xff]
  %v170 = vld [vmem:[%s1 + $0x180] sm:$0xff]
  %v171 = vld [vmem:[%s1 + $0x188] sm:$0xff]
  %v172 = vld [vmem:[%s1 + $0x190] sm:$0xff]
  %v173 = vld [vmem:[%s1 + $0x198] sm:$0xff]
  %v174 = vld [vmem:[%s1 + $0x1a0] sm:$0xff]
  %v175 = vld [vmem:[%s1 + $0x1a8] sm:$0xff]
  %v176 = vld [vmem:[%s1 + $0x1b0] sm:$0xff]
  %v177 = vld [vmem:[%s1 + $0x1b8] sm:$0xff]
  %v178 = vld [vmem:[%s1 + $0x1c0] sm:$0xff]
  %v179 = vld [vmem:[%s1 + $0x1c8] sm:$0xff]
  %v180 = vld [vmem:[%s1 + $0x1d0] sm:$0xff]
  %v181 = vld [vmem:[%s1 + $0x1d8] sm:$0xff]
  %v182 = vld [vmem:[%s1 + $0x1e0] sm:$0xff]
  %v183 = vld [vmem:[%s1 + $0x1e8] sm:$0xff]
  %v184 = vld [vmem:[%s1 + $0x1f0] sm:$0xff]
  %v185 = vld [vmem:[%s1 + $0x1f8] sm:$0xff]
  %v186 = vld [vmem:[%s1 + $0x200] sm:$0xff]
  %v187 = vld [vmem:[%s1 + $0x208] sm:$0xff]
  %v188 = vld [vmem:[%s1 + $0x210] sm:$0xff]
  %v189 = vld [vmem:[%s1 + $0x218] sm:$0xff]
  %v190 = vld [vmem:[%s1 + $0x220] sm:$0xff]
  %v191 = vld [vmem:[%s1 + $0x228] sm:$0xff]
  %v192 = vld [vmem:[%s1 + $0x230] sm:$0xff]
  %v193 = vld [vmem:[%s1 + $0x238] sm:$0xff]
  %v194 = vld [vmem:[%s1 + $0x240] sm:$0xff]
  %v195 = vld [vmem:[%s1 + $0x248] sm:$0xff]
  %v196 = vld [vmem:[%s1 + $0x250] sm:$0xff]
  %v197 = vld [vmem:[%s1 + $0x258] sm:$0xff]
  %v198 = vld [vmem:[%s1 + $0x260] sm:$0xff]
  %v199 = vld [vmem:[%s1 + $0x268] sm:$0xff]
  %v200 = vld [vmem:[%s1 + $0x270] sm:$0xff]
  %v201 = vld [vmem:[%s1 + $0x278] sm:$0xff]
  %v202 = vld [vmem:[%s1 + $0x280] sm:$0xff]
  %v203 = vld [vmem:[%s1 + $0x288] sm:$0xff]
  %v204 = vld [vmem:[%s1 + $0x290] sm:$0xff]
  %v205 = vld [vmem:[%s1 + $0x298] sm:$0xff]
  %v206 = vld [vmem:[%s1 + $0x2a0] sm:$0xff]
  %v207 = vld [vmem:[%s1 + $0x2a8] sm:$0xff]
  %v208 = vld [vmem:[%s1 + $0x2b0] sm:$0xff]
  %v209 = vld [vmem:[%s1 + $0x2b8] sm:$0xff]
  %v210 = vld [vmem:[%s1 + $0x2c0] sm:$0xff]
  %v211 = vld [vmem:[%s1 + $0x2c8] sm:$0xff]
  %v212 = vld [vmem:[%s1 + $0x2d0] sm:$0xff]
  %v213 = vld [vmem:[%s1 + $0x2d8] sm:$0xff]
  %v214 = vld [vmem:[%s1 + $0x2e0] sm:$0xff]
  %v215 = vld [vmem:[%s1 + $0x2e8] sm:$0xff]
  %v216 = vld [vmem:[%s1 + $0x2f0] sm:$0xff]
  %v217 = vld [vmem:[%s1 + $0x2f8] sm:$0xff]
  %v218 = vld [vmem:[%s1 + $0x300] sm:$0xff]
  %v219 = vld [vmem:[%s1 + $0x308] sm:$0xff]
  %v220 = vld [vmem:[%s1 + $0x310] sm:$0xff]
  %v221 = vld [vmem:[%s1 + $0x318] sm:$0xff]
  %v222 = vld [vmem:[%s1 + $0x320] sm:$0xff]
  %v223 = vld [vmem:[%s1 + $0x328] sm:$0xff]
  %v224 = vld [vmem:[%s1 + $0x330] sm:$0xff]
  %v225 = vld [vmem:[%s1 + $0x338] sm:$0xff]
  %v226 = vld [vmem:[%s1 + $0x340] sm:$0xff]
  %v227 = vld [vmem:[%s1 + $0x348] sm:$0xff]
  %v228 = vld [vmem:[%s1 + $0x350] sm:$0xff]
  %v229 = vld [vmem:[%s1 + $0x358] sm:$0xff]
  %v230 = vld [vmem:[%s1 + $0x360] sm:$0xff]
  %v231 = vld [vmem:[%s1 + $0x368] sm:$0xff]
  %v232 = vld [vmem:[%s1 + $0x370] sm:$0xff]
  %v233 = vld [vmem:[%s1 + $0x378] sm:$0xff]
  %v234 = vld [vmem:[%s1 + $0x380] sm:$0xff]
  %v235 = vld [vmem:[%s1 + $0x388] sm:$0xff]
  %v236 = vld [vmem:[%s1 + $0x390] sm:$0xff]
  %v237 = vld [vmem:[%s1 + $0x398] sm:$0xff]
  %v238 = vld [vmem:[%s1 + $0x3a0] sm:$0xff]
  %v239 = vld [vmem:[%s1 + $0x3a8] sm:$0xff]
  %v240 = vld [vmem:[%s1 + $0x3b0] sm:$0xff]
  %v241 = vld [vmem:[%s1 + $0x3b8] sm:$0xff]
  %v242 = vld [vmem:[%s1 + $0x3c0] sm:$0xff]
  %v243 = vld [vmem:[%s1 + $0x3c8] sm:$0xff]
  %v244 = vld [vmem:[%s1 + $0x3d0] sm:$0xff]
  %v245 = vld [vmem:[%s1 + $0x3d8] sm:$0xff]
  %v246 = vld [vmem:[%s1 + $0x3e0] sm:$0xff]
  %v247 = vld [vmem:[%s1 + $0x3e8] sm:$0xff]
  %v248 = vld [vmem:[%s1 + $0x3f0] sm:$0xff]
  %v249 = vld [vmem:[%s1 + $0x3f8] sm:$0xff]
  %v250 = vld [vmem:[%s1 + $0x400] sm:$0xff]
  %v251 = vld [vmem:[%s1 + $0x408] sm:$0xff]
  %v252 = vld [vmem:[%s1 + $0x410] sm:$0xff]
  %v253 = vld [vmem:[%s1 + $0x418] sm:$0xff]
  %v254 = vld [vmem:[%s1 + $0x420] sm:$0xff]
  %v255 = vld [vmem:[%s1 + $0x428] sm:$0xff]
  %v256 = vld [vmem:[%s1 + $0x430] sm:$0xff]
  %v257 = vld [vmem:[%s1 + $0x438] sm:$0xff]
  %v258 = vld [vmem:[%s1 + $0x440] sm:$0xff]
  %v259 = vld [vmem:[%s1 + $0x448] sm:$0xff]
  %v260 = vld [vmem:[%s1 + $0x450] sm:$0xff]
  %v261 = vld [vmem:[%s1 + $0x458] sm:$0xff]
  %v262 = vld [vmem:[%s1 + $0x460] sm:$0xff]
  %v263 = vld [vmem:[%s1 + $0x468] sm:$0xff]
  %v264 = vld [vmem:[%s1 + $0x470] sm:$0xff]
  %v265 = vld [vmem:[%s1 + $0x478] sm:$0xff]
  %v266 = vld [vmem:[%s1 + $0x480] sm:$0xff]
  %v267 = vld [vmem:[%s1 + $0x488] sm:$0xff]
  %v268 = vld [vmem:[%s1 + $0x490] sm:$0xff]
  %v269 = vld [vmem:[%s1 + $0x498] sm:$0xff]
  %v270 = vld [vmem:[%s1 + $0x4a0] sm:$0xff]
  %v271 = vld [vmem:[%s1 + $0x4a8] sm:$0xff]
  %v272 = vld [vmem:[%s1 + $0x4b0] sm:$0xff]
  %v273 = vld [vmem:[%s1 + $0x4b8] sm:$0xff]
  %v274 = vld [vmem:[%s1 + $0x4c0] sm:$0xff]
  %v275 = vld [vmem:[%s1 + $0x4c8] sm:$0xff]
  %v276 = vld [vmem:[%s1 + $0x4d0] sm:$0xff]
  %v277 = vld [vmem:[%s1 + $0x4d8] sm:$0xff]
  %v278 = vld [vmem:[%s1 + $0x4e0] sm:$0xff]
  %v279 = vld [vmem:[%s1 + $0x4e8] sm:$0xff]
  %v280 = vld [vmem:[%s1 + $0x4f0] sm:$0xff]
  %v281 = vld [vmem:[%s1 + $0x4f8] sm:$0xff]
  %v282 = vld [vmem:[%s1 + $0x500] sm:$0xff]
  %v283 = vld [vmem:[%s1 + $0x508] sm:$0xff]
  %v284 = vld [vmem:[%s1 + $0x510] sm:$0xff]
  %v285 = vld [vmem:[%s1 + $0x518] sm:$0xff]
  %v286 = vld [vmem:[%s1 + $0x520] sm:$0xff]
  %v287 = vld [vmem:[%s1 + $0x528] sm:$0xff]
  %v288 = vld [vmem:[%s1 + $0x530] sm:$0xff]
  %v289 = vld [vmem:[%s1 + $0x538] sm:$0xff]
  %v290 = vld [vmem:[%s1 + $0x540] sm:$0xff]
  %v291 = vld [vmem:[%s1 + $0x548] sm:$0xff]
  %v292 = vld [vmem:[%s1 + $0x550] sm:$0xff]
  %v293 = vld [vmem:[%s1 + $0x558] sm:$0xff]
  %v294 = vld [vmem:[%s1 + $0x560] sm:$0xff]
  %v295 = vld [vmem:[%s1 + $0x568] sm:$0xff]
  %v296 = vld [vmem:[%s1 + $0x570] sm:$0xff]
  %v297 = vld [vmem:[%s1 + $0x578] sm:$0xff]
  %v298 = vld [vmem:[%s1 + $0x580] sm:$0xff]
  %v299 = vld [vmem:[%s1 + $0x588] sm:$0xff]
  %v300 = vld [vmem:[%s1 + $0x590] sm:$0xff]
  %v301 = vld [vmem:[%s1 + $0x598] sm:$0xff]
  %v302 = vld [vmem:[%s1 + $0x5a0] sm:$0xff]
  %v303 = vld [vmem:[%s1 + $0x5a8] sm:$0xff]
  %v304 = vld [vmem:[%s1 + $0x5b0] sm:$0xff]
  %v305 = vld [vmem:[%s1 + $0x5b8] sm:$0xff]
  %v306 = vld [vmem:[%s1 + $0x5c0] sm:$0xff]
  %v307 = vld [vmem:[%s1 + $0x5c8] sm:$0xff]
  %v308 = vld [vmem:[%s1 + $0x5d0] sm:$0xff]
  %v309 = vld [vmem:[%s1 + $0x5d8] sm:$0xff]
  %v310 = vld [vmem:[%s1 + $0x5e0] sm:$0xff]
  %v311 = vld [vmem:[%s1 + $0x5e8] sm:$0xff]
  %v312 = vld [vmem:[%s1 + $0x5f0] sm:$0xff]
  %v313 = vld [vmem:[%s1 + $0x5f8] sm:$0xff]
  %v410 = vunpack.c.l.b16 %v26
  %v411 = vunpack.c.h.b16 %v26
  %v412 = vunpack.c.l.b16 %v27
  %v413 = vunpack.c.h.b16 %v27
  %v414 = vunpack.c.l.b16 %v28
  %v415 = vunpack.c.h.b16 %v28
  %v416 = vunpack.c.l.b16 %v29
  %v417 = vunpack.c.h.b16 %v29
  %v418 = vunpack.c.l.b16 %v30
  %v419 = vunpack.c.h.b16 %v30
  %v420 = vunpack.c.l.b16 %v31
  %v421 = vunpack.c.h.b16 %v31
  %v422 = vunpack.c.l.b16 %v32
  %v423 = vunpack.c.h.b16 %v32
  %v424 = vunpack.c.l.b16 %v33
  %v425 = vunpack.c.h.b16 %v33
  %v426 = vunpack.c.l.b16 %v34
  %v427 = vunpack.c.h.b16 %v34
  %v428 = vunpack.c.l.b16 %v35
  %v429 = vunpack.c.h.b16 %v35
  %v430 = vunpack.c.l.b16 %v36
  %v431 = vunpack.c.h.b16 %v36
  %v432 = vunpack.c.l.b16 %v37
  %v433 = vunpack.c.h.b16 %v37
  %v434 = vunpack.c.l.b16 %v38
  %v435 = vunpack.c.h.b16 %v38
  %v436 = vunpack.c.l.b16 %v39
  %v437 = vunpack.c.h.b16 %v39
  %v438 = vunpack.c.l.b16 %v40
  %v439 = vunpack.c.h.b16 %v40
  %v440 = vunpack.c.l.b16 %v41
  %v441 = vunpack.c.h.b16 %v41
  %v442 = vunpack.c.l.b16 %v42
  %v443 = vunpack.c.h.b16 %v42
  %v444 = vunpack.c.l.b16 %v43
  %v445 = vunpack.c.h.b16 %v43
  %v446 = vunpack.c.l.b16 %v44
  %v447 = vunpack.c.h.b16 %v44
  %v448 = vunpack.c.l.b16 %v45
  %v449 = vunpack.c.h.b16 %v45
  %v450 = vunpack.c.l.b16 %v46
  %v451 = vunpack.c.h.b16 %v46
  %v452 = vunpack.c.l.b16 %v47
  %v453 = vunpack.c.h.b16 %v47
  %v454 = vunpack.c.l.b16 %v48
  %v455 = vunpack.c.h.b16 %v48
  %v456 = vunpack.c.l.b16 %v49
  %v457 = vunpack.c.h.b16 %v49
  %v458 = vunpack.c.l.b16 %v50
  %v459 = vunpack.c.h.b16 %v50
  %v460 = vunpack.c.l.b16 %v51
  %v461 = vunpack.c.h.b16 %v51
  %v462 = vunpack.c.l.b16 %v52
  %v463 = vunpack.c.h.b16 %v52
  %v464 = vunpack.c.l.b16 %v53
  %v465 = vunpack.c.h.b16 %v53
  %v466 = vunpack.c.l.b16 %v54
  %v467 = vunpack.c.h.b16 %v54
  %v468 = vunpack.c.l.b16 %v55
  %v469 = vunpack.c.h.b16 %v55
  %v470 = vunpack.c.l.b16 %v56
  %v471 = vunpack.c.h.b16 %v56
  %v472 = vunpack.c.l.b16 %v57
  %v473 = vunpack.c.h.b16 %v57
  %v474 = vunpack.c.l.b16 %v58
  %v475 = vunpack.c.h.b16 %v58
  %v476 = vunpack.c.l.b16 %v59
  %v477 = vunpack.c.h.b16 %v59
  %v478 = vunpack.c.l.b16 %v60
  %v479 = vunpack.c.h.b16 %v60
  %v480 = vunpack.c.l.b16 %v61
  %v481 = vunpack.c.h.b16 %v61
  %v482 = vunpack.c.l.b16 %v62
  %v483 = vunpack.c.h.b16 %v62
  %v484 = vunpack.c.l.b16 %v63
  %v485 = vunpack.c.h.b16 %v63
  %v486 = vunpack.c.l.b16 %v64
  %v487 = vunpack.c.h.b16 %v64
  %v488 = vunpack.c.l.b16 %v65
  %v489 = vunpack.c.h.b16 %v65
  %v490 = vunpack.c.l.b16 %v66
  %v491 = vunpack.c.h.b16 %v66
  %v492 = vunpack.c.l.b16 %v67
  %v493 = vunpack.c.h.b16 %v67
  %v494 = vunpack.c.l.b16 %v68
  %v495 = vunpack.c.h.b16 %v68
  %v496 = vunpack.c.l.b16 %v69
  %v497 = vunpack.c.h.b16 %v69
  %v498 = vunpack.c.l.b16 %v70
  %v499 = vunpack.c.h.b16 %v70
  %v500 = vunpack.c.l.b16 %v71
  %v501 = vunpack.c.h.b16 %v71
  %v502 = vunpack.c.l.b16 %v72
  %v503 = vunpack.c.h.b16 %v72
  %v504 = vunpack.c.l.b16 %v73
  %v505 = vunpack.c.h.b16 %v73
  %v506 = vunpack.c.l.b16 %v74
  %v507 = vunpack.c.h.b16 %v74
  %v508 = vunpack.c.l.b16 %v75
  %v509 = vunpack.c.h.b16 %v75
  %v510 = vunpack.c.l.b16 %v76
  %v511 = vunpack.c.h.b16 %v76
  %v512 = vunpack.c.l.b16 %v77
  %v513 = vunpack.c.h.b16 %v77
  %v514 = vunpack.c.l.b16 %v78
  %v515 = vunpack.c.h.b16 %v78
  %v516 = vunpack.c.l.b16 %v79
  %v517 = vunpack.c.h.b16 %v79
  %v518 = vunpack.c.l.b16 %v80
  %v519 = vunpack.c.h.b16 %v80
  %v520 = vunpack.c.l.b16 %v81
  %v521 = vunpack.c.h.b16 %v81
  %v522 = vunpack.c.l.b16 %v82
  %v523 = vunpack.c.h.b16 %v82
  %v524 = vunpack.c.l.b16 %v83
  %v525 = vunpack.c.h.b16 %v83
  %v526 = vunpack.c.l.b16 %v84
  %v527 = vunpack.c.h.b16 %v84
  %v528 = vunpack.c.l.b16 %v85
  %v529 = vunpack.c.h.b16 %v85
  %v530 = vunpack.c.l.b16 %v86
  %v531 = vunpack.c.h.b16 %v86
  %v532 = vunpack.c.l.b16 %v87
  %v533 = vunpack.c.h.b16 %v87
  %v534 = vunpack.c.l.b16 %v88
  %v535 = vunpack.c.h.b16 %v88
  %v536 = vunpack.c.l.b16 %v89
  %v537 = vunpack.c.h.b16 %v89
  %v538 = vunpack.c.l.b16 %v90
  %v539 = vunpack.c.h.b16 %v90
  %v540 = vunpack.c.l.b16 %v91
  %v541 = vunpack.c.h.b16 %v91
  %v542 = vunpack.c.l.b16 %v92
  %v543 = vunpack.c.h.b16 %v92
  %v544 = vunpack.c.l.b16 %v93
  %v545 = vunpack.c.h.b16 %v93
  %v546 = vunpack.c.l.b16 %v94
  %v547 = vunpack.c.h.b16 %v94
  %v548 = vunpack.c.l.b16 %v95
  %v549 = vunpack.c.h.b16 %v95
  %v550 = vunpack.c.l.b16 %v96
  %v551 = vunpack.c.h.b16 %v96
  %v552 = vunpack.c.l.b16 %v97
  %v553 = vunpack.c.h.b16 %v97
  %v554 = vunpack.c.l.b16 %v98
  %v555 = vunpack.c.h.b16 %v98
  %v556 = vunpack.c.l.b16 %v99
  %v557 = vunpack.c.h.b16 %v99
  %v558 = vunpack.c.l.b16 %v100
  %v559 = vunpack.c.h.b16 %v100
  %v560 = vunpack.c.l.b16 %v101
  %v561 = vunpack.c.h.b16 %v101
  %v562 = vunpack.c.l.b16 %v102
  %v563 = vunpack.c.h.b16 %v102
  %v564 = vunpack.c.l.b16 %v103
  %v565 = vunpack.c.h.b16 %v103
  %v566 = vunpack.c.l.b16 %v104
  %v567 = vunpack.c.h.b16 %v104
  %v568 = vunpack.c.l.b16 %v105
  %v569 = vunpack.c.h.b16 %v105
  %v570 = vunpack.c.l.b16 %v106
  %v571 = vunpack.c.h.b16 %v106
  %v572 = vunpack.c.l.b16 %v107
  %v573 = vunpack.c.h.b16 %v107
  %v574 = vunpack.c.l.b16 %v108
  %v575 = vunpack.c.h.b16 %v108
  %v576 = vunpack.c.l.b16 %v109
  %v577 = vunpack.c.h.b16 %v109
  %v578 = vunpack.c.l.b16 %v110
  %v579 = vunpack.c.h.b16 %v110
  %v580 = vunpack.c.l.b16 %v111
  %v581 = vunpack.c.h.b16 %v111
  %v582 = vunpack.c.l.b16 %v112
  %v583 = vunpack.c.h.b16 %v112
  %v584 = vunpack.c.l.b16 %v113
  %v585 = vunpack.c.h.b16 %v113
  %v586 = vunpack.c.l.b16 %v114
  %v587 = vunpack.c.h.b16 %v114
  %v588 = vunpack.c.l.b16 %v115
  %v589 = vunpack.c.h.b16 %v115
  %v590 = vunpack.c.l.b16 %v116
  %v591 = vunpack.c.h.b16 %v116
  %v592 = vunpack.c.l.b16 %v117
  %v593 = vunpack.c.h.b16 %v117
  %v594 = vunpack.c.l.b16 %v118
  %v595 = vunpack.c.h.b16 %v118
  %v596 = vunpack.c.l.b16 %v119
  %v597 = vunpack.c.h.b16 %v119
  %v598 = vunpack.c.l.b16 %v120
  %v599 = vunpack.c.h.b16 %v120
  %v600 = vunpack.c.l.b16 %v121
  %v601 = vunpack.c.h.b16 %v121
  %v602 = vpack.c.b16 %v416, %v410
  %v603 = vpack.c.b16 %v417, %v411
  %v604 = vpack.c.b16 %v418, %v412
  %v605 = vpack.c.b16 %v419, %v413
  %v606 = vpack.c.b16 %v420, %v414
  %v607 = vpack.c.b16 %v421, %v415
  %v608 = vpack.c.b16 %v428, %v422
  %v609 = vpack.c.b16 %v429, %v423
  %v610 = vpack.c.b16 %v430, %v424
  %v611 = vpack.c.b16 %v431, %v425
  %v612 = vpack.c.b16 %v432, %v426
  %v613 = vpack.c.b16 %v433, %v427
  %v614 = vpack.c.b16 %v440, %v434
  %v615 = vpack.c.b16 %v441, %v435
  %v616 = vpack.c.b16 %v442, %v436
  %v617 = vpack.c.b16 %v443, %v437
  %v618 = vpack.c.b16 %v444, %v438
  %v619 = vpack.c.b16 %v445, %v439
  %v620 = vpack.c.b16 %v452, %v446
  %v621 = vpack.c.b16 %v453, %v447
  %v622 = vpack.c.b16 %v454, %v448
  %v623 = vpack.c.b16 %v455, %v449
  %v624 = vpack.c.b16 %v456, %v450
  %v625 = vpack.c.b16 %v457, %v451
  %v626 = vpack.c.b16 %v464, %v458
  %v627 = vpack.c.b16 %v465, %v459
  %v628 = vpack.c.b16 %v466, %v460
  %v629 = vpack.c.b16 %v467, %v461
  %v630 = vpack.c.b16 %v468, %v462
  %v631 = vpack.c.b16 %v469, %v463
  %v632 = vpack.c.b16 %v476, %v470
  %v633 = vpack.c.b16 %v477, %v471
  %v634 = vpack.c.b16 %v478, %v472
  %v635 = vpack.c.b16 %v479, %v473
  %v636 = vpack.c.b16 %v480, %v474
  %v637 = vpack.c.b16 %v481, %v475
  %v638 = vpack.c.b16 %v488, %v482
  %v639 = vpack.c.b16 %v489, %v483
  %v640 = vpack.c.b16 %v490, %v484
  %v641 = vpack.c.b16 %v491, %v485
  %v642 = vpack.c.b16 %v492, %v486
  %v643 = vpack.c.b16 %v493, %v487
  %v644 = vpack.c.b16 %v500, %v494
  %v645 = vpack.c.b16 %v501, %v495
  %v646 = vpack.c.b16 %v502, %v496
  %v647 = vpack.c.b16 %v503, %v497
  %v648 = vpack.c.b16 %v504, %v498
  %v649 = vpack.c.b16 %v505, %v499
  %v650 = vpack.c.b16 %v512, %v506
  %v651 = vpack.c.b16 %v513, %v507
  %v652 = vpack.c.b16 %v514, %v508
  %v653 = vpack.c.b16 %v515, %v509
  %v654 = vpack.c.b16 %v516, %v510
  %v655 = vpack.c.b16 %v517, %v511
  %v656 = vpack.c.b16 %v524, %v518
  %v657 = vpack.c.b16 %v525, %v519
  %v658 = vpack.c.b16 %v526, %v520
  %v659 = vpack.c.b16 %v527, %v521
  %v660 = vpack.c.b16 %v528, %v522
  %v661 = vpack.c.b16 %v529, %v523
  %v662 = vpack.c.b16 %v536, %v530
  %v663 = vpack.c.b16 %v537, %v531
  %v664 = vpack.c.b16 %v538, %v532
  %v665 = vpack.c.b16 %v539, %v533
  %v666 = vpack.c.b16 %v540, %v534
  %v667 = vpack.c.b16 %v541, %v535
  %v668 = vpack.c.b16 %v548, %v542
  %v669 = vpack.c.b16 %v549, %v543
  %v670 = vpack.c.b16 %v550, %v544
  %v671 = vpack.c.b16 %v551, %v545
  %v672 = vpack.c.b16 %v552, %v546
  %v673 = vpack.c.b16 %v553, %v547
  %v674 = vpack.c.b16 %v560, %v554
  %v675 = vpack.c.b16 %v561, %v555
  %v676 = vpack.c.b16 %v562, %v556
  %v677 = vpack.c.b16 %v563, %v557
  %v678 = vpack.c.b16 %v564, %v558
  %v679 = vpack.c.b16 %v565, %v559
  %v680 = vpack.c.b16 %v572, %v566
  %v681 = vpack.c.b16 %v573, %v567
  %v682 = vpack.c.b16 %v574, %v568
  %v683 = vpack.c.b16 %v575, %v569
  %v684 = vpack.c.b16 %v576, %v570
  %v685 = vpack.c.b16 %v577, %v571
  %v686 = vpack.c.b16 %v584, %v578
  %v687 = vpack.c.b16 %v585, %v579
  %v688 = vpack.c.b16 %v586, %v580
  %v689 = vpack.c.b16 %v587, %v581
  %v690 = vpack.c.b16 %v588, %v582
  %v691 = vpack.c.b16 %v589, %v583
  %v692 = vpack.c.b16 %v596, %v590
  %v693 = vpack.c.b16 %v597, %v591
  %v694 = vpack.c.b16 %v598, %v592
  %v695 = vpack.c.b16 %v599, %v593
  %v696 = vpack.c.b16 %v600, %v594
  %v697 = vpack.c.b16 %v601, %v595
  %v986 = vunpack.c.l.b16 %v122
  %v987 = vunpack.c.h.b16 %v122
  %v988 = vunpack.c.l.b16 %v123
  %v989 = vunpack.c.h.b16 %v123
  %v990 = vunpack.c.l.b16 %v124
  %v991 = vunpack.c.h.b16 %v124
  %v992 = vunpack.c.l.b16 %v125
  %v993 = vunpack.c.h.b16 %v125
  %v994 = vunpack.c.l.b16 %v126
  %v995 = vunpack.c.h.b16 %v126
  %v996 = vunpack.c.l.b16 %v127
  %v997 = vunpack.c.h.b16 %v127
  %v998 = vunpack.c.l.b16 %v128
  %v999 = vunpack.c.h.b16 %v128
  %v1000 = vunpack.c.l.b16 %v129
  %v1001 = vunpack.c.h.b16 %v129
  %v1002 = vunpack.c.l.b16 %v130
  %v1003 = vunpack.c.h.b16 %v130
  %v1004 = vunpack.c.l.b16 %v131
  %v1005 = vunpack.c.h.b16 %v131
  %v1006 = vunpack.c.l.b16 %v132
  %v1007 = vunpack.c.h.b16 %v132
  %v1008 = vunpack.c.l.b16 %v133
  %v1009 = vunpack.c.h.b16 %v133
  %v1010 = vunpack.c.l.b16 %v134
  %v1011 = vunpack.c.h.b16 %v134
  %v1012 = vunpack.c.l.b16 %v135
  %v1013 = vunpack.c.h.b16 %v135
  %v1014 = vunpack.c.l.b16 %v136
  %v1015 = vunpack.c.h.b16 %v136
  %v1016 = vunpack.c.l.b16 %v137
  %v1017 = vunpack.c.h.b16 %v137
  %v1018 = vunpack.c.l.b16 %v138
  %v1019 = vunpack.c.h.b16 %v138
  %v1020 = vunpack.c.l.b16 %v139
  %v1021 = vunpack.c.h.b16 %v139
  %v1022 = vunpack.c.l.b16 %v140
  %v1023 = vunpack.c.h.b16 %v140
  %v1024 = vunpack.c.l.b16 %v141
  %v1025 = vunpack.c.h.b16 %v141
  %v1026 = vunpack.c.l.b16 %v142
  %v1027 = vunpack.c.h.b16 %v142
  %v1028 = vunpack.c.l.b16 %v143
  %v1029 = vunpack.c.h.b16 %v143
  %v1030 = vunpack.c.l.b16 %v144
  %v1031 = vunpack.c.h.b16 %v144
  %v1032 = vunpack.c.l.b16 %v145
  %v1033 = vunpack.c.h.b16 %v145
  %v1034 = vunpack.c.l.b16 %v146
  %v1035 = vunpack.c.h.b16 %v146
  %v1036 = vunpack.c.l.b16 %v147
  %v1037 = vunpack.c.h.b16 %v147
  %v1038 = vunpack.c.l.b16 %v148
  %v1039 = vunpack.c.h.b16 %v148
  %v1040 = vunpack.c.l.b16 %v149
  %v1041 = vunpack.c.h.b16 %v149
  %v1042 = vunpack.c.l.b16 %v150
  %v1043 = vunpack.c.h.b16 %v150
  %v1044 = vunpack.c.l.b16 %v151
  %v1045 = vunpack.c.h.b16 %v151
  %v1046 = vunpack.c.l.b16 %v152
  %v1047 = vunpack.c.h.b16 %v152
  %v1048 = vunpack.c.l.b16 %v153
  %v1049 = vunpack.c.h.b16 %v153
  %v1050 = vunpack.c.l.b16 %v154
  %v1051 = vunpack.c.h.b16 %v154
  %v1052 = vunpack.c.l.b16 %v155
  %v1053 = vunpack.c.h.b16 %v155
  %v1054 = vunpack.c.l.b16 %v156
  %v1055 = vunpack.c.h.b16 %v156
  %v1056 = vunpack.c.l.b16 %v157
  %v1057 = vunpack.c.h.b16 %v157
  %v1058 = vunpack.c.l.b16 %v158
  %v1059 = vunpack.c.h.b16 %v158
  %v1060 = vunpack.c.l.b16 %v159
  %v1061 = vunpack.c.h.b16 %v159
  %v1062 = vunpack.c.l.b16 %v160
  %v1063 = vunpack.c.h.b16 %v160
  %v1064 = vunpack.c.l.b16 %v161
  %v1065 = vunpack.c.h.b16 %v161
  %v1066 = vunpack.c.l.b16 %v162
  %v1067 = vunpack.c.h.b16 %v162
  %v1068 = vunpack.c.l.b16 %v163
  %v1069 = vunpack.c.h.b16 %v163
  %v1070 = vunpack.c.l.b16 %v164
  %v1071 = vunpack.c.h.b16 %v164
  %v1072 = vunpack.c.l.b16 %v165
  %v1073 = vunpack.c.h.b16 %v165
  %v1074 = vunpack.c.l.b16 %v166
  %v1075 = vunpack.c.h.b16 %v166
  %v1076 = vunpack.c.l.b16 %v167
  %v1077 = vunpack.c.h.b16 %v167
  %v1078 = vunpack.c.l.b16 %v168
  %v1079 = vunpack.c.h.b16 %v168
  %v1080 = vunpack.c.l.b16 %v169
  %v1081 = vunpack.c.h.b16 %v169
  %v1082 = vunpack.c.l.b16 %v170
  %v1083 = vunpack.c.h.b16 %v170
  %v1084 = vunpack.c.l.b16 %v171
  %v1085 = vunpack.c.h.b16 %v171
  %v1086 = vunpack.c.l.b16 %v172
  %v1087 = vunpack.c.h.b16 %v172
  %v1088 = vunpack.c.l.b16 %v173
  %v1089 = vunpack.c.h.b16 %v173
  %v1090 = vunpack.c.l.b16 %v174
  %v1091 = vunpack.c.h.b16 %v174
  %v1092 = vunpack.c.l.b16 %v175
  %v1093 = vunpack.c.h.b16 %v175
  %v1094 = vunpack.c.l.b16 %v176
  %v1095 = vunpack.c.h.b16 %v176
  %v1096 = vunpack.c.l.b16 %v177
  %v1097 = vunpack.c.h.b16 %v177
  %v1098 = vunpack.c.l.b16 %v178
  %v1099 = vunpack.c.h.b16 %v178
  %v1100 = vunpack.c.l.b16 %v179
  %v1101 = vunpack.c.h.b16 %v179
  %v1102 = vunpack.c.l.b16 %v180
  %v1103 = vunpack.c.h.b16 %v180
  %v1104 = vunpack.c.l.b16 %v181
  %v1105 = vunpack.c.h.b16 %v181
  %v1106 = vunpack.c.l.b16 %v182
  %v1107 = vunpack.c.h.b16 %v182
  %v1108 = vunpack.c.l.b16 %v183
  %v1109 = vunpack.c.h.b16 %v183
  %v1110 = vunpack.c.l.b16 %v184
  %v1111 = vunpack.c.h.b16 %v184
  %v1112 = vunpack.c.l.b16 %v185
  %v1113 = vunpack.c.h.b16 %v185
  %v1114 = vunpack.c.l.b16 %v186
  %v1115 = vunpack.c.h.b16 %v186
  %v1116 = vunpack.c.l.b16 %v187
  %v1117 = vunpack.c.h.b16 %v187
  %v1118 = vunpack.c.l.b16 %v188
  %v1119 = vunpack.c.h.b16 %v188
  %v1120 = vunpack.c.l.b16 %v189
  %v1121 = vunpack.c.h.b16 %v189
  %v1122 = vunpack.c.l.b16 %v190
  %v1123 = vunpack.c.h.b16 %v190
  %v1124 = vunpack.c.l.b16 %v191
  %v1125 = vunpack.c.h.b16 %v191
  %v1126 = vunpack.c.l.b16 %v192
  %v1127 = vunpack.c.h.b16 %v192
  %v1128 = vunpack.c.l.b16 %v193
  %v1129 = vunpack.c.h.b16 %v193
  %v1130 = vunpack.c.l.b16 %v194
  %v1131 = vunpack.c.h.b16 %v194
  %v1132 = vunpack.c.l.b16 %v195
  %v1133 = vunpack.c.h.b16 %v195
  %v1134 = vunpack.c.l.b16 %v196
  %v1135 = vunpack.c.h.b16 %v196
  %v1136 = vunpack.c.l.b16 %v197
  %v1137 = vunpack.c.h.b16 %v197
  %v1138 = vunpack.c.l.b16 %v198
  %v1139 = vunpack.c.h.b16 %v198
  %v1140 = vunpack.c.l.b16 %v199
  %v1141 = vunpack.c.h.b16 %v199
  %v1142 = vunpack.c.l.b16 %v200
  %v1143 = vunpack.c.h.b16 %v200
  %v1144 = vunpack.c.l.b16 %v201
  %v1145 = vunpack.c.h.b16 %v201
  %v1146 = vunpack.c.l.b16 %v202
  %v1147 = vunpack.c.h.b16 %v202
  %v1148 = vunpack.c.l.b16 %v203
  %v1149 = vunpack.c.h.b16 %v203
  %v1150 = vunpack.c.l.b16 %v204
  %v1151 = vunpack.c.h.b16 %v204
  %v1152 = vunpack.c.l.b16 %v205
  %v1153 = vunpack.c.h.b16 %v205
  %v1154 = vunpack.c.l.b16 %v206
  %v1155 = vunpack.c.h.b16 %v206
  %v1156 = vunpack.c.l.b16 %v207
  %v1157 = vunpack.c.h.b16 %v207
  %v1158 = vunpack.c.l.b16 %v208
  %v1159 = vunpack.c.h.b16 %v208
  %v1160 = vunpack.c.l.b16 %v209
  %v1161 = vunpack.c.h.b16 %v209
  %v1162 = vunpack.c.l.b16 %v210
  %v1163 = vunpack.c.h.b16 %v210
  %v1164 = vunpack.c.l.b16 %v211
  %v1165 = vunpack.c.h.b16 %v211
  %v1166 = vunpack.c.l.b16 %v212
  %v1167 = vunpack.c.h.b16 %v212
  %v1168 = vunpack.c.l.b16 %v213
  %v1169 = vunpack.c.h.b16 %v213
  %v1170 = vunpack.c.l.b16 %v214
  %v1171 = vunpack.c.h.b16 %v214
  %v1172 = vunpack.c.l.b16 %v215
  %v1173 = vunpack.c.h.b16 %v215
  %v1174 = vunpack.c.l.b16 %v216
  %v1175 = vunpack.c.h.b16 %v216
  %v1176 = vunpack.c.l.b16 %v217
  %v1177 = vunpack.c.h.b16 %v217
  %v1178 = vunpack.c.l.b16 %v218
  %v1179 = vunpack.c.h.b16 %v218
  %v1180 = vunpack.c.l.b16 %v219
  %v1181 = vunpack.c.h.b16 %v219
  %v1182 = vunpack.c.l.b16 %v220
  %v1183 = vunpack.c.h.b16 %v220
  %v1184 = vunpack.c.l.b16 %v221
  %v1185 = vunpack.c.h.b16 %v221
  %v1186 = vunpack.c.l.b16 %v222
  %v1187 = vunpack.c.h.b16 %v222
  %v1188 = vunpack.c.l.b16 %v223
  %v1189 = vunpack.c.h.b16 %v223
  %v1190 = vunpack.c.l.b16 %v224
  %v1191 = vunpack.c.h.b16 %v224
  %v1192 = vunpack.c.l.b16 %v225
  %v1193 = vunpack.c.h.b16 %v225
  %v1194 = vunpack.c.l.b16 %v226
  %v1195 = vunpack.c.h.b16 %v226
  %v1196 = vunpack.c.l.b16 %v227
  %v1197 = vunpack.c.h.b16 %v227
  %v1198 = vunpack.c.l.b16 %v228
  %v1199 = vunpack.c.h.b16 %v228
  %v1200 = vunpack.c.l.b16 %v229
  %v1201 = vunpack.c.h.b16 %v229
  %v1202 = vunpack.c.l.b16 %v230
  %v1203 = vunpack.c.h.b16 %v230
  %v1204 = vunpack.c.l.b16 %v231
  %v1205 = vunpack.c.h.b16 %v231
  %v1206 = vunpack.c.l.b16 %v232
  %v1207 = vunpack.c.h.b16 %v232
  %v1208 = vunpack.c.l.b16 %v233
  %v1209 = vunpack.c.h.b16 %v233
  %v1210 = vunpack.c.l.b16 %v234
  %v1211 = vunpack.c.h.b16 %v234
  %v1212 = vunpack.c.l.b16 %v235
  %v1213 = vunpack.c.h.b16 %v235
  %v1214 = vunpack.c.l.b16 %v236
  %v1215 = vunpack.c.h.b16 %v236
  %v1216 = vunpack.c.l.b16 %v237
  %v1217 = vunpack.c.h.b16 %v237
  %v1218 = vunpack.c.l.b16 %v238
  %v1219 = vunpack.c.h.b16 %v238
  %v1220 = vunpack.c.l.b16 %v239
  %v1221 = vunpack.c.h.b16 %v239
  %v1222 = vunpack.c.l.b16 %v240
  %v1223 = vunpack.c.h.b16 %v240
  %v1224 = vunpack.c.l.b16 %v241
  %v1225 = vunpack.c.h.b16 %v241
  %v1226 = vunpack.c.l.b16 %v242
  %v1227 = vunpack.c.h.b16 %v242
  %v1228 = vunpack.c.l.b16 %v243
  %v1229 = vunpack.c.h.b16 %v243
  %v1230 = vunpack.c.l.b16 %v244
  %v1231 = vunpack.c.h.b16 %v244
  %v1232 = vunpack.c.l.b16 %v245
  %v1233 = vunpack.c.h.b16 %v245
  %v1234 = vunpack.c.l.b16 %v246
  %v1235 = vunpack.c.h.b16 %v246
  %v1236 = vunpack.c.l.b16 %v247
  %v1237 = vunpack.c.h.b16 %v247
  %v1238 = vunpack.c.l.b16 %v248
  %v1239 = vunpack.c.h.b16 %v248
  %v1240 = vunpack.c.l.b16 %v249
  %v1241 = vunpack.c.h.b16 %v249
  %v1242 = vunpack.c.l.b16 %v250
  %v1243 = vunpack.c.h.b16 %v250
  %v1244 = vunpack.c.l.b16 %v251
  %v1245 = vunpack.c.h.b16 %v251
  %v1246 = vunpack.c.l.b16 %v252
  %v1247 = vunpack.c.h.b16 %v252
  %v1248 = vunpack.c.l.b16 %v253
  %v1249 = vunpack.c.h.b16 %v253
  %v1250 = vunpack.c.l.b16 %v254
  %v1251 = vunpack.c.h.b16 %v254
  %v1252 = vunpack.c.l.b16 %v255
  %v1253 = vunpack.c.h.b16 %v255
  %v1254 = vunpack.c.l.b16 %v256
  %v1255 = vunpack.c.h.b16 %v256
  %v1256 = vunpack.c.l.b16 %v257
  %v1257 = vunpack.c.h.b16 %v257
  %v1258 = vunpack.c.l.b16 %v258
  %v1259 = vunpack.c.h.b16 %v258
  %v1260 = vunpack.c.l.b16 %v259
  %v1261 = vunpack.c.h.b16 %v259
  %v1262 = vunpack.c.l.b16 %v260
  %v1263 = vunpack.c.h.b16 %v260
  %v1264 = vunpack.c.l.b16 %v261
  %v1265 = vunpack.c.h.b16 %v261
  %v1266 = vunpack.c.l.b16 %v262
  %v1267 = vunpack.c.h.b16 %v262
  %v1268 = vunpack.c.l.b16 %v263
  %v1269 = vunpack.c.h.b16 %v263
  %v1270 = vunpack.c.l.b16 %v264
  %v1271 = vunpack.c.h.b16 %v264
  %v1272 = vunpack.c.l.b16 %v265
  %v1273 = vunpack.c.h.b16 %v265
  %v1274 = vunpack.c.l.b16 %v266
  %v1275 = vunpack.c.h.b16 %v266
  %v1276 = vunpack.c.l.b16 %v267
  %v1277 = vunpack.c.h.b16 %v267
  %v1278 = vunpack.c.l.b16 %v268
  %v1279 = vunpack.c.h.b16 %v268
  %v1280 = vunpack.c.l.b16 %v269
  %v1281 = vunpack.c.h.b16 %v269
  %v1282 = vunpack.c.l.b16 %v270
  %v1283 = vunpack.c.h.b16 %v270
  %v1284 = vunpack.c.l.b16 %v271
  %v1285 = vunpack.c.h.b16 %v271
  %v1286 = vunpack.c.l.b16 %v272
  %v1287 = vunpack.c.h.b16 %v272
  %v1288 = vunpack.c.l.b16 %v273
  %v1289 = vunpack.c.h.b16 %v273
  %v1290 = vunpack.c.l.b16 %v274
  %v1291 = vunpack.c.h.b16 %v274
  %v1292 = vunpack.c.l.b16 %v275
  %v1293 = vunpack.c.h.b16 %v275
  %v1294 = vunpack.c.l.b16 %v276
  %v1295 = vunpack.c.h.b16 %v276
  %v1296 = vunpack.c.l.b16 %v277
  %v1297 = vunpack.c.h.b16 %v277
  %v1298 = vunpack.c.l.b16 %v278
  %v1299 = vunpack.c.h.b16 %v278
  %v1300 = vunpack.c.l.b16 %v279
  %v1301 = vunpack.c.h.b16 %v279
  %v1302 = vunpack.c.l.b16 %v280
  %v1303 = vunpack.c.h.b16 %v280
  %v1304 = vunpack.c.l.b16 %v281
  %v1305 = vunpack.c.h.b16 %v281
  %v1306 = vunpack.c.l.b16 %v282
  %v1307 = vunpack.c.h.b16 %v282
  %v1308 = vunpack.c.l.b16 %v283
  %v1309 = vunpack.c.h.b16 %v283
  %v1310 = vunpack.c.l.b16 %v284
  %v1311 = vunpack.c.h.b16 %v284
  %v1312 = vunpack.c.l.b16 %v285
  %v1313 = vunpack.c.h.b16 %v285
  %v1314 = vunpack.c.l.b16 %v286
  %v1315 = vunpack.c.h.b16 %v286
  %v1316 = vunpack.c.l.b16 %v287
  %v1317 = vunpack.c.h.b16 %v287
  %v1318 = vunpack.c.l.b16 %v288
  %v1319 = vunpack.c.h.b16 %v288
  %v1320 = vunpack.c.l.b16 %v289
  %v1321 = vunpack.c.h.b16 %v289
  %v1322 = vunpack.c.l.b16 %v290
  %v1323 = vunpack.c.h.b16 %v290
  %v1324 = vunpack.c.l.b16 %v291
  %v1325 = vunpack.c.h.b16 %v291
  %v1326 = vunpack.c.l.b16 %v292
  %v1327 = vunpack.c.h.b16 %v292
  %v1328 = vunpack.c.l.b16 %v293
  %v1329 = vunpack.c.h.b16 %v293
  %v1330 = vunpack.c.l.b16 %v294
  %v1331 = vunpack.c.h.b16 %v294
  %v1332 = vunpack.c.l.b16 %v295
  %v1333 = vunpack.c.h.b16 %v295
  %v1334 = vunpack.c.l.b16 %v296
  %v1335 = vunpack.c.h.b16 %v296
  %v1336 = vunpack.c.l.b16 %v297
  %v1337 = vunpack.c.h.b16 %v297
  %v1338 = vunpack.c.l.b16 %v298
  %v1339 = vunpack.c.h.b16 %v298
  %v1340 = vunpack.c.l.b16 %v299
  %v1341 = vunpack.c.h.b16 %v299
  %v1342 = vunpack.c.l.b16 %v300
  %v1343 = vunpack.c.h.b16 %v300
  %v1344 = vunpack.c.l.b16 %v301
  %v1345 = vunpack.c.h.b16 %v301
  %v1346 = vunpack.c.l.b16 %v302
  %v1347 = vunpack.c.h.b16 %v302
  %v1348 = vunpack.c.l.b16 %v303
  %v1349 = vunpack.c.h.b16 %v303
  %v1350 = vunpack.c.l.b16 %v304
  %v1351 = vunpack.c.h.b16 %v304
  %v1352 = vunpack.c.l.b16 %v305
  %v1353 = vunpack.c.h.b16 %v305
  %v1354 = vunpack.c.l.b16 %v306
  %v1355 = vunpack.c.h.b16 %v306
  %v1356 = vunpack.c.l.b16 %v307
  %v1357 = vunpack.c.h.b16 %v307
  %v1358 = vunpack.c.l.b16 %v308
  %v1359 = vunpack.c.h.b16 %v308
  %v1360 = vunpack.c.l.b16 %v309
  %v1361 = vunpack.c.h.b16 %v309
  %v1362 = vunpack.c.l.b16 %v310
  %v1363 = vunpack.c.h.b16 %v310
  %v1364 = vunpack.c.l.b16 %v311
  %v1365 = vunpack.c.h.b16 %v311
  %v1366 = vunpack.c.l.b16 %v312
  %v1367 = vunpack.c.h.b16 %v312
  %v1368 = vunpack.c.l.b16 %v313
  %v1369 = vunpack.c.h.b16 %v313
  %v1370 = vpack.c.b16 %v990, %v986
  %v1371 = vpack.c.b16 %v991, %v987
  %v1372 = vpack.c.b16 %v992, %v988
  %v1373 = vpack.c.b16 %v993, %v989
  %v1374 = vpack.c.b16 %v998, %v994
  %v1375 = vpack.c.b16 %v999, %v995
  %v1376 = vpack.c.b16 %v1000, %v996
  %v1377 = vpack.c.b16 %v1001, %v997
  %v1378 = vpack.c.b16 %v1006, %v1002
  %v1379 = vpack.c.b16 %v1007, %v1003
  %v1380 = vpack.c.b16 %v1008, %v1004
  %v1381 = vpack.c.b16 %v1009, %v1005
  %v1382 = vpack.c.b16 %v1014, %v1010
  %v1383 = vpack.c.b16 %v1015, %v1011
  %v1384 = vpack.c.b16 %v1016, %v1012
  %v1385 = vpack.c.b16 %v1017, %v1013
  %v1386 = vpack.c.b16 %v1022, %v1018
  %v1387 = vpack.c.b16 %v1023, %v1019
  %v1388 = vpack.c.b16 %v1024, %v1020
  %v1389 = vpack.c.b16 %v1025, %v1021
  %v1390 = vpack.c.b16 %v1030, %v1026
  %v1391 = vpack.c.b16 %v1031, %v1027
  %v1392 = vpack.c.b16 %v1032, %v1028
  %v1393 = vpack.c.b16 %v1033, %v1029
  %v1394 = vpack.c.b16 %v1038, %v1034
  %v1395 = vpack.c.b16 %v1039, %v1035
  %v1396 = vpack.c.b16 %v1040, %v1036
  %v1397 = vpack.c.b16 %v1041, %v1037
  %v1398 = vpack.c.b16 %v1046, %v1042
  %v1399 = vpack.c.b16 %v1047, %v1043
  %v1400 = vpack.c.b16 %v1048, %v1044
  %v1401 = vpack.c.b16 %v1049, %v1045
  %v1402 = vpack.c.b16 %v1054, %v1050
  %v1403 = vpack.c.b16 %v1055, %v1051
  %v1404 = vpack.c.b16 %v1056, %v1052
  %v1405 = vpack.c.b16 %v1057, %v1053
  %v1406 = vpack.c.b16 %v1062, %v1058
  %v1407 = vpack.c.b16 %v1063, %v1059
  %v1408 = vpack.c.b16 %v1064, %v1060
  %v1409 = vpack.c.b16 %v1065, %v1061
  %v1410 = vpack.c.b16 %v1070, %v1066
  %v1411 = vpack.c.b16 %v1071, %v1067
  %v1412 = vpack.c.b16 %v1072, %v1068
  %v1413 = vpack.c.b16 %v1073, %v1069
  %v1414 = vpack.c.b16 %v1078, %v1074
  %v1415 = vpack.c.b16 %v1079, %v1075
  %v1416 = vpack.c.b16 %v1080, %v1076
  %v1417 = vpack.c.b16 %v1081, %v1077
  %v1418 = vpack.c.b16 %v1086, %v1082
  %v1419 = vpack.c.b16 %v1087, %v1083
  %v1420 = vpack.c.b16 %v1088, %v1084
  %v1421 = vpack.c.b16 %v1089, %v1085
  %v1422 = vpack.c.b16 %v1094, %v1090
  %v1423 = vpack.c.b16 %v1095, %v1091
  %v1424 = vpack.c.b16 %v1096, %v1092
  %v1425 = vpack.c.b16 %v1097, %v1093
  %v1426 = vpack.c.b16 %v1102, %v1098
  %v1427 = vpack.c.b16 %v1103, %v1099
  %v1428 = vpack.c.b16 %v1104, %v1100
  %v1429 = vpack.c.b16 %v1105, %v1101
  %v1430 = vpack.c.b16 %v1110, %v1106
  %v1431 = vpack.c.b16 %v1111, %v1107
  %v1432 = vpack.c.b16 %v1112, %v1108
  %v1433 = vpack.c.b16 %v1113, %v1109
  %v1434 = vpack.c.b16 %v1118, %v1114
  %v1435 = vpack.c.b16 %v1119, %v1115
  %v1436 = vpack.c.b16 %v1120, %v1116
  %v1437 = vpack.c.b16 %v1121, %v1117
  %v1438 = vpack.c.b16 %v1126, %v1122
  %v1439 = vpack.c.b16 %v1127, %v1123
  %v1440 = vpack.c.b16 %v1128, %v1124
  %v1441 = vpack.c.b16 %v1129, %v1125
  %v1442 = vpack.c.b16 %v1134, %v1130
  %v1443 = vpack.c.b16 %v1135, %v1131
  %v1444 = vpack.c.b16 %v1136, %v1132
  %v1445 = vpack.c.b16 %v1137, %v1133
  %v1446 = vpack.c.b16 %v1142, %v1138
  %v1447 = vpack.c.b16 %v1143, %v1139
  %v1448 = vpack.c.b16 %v1144, %v1140
  %v1449 = vpack.c.b16 %v1145, %v1141
  %v1450 = vpack.c.b16 %v1150, %v1146
  %v1451 = vpack.c.b16 %v1151, %v1147
  %v1452 = vpack.c.b16 %v1152, %v1148
  %v1453 = vpack.c.b16 %v1153, %v1149
  %v1454 = vpack.c.b16 %v1158, %v1154
  %v1455 = vpack.c.b16 %v1159, %v1155
  %v1456 = vpack.c.b16 %v1160, %v1156
  %v1457 = vpack.c.b16 %v1161, %v1157
  %v1458 = vpack.c.b16 %v1166, %v1162
  %v1459 = vpack.c.b16 %v1167, %v1163
  %v1460 = vpack.c.b16 %v1168, %v1164
  %v1461 = vpack.c.b16 %v1169, %v1165
  %v1462 = vpack.c.b16 %v1174, %v1170
  %v1463 = vpack.c.b16 %v1175, %v1171
  %v1464 = vpack.c.b16 %v1176, %v1172
  %v1465 = vpack.c.b16 %v1177, %v1173
  %v1466 = vpack.c.b16 %v1182, %v1178
  %v1467 = vpack.c.b16 %v1183, %v1179
  %v1468 = vpack.c.b16 %v1184, %v1180
  %v1469 = vpack.c.b16 %v1185, %v1181
  %v1470 = vpack.c.b16 %v1190, %v1186
  %v1471 = vpack.c.b16 %v1191, %v1187
  %v1472 = vpack.c.b16 %v1192, %v1188
  %v1473 = vpack.c.b16 %v1193, %v1189
  %v1474 = vpack.c.b16 %v1198, %v1194
  %v1475 = vpack.c.b16 %v1199, %v1195
  %v1476 = vpack.c.b16 %v1200, %v1196
  %v1477 = vpack.c.b16 %v1201, %v1197
  %v1478 = vpack.c.b16 %v1206, %v1202
  %v1479 = vpack.c.b16 %v1207, %v1203
  %v1480 = vpack.c.b16 %v1208, %v1204
  %v1481 = vpack.c.b16 %v1209, %v1205
  %v1482 = vpack.c.b16 %v1214, %v1210
  %v1483 = vpack.c.b16 %v1215, %v1211
  %v1484 = vpack.c.b16 %v1216, %v1212
  %v1485 = vpack.c.b16 %v1217, %v1213
  %v1486 = vpack.c.b16 %v1222, %v1218
  %v1487 = vpack.c.b16 %v1223, %v1219
  %v1488 = vpack.c.b16 %v1224, %v1220
  %v1489 = vpack.c.b16 %v1225, %v1221
  %v1490 = vpack.c.b16 %v1230, %v1226
  %v1491 = vpack.c.b16 %v1231, %v1227
  %v1492 = vpack.c.b16 %v1232, %v1228
  %v1493 = vpack.c.b16 %v1233, %v1229
  %v1494 = vpack.c.b16 %v1238, %v1234
  %v1495 = vpack.c.b16 %v1239, %v1235
  %v1496 = vpack.c.b16 %v1240, %v1236
  %v1497 = vpack.c.b16 %v1241, %v1237
  %v1498 = vpack.c.b16 %v1246, %v1242
  %v1499 = vpack.c.b16 %v1247, %v1243
  %v1500 = vpack.c.b16 %v1248, %v1244
  %v1501 = vpack.c.b16 %v1249, %v1245
  %v1502 = vpack.c.b16 %v1254, %v1250
  %v1503 = vpack.c.b16 %v1255, %v1251
  %v1504 = vpack.c.b16 %v1256, %v1252
  %v1505 = vpack.c.b16 %v1257, %v1253
  %v1506 = vpack.c.b16 %v1262, %v1258
  %v1507 = vpack.c.b16 %v1263, %v1259
  %v1508 = vpack.c.b16 %v1264, %v1260
  %v1509 = vpack.c.b16 %v1265, %v1261
  %v1510 = vpack.c.b16 %v1270, %v1266
  %v1511 = vpack.c.b16 %v1271, %v1267
  %v1512 = vpack.c.b16 %v1272, %v1268
  %v1513 = vpack.c.b16 %v1273, %v1269
  %v1514 = vpack.c.b16 %v1278, %v1274
  %v1515 = vpack.c.b16 %v1279, %v1275
  %v1516 = vpack.c.b16 %v1280, %v1276
  %v1517 = vpack.c.b16 %v1281, %v1277
  %v1518 = vpack.c.b16 %v1286, %v1282
  %v1519 = vpack.c.b16 %v1287, %v1283
  %v1520 = vpack.c.b16 %v1288, %v1284
  %v1521 = vpack.c.b16 %v1289, %v1285
  %v1522 = vpack.c.b16 %v1294, %v1290
  %v1523 = vpack.c.b16 %v1295, %v1291
  %v1524 = vpack.c.b16 %v1296, %v1292
  %v1525 = vpack.c.b16 %v1297, %v1293
  %v1526 = vpack.c.b16 %v1302, %v1298
  %v1527 = vpack.c.b16 %v1303, %v1299
  %v1528 = vpack.c.b16 %v1304, %v1300
  %v1529 = vpack.c.b16 %v1305, %v1301
  %v1530 = vpack.c.b16 %v1310, %v1306
  %v1531 = vpack.c.b16 %v1311, %v1307
  %v1532 = vpack.c.b16 %v1312, %v1308
  %v1533 = vpack.c.b16 %v1313, %v1309
  %v1534 = vpack.c.b16 %v1318, %v1314
  %v1535 = vpack.c.b16 %v1319, %v1315
  %v1536 = vpack.c.b16 %v1320, %v1316
  %v1537 = vpack.c.b16 %v1321, %v1317
  %v1538 = vpack.c.b16 %v1326, %v1322
  %v1539 = vpack.c.b16 %v1327, %v1323
  %v1540 = vpack.c.b16 %v1328, %v1324
  %v1541 = vpack.c.b16 %v1329, %v1325
  %v1542 = vpack.c.b16 %v1334, %v1330
  %v1543 = vpack.c.b16 %v1335, %v1331
  %v1544 = vpack.c.b16 %v1336, %v1332
  %v1545 = vpack.c.b16 %v1337, %v1333
  %v1546 = vpack.c.b16 %v1342, %v1338
  %v1547 = vpack.c.b16 %v1343, %v1339
  %v1548 = vpack.c.b16 %v1344, %v1340
  %v1549 = vpack.c.b16 %v1345, %v1341
  %v1550 = vpack.c.b16 %v1350, %v1346
  %v1551 = vpack.c.b16 %v1351, %v1347
  %v1552 = vpack.c.b16 %v1352, %v1348
  %v1553 = vpack.c.b16 %v1353, %v1349
  %v1554 = vpack.c.b16 %v1358, %v1354
  %v1555 = vpack.c.b16 %v1359, %v1355
  %v1556 = vpack.c.b16 %v1360, %v1356
  %v1557 = vpack.c.b16 %v1361, %v1357
  %v1558 = vpack.c.b16 %v1366, %v1362
  %v1559 = vpack.c.b16 %v1367, %v1363
  %v1560 = vpack.c.b16 %v1368, %v1364
  %v1561 = vpack.c.b16 %v1369, %v1365
  %1754 = vmatprep.subr.bf16.mxu0 %v1371
  %1755 = vmatpush1.bf16.msra.mxu0 %v1370
  %1756 = vmatprep.subr.bf16.mxu0 %v1375
  %1757 = vmatpush1.bf16.msra.mxu0 %v1374
  %1758 = vmatprep.subr.bf16.mxu0 %v1379
  %1759 = vmatpush1.bf16.msra.mxu0 %v1378
  %1760 = vmatprep.subr.bf16.mxu0 %v1383
  %1761 = vmatpush1.bf16.msra.mxu0 %v1382
  %1762 = vmatprep.subr.bf16.mxu0 %v1387
  %1763 = vmatpush1.bf16.msra.mxu0 %v1386
  %1764 = vmatprep.subr.bf16.mxu0 %v1391
  %1765 = vmatpush1.bf16.msra.mxu0 %v1390
  %1766 = vmatprep.subr.bf16.mxu0 %v1395
  %1767 = vmatpush1.bf16.msra.mxu0 %v1394
  %1768 = vmatprep.subr.bf16.mxu0 %v1399
  %1769 = vmatpush1.bf16.msra.mxu0 %v1398
  %1770 = vmatprep.subr.bf16.mxu0 %v1403
  %1771 = vmatpush1.bf16.msra.mxu0 %v1402
  %1772 = vmatprep.subr.bf16.mxu0 %v1407
  %1773 = vmatpush1.bf16.msra.mxu0 %v1406
  %1774 = vmatprep.subr.bf16.mxu0 %v1411
  %1775 = vmatpush1.bf16.msra.mxu0 %v1410
  %1776 = vmatprep.subr.bf16.mxu0 %v1415
  %1777 = vmatpush1.bf16.msra.mxu0 %v1414
  %1778 = vmatprep.subr.bf16.mxu0 %v1419
  %1779 = vmatpush1.bf16.msra.mxu0 %v1418
  %1780 = vmatprep.subr.bf16.mxu0 %v1423
  %1781 = vmatpush1.bf16.msra.mxu0 %v1422
  %1782 = vmatprep.subr.bf16.mxu0 %v1427
  %1783 = vmatpush1.bf16.msra.mxu0 %v1426
  %1784 = vmatprep.subr.bf16.mxu0 %v1431
  %1785 = vmatpush1.bf16.msra.mxu0 %v1430
  %1786 = vmatprep.mubr.bf16.mxu0 %v603
  %1787 = vmatmul.mubr.bf16.gmra.mrb[0].mxu0 %v602
  %v1788 = vpop.f32.mrb[0].mxu0
  %v1789 = vadd.f32 0.0, %v1788
  %v1790 = vpop.f32.mrb[0].mxu0
  %v1791 = vadd.f32 0.0, %v1790
  %v1792 = vpop.f32.mrb[0].mxu0
  %v1793 = vadd.f32 0.0, %v1792
  %v1794 = vpop.f32.mrb[0].mxu0
  %v1795 = vadd.f32 0.0, %v1794
  %1796 = vmatprep.mubr.bf16.mxu0 %v609
  %1797 = vmatmul.mubr.bf16.gmra.mrb[0].mxu0 %v608
  %v1798 = vpop.f32.mrb[0].mxu0
  %v1799 = vadd.f32 0.0, %v1798
  %v1800 = vpop.f32.mrb[0].mxu0
  %v1801 = vadd.f32 0.0, %v1800
  %v1802 = vpop.f32.mrb[0].mxu0
  %v1803 = vadd.f32 0.0, %v1802
  %v1804 = vpop.f32.mrb[0].mxu0
  %v1805 = vadd.f32 0.0, %v1804
  %1806 = vmatprep.mubr.bf16.mxu0 %v615
  %1807 = vmatmul.mubr.bf16.gmra.mrb[0].mxu0 %v614
  %v1808 = vpop.f32.mrb[0].mxu0
  %v1809 = vadd.f32 0.0, %v1808
  %v1810 = vpop.f32.mrb[0].mxu0
  %v1811 = vadd.f32 0.0, %v1810
  %v1812 = vpop.f32.mrb[0].mxu0
  %v1813 = vadd.f32 0.0, %v1812
  %v1814 = vpop.f32.mrb[0].mxu0
  %v1815 = vadd.f32 0.0, %v1814
  %1816 = vmatprep.mubr.bf16.mxu0 %v621
  %1817 = vmatmul.mubr.bf16.gmra.mrb[0].mxu0 %v620
  %v1818 = vpop.f32.mrb[0].mxu0
  %v1819 = vadd.f32 0.0, %v1818
  %v1820 = vpop.f32.mrb[0].mxu0
  %v1821 = vadd.f32 0.0, %v1820
  %v1822 = vpop.f32.mrb[0].mxu0
  %v1823 = vadd.f32 0.0, %v1822
  %v1824 = vpop.f32.mrb[0].mxu0
  %v1825 = vadd.f32 0.0, %v1824
  %1826 = vmatprep.mubr.bf16.mxu0 %v627
  %1827 = vmatmul.mubr.bf16.gmra.mrb[0].mxu0 %v626
  %v1828 = vpop.f32.mrb[0].mxu0
  %v1829 = vadd.f32 0.0, %v1828
  %v1830 = vpop.f32.mrb[0].mxu0
  %v1831 = vadd.f32 0.0, %v1830
  %v1832 = vpop.f32.mrb[0].mxu0
  %v1833 = vadd.f32 0.0, %v1832
  %v1834 = vpop.f32.mrb[0].mxu0
  %v1835 = vadd.f32 0.0, %v1834
  %1836 = vmatprep.mubr.bf16.mxu0 %v633
  %1837 = vmatmul.mubr.bf16.gmra.mrb[0].mxu0 %v632
  %v1838 = vpop.f32.mrb[0].mxu0
  %v1839 = vadd.f32 0.0, %v1838
  %v1840 = vpop.f32.mrb[0].mxu0
  %v1841 = vadd.f32 0.0, %v1840
  %v1842 = vpop.f32.mrb[0].mxu0
  %v1843 = vadd.f32 0.0, %v1842
  %v1844 = vpop.f32.mrb[0].mxu0
  %v1845 = vadd.f32 0.0, %v1844
  %1846 = vmatprep.mubr.bf16.mxu0 %v639
  %1847 = vmatmul.mubr.bf16.gmra.mrb[0].mxu0 %v638
  %v1848 = vpop.f32.mrb[0].mxu0
  %v1849 = vadd.f32 0.0, %v1848
  %v1850 = vpop.f32.mrb[0].mxu0
  %v1851 = vadd.f32 0.0, %v1850
  %v1852 = vpop.f32.mrb[0].mxu0
  %v1853 = vadd.f32 0.0, %v1852
  %v1854 = vpop.f32.mrb[0].mxu0
  %v1855 = vadd.f32 0.0, %v1854
  %1856 = vmatprep.mubr.bf16.mxu0 %v645
  %1857 = vmatmul.mubr.bf16.gmra.mrb[0].mxu0 %v644
  %v1858 = vpop.f32.mrb[0].mxu0
  %v1859 = vadd.f32 0.0, %v1858
  %v1860 = vpop.f32.mrb[0].mxu0
  %v1861 = vadd.f32 0.0, %v1860
  %v1862 = vpop.f32.mrb[0].mxu0
  %v1863 = vadd.f32 0.0, %v1862
  %v1864 = vpop.f32.mrb[0].mxu0
  %v1865 = vadd.f32 0.0, %v1864
  %1866 = vmatprep.mubr.bf16.mxu0 %v651
  %1867 = vmatmul.mubr.bf16.gmra.mrb[0].mxu0 %v650
  %v1868 = vpop.f32.mrb[0].mxu0
  %v1869 = vadd.f32 0.0, %v1868
  %v1870 = vpop.f32.mrb[0].mxu0
  %v1871 = vadd.f32 0.0, %v1870
  %v1872 = vpop.f32.mrb[0].mxu0
  %v1873 = vadd.f32 0.0, %v1872
  %v1874 = vpop.f32.mrb[0].mxu0
  %v1875 = vadd.f32 0.0, %v1874
  %1876 = vmatprep.mubr.bf16.mxu0 %v657
  %1877 = vmatmul.mubr.bf16.gmra.mrb[0].mxu0 %v656
  %v1878 = vpop.f32.mrb[0].mxu0
  %v1879 = vadd.f32 0.0, %v1878
  %v1880 = vpop.f32.mrb[0].mxu0
  %v1881 = vadd.f32 0.0, %v1880
  %v1882 = vpop.f32.mrb[0].mxu0
  %v1883 = vadd.f32 0.0, %v1882
  %v1884 = vpop.f32.mrb[0].mxu0
  %v1885 = vadd.f32 0.0, %v1884
  %1886 = vmatprep.mubr.bf16.mxu0 %v663
  %1887 = vmatmul.mubr.bf16.gmra.mrb[0].mxu0 %v662
  %v1888 = vpop.f32.mrb[0].mxu0
  %v1889 = vadd.f32 0.0, %v1888
  %v1890 = vpop.f32.mrb[0].mxu0
  %v1891 = vadd.f32 0.0, %v1890
  %v1892 = vpop.f32.mrb[0].mxu0
  %v1893 = vadd.f32 0.0, %v1892
  %v1894 = vpop.f32.mrb[0].mxu0
  %v1895 = vadd.f32 0.0, %v1894
  %1896 = vmatprep.mubr.bf16.mxu0 %v669
  %1897 = vmatmul.mubr.bf16.gmra.mrb[0].mxu0 %v668
  %v1898 = vpop.f32.mrb[0].mxu0
  %v1899 = vadd.f32 0.0, %v1898
  %v1900 = vpop.f32.mrb[0].mxu0
  %v1901 = vadd.f32 0.0, %v1900
  %v1902 = vpop.f32.mrb[0].mxu0
  %v1903 = vadd.f32 0.0, %v1902
  %v1904 = vpop.f32.mrb[0].mxu0
  %v1905 = vadd.f32 0.0, %v1904
  %1906 = vmatprep.mubr.bf16.mxu0 %v675
  %1907 = vmatmul.mubr.bf16.gmra.mrb[0].mxu0 %v674
  %v1908 = vpop.f32.mrb[0].mxu0
  %v1909 = vadd.f32 0.0, %v1908
  %v1910 = vpop.f32.mrb[0].mxu0
  %v1911 = vadd.f32 0.0, %v1910
  %v1912 = vpop.f32.mrb[0].mxu0
  %v1913 = vadd.f32 0.0, %v1912
  %v1914 = vpop.f32.mrb[0].mxu0
  %v1915 = vadd.f32 0.0, %v1914
  %1916 = vmatprep.mubr.bf16.mxu0 %v681
  %1917 = vmatmul.mubr.bf16.gmra.mrb[0].mxu0 %v680
  %v1918 = vpop.f32.mrb[0].mxu0
  %v1919 = vadd.f32 0.0, %v1918
  %v1920 = vpop.f32.mrb[0].mxu0
  %v1921 = vadd.f32 0.0, %v1920
  %v1922 = vpop.f32.mrb[0].mxu0
  %v1923 = vadd.f32 0.0, %v1922
  %v1924 = vpop.f32.mrb[0].mxu0
  %v1925 = vadd.f32 0.0, %v1924
  %1926 = vmatprep.mubr.bf16.mxu0 %v687
  %1927 = vmatmul.mubr.bf16.gmra.mrb[0].mxu0 %v686
  %v1928 = vpop.f32.mrb[0].mxu0
  %v1929 = vadd.f32 0.0, %v1928
  %v1930 = vpop.f32.mrb[0].mxu0
  %v1931 = vadd.f32 0.0, %v1930
  %v1932 = vpop.f32.mrb[0].mxu0
  %v1933 = vadd.f32 0.0, %v1932
  %v1934 = vpop.f32.mrb[0].mxu0
  %v1935 = vadd.f32 0.0, %v1934
  %1936 = vmatprep.mubr.bf16.mxu0 %v693
  %1937 = vmatmul.mubr.bf16.gmra.mrb[0].mxu0 %v692
  %v1938 = vpop.f32.mrb[0].mxu0
  %v1939 = vadd.f32 0.0, %v1938
  %v1940 = vpop.f32.mrb[0].mxu0
  %v1941 = vadd.f32 0.0, %v1940
  %v1942 = vpop.f32.mrb[0].mxu0
  %v1943 = vadd.f32 0.0, %v1942
  %v1944 = vpop.f32.mrb[0].mxu0
  %v1945 = vadd.f32 0.0, %v1944
  %1946 = vdwg.mxu0
  %1947 = vmatprep.subr.bf16.mxu0 %v1435
  %1948 = vmatpush1.bf16.msra.mxu0 %v1434
  %1949 = vmatprep.subr.bf16.mxu0 %v1439
  %1950 = vmatpush1.bf16.msra.mxu0 %v1438
  %1951 = vmatprep.subr.bf16.mxu0 %v1443
  %1952 = vmatpush1.bf16.msra.mxu0 %v1442
  %1953 = vmatprep.subr.bf16.mxu0 %v1447
  %1954 = vmatpush1.bf16.msra.mxu0 %v1446
  %1955 = vmatprep.subr.bf16.mxu0 %v1451
  %1956 = vmatpush1.bf16.msra.mxu0 %v1450
  %1957 = vmatprep.subr.bf16.mxu0 %v1455
  %1958 = vmatpush1.bf16.msra.mxu0 %v1454
  %1959 = vmatprep.subr.bf16.mxu0 %v1459
  %1960 = vmatpush1.bf16.msra.mxu0 %v1458
  %1961 = vmatprep.subr.bf16.mxu0 %v1463
  %1962 = vmatpush1.bf16.msra.mxu0 %v1462
  %1963 = vmatprep.subr.bf16.mxu0 %v1467
  %1964 = vmatpush1.bf16.msra.mxu0 %v1466
  %1965 = vmatprep.subr.bf16.mxu0 %v1471
  %1966 = vmatpush1.bf16.msra.mxu0 %v1470
  %1967 = vmatprep.subr.bf16.mxu0 %v1475
  %1968 = vmatpush1.bf16.msra.mxu0 %v1474
  %1969 = vmatprep.subr.bf16.mxu0 %v1479
  %1970 = vmatpush1.bf16.msra.mxu0 %v1478
  %1971 = vmatprep.subr.bf16.mxu0 %v1483
  %1972 = vmatpush1.bf16.msra.mxu0 %v1482
  %1973 = vmatprep.subr.bf16.mxu0 %v1487
  %1974 = vmatpush1.bf16.msra.mxu0 %v1486
  %1975 = vmatprep.subr.bf16.mxu0 %v1491
  %1976 = vmatpush1.bf16.msra.mxu0 %v1490
  %1977 = vmatprep.subr.bf16.mxu0 %v1495
  %1978 = vmatpush1.bf16.msra.mxu0 %v1494
  %1979 = vmatprep.mubr.bf16.mxu0 %v605
  %1980 = vmatmul.mubr.bf16.gmra.mrb[0].mxu0 %v604
  %v1981 = vpop.f32.mrb[0].mxu0
  %v1982 = vadd.f32 %v1789, %v1981
  %v1983 = vpop.f32.mrb[0].mxu0
  %v1984 = vadd.f32 %v1791, %v1983
  %v1985 = vpop.f32.mrb[0].mxu0
  %v1986 = vadd.f32 %v1793, %v1985
  %v1987 = vpop.f32.mrb[0].mxu0
  %v1988 = vadd.f32 %v1795, %v1987
  %1989 = vmatprep.mubr.bf16.mxu0 %v611
  %1990 = vmatmul.mubr.bf16.gmra.mrb[0].mxu0 %v610
  %v1991 = vpop.f32.mrb[0].mxu0
  %v1992 = vadd.f32 %v1799, %v1991
  %v1993 = vpop.f32.mrb[0].mxu0
  %v1994 = vadd.f32 %v1801, %v1993
  %v1995 = vpop.f32.mrb[0].mxu0
  %v1996 = vadd.f32 %v1803, %v1995
  %v1997 = vpop.f32.mrb[0].mxu0
  %v1998 = vadd.f32 %v1805, %v1997
  %1999 = vmatprep.mubr.bf16.mxu0 %v617
  %2000 = vmatmul.mubr.bf16.gmra.mrb[0].mxu0 %v616
  %v2001 = vpop.f32.mrb[0].mxu0
  %v2002 = vadd.f32 %v1809, %v2001
  %v2003 = vpop.f32.mrb[0].mxu0
  %v2004 = vadd.f32 %v1811, %v2003
  %v2005 = vpop.f32.mrb[0].mxu0
  %v2006 = vadd.f32 %v1813, %v2005
  %v2007 = vpop.f32.mrb[0].mxu0
  %v2008 = vadd.f32 %v1815, %v2007
  %2009 = vmatprep.mubr.bf16.mxu0 %v623
  %2010 = vmatmul.mubr.bf16.gmra.mrb[0].mxu0 %v622
  %v2011 = vpop.f32.mrb[0].mxu0
  %v2012 = vadd.f32 %v1819, %v2011
  %v2013 = vpop.f32.mrb[0].mxu0
  %v2014 = vadd.f32 %v1821, %v2013
  %v2015 = vpop.f32.mrb[0].mxu0
  %v2016 = vadd.f32 %v1823, %v2015
  %v2017 = vpop.f32.mrb[0].mxu0
  %v2018 = vadd.f32 %v1825, %v2017
  %2019 = vmatprep.mubr.bf16.mxu0 %v629
  %2020 = vmatmul.mubr.bf16.gmra.mrb[0].mxu0 %v628
  %v2021 = vpop.f32.mrb[0].mxu0
  %v2022 = vadd.f32 %v1829, %v2021
  %v2023 = vpop.f32.mrb[0].mxu0
  %v2024 = vadd.f32 %v1831, %v2023
  %v2025 = vpop.f32.mrb[0].mxu0
  %v2026 = vadd.f32 %v1833, %v2025
  %v2027 = vpop.f32.mrb[0].mxu0
  %v2028 = vadd.f32 %v1835, %v2027
  %2029 = vmatprep.mubr.bf16.mxu0 %v635
  %2030 = vmatmul.mubr.bf16.gmra.mrb[0].mxu0 %v634
  %v2031 = vpop.f32.mrb[0].mxu0
  %v2032 = vadd.f32 %v1839, %v2031
  %v2033 = vpop.f32.mrb[0].mxu0
  %v2034 = vadd.f32 %v1841, %v2033
  %v2035 = vpop.f32.mrb[0].mxu0
  %v2036 = vadd.f32 %v1843, %v2035
  %v2037 = vpop.f32.mrb[0].mxu0
  %v2038 = vadd.f32 %v1845, %v2037
  %2039 = vmatprep.mubr.bf16.mxu0 %v641
  %2040 = vmatmul.mubr.bf16.gmra.mrb[0].mxu0 %v640
  %v2041 = vpop.f32.mrb[0].mxu0
  %v2042 = vadd.f32 %v1849, %v2041
  %v2043 = vpop.f32.mrb[0].mxu0
  %v2044 = vadd.f32 %v1851, %v2043
  %v2045 = vpop.f32.mrb[0].mxu0
  %v2046 = vadd.f32 %v1853, %v2045
  %v2047 = vpop.f32.mrb[0].mxu0
  %v2048 = vadd.f32 %v1855, %v2047
  %2049 = vmatprep.mubr.bf16.mxu0 %v647
  %2050 = vmatmul.mubr.bf16.gmra.mrb[0].mxu0 %v646
  %v2051 = vpop.f32.mrb[0].mxu0
  %v2052 = vadd.f32 %v1859, %v2051
  %v2053 = vpop.f32.mrb[0].mxu0
  %v2054 = vadd.f32 %v1861, %v2053
  %v2055 = vpop.f32.mrb[0].mxu0
  %v2056 = vadd.f32 %v1863, %v2055
  %v2057 = vpop.f32.mrb[0].mxu0
  %v2058 = vadd.f32 %v1865, %v2057
  %2059 = vmatprep.mubr.bf16.mxu0 %v653
  %2060 = vmatmul.mubr.bf16.gmra.mrb[0].mxu0 %v652
  %v2061 = vpop.f32.mrb[0].mxu0
  %v2062 = vadd.f32 %v1869, %v2061
  %v2063 = vpop.f32.mrb[0].mxu0
  %v2064 = vadd.f32 %v1871, %v2063
  %v2065 = vpop.f32.mrb[0].mxu0
  %v2066 = vadd.f32 %v1873, %v2065
  %v2067 = vpop.f32.mrb[0].mxu0
  %v2068 = vadd.f32 %v1875, %v2067
  %2069 = vmatprep.mubr.bf16.mxu0 %v659
  %2070 = vmatmul.mubr.bf16.gmra.mrb[0].mxu0 %v658
  %v2071 = vpop.f32.mrb[0].mxu0
  %v2072 = vadd.f32 %v1879, %v2071
  %v2073 = vpop.f32.mrb[0].mxu0
  %v2074 = vadd.f32 %v1881, %v2073
  %v2075 = vpop.f32.mrb[0].mxu0
  %v2076 = vadd.f32 %v1883, %v2075
  %v2077 = vpop.f32.mrb[0].mxu0
  %v2078 = vadd.f32 %v1885, %v2077
  %2079 = vmatprep.mubr.bf16.mxu0 %v665
  %2080 = vmatmul.mubr.bf16.gmra.mrb[0].mxu0 %v664
  %v2081 = vpop.f32.mrb[0].mxu0
  %v2082 = vadd.f32 %v1889, %v2081
  %v2083 = vpop.f32.mrb[0].mxu0
  %v2084 = vadd.f32 %v1891, %v2083
  %v2085 = vpop.f32.mrb[0].mxu0
  %v2086 = vadd.f32 %v1893, %v2085
  %v2087 = vpop.f32.mrb[0].mxu0
  %v2088 = vadd.f32 %v1895, %v2087
  %2089 = vmatprep.mubr.bf16.mxu0 %v671
  %2090 = vmatmul.mubr.bf16.gmra.mrb[0].mxu0 %v670
  %v2091 = vpop.f32.mrb[0].mxu0
  %v2092 = vadd.f32 %v1899, %v2091
  %v2093 = vpop.f32.mrb[0].mxu0
  %v2094 = vadd.f32 %v1901, %v2093
  %v2095 = vpop.f32.mrb[0].mxu0
  %v2096 = vadd.f32 %v1903, %v2095
  %v2097 = vpop.f32.mrb[0].mxu0
  %v2098 = vadd.f32 %v1905, %v2097
  %2099 = vmatprep.mubr.bf16.mxu0 %v677
  %2100 = vmatmul.mubr.bf16.gmra.mrb[0].mxu0 %v676
  %v2101 = vpop.f32.mrb[0].mxu0
  %v2102 = vadd.f32 %v1909, %v2101
  %v2103 = vpop.f32.mrb[0].mxu0
  %v2104 = vadd.f32 %v1911, %v2103
  %v2105 = vpop.f32.mrb[0].mxu0
  %v2106 = vadd.f32 %v1913, %v2105
  %v2107 = vpop.f32.mrb[0].mxu0
  %v2108 = vadd.f32 %v1915, %v2107
  %2109 = vmatprep.mubr.bf16.mxu0 %v683
  %2110 = vmatmul.mubr.bf16.gmra.mrb[0].mxu0 %v682
  %v2111 = vpop.f32.mrb[0].mxu0
  %v2112 = vadd.f32 %v1919, %v2111
  %v2113 = vpop.f32.mrb[0].mxu0
  %v2114 = vadd.f32 %v1921, %v2113
  %v2115 = vpop.f32.mrb[0].mxu0
  %v2116 = vadd.f32 %v1923, %v2115
  %v2117 = vpop.f32.mrb[0].mxu0
  %v2118 = vadd.f32 %v1925, %v2117
  %2119 = vmatprep.mubr.bf16.mxu0 %v689
  %2120 = vmatmul.mubr.bf16.gmra.mrb[0].mxu0 %v688
  %v2121 = vpop.f32.mrb[0].mxu0
  %v2122 = vadd.f32 %v1929, %v2121
  %v2123 = vpop.f32.mrb[0].mxu0
  %v2124 = vadd.f32 %v1931, %v2123
  %v2125 = vpop.f32.mrb[0].mxu0
  %v2126 = vadd.f32 %v1933, %v2125
  %v2127 = vpop.f32.mrb[0].mxu0
  %v2128 = vadd.f32 %v1935, %v2127
  %2129 = vmatprep.mubr.bf16.mxu0 %v695
  %2130 = vmatmul.mubr.bf16.gmra.mrb[0].mxu0 %v694
  %v2131 = vpop.f32.mrb[0].mxu0
  %v2132 = vadd.f32 %v1939, %v2131
  %v2133 = vpop.f32.mrb[0].mxu0
  %v2134 = vadd.f32 %v1941, %v2133
  %v2135 = vpop.f32.mrb[0].mxu0
  %v2136 = vadd.f32 %v1943, %v2135
  %v2137 = vpop.f32.mrb[0].mxu0
  %v2138 = vadd.f32 %v1945, %v2137
  %2139 = vdwg.mxu0
  %2140 = vmatprep.subr.bf16.mxu0 %v1499
  %2141 = vmatpush1.bf16.msra.mxu0 %v1498
  %2142 = vmatprep.subr.bf16.mxu0 %v1503
  %2143 = vmatpush1.bf16.msra.mxu0 %v1502
  %2144 = vmatprep.subr.bf16.mxu0 %v1507
  %2145 = vmatpush1.bf16.msra.mxu0 %v1506
  %2146 = vmatprep.subr.bf16.mxu0 %v1511
  %2147 = vmatpush1.bf16.msra.mxu0 %v1510
  %2148 = vmatprep.subr.bf16.mxu0 %v1515
  %2149 = vmatpush1.bf16.msra.mxu0 %v1514
  %2150 = vmatprep.subr.bf16.mxu0 %v1519
  %2151 = vmatpush1.bf16.msra.mxu0 %v1518
  %2152 = vmatprep.subr.bf16.mxu0 %v1523
  %2153 = vmatpush1.bf16.msra.mxu0 %v1522
  %2154 = vmatprep.subr.bf16.mxu0 %v1527
  %2155 = vmatpush1.bf16.msra.mxu0 %v1526
  %2156 = vmatprep.subr.bf16.mxu0 %v1531
  %2157 = vmatpush1.bf16.msra.mxu0 %v1530
  %2158 = vmatprep.subr.bf16.mxu0 %v1535
  %2159 = vmatpush1.bf16.msra.mxu0 %v1534
  %2160 = vmatprep.subr.bf16.mxu0 %v1539
  %2161 = vmatpush1.bf16.msra.mxu0 %v1538
  %2162 = vmatprep.subr.bf16.mxu0 %v1543
  %2163 = vmatpush1.bf16.msra.mxu0 %v1542
  %2164 = vmatprep.subr.bf16.mxu0 %v1547
  %2165 = vmatpush1.bf16.msra.mxu0 %v1546
  %2166 = vmatprep.subr.bf16.mxu0 %v1551
  %2167 = vmatpush1.bf16.msra.mxu0 %v1550
  %2168 = vmatprep.subr.bf16.mxu0 %v1555
  %2169 = vmatpush1.bf16.msra.mxu0 %v1554
  %2170 = vmatprep.subr.bf16.mxu0 %v1559
  %2171 = vmatpush1.bf16.msra.mxu0 %v1558
  %2172 = vmatprep.mubr.bf16.mxu0 %v607
  %2173 = vmatmul.mubr.bf16.gmra.mrb[0].mxu0 %v606
  %v2174 = vpop.f32.mrb[0].mxu0
  %v2175 = vadd.f32 %v1982, %v2174
  %v2176 = vpop.f32.mrb[0].mxu0
  %v2177 = vadd.f32 %v1984, %v2176
  %v2178 = vpop.f32.mrb[0].mxu0
  %v2179 = vadd.f32 %v1986, %v2178
  %v2180 = vpop.f32.mrb[0].mxu0
  %v2181 = vadd.f32 %v1988, %v2180
  %2182 = vmatprep.mubr.bf16.mxu0 %v613
  %2183 = vmatmul.mubr.bf16.gmra.mrb[0].mxu0 %v612
  %v2184 = vpop.f32.mrb[0].mxu0
  %v2185 = vadd.f32 %v1992, %v2184
  %v2186 = vpop.f32.mrb[0].mxu0
  %v2187 = vadd.f32 %v1994, %v2186
  %v2188 = vpop.f32.mrb[0].mxu0
  %v2189 = vadd.f32 %v1996, %v2188
  %v2190 = vpop.f32.mrb[0].mxu0
  %v2191 = vadd.f32 %v1998, %v2190
  %2192 = vmatprep.mubr.bf16.mxu0 %v619
  %2193 = vmatmul.mubr.bf16.gmra.mrb[0].mxu0 %v618
  %v2194 = vpop.f32.mrb[0].mxu0
  %v2195 = vadd.f32 %v2002, %v2194
  %v2196 = vpop.f32.mrb[0].mxu0
  %v2197 = vadd.f32 %v2004, %v2196
  %v2198 = vpop.f32.mrb[0].mxu0
  %v2199 = vadd.f32 %v2006, %v2198
  %v2200 = vpop.f32.mrb[0].mxu0
  %v2201 = vadd.f32 %v2008, %v2200
  %2202 = vmatprep.mubr.bf16.mxu0 %v625
  %2203 = vmatmul.mubr.bf16.gmra.mrb[0].mxu0 %v624
  %v2204 = vpop.f32.mrb[0].mxu0
  %v2205 = vadd.f32 %v2012, %v2204
  %v2206 = vpop.f32.mrb[0].mxu0
  %v2207 = vadd.f32 %v2014, %v2206
  %v2208 = vpop.f32.mrb[0].mxu0
  %v2209 = vadd.f32 %v2016, %v2208
  %v2210 = vpop.f32.mrb[0].mxu0
  %v2211 = vadd.f32 %v2018, %v2210
  %2212 = vmatprep.mubr.bf16.mxu0 %v631
  %2213 = vmatmul.mubr.bf16.gmra.mrb[0].mxu0 %v630
  %v2214 = vpop.f32.mrb[0].mxu0
  %v2215 = vadd.f32 %v2022, %v2214
  %v2216 = vpop.f32.mrb[0].mxu0
  %v2217 = vadd.f32 %v2024, %v2216
  %v2218 = vpop.f32.mrb[0].mxu0
  %v2219 = vadd.f32 %v2026, %v2218
  %v2220 = vpop.f32.mrb[0].mxu0
  %v2221 = vadd.f32 %v2028, %v2220
  %2222 = vmatprep.mubr.bf16.mxu0 %v637
  %2223 = vmatmul.mubr.bf16.gmra.mrb[0].mxu0 %v636
  %v2224 = vpop.f32.mrb[0].mxu0
  %v2225 = vadd.f32 %v2032, %v2224
  %v2226 = vpop.f32.mrb[0].mxu0
  %v2227 = vadd.f32 %v2034, %v2226
  %v2228 = vpop.f32.mrb[0].mxu0
  %v2229 = vadd.f32 %v2036, %v2228
  %v2230 = vpop.f32.mrb[0].mxu0
  %v2231 = vadd.f32 %v2038, %v2230
  %2232 = vmatprep.mubr.bf16.mxu0 %v643
  %2233 = vmatmul.mubr.bf16.gmra.mrb[0].mxu0 %v642
  %v2234 = vpop.f32.mrb[0].mxu0
  %v2235 = vadd.f32 %v2042, %v2234
  %v2236 = vpop.f32.mrb[0].mxu0
  %v2237 = vadd.f32 %v2044, %v2236
  %v2238 = vpop.f32.mrb[0].mxu0
  %v2239 = vadd.f32 %v2046, %v2238
  %v2240 = vpop.f32.mrb[0].mxu0
  %v2241 = vadd.f32 %v2048, %v2240
  %2242 = vmatprep.mubr.bf16.mxu0 %v649
  %2243 = vmatmul.mubr.bf16.gmra.mrb[0].mxu0 %v648
  %v2244 = vpop.f32.mrb[0].mxu0
  %v2245 = vadd.f32 %v2052, %v2244
  %v2246 = vpop.f32.mrb[0].mxu0
  %v2247 = vadd.f32 %v2054, %v2246
  %v2248 = vpop.f32.mrb[0].mxu0
  %v2249 = vadd.f32 %v2056, %v2248
  %v2250 = vpop.f32.mrb[0].mxu0
  %v2251 = vadd.f32 %v2058, %v2250
  %2252 = vmatprep.mubr.bf16.mxu0 %v655
  %2253 = vmatmul.mubr.bf16.gmra.mrb[0].mxu0 %v654
  %v2254 = vpop.f32.mrb[0].mxu0
  %v2255 = vadd.f32 %v2062, %v2254
  %v2256 = vpop.f32.mrb[0].mxu0
  %v2257 = vadd.f32 %v2064, %v2256
  %v2258 = vpop.f32.mrb[0].mxu0
  %v2259 = vadd.f32 %v2066, %v2258
  %v2260 = vpop.f32.mrb[0].mxu0
  %v2261 = vadd.f32 %v2068, %v2260
  %2262 = vmatprep.mubr.bf16.mxu0 %v661
  %2263 = vmatmul.mubr.bf16.gmra.mrb[0].mxu0 %v660
  %v2264 = vpop.f32.mrb[0].mxu0
  %v2265 = vadd.f32 %v2072, %v2264
  %v2266 = vpop.f32.mrb[0].mxu0
  %v2267 = vadd.f32 %v2074, %v2266
  %v2268 = vpop.f32.mrb[0].mxu0
  %v2269 = vadd.f32 %v2076, %v2268
  %v2270 = vpop.f32.mrb[0].mxu0
  %v2271 = vadd.f32 %v2078, %v2270
  %2272 = vmatprep.mubr.bf16.mxu0 %v667
  %2273 = vmatmul.mubr.bf16.gmra.mrb[0].mxu0 %v666
  %v2274 = vpop.f32.mrb[0].mxu0
  %v2275 = vadd.f32 %v2082, %v2274
  %v2276 = vpop.f32.mrb[0].mxu0
  %v2277 = vadd.f32 %v2084, %v2276
  %v2278 = vpop.f32.mrb[0].mxu0
  %v2279 = vadd.f32 %v2086, %v2278
  %v2280 = vpop.f32.mrb[0].mxu0
  %v2281 = vadd.f32 %v2088, %v2280
  %2282 = vmatprep.mubr.bf16.mxu0 %v673
  %2283 = vmatmul.mubr.bf16.gmra.mrb[0].mxu0 %v672
  %v2284 = vpop.f32.mrb[0].mxu0
  %v2285 = vadd.f32 %v2092, %v2284
  %v2286 = vpop.f32.mrb[0].mxu0
  %v2287 = vadd.f32 %v2094, %v2286
  %v2288 = vpop.f32.mrb[0].mxu0
  %v2289 = vadd.f32 %v2096, %v2288
  %v2290 = vpop.f32.mrb[0].mxu0
  %v2291 = vadd.f32 %v2098, %v2290
  %2292 = vmatprep.mubr.bf16.mxu0 %v679
  %2293 = vmatmul.mubr.bf16.gmra.mrb[0].mxu0 %v678
  %v2294 = vpop.f32.mrb[0].mxu0
  %v2295 = vadd.f32 %v2102, %v2294
  %v2296 = vpop.f32.mrb[0].mxu0
  %v2297 = vadd.f32 %v2104, %v2296
  %v2298 = vpop.f32.mrb[0].mxu0
  %v2299 = vadd.f32 %v2106, %v2298
  %v2300 = vpop.f32.mrb[0].mxu0
  %v2301 = vadd.f32 %v2108, %v2300
  %2302 = vmatprep.mubr.bf16.mxu0 %v685
  %2303 = vmatmul.mubr.bf16.gmra.mrb[0].mxu0 %v684
  %v2304 = vpop.f32.mrb[0].mxu0
  %v2305 = vadd.f32 %v2112, %v2304
  %v2306 = vpop.f32.mrb[0].mxu0
  %v2307 = vadd.f32 %v2114, %v2306
  %v2308 = vpop.f32.mrb[0].mxu0
  %v2309 = vadd.f32 %v2116, %v2308
  %v2310 = vpop.f32.mrb[0].mxu0
  %v2311 = vadd.f32 %v2118, %v2310
  %2312 = vmatprep.mubr.bf16.mxu0 %v691
  %2313 = vmatmul.mubr.bf16.gmra.mrb[0].mxu0 %v690
  %v2314 = vpop.f32.mrb[0].mxu0
  %v2315 = vadd.f32 %v2122, %v2314
  %v2316 = vpop.f32.mrb[0].mxu0
  %v2317 = vadd.f32 %v2124, %v2316
  %v2318 = vpop.f32.mrb[0].mxu0
  %v2319 = vadd.f32 %v2126, %v2318
  %v2320 = vpop.f32.mrb[0].mxu0
  %v2321 = vadd.f32 %v2128, %v2320
  %2322 = vmatprep.mubr.bf16.mxu0 %v697
  %2323 = vmatmul.mubr.bf16.gmra.mrb[0].mxu0 %v696
  %v2324 = vpop.f32.mrb[0].mxu0
  %v2325 = vadd.f32 %v2132, %v2324
  %v2326 = vpop.f32.mrb[0].mxu0
  %v2327 = vadd.f32 %v2134, %v2326
  %v2328 = vpop.f32.mrb[0].mxu0
  %v2329 = vadd.f32 %v2136, %v2328
  %v2330 = vpop.f32.mrb[0].mxu0
  %v2331 = vadd.f32 %v2138, %v2330
  %2332 = vdwg.mxu0
  %2333 = vmatprep.subr.bf16.mxu0 %v1373
  %2334 = vmatpush1.bf16.msra.mxu0 %v1372
  %2335 = vmatprep.subr.bf16.mxu0 %v1377
  %2336 = vmatpush1.bf16.msra.mxu0 %v1376
  %2337 = vmatprep.subr.bf16.mxu0 %v1381
  %2338 = vmatpush1.bf16.msra.mxu0 %v1380
  %2339 = vmatprep.subr.bf16.mxu0 %v1385
  %2340 = vmatpush1.bf16.msra.mxu0 %v1384
  %2341 = vmatprep.subr.bf16.mxu0 %v1389
  %2342 = vmatpush1.bf16.msra.mxu0 %v1388
  %2343 = vmatprep.subr.bf16.mxu0 %v1393
  %2344 = vmatpush1.bf16.msra.mxu0 %v1392
  %2345 = vmatprep.subr.bf16.mxu0 %v1397
  %2346 = vmatpush1.bf16.msra.mxu0 %v1396
  %2347 = vmatprep.subr.bf16.mxu0 %v1401
  %2348 = vmatpush1.bf16.msra.mxu0 %v1400
  %2349 = vmatprep.subr.bf16.mxu0 %v1405
  %2350 = vmatpush1.bf16.msra.mxu0 %v1404
  %2351 = vmatprep.subr.bf16.mxu0 %v1409
  %2352 = vmatpush1.bf16.msra.mxu0 %v1408
  %2353 = vmatprep.subr.bf16.mxu0 %v1413
  %2354 = vmatpush1.bf16.msra.mxu0 %v1412
  %2355 = vmatprep.subr.bf16.mxu0 %v1417
  %2356 = vmatpush1.bf16.msra.mxu0 %v1416
  %2357 = vmatprep.subr.bf16.mxu0 %v1421
  %2358 = vmatpush1.bf16.msra.mxu0 %v1420
  %2359 = vmatprep.subr.bf16.mxu0 %v1425
  %2360 = vmatpush1.bf16.msra.mxu0 %v1424
  %2361 = vmatprep.subr.bf16.mxu0 %v1429
  %2362 = vmatpush1.bf16.msra.mxu0 %v1428
  %2363 = vmatprep.subr.bf16.mxu0 %v1433
  %2364 = vmatpush1.bf16.msra.mxu0 %v1432
  %2365 = vmatprep.mubr.bf16.mxu0 %v603
  %2366 = vmatmul.mubr.bf16.gmra.mrb[0].mxu0 %v602
  %v2367 = vpop.f32.mrb[0].mxu0
  %v2368 = vadd.f32 0.0, %v2367
  %v2369 = vpop.f32.mrb[0].mxu0
  %v2370 = vadd.f32 0.0, %v2369
  %v2371 = vpop.f32.mrb[0].mxu0
  %v2372 = vadd.f32 0.0, %v2371
  %v2373 = vpop.f32.mrb[0].mxu0
  %v2374 = vadd.f32 0.0, %v2373
  %2375 = vmatprep.mubr.bf16.mxu0 %v609
  %2376 = vmatmul.mubr.bf16.gmra.mrb[0].mxu0 %v608
  %v2377 = vpop.f32.mrb[0].mxu0
  %v2378 = vadd.f32 0.0, %v2377
  %v2379 = vpop.f32.mrb[0].mxu0
  %v2380 = vadd.f32 0.0, %v2379
  %v2381 = vpop.f32.mrb[0].mxu0
  %v2382 = vadd.f32 0.0, %v2381
  %v2383 = vpop.f32.mrb[0].mxu0
  %v2384 = vadd.f32 0.0, %v2383
  %2385 = vmatprep.mubr.bf16.mxu0 %v615
  %2386 = vmatmul.mubr.bf16.gmra.mrb[0].mxu0 %v614
  %v2387 = vpop.f32.mrb[0].mxu0
  %v2388 = vadd.f32 0.0, %v2387
  %v2389 = vpop.f32.mrb[0].mxu0
  %v2390 = vadd.f32 0.0, %v2389
  %v2391 = vpop.f32.mrb[0].mxu0
  %v2392 = vadd.f32 0.0, %v2391
  %v2393 = vpop.f32.mrb[0].mxu0
  %v2394 = vadd.f32 0.0, %v2393
  %2395 = vmatprep.mubr.bf16.mxu0 %v621
  %2396 = vmatmul.mubr.bf16.gmra.mrb[0].mxu0 %v620
  %v2397 = vpop.f32.mrb[0].mxu0
  %v2398 = vadd.f32 0.0, %v2397
  %v2399 = vpop.f32.mrb[0].mxu0
  %v2400 = vadd.f32 0.0, %v2399
  %v2401 = vpop.f32.mrb[0].mxu0
  %v2402 = vadd.f32 0.0, %v2401
  %v2403 = vpop.f32.mrb[0].mxu0
  %v2404 = vadd.f32 0.0, %v2403
  %2405 = vmatprep.mubr.bf16.mxu0 %v627
  %2406 = vmatmul.mubr.bf16.gmra.mrb[0].mxu0 %v626
  %v2407 = vpop.f32.mrb[0].mxu0
  %v2408 = vadd.f32 0.0, %v2407
  %v2409 = vpop.f32.mrb[0].mxu0
  %v2410 = vadd.f32 0.0, %v2409
  %v2411 = vpop.f32.mrb[0].mxu0
  %v2412 = vadd.f32 0.0, %v2411
  %v2413 = vpop.f32.mrb[0].mxu0
  %v2414 = vadd.f32 0.0, %v2413
  %2415 = vmatprep.mubr.bf16.mxu0 %v633
  %2416 = vmatmul.mubr.bf16.gmra.mrb[0].mxu0 %v632
  %v2417 = vpop.f32.mrb[0].mxu0
  %v2418 = vadd.f32 0.0, %v2417
  %v2419 = vpop.f32.mrb[0].mxu0
  %v2420 = vadd.f32 0.0, %v2419
  %v2421 = vpop.f32.mrb[0].mxu0
  %v2422 = vadd.f32 0.0, %v2421
  %v2423 = vpop.f32.mrb[0].mxu0
  %v2424 = vadd.f32 0.0, %v2423
  %2425 = vmatprep.mubr.bf16.mxu0 %v639
  %2426 = vmatmul.mubr.bf16.gmra.mrb[0].mxu0 %v638
  %v2427 = vpop.f32.mrb[0].mxu0
  %v2428 = vadd.f32 0.0, %v2427
  %v2429 = vpop.f32.mrb[0].mxu0
  %v2430 = vadd.f32 0.0, %v2429
  %v2431 = vpop.f32.mrb[0].mxu0
  %v2432 = vadd.f32 0.0, %v2431
  %v2433 = vpop.f32.mrb[0].mxu0
  %v2434 = vadd.f32 0.0, %v2433
  %2435 = vmatprep.mubr.bf16.mxu0 %v645
  %2436 = vmatmul.mubr.bf16.gmra.mrb[0].mxu0 %v644
  %v2437 = vpop.f32.mrb[0].mxu0
  %v2438 = vadd.f32 0.0, %v2437
  %v2439 = vpop.f32.mrb[0].mxu0
  %v2440 = vadd.f32 0.0, %v2439
  %v2441 = vpop.f32.mrb[0].mxu0
  %v2442 = vadd.f32 0.0, %v2441
  %v2443 = vpop.f32.mrb[0].mxu0
  %v2444 = vadd.f32 0.0, %v2443
  %2445 = vmatprep.mubr.bf16.mxu0 %v651
  %2446 = vmatmul.mubr.bf16.gmra.mrb[0].mxu0 %v650
  %v2447 = vpop.f32.mrb[0].mxu0
  %v2448 = vadd.f32 0.0, %v2447
  %v2449 = vpop.f32.mrb[0].mxu0
  %v2450 = vadd.f32 0.0, %v2449
  %v2451 = vpop.f32.mrb[0].mxu0
  %v2452 = vadd.f32 0.0, %v2451
  %v2453 = vpop.f32.mrb[0].mxu0
  %v2454 = vadd.f32 0.0, %v2453
  %2455 = vmatprep.mubr.bf16.mxu0 %v657
  %2456 = vmatmul.mubr.bf16.gmra.mrb[0].mxu0 %v656
  %v2457 = vpop.f32.mrb[0].mxu0
  %v2458 = vadd.f32 0.0, %v2457
  %v2459 = vpop.f32.mrb[0].mxu0
  %v2460 = vadd.f32 0.0, %v2459
  %v2461 = vpop.f32.mrb[0].mxu0
  %v2462 = vadd.f32 0.0, %v2461
  %v2463 = vpop.f32.mrb[0].mxu0
  %v2464 = vadd.f32 0.0, %v2463
  %2465 = vmatprep.mubr.bf16.mxu0 %v663
  %2466 = vmatmul.mubr.bf16.gmra.mrb[0].mxu0 %v662
  %v2467 = vpop.f32.mrb[0].mxu0
  %v2468 = vadd.f32 0.0, %v2467
  %v2469 = vpop.f32.mrb[0].mxu0
  %v2470 = vadd.f32 0.0, %v2469
  %v2471 = vpop.f32.mrb[0].mxu0
  %v2472 = vadd.f32 0.0, %v2471
  %v2473 = vpop.f32.mrb[0].mxu0
  %v2474 = vadd.f32 0.0, %v2473
  %2475 = vmatprep.mubr.bf16.mxu0 %v669
  %2476 = vmatmul.mubr.bf16.gmra.mrb[0].mxu0 %v668
  %v2477 = vpop.f32.mrb[0].mxu0
  %v2478 = vadd.f32 0.0, %v2477
  %v2479 = vpop.f32.mrb[0].mxu0
  %v2480 = vadd.f32 0.0, %v2479
  %v2481 = vpop.f32.mrb[0].mxu0
  %v2482 = vadd.f32 0.0, %v2481
  %v2483 = vpop.f32.mrb[0].mxu0
  %v2484 = vadd.f32 0.0, %v2483
  %2485 = vmatprep.mubr.bf16.mxu0 %v675
  %2486 = vmatmul.mubr.bf16.gmra.mrb[0].mxu0 %v674
  %v2487 = vpop.f32.mrb[0].mxu0
  %v2488 = vadd.f32 0.0, %v2487
  %v2489 = vpop.f32.mrb[0].mxu0
  %v2490 = vadd.f32 0.0, %v2489
  %v2491 = vpop.f32.mrb[0].mxu0
  %v2492 = vadd.f32 0.0, %v2491
  %v2493 = vpop.f32.mrb[0].mxu0
  %v2494 = vadd.f32 0.0, %v2493
  %2495 = vmatprep.mubr.bf16.mxu0 %v681
  %2496 = vmatmul.mubr.bf16.gmra.mrb[0].mxu0 %v680
  %v2497 = vpop.f32.mrb[0].mxu0
  %v2498 = vadd.f32 0.0, %v2497
  %v2499 = vpop.f32.mrb[0].mxu0
  %v2500 = vadd.f32 0.0, %v2499
  %v2501 = vpop.f32.mrb[0].mxu0
  %v2502 = vadd.f32 0.0, %v2501
  %v2503 = vpop.f32.mrb[0].mxu0
  %v2504 = vadd.f32 0.0, %v2503
  %2505 = vmatprep.mubr.bf16.mxu0 %v687
  %2506 = vmatmul.mubr.bf16.gmra.mrb[0].mxu0 %v686
  %v2507 = vpop.f32.mrb[0].mxu0
  %v2508 = vadd.f32 0.0, %v2507
  %v2509 = vpop.f32.mrb[0].mxu0
  %v2510 = vadd.f32 0.0, %v2509
  %v2511 = vpop.f32.mrb[0].mxu0
  %v2512 = vadd.f32 0.0, %v2511
  %v2513 = vpop.f32.mrb[0].mxu0
  %v2514 = vadd.f32 0.0, %v2513
  %2515 = vmatprep.mubr.bf16.mxu0 %v693
  %2516 = vmatmul.mubr.bf16.gmra.mrb[0].mxu0 %v692
  %v2517 = vpop.f32.mrb[0].mxu0
  %v2518 = vadd.f32 0.0, %v2517
  %v2519 = vpop.f32.mrb[0].mxu0
  %v2520 = vadd.f32 0.0, %v2519
  %v2521 = vpop.f32.mrb[0].mxu0
  %v2522 = vadd.f32 0.0, %v2521
  %v2523 = vpop.f32.mrb[0].mxu0
  %v2524 = vadd.f32 0.0, %v2523
  %2525 = vdwg.mxu0
  %2526 = vmatprep.subr.bf16.mxu0 %v1437
  %2527 = vmatpush1.bf16.msra.mxu0 %v1436
  %2528 = vmatprep.subr.bf16.mxu0 %v1441
  %2529 = vmatpush1.bf16.msra.mxu0 %v1440
  %2530 = vmatprep.subr.bf16.mxu0 %v1445
  %2531 = vmatpush1.bf16.msra.mxu0 %v1444
  %2532 = vmatprep.subr.bf16.mxu0 %v1449
  %2533 = vmatpush1.bf16.msra.mxu0 %v1448
  %2534 = vmatprep.subr.bf16.mxu0 %v1453
  %2535 = vmatpush1.bf16.msra.mxu0 %v1452
  %2536 = vmatprep.subr.bf16.mxu0 %v1457
  %2537 = vmatpush1.bf16.msra.mxu0 %v1456
  %2538 = vmatprep.subr.bf16.mxu0 %v1461
  %2539 = vmatpush1.bf16.msra.mxu0 %v1460
  %2540 = vmatprep.subr.bf16.mxu0 %v1465
  %2541 = vmatpush1.bf16.msra.mxu0 %v1464
  %2542 = vmatprep.subr.bf16.mxu0 %v1469
  %2543 = vmatpush1.bf16.msra.mxu0 %v1468
  %2544 = vmatprep.subr.bf16.mxu0 %v1473
  %2545 = vmatpush1.bf16.msra.mxu0 %v1472
  %2546 = vmatprep.subr.bf16.mxu0 %v1477
  %2547 = vmatpush1.bf16.msra.mxu0 %v1476
  %2548 = vmatprep.subr.bf16.mxu0 %v1481
  %2549 = vmatpush1.bf16.msra.mxu0 %v1480
  %2550 = vmatprep.subr.bf16.mxu0 %v1485
  %2551 = vmatpush1.bf16.msra.mxu0 %v1484
  %2552 = vmatprep.subr.bf16.mxu0 %v1489
  %2553 = vmatpush1.bf16.msra.mxu0 %v1488
  %2554 = vmatprep.subr.bf16.mxu0 %v1493
  %2555 = vmatpush1.bf16.msra.mxu0 %v1492
  %2556 = vmatprep.subr.bf16.mxu0 %v1497
  %2557 = vmatpush1.bf16.msra.mxu0 %v1496
  %2558 = vmatprep.mubr.bf16.mxu0 %v605
  %2559 = vmatmul.mubr.bf16.gmra.mrb[0].mxu0 %v604
  %v2560 = vpop.f32.mrb[0].mxu0
  %v2561 = vadd.f32 %v2368, %v2560
  %v2562 = vpop.f32.mrb[0].mxu0
  %v2563 = vadd.f32 %v2370, %v2562
  %v2564 = vpop.f32.mrb[0].mxu0
  %v2565 = vadd.f32 %v2372, %v2564
  %v2566 = vpop.f32.mrb[0].mxu0
  %v2567 = vadd.f32 %v2374, %v2566
  %2568 = vmatprep.mubr.bf16.mxu0 %v611
  %2569 = vmatmul.mubr.bf16.gmra.mrb[0].mxu0 %v610
  %v2570 = vpop.f32.mrb[0].mxu0
  %v2571 = vadd.f32 %v2378, %v2570
  %v2572 = vpop.f32.mrb[0].mxu0
  %v2573 = vadd.f32 %v2380, %v2572
  %v2574 = vpop.f32.mrb[0].mxu0
  %v2575 = vadd.f32 %v2382, %v2574
  %v2576 = vpop.f32.mrb[0].mxu0
  %v2577 = vadd.f32 %v2384, %v2576
  %2578 = vmatprep.mubr.bf16.mxu0 %v617
  %2579 = vmatmul.mubr.bf16.gmra.mrb[0].mxu0 %v616
  %v2580 = vpop.f32.mrb[0].mxu0
  %v2581 = vadd.f32 %v2388, %v2580
  %v2582 = vpop.f32.mrb[0].mxu0
  %v2583 = vadd.f32 %v2390, %v2582
  %v2584 = vpop.f32.mrb[0].mxu0
  %v2585 = vadd.f32 %v2392, %v2584
  %v2586 = vpop.f32.mrb[0].mxu0
  %v2587 = vadd.f32 %v2394, %v2586
  %2588 = vmatprep.mubr.bf16.mxu0 %v623
  %2589 = vmatmul.mubr.bf16.gmra.mrb[0].mxu0 %v622
  %v2590 = vpop.f32.mrb[0].mxu0
  %v2591 = vadd.f32 %v2398, %v2590
  %v2592 = vpop.f32.mrb[0].mxu0
  %v2593 = vadd.f32 %v2400, %v2592
  %v2594 = vpop.f32.mrb[0].mxu0
  %v2595 = vadd.f32 %v2402, %v2594
  %v2596 = vpop.f32.mrb[0].mxu0
  %v2597 = vadd.f32 %v2404, %v2596
  %2598 = vmatprep.mubr.bf16.mxu0 %v629
  %2599 = vmatmul.mubr.bf16.gmra.mrb[0].mxu0 %v628
  %v2600 = vpop.f32.mrb[0].mxu0
  %v2601 = vadd.f32 %v2408, %v2600
  %v2602 = vpop.f32.mrb[0].mxu0
  %v2603 = vadd.f32 %v2410, %v2602
  %v2604 = vpop.f32.mrb[0].mxu0
  %v2605 = vadd.f32 %v2412, %v2604
  %v2606 = vpop.f32.mrb[0].mxu0
  %v2607 = vadd.f32 %v2414, %v2606
  %2608 = vmatprep.mubr.bf16.mxu0 %v635
  %2609 = vmatmul.mubr.bf16.gmra.mrb[0].mxu0 %v634
  %v2610 = vpop.f32.mrb[0].mxu0
  %v2611 = vadd.f32 %v2418, %v2610
  %v2612 = vpop.f32.mrb[0].mxu0
  %v2613 = vadd.f32 %v2420, %v2612
  %v2614 = vpop.f32.mrb[0].mxu0
  %v2615 = vadd.f32 %v2422, %v2614
  %v2616 = vpop.f32.mrb[0].mxu0
  %v2617 = vadd.f32 %v2424, %v2616
  %2618 = vmatprep.mubr.bf16.mxu0 %v641
  %2619 = vmatmul.mubr.bf16.gmra.mrb[0].mxu0 %v640
  %v2620 = vpop.f32.mrb[0].mxu0
  %v2621 = vadd.f32 %v2428, %v2620
  %v2622 = vpop.f32.mrb[0].mxu0
  %v2623 = vadd.f32 %v2430, %v2622
  %v2624 = vpop.f32.mrb[0].mxu0
  %v2625 = vadd.f32 %v2432, %v2624
  %v2626 = vpop.f32.mrb[0].mxu0
  %v2627 = vadd.f32 %v2434, %v2626
  %2628 = vmatprep.mubr.bf16.mxu0 %v647
  %2629 = vmatmul.mubr.bf16.gmra.mrb[0].mxu0 %v646
  %v2630 = vpop.f32.mrb[0].mxu0
  %v2631 = vadd.f32 %v2438, %v2630
  %v2632 = vpop.f32.mrb[0].mxu0
  %v2633 = vadd.f32 %v2440, %v2632
  %v2634 = vpop.f32.mrb[0].mxu0
  %v2635 = vadd.f32 %v2442, %v2634
  %v2636 = vpop.f32.mrb[0].mxu0
  %v2637 = vadd.f32 %v2444, %v2636
  %2638 = vmatprep.mubr.bf16.mxu0 %v653
  %2639 = vmatmul.mubr.bf16.gmra.mrb[0].mxu0 %v652
  %v2640 = vpop.f32.mrb[0].mxu0
  %v2641 = vadd.f32 %v2448, %v2640
  %v2642 = vpop.f32.mrb[0].mxu0
  %v2643 = vadd.f32 %v2450, %v2642
  %v2644 = vpop.f32.mrb[0].mxu0
  %v2645 = vadd.f32 %v2452, %v2644
  %v2646 = vpop.f32.mrb[0].mxu0
  %v2647 = vadd.f32 %v2454, %v2646
  %2648 = vmatprep.mubr.bf16.mxu0 %v659
  %2649 = vmatmul.mubr.bf16.gmra.mrb[0].mxu0 %v658
  %v2650 = vpop.f32.mrb[0].mxu0
  %v2651 = vadd.f32 %v2458, %v2650
  %v2652 = vpop.f32.mrb[0].mxu0
  %v2653 = vadd.f32 %v2460, %v2652
  %v2654 = vpop.f32.mrb[0].mxu0
  %v2655 = vadd.f32 %v2462, %v2654
  %v2656 = vpop.f32.mrb[0].mxu0
  %v2657 = vadd.f32 %v2464, %v2656
  %2658 = vmatprep.mubr.bf16.mxu0 %v665
  %2659 = vmatmul.mubr.bf16.gmra.mrb[0].mxu0 %v664
  %v2660 = vpop.f32.mrb[0].mxu0
  %v2661 = vadd.f32 %v2468, %v2660
  %v2662 = vpop.f32.mrb[0].mxu0
  %v2663 = vadd.f32 %v2470, %v2662
  %v2664 = vpop.f32.mrb[0].mxu0
  %v2665 = vadd.f32 %v2472, %v2664
  %v2666 = vpop.f32.mrb[0].mxu0
  %v2667 = vadd.f32 %v2474, %v2666
  %2668 = vmatprep.mubr.bf16.mxu0 %v671
  %2669 = vmatmul.mubr.bf16.gmra.mrb[0].mxu0 %v670
  %v2670 = vpop.f32.mrb[0].mxu0
  %v2671 = vadd.f32 %v2478, %v2670
  %v2672 = vpop.f32.mrb[0].mxu0
  %v2673 = vadd.f32 %v2480, %v2672
  %v2674 = vpop.f32.mrb[0].mxu0
  %v2675 = vadd.f32 %v2482, %v2674
  %v2676 = vpop.f32.mrb[0].mxu0
  %v2677 = vadd.f32 %v2484, %v2676
  %2678 = vmatprep.mubr.bf16.mxu0 %v677
  %2679 = vmatmul.mubr.bf16.gmra.mrb[0].mxu0 %v676
  %v2680 = vpop.f32.mrb[0].mxu0
  %v2681 = vadd.f32 %v2488, %v2680
  %v2682 = vpop.f32.mrb[0].mxu0
  %v2683 = vadd.f32 %v2490, %v2682
  %v2684 = vpop.f32.mrb[0].mxu0
  %v2685 = vadd.f32 %v2492, %v2684
  %v2686 = vpop.f32.mrb[0].mxu0
  %v2687 = vadd.f32 %v2494, %v2686
  %2688 = vmatprep.mubr.bf16.mxu0 %v683
  %2689 = vmatmul.mubr.bf16.gmra.mrb[0].mxu0 %v682
  %v2690 = vpop.f32.mrb[0].mxu0
  %v2691 = vadd.f32 %v2498, %v2690
  %v2692 = vpop.f32.mrb[0].mxu0
  %v2693 = vadd.f32 %v2500, %v2692
  %v2694 = vpop.f32.mrb[0].mxu0
  %v2695 = vadd.f32 %v2502, %v2694
  %v2696 = vpop.f32.mrb[0].mxu0
  %v2697 = vadd.f32 %v2504, %v2696
  %2698 = vmatprep.mubr.bf16.mxu0 %v689
  %2699 = vmatmul.mubr.bf16.gmra.mrb[0].mxu0 %v688
  %v2700 = vpop.f32.mrb[0].mxu0
  %v2701 = vadd.f32 %v2508, %v2700
  %v2702 = vpop.f32.mrb[0].mxu0
  %v2703 = vadd.f32 %v2510, %v2702
  %v2704 = vpop.f32.mrb[0].mxu0
  %v2705 = vadd.f32 %v2512, %v2704
  %v2706 = vpop.f32.mrb[0].mxu0
  %v2707 = vadd.f32 %v2514, %v2706
  %2708 = vmatprep.mubr.bf16.mxu0 %v695
  %2709 = vmatmul.mubr.bf16.gmra.mrb[0].mxu0 %v694
  %v2710 = vpop.f32.mrb[0].mxu0
  %v2711 = vadd.f32 %v2518, %v2710
  %v2712 = vpop.f32.mrb[0].mxu0
  %v2713 = vadd.f32 %v2520, %v2712
  %v2714 = vpop.f32.mrb[0].mxu0
  %v2715 = vadd.f32 %v2522, %v2714
  %v2716 = vpop.f32.mrb[0].mxu0
  %v2717 = vadd.f32 %v2524, %v2716
  %2718 = vdwg.mxu0
  %2719 = vmatprep.subr.bf16.mxu0 %v1501
  %2720 = vmatpush1.bf16.msra.mxu0 %v1500
  %2721 = vmatprep.subr.bf16.mxu0 %v1505
  %2722 = vmatpush1.bf16.msra.mxu0 %v1504
  %2723 = vmatprep.subr.bf16.mxu0 %v1509
  %2724 = vmatpush1.bf16.msra.mxu0 %v1508
  %2725 = vmatprep.subr.bf16.mxu0 %v1513
  %2726 = vmatpush1.bf16.msra.mxu0 %v1512
  %2727 = vmatprep.subr.bf16.mxu0 %v1517
  %2728 = vmatpush1.bf16.msra.mxu0 %v1516
  %2729 = vmatprep.subr.bf16.mxu0 %v1521
  %2730 = vmatpush1.bf16.msra.mxu0 %v1520
  %2731 = vmatprep.subr.bf16.mxu0 %v1525
  %2732 = vmatpush1.bf16.msra.mxu0 %v1524
  %2733 = vmatprep.subr.bf16.mxu0 %v1529
  %2734 = vmatpush1.bf16.msra.mxu0 %v1528
  %2735 = vmatprep.subr.bf16.mxu0 %v1533
  %2736 = vmatpush1.bf16.msra.mxu0 %v1532
  %2737 = vmatprep.subr.bf16.mxu0 %v1537
  %2738 = vmatpush1.bf16.msra.mxu0 %v1536
  %2739 = vmatprep.subr.bf16.mxu0 %v1541
  %2740 = vmatpush1.bf16.msra.mxu0 %v1540
  %2741 = vmatprep.subr.bf16.mxu0 %v1545
  %2742 = vmatpush1.bf16.msra.mxu0 %v1544
  %2743 = vmatprep.subr.bf16.mxu0 %v1549
  %2744 = vmatpush1.bf16.msra.mxu0 %v1548
  %2745 = vmatprep.subr.bf16.mxu0 %v1553
  %2746 = vmatpush1.bf16.msra.mxu0 %v1552
  %2747 = vmatprep.subr.bf16.mxu0 %v1557
  %2748 = vmatpush1.bf16.msra.mxu0 %v1556
  %2749 = vmatprep.subr.bf16.mxu0 %v1561
  %2750 = vmatpush1.bf16.msra.mxu0 %v1560
  %2751 = vmatprep.mubr.bf16.mxu0 %v607
  %2752 = vmatmul.mubr.bf16.gmra.mrb[0].mxu0 %v606
  %v2753 = vpop.f32.mrb[0].mxu0
  %v2754 = vadd.f32 %v2561, %v2753
  %v2755 = vpop.f32.mrb[0].mxu0
  %v2756 = vadd.f32 %v2563, %v2755
  %v2757 = vpop.f32.mrb[0].mxu0
  %v2758 = vadd.f32 %v2565, %v2757
  %v2759 = vpop.f32.mrb[0].mxu0
  %v2760 = vadd.f32 %v2567, %v2759
  %2761 = vmatprep.mubr.bf16.mxu0 %v613
  %2762 = vmatmul.mubr.bf16.gmra.mrb[0].mxu0 %v612
  %v2763 = vpop.f32.mrb[0].mxu0
  %v2764 = vadd.f32 %v2571, %v2763
  %v2765 = vpop.f32.mrb[0].mxu0
  %v2766 = vadd.f32 %v2573, %v2765
  %v2767 = vpop.f32.mrb[0].mxu0
  %v2768 = vadd.f32 %v2575, %v2767
  %v2769 = vpop.f32.mrb[0].mxu0
  %v2770 = vadd.f32 %v2577, %v2769
  %2771 = vmatprep.mubr.bf16.mxu0 %v619
  %2772 = vmatmul.mubr.bf16.gmra.mrb[0].mxu0 %v618
  %v2773 = vpop.f32.mrb[0].mxu0
  %v2774 = vadd.f32 %v2581, %v2773
  %v2775 = vpop.f32.mrb[0].mxu0
  %v2776 = vadd.f32 %v2583, %v2775
  %v2777 = vpop.f32.mrb[0].mxu0
  %v2778 = vadd.f32 %v2585, %v2777
  %v2779 = vpop.f32.mrb[0].mxu0
  %v2780 = vadd.f32 %v2587, %v2779
  %2781 = vmatprep.mubr.bf16.mxu0 %v625
  %2782 = vmatmul.mubr.bf16.gmra.mrb[0].mxu0 %v624
  %v2783 = vpop.f32.mrb[0].mxu0
  %v2784 = vadd.f32 %v2591, %v2783
  %v2785 = vpop.f32.mrb[0].mxu0
  %v2786 = vadd.f32 %v2593, %v2785
  %v2787 = vpop.f32.mrb[0].mxu0
  %v2788 = vadd.f32 %v2595, %v2787
  %v2789 = vpop.f32.mrb[0].mxu0
  %v2790 = vadd.f32 %v2597, %v2789
  %2791 = vmatprep.mubr.bf16.mxu0 %v631
  %2792 = vmatmul.mubr.bf16.gmra.mrb[0].mxu0 %v630
  %v2793 = vpop.f32.mrb[0].mxu0
  %v2794 = vadd.f32 %v2601, %v2793
  %v2795 = vpop.f32.mrb[0].mxu0
  %v2796 = vadd.f32 %v2603, %v2795
  %v2797 = vpop.f32.mrb[0].mxu0
  %v2798 = vadd.f32 %v2605, %v2797
  %v2799 = vpop.f32.mrb[0].mxu0
  %v2800 = vadd.f32 %v2607, %v2799
  %2801 = vmatprep.mubr.bf16.mxu0 %v637
  %2802 = vmatmul.mubr.bf16.gmra.mrb[0].mxu0 %v636
  %v2803 = vpop.f32.mrb[0].mxu0
  %v2804 = vadd.f32 %v2611, %v2803
  %v2805 = vpop.f32.mrb[0].mxu0
  %v2806 = vadd.f32 %v2613, %v2805
  %v2807 = vpop.f32.mrb[0].mxu0
  %v2808 = vadd.f32 %v2615, %v2807
  %v2809 = vpop.f32.mrb[0].mxu0
  %v2810 = vadd.f32 %v2617, %v2809
  %2811 = vmatprep.mubr.bf16.mxu0 %v643
  %2812 = vmatmul.mubr.bf16.gmra.mrb[0].mxu0 %v642
  %v2813 = vpop.f32.mrb[0].mxu0
  %v2814 = vadd.f32 %v2621, %v2813
  %v2815 = vpop.f32.mrb[0].mxu0
  %v2816 = vadd.f32 %v2623, %v2815
  %v2817 = vpop.f32.mrb[0].mxu0
  %v2818 = vadd.f32 %v2625, %v2817
  %v2819 = vpop.f32.mrb[0].mxu0
  %v2820 = vadd.f32 %v2627, %v2819
  %2821 = vmatprep.mubr.bf16.mxu0 %v649
  %2822 = vmatmul.mubr.bf16.gmra.mrb[0].mxu0 %v648
  %v2823 = vpop.f32.mrb[0].mxu0
  %v2824 = vadd.f32 %v2631, %v2823
  %v2825 = vpop.f32.mrb[0].mxu0
  %v2826 = vadd.f32 %v2633, %v2825
  %v2827 = vpop.f32.mrb[0].mxu0
  %v2828 = vadd.f32 %v2635, %v2827
  %v2829 = vpop.f32.mrb[0].mxu0
  %v2830 = vadd.f32 %v2637, %v2829
  %2831 = vmatprep.mubr.bf16.mxu0 %v655
  %2832 = vmatmul.mubr.bf16.gmra.mrb[0].mxu0 %v654
  %v2833 = vpop.f32.mrb[0].mxu0
  %v2834 = vadd.f32 %v2641, %v2833
  %v2835 = vpop.f32.mrb[0].mxu0
  %v2836 = vadd.f32 %v2643, %v2835
  %v2837 = vpop.f32.mrb[0].mxu0
  %v2838 = vadd.f32 %v2645, %v2837
  %v2839 = vpop.f32.mrb[0].mxu0
  %v2840 = vadd.f32 %v2647, %v2839
  %2841 = vmatprep.mubr.bf16.mxu0 %v661
  %2842 = vmatmul.mubr.bf16.gmra.mrb[0].mxu0 %v660
  %v2843 = vpop.f32.mrb[0].mxu0
  %v2844 = vadd.f32 %v2651, %v2843
  %v2845 = vpop.f32.mrb[0].mxu0
  %v2846 = vadd.f32 %v2653, %v2845
  %v2847 = vpop.f32.mrb[0].mxu0
  %v2848 = vadd.f32 %v2655, %v2847
  %v2849 = vpop.f32.mrb[0].mxu0
  %v2850 = vadd.f32 %v2657, %v2849
  %2851 = vmatprep.mubr.bf16.mxu0 %v667
  %2852 = vmatmul.mubr.bf16.gmra.mrb[0].mxu0 %v666
  %v2853 = vpop.f32.mrb[0].mxu0
  %v2854 = vadd.f32 %v2661, %v2853
  %v2855 = vpop.f32.mrb[0].mxu0
  %v2856 = vadd.f32 %v2663, %v2855
  %v2857 = vpop.f32.mrb[0].mxu0
  %v2858 = vadd.f32 %v2665, %v2857
  %v2859 = vpop.f32.mrb[0].mxu0
  %v2860 = vadd.f32 %v2667, %v2859
  %2861 = vmatprep.mubr.bf16.mxu0 %v673
  %2862 = vmatmul.mubr.bf16.gmra.mrb[0].mxu0 %v672
  %v2863 = vpop.f32.mrb[0].mxu0
  %v2864 = vadd.f32 %v2671, %v2863
  %v2865 = vpop.f32.mrb[0].mxu0
  %v2866 = vadd.f32 %v2673, %v2865
  %v2867 = vpop.f32.mrb[0].mxu0
  %v2868 = vadd.f32 %v2675, %v2867
  %v2869 = vpop.f32.mrb[0].mxu0
  %v2870 = vadd.f32 %v2677, %v2869
  %2871 = vmatprep.mubr.bf16.mxu0 %v679
  %2872 = vmatmul.mubr.bf16.gmra.mrb[0].mxu0 %v678
  %v2873 = vpop.f32.mrb[0].mxu0
  %v2874 = vadd.f32 %v2681, %v2873
  %v2875 = vpop.f32.mrb[0].mxu0
  %v2876 = vadd.f32 %v2683, %v2875
  %v2877 = vpop.f32.mrb[0].mxu0
  %v2878 = vadd.f32 %v2685, %v2877
  %v2879 = vpop.f32.mrb[0].mxu0
  %v2880 = vadd.f32 %v2687, %v2879
  %2881 = vmatprep.mubr.bf16.mxu0 %v685
  %2882 = vmatmul.mubr.bf16.gmra.mrb[0].mxu0 %v684
  %v2883 = vpop.f32.mrb[0].mxu0
  %v2884 = vadd.f32 %v2691, %v2883
  %v2885 = vpop.f32.mrb[0].mxu0
  %v2886 = vadd.f32 %v2693, %v2885
  %v2887 = vpop.f32.mrb[0].mxu0
  %v2888 = vadd.f32 %v2695, %v2887
  %v2889 = vpop.f32.mrb[0].mxu0
  %v2890 = vadd.f32 %v2697, %v2889
  %2891 = vmatprep.mubr.bf16.mxu0 %v691
  %2892 = vmatmul.mubr.bf16.gmra.mrb[0].mxu0 %v690
  %v2893 = vpop.f32.mrb[0].mxu0
  %v2894 = vadd.f32 %v2701, %v2893
  %v2895 = vpop.f32.mrb[0].mxu0
  %v2896 = vadd.f32 %v2703, %v2895
  %v2897 = vpop.f32.mrb[0].mxu0
  %v2898 = vadd.f32 %v2705, %v2897
  %v2899 = vpop.f32.mrb[0].mxu0
  %v2900 = vadd.f32 %v2707, %v2899
  %2901 = vmatprep.mubr.bf16.mxu0 %v697
  %2902 = vmatmul.mubr.bf16.gmra.mrb[0].mxu0 %v696
  %v2903 = vpop.f32.mrb[0].mxu0
  %v2904 = vadd.f32 %v2711, %v2903
  %v2905 = vpop.f32.mrb[0].mxu0
  %v2906 = vadd.f32 %v2713, %v2905
  %v2907 = vpop.f32.mrb[0].mxu0
  %v2908 = vadd.f32 %v2715, %v2907
  %v2909 = vpop.f32.mrb[0].mxu0
  %v2910 = vadd.f32 %v2717, %v2909
  %2911 = vdwg.mxu0
  %s2912 = scalar_lea.vmem %s1, 1536
  %v2913 = vld [vmem:[%s2912] sm:$0xff]
  %v2914 = vld [vmem:[%s2912 + $0x8] sm:$0xff]
  %v2915 = vld [vmem:[%s2912 + $0x10] sm:$0xff]
  %v2916 = vld [vmem:[%s2912 + $0x18] sm:$0xff]
  %v2917 = vld [vmem:[%s2912 + $0x20] sm:$0xff]
  %v2918 = vld [vmem:[%s2912 + $0x28] sm:$0xff]
  %v2919 = vld [vmem:[%s2912 + $0x30] sm:$0xff]
  %v2920 = vld [vmem:[%s2912 + $0x38] sm:$0xff]
  %v2921 = vld [vmem:[%s2912 + $0x40] sm:$0xff]
  %v2922 = vld [vmem:[%s2912 + $0x48] sm:$0xff]
  %v2923 = vld [vmem:[%s2912 + $0x50] sm:$0xff]
  %v2924 = vld [vmem:[%s2912 + $0x58] sm:$0xff]
  %v2925 = vld [vmem:[%s2912 + $0x60] sm:$0xff]
  %v2926 = vld [vmem:[%s2912 + $0x68] sm:$0xff]
  %v2927 = vld [vmem:[%s2912 + $0x70] sm:$0xff]
  %v2928 = vld [vmem:[%s2912 + $0x78] sm:$0xff]
  %v2929 = vld [vmem:[%s2912 + $0x80] sm:$0xff]
  %v2930 = vld [vmem:[%s2912 + $0x88] sm:$0xff]
  %v2931 = vld [vmem:[%s2912 + $0x90] sm:$0xff]
  %v2932 = vld [vmem:[%s2912 + $0x98] sm:$0xff]
  %v2933 = vld [vmem:[%s2912 + $0xa0] sm:$0xff]
  %v2934 = vld [vmem:[%s2912 + $0xa8] sm:$0xff]
  %v2935 = vld [vmem:[%s2912 + $0xb0] sm:$0xff]
  %v2936 = vld [vmem:[%s2912 + $0xb8] sm:$0xff]
  %v2937 = vld [vmem:[%s2912 + $0xc0] sm:$0xff]
  %v2938 = vld [vmem:[%s2912 + $0xc8] sm:$0xff]
  %v2939 = vld [vmem:[%s2912 + $0xd0] sm:$0xff]
  %v2940 = vld [vmem:[%s2912 + $0xd8] sm:$0xff]
  %v2941 = vld [vmem:[%s2912 + $0xe0] sm:$0xff]
  %v2942 = vld [vmem:[%s2912 + $0xe8] sm:$0xff]
  %v2943 = vld [vmem:[%s2912 + $0xf0] sm:$0xff]
  %v2944 = vld [vmem:[%s2912 + $0xf8] sm:$0xff]
  %v2945 = vld [vmem:[%s2912 + $0x100] sm:$0xff]
  %v2946 = vld [vmem:[%s2912 + $0x108] sm:$0xff]
  %v2947 = vld [vmem:[%s2912 + $0x110] sm:$0xff]
  %v2948 = vld [vmem:[%s2912 + $0x118] sm:$0xff]
  %v2949 = vld [vmem:[%s2912 + $0x120] sm:$0xff]
  %v2950 = vld [vmem:[%s2912 + $0x128] sm:$0xff]
  %v2951 = vld [vmem:[%s2912 + $0x130] sm:$0xff]
  %v2952 = vld [vmem:[%s2912 + $0x138] sm:$0xff]
  %v2953 = vld [vmem:[%s2912 + $0x140] sm:$0xff]
  %v2954 = vld [vmem:[%s2912 + $0x148] sm:$0xff]
  %v2955 = vld [vmem:[%s2912 + $0x150] sm:$0xff]
  %v2956 = vld [vmem:[%s2912 + $0x158] sm:$0xff]
  %v2957 = vld [vmem:[%s2912 + $0x160] sm:$0xff]
  %v2958 = vld [vmem:[%s2912 + $0x168] sm:$0xff]
  %v2959 = vld [vmem:[%s2912 + $0x170] sm:$0xff]
  %v2960 = vld [vmem:[%s2912 + $0x178] sm:$0xff]
  %v2961 = vld [vmem:[%s2912 + $0x180] sm:$0xff]
  %v2962 = vld [vmem:[%s2912 + $0x188] sm:$0xff]
  %v2963 = vld [vmem:[%s2912 + $0x190] sm:$0xff]
  %v2964 = vld [vmem:[%s2912 + $0x198] sm:$0xff]
  %v2965 = vld [vmem:[%s2912 + $0x1a0] sm:$0xff]
  %v2966 = vld [vmem:[%s2912 + $0x1a8] sm:$0xff]
  %v2967 = vld [vmem:[%s2912 + $0x1b0] sm:$0xff]
  %v2968 = vld [vmem:[%s2912 + $0x1b8] sm:$0xff]
  %v2969 = vld [vmem:[%s2912 + $0x1c0] sm:$0xff]
  %v2970 = vld [vmem:[%s2912 + $0x1c8] sm:$0xff]
  %v2971 = vld [vmem:[%s2912 + $0x1d0] sm:$0xff]
  %v2972 = vld [vmem:[%s2912 + $0x1d8] sm:$0xff]
  %v2973 = vld [vmem:[%s2912 + $0x1e0] sm:$0xff]
  %v2974 = vld [vmem:[%s2912 + $0x1e8] sm:$0xff]
  %v2975 = vld [vmem:[%s2912 + $0x1f0] sm:$0xff]
  %v2976 = vld [vmem:[%s2912 + $0x1f8] sm:$0xff]
  %v2977 = vld [vmem:[%s2912 + $0x200] sm:$0xff]
  %v2978 = vld [vmem:[%s2912 + $0x208] sm:$0xff]
  %v2979 = vld [vmem:[%s2912 + $0x210] sm:$0xff]
  %v2980 = vld [vmem:[%s2912 + $0x218] sm:$0xff]
  %v2981 = vld [vmem:[%s2912 + $0x220] sm:$0xff]
  %v2982 = vld [vmem:[%s2912 + $0x228] sm:$0xff]
  %v2983 = vld [vmem:[%s2912 + $0x230] sm:$0xff]
  %v2984 = vld [vmem:[%s2912 + $0x238] sm:$0xff]
  %v2985 = vld [vmem:[%s2912 + $0x240] sm:$0xff]
  %v2986 = vld [vmem:[%s2912 + $0x248] sm:$0xff]
  %v2987 = vld [vmem:[%s2912 + $0x250] sm:$0xff]
  %v2988 = vld [vmem:[%s2912 + $0x258] sm:$0xff]
  %v2989 = vld [vmem:[%s2912 + $0x260] sm:$0xff]
  %v2990 = vld [vmem:[%s2912 + $0x268] sm:$0xff]
  %v2991 = vld [vmem:[%s2912 + $0x270] sm:$0xff]
  %v2992 = vld [vmem:[%s2912 + $0x278] sm:$0xff]
  %v2993 = vld [vmem:[%s2912 + $0x280] sm:$0xff]
  %v2994 = vld [vmem:[%s2912 + $0x288] sm:$0xff]
  %v2995 = vld [vmem:[%s2912 + $0x290] sm:$0xff]
  %v2996 = vld [vmem:[%s2912 + $0x298] sm:$0xff]
  %v2997 = vld [vmem:[%s2912 + $0x2a0] sm:$0xff]
  %v2998 = vld [vmem:[%s2912 + $0x2a8] sm:$0xff]
  %v2999 = vld [vmem:[%s2912 + $0x2b0] sm:$0xff]
  %v3000 = vld [vmem:[%s2912 + $0x2b8] sm:$0xff]
  %v3001 = vld [vmem:[%s2912 + $0x2c0] sm:$0xff]
  %v3002 = vld [vmem:[%s2912 + $0x2c8] sm:$0xff]
  %v3003 = vld [vmem:[%s2912 + $0x2d0] sm:$0xff]
  %v3004 = vld [vmem:[%s2912 + $0x2d8] sm:$0xff]
  %v3005 = vld [vmem:[%s2912 + $0x2e0] sm:$0xff]
  %v3006 = vld [vmem:[%s2912 + $0x2e8] sm:$0xff]
  %v3007 = vld [vmem:[%s2912 + $0x2f0] sm:$0xff]
  %v3008 = vld [vmem:[%s2912 + $0x2f8] sm:$0xff]
  %v3009 = vld [vmem:[%s2912 + $0x300] sm:$0xff]
  %v3010 = vld [vmem:[%s2912 + $0x308] sm:$0xff]
  %v3011 = vld [vmem:[%s2912 + $0x310] sm:$0xff]
  %v3012 = vld [vmem:[%s2912 + $0x318] sm:$0xff]
  %v3013 = vld [vmem:[%s2912 + $0x320] sm:$0xff]
  %v3014 = vld [vmem:[%s2912 + $0x328] sm:$0xff]
  %v3015 = vld [vmem:[%s2912 + $0x330] sm:$0xff]
  %v3016 = vld [vmem:[%s2912 + $0x338] sm:$0xff]
  %v3017 = vld [vmem:[%s2912 + $0x340] sm:$0xff]
  %v3018 = vld [vmem:[%s2912 + $0x348] sm:$0xff]
  %v3019 = vld [vmem:[%s2912 + $0x350] sm:$0xff]
  %v3020 = vld [vmem:[%s2912 + $0x358] sm:$0xff]
  %v3021 = vld [vmem:[%s2912 + $0x360] sm:$0xff]
  %v3022 = vld [vmem:[%s2912 + $0x368] sm:$0xff]
  %v3023 = vld [vmem:[%s2912 + $0x370] sm:$0xff]
  %v3024 = vld [vmem:[%s2912 + $0x378] sm:$0xff]
  %v3025 = vld [vmem:[%s2912 + $0x380] sm:$0xff]
  %v3026 = vld [vmem:[%s2912 + $0x388] sm:$0xff]
  %v3027 = vld [vmem:[%s2912 + $0x390] sm:$0xff]
  %v3028 = vld [vmem:[%s2912 + $0x398] sm:$0xff]
  %v3029 = vld [vmem:[%s2912 + $0x3a0] sm:$0xff]
  %v3030 = vld [vmem:[%s2912 + $0x3a8] sm:$0xff]
  %v3031 = vld [vmem:[%s2912 + $0x3b0] sm:$0xff]
  %v3032 = vld [vmem:[%s2912 + $0x3b8] sm:$0xff]
  %v3033 = vld [vmem:[%s2912 + $0x3c0] sm:$0xff]
  %v3034 = vld [vmem:[%s2912 + $0x3c8] sm:$0xff]
  %v3035 = vld [vmem:[%s2912 + $0x3d0] sm:$0xff]
  %v3036 = vld [vmem:[%s2912 + $0x3d8] sm:$0xff]
  %v3037 = vld [vmem:[%s2912 + $0x3e0] sm:$0xff]
  %v3038 = vld [vmem:[%s2912 + $0x3e8] sm:$0xff]
  %v3039 = vld [vmem:[%s2912 + $0x3f0] sm:$0xff]
  %v3040 = vld [vmem:[%s2912 + $0x3f8] sm:$0xff]
  %v3041 = vld [vmem:[%s2912 + $0x400] sm:$0xff]
  %v3042 = vld [vmem:[%s2912 + $0x408] sm:$0xff]
  %v3043 = vld [vmem:[%s2912 + $0x410] sm:$0xff]
  %v3044 = vld [vmem:[%s2912 + $0x418] sm:$0xff]
  %v3045 = vld [vmem:[%s2912 + $0x420] sm:$0xff]
  %v3046 = vld [vmem:[%s2912 + $0x428] sm:$0xff]
  %v3047 = vld [vmem:[%s2912 + $0x430] sm:$0xff]
  %v3048 = vld [vmem:[%s2912 + $0x438] sm:$0xff]
  %v3049 = vld [vmem:[%s2912 + $0x440] sm:$0xff]
  %v3050 = vld [vmem:[%s2912 + $0x448] sm:$0xff]
  %v3051 = vld [vmem:[%s2912 + $0x450] sm:$0xff]
  %v3052 = vld [vmem:[%s2912 + $0x458] sm:$0xff]
  %v3053 = vld [vmem:[%s2912 + $0x460] sm:$0xff]
  %v3054 = vld [vmem:[%s2912 + $0x468] sm:$0xff]
  %v3055 = vld [vmem:[%s2912 + $0x470] sm:$0xff]
  %v3056 = vld [vmem:[%s2912 + $0x478] sm:$0xff]
  %v3057 = vld [vmem:[%s2912 + $0x480] sm:$0xff]
  %v3058 = vld [vmem:[%s2912 + $0x488] sm:$0xff]
  %v3059 = vld [vmem:[%s2912 + $0x490] sm:$0xff]
  %v3060 = vld [vmem:[%s2912 + $0x498] sm:$0xff]
  %v3061 = vld [vmem:[%s2912 + $0x4a0] sm:$0xff]
  %v3062 = vld [vmem:[%s2912 + $0x4a8] sm:$0xff]
  %v3063 = vld [vmem:[%s2912 + $0x4b0] sm:$0xff]
  %v3064 = vld [vmem:[%s2912 + $0x4b8] sm:$0xff]
  %v3065 = vld [vmem:[%s2912 + $0x4c0] sm:$0xff]
  %v3066 = vld [vmem:[%s2912 + $0x4c8] sm:$0xff]
  %v3067 = vld [vmem:[%s2912 + $0x4d0] sm:$0xff]
  %v3068 = vld [vmem:[%s2912 + $0x4d8] sm:$0xff]
  %v3069 = vld [vmem:[%s2912 + $0x4e0] sm:$0xff]
  %v3070 = vld [vmem:[%s2912 + $0x4e8] sm:$0xff]
  %v3071 = vld [vmem:[%s2912 + $0x4f0] sm:$0xff]
  %v3072 = vld [vmem:[%s2912 + $0x4f8] sm:$0xff]
  %v3073 = vld [vmem:[%s2912 + $0x500] sm:$0xff]
  %v3074 = vld [vmem:[%s2912 + $0x508] sm:$0xff]
  %v3075 = vld [vmem:[%s2912 + $0x510] sm:$0xff]
  %v3076 = vld [vmem:[%s2912 + $0x518] sm:$0xff]
  %v3077 = vld [vmem:[%s2912 + $0x520] sm:$0xff]
  %v3078 = vld [vmem:[%s2912 + $0x528] sm:$0xff]
  %v3079 = vld [vmem:[%s2912 + $0x530] sm:$0xff]
  %v3080 = vld [vmem:[%s2912 + $0x538] sm:$0xff]
  %v3081 = vld [vmem:[%s2912 + $0x540] sm:$0xff]
  %v3082 = vld [vmem:[%s2912 + $0x548] sm:$0xff]
  %v3083 = vld [vmem:[%s2912 + $0x550] sm:$0xff]
  %v3084 = vld [vmem:[%s2912 + $0x558] sm:$0xff]
  %v3085 = vld [vmem:[%s2912 + $0x560] sm:$0xff]
  %v3086 = vld [vmem:[%s2912 + $0x568] sm:$0xff]
  %v3087 = vld [vmem:[%s2912 + $0x570] sm:$0xff]
  %v3088 = vld [vmem:[%s2912 + $0x578] sm:$0xff]
  %v3089 = vld [vmem:[%s2912 + $0x580] sm:$0xff]
  %v3090 = vld [vmem:[%s2912 + $0x588] sm:$0xff]
  %v3091 = vld [vmem:[%s2912 + $0x590] sm:$0xff]
  %v3092 = vld [vmem:[%s2912 + $0x598] sm:$0xff]
  %v3093 = vld [vmem:[%s2912 + $0x5a0] sm:$0xff]
  %v3094 = vld [vmem:[%s2912 + $0x5a8] sm:$0xff]
  %v3095 = vld [vmem:[%s2912 + $0x5b0] sm:$0xff]
  %v3096 = vld [vmem:[%s2912 + $0x5b8] sm:$0xff]
  %v3097 = vld [vmem:[%s2912 + $0x5c0] sm:$0xff]
  %v3098 = vld [vmem:[%s2912 + $0x5c8] sm:$0xff]
  %v3099 = vld [vmem:[%s2912 + $0x5d0] sm:$0xff]
  %v3100 = vld [vmem:[%s2912 + $0x5d8] sm:$0xff]
  %v3101 = vld [vmem:[%s2912 + $0x5e0] sm:$0xff]
  %v3102 = vld [vmem:[%s2912 + $0x5e8] sm:$0xff]
  %v3103 = vld [vmem:[%s2912 + $0x5f0] sm:$0xff]
  %v3104 = vld [vmem:[%s2912 + $0x5f8] sm:$0xff]
  %v3297 = vunpack.c.l.b16 %v2913
  %v3298 = vunpack.c.h.b16 %v2913
  %v3299 = vunpack.c.l.b16 %v2914
  %v3300 = vunpack.c.h.b16 %v2914
  %v3301 = vunpack.c.l.b16 %v2915
  %v3302 = vunpack.c.h.b16 %v2915
  %v3303 = vunpack.c.l.b16 %v2916
  %v3304 = vunpack.c.h.b16 %v2916
  %v3305 = vunpack.c.l.b16 %v2917
  %v3306 = vunpack.c.h.b16 %v2917
  %v3307 = vunpack.c.l.b16 %v2918
  %v3308 = vunpack.c.h.b16 %v2918
  %v3309 = vunpack.c.l.b16 %v2919
  %v3310 = vunpack.c.h.b16 %v2919
  %v3311 = vunpack.c.l.b16 %v2920
  %v3312 = vunpack.c.h.b16 %v2920
  %v3313 = vunpack.c.l.b16 %v2921
  %v3314 = vunpack.c.h.b16 %v2921
  %v3315 = vunpack.c.l.b16 %v2922
  %v3316 = vunpack.c.h.b16 %v2922
  %v3317 = vunpack.c.l.b16 %v2923
  %v3318 = vunpack.c.h.b16 %v2923
  %v3319 = vunpack.c.l.b16 %v2924
  %v3320 = vunpack.c.h.b16 %v2924
  %v3321 = vunpack.c.l.b16 %v2925
  %v3322 = vunpack.c.h.b16 %v2925
  %v3323 = vunpack.c.l.b16 %v2926
  %v3324 = vunpack.c.h.b16 %v2926
  %v3325 = vunpack.c.l.b16 %v2927
  %v3326 = vunpack.c.h.b16 %v2927
  %v3327 = vunpack.c.l.b16 %v2928
  %v3328 = vunpack.c.h.b16 %v2928
  %v3329 = vunpack.c.l.b16 %v2929
  %v3330 = vunpack.c.h.b16 %v2929
  %v3331 = vunpack.c.l.b16 %v2930
  %v3332 = vunpack.c.h.b16 %v2930
  %v3333 = vunpack.c.l.b16 %v2931
  %v3334 = vunpack.c.h.b16 %v2931
  %v3335 = vunpack.c.l.b16 %v2932
  %v3336 = vunpack.c.h.b16 %v2932
  %v3337 = vunpack.c.l.b16 %v2933
  %v3338 = vunpack.c.h.b16 %v2933
  %v3339 = vunpack.c.l.b16 %v2934
  %v3340 = vunpack.c.h.b16 %v2934
  %v3341 = vunpack.c.l.b16 %v2935
  %v3342 = vunpack.c.h.b16 %v2935
  %v3343 = vunpack.c.l.b16 %v2936
  %v3344 = vunpack.c.h.b16 %v2936
  %v3345 = vunpack.c.l.b16 %v2937
  %v3346 = vunpack.c.h.b16 %v2937
  %v3347 = vunpack.c.l.b16 %v2938
  %v3348 = vunpack.c.h.b16 %v2938
  %v3349 = vunpack.c.l.b16 %v2939
  %v3350 = vunpack.c.h.b16 %v2939
  %v3351 = vunpack.c.l.b16 %v2940
  %v3352 = vunpack.c.h.b16 %v2940
  %v3353 = vunpack.c.l.b16 %v2941
  %v3354 = vunpack.c.h.b16 %v2941
  %v3355 = vunpack.c.l.b16 %v2942
  %v3356 = vunpack.c.h.b16 %v2942
  %v3357 = vunpack.c.l.b16 %v2943
  %v3358 = vunpack.c.h.b16 %v2943
  %v3359 = vunpack.c.l.b16 %v2944
  %v3360 = vunpack.c.h.b16 %v2944
  %v3361 = vunpack.c.l.b16 %v2945
  %v3362 = vunpack.c.h.b16 %v2945
  %v3363 = vunpack.c.l.b16 %v2946
  %v3364 = vunpack.c.h.b16 %v2946
  %v3365 = vunpack.c.l.b16 %v2947
  %v3366 = vunpack.c.h.b16 %v2947
  %v3367 = vunpack.c.l.b16 %v2948
  %v3368 = vunpack.c.h.b16 %v2948
  %v3369 = vunpack.c.l.b16 %v2949
  %v3370 = vunpack.c.h.b16 %v2949
  %v3371 = vunpack.c.l.b16 %v2950
  %v3372 = vunpack.c.h.b16 %v2950
  %v3373 = vunpack.c.l.b16 %v2951
  %v3374 = vunpack.c.h.b16 %v2951
  %v3375 = vunpack.c.l.b16 %v2952
  %v3376 = vunpack.c.h.b16 %v2952
  %v3377 = vunpack.c.l.b16 %v2953
  %v3378 = vunpack.c.h.b16 %v2953
  %v3379 = vunpack.c.l.b16 %v2954
  %v3380 = vunpack.c.h.b16 %v2954
  %v3381 = vunpack.c.l.b16 %v2955
  %v3382 = vunpack.c.h.b16 %v2955
  %v3383 = vunpack.c.l.b16 %v2956
  %v3384 = vunpack.c.h.b16 %v2956
  %v3385 = vunpack.c.l.b16 %v2957
  %v3386 = vunpack.c.h.b16 %v2957
  %v3387 = vunpack.c.l.b16 %v2958
  %v3388 = vunpack.c.h.b16 %v2958
  %v3389 = vunpack.c.l.b16 %v2959
  %v3390 = vunpack.c.h.b16 %v2959
  %v3391 = vunpack.c.l.b16 %v2960
  %v3392 = vunpack.c.h.b16 %v2960
  %v3393 = vunpack.c.l.b16 %v2961
  %v3394 = vunpack.c.h.b16 %v2961
  %v3395 = vunpack.c.l.b16 %v2962
  %v3396 = vunpack.c.h.b16 %v2962
  %v3397 = vunpack.c.l.b16 %v2963
  %v3398 = vunpack.c.h.b16 %v2963
  %v3399 = vunpack.c.l.b16 %v2964
  %v3400 = vunpack.c.h.b16 %v2964
  %v3401 = vunpack.c.l.b16 %v2965
  %v3402 = vunpack.c.h.b16 %v2965
  %v3403 = vunpack.c.l.b16 %v2966
  %v3404 = vunpack.c.h.b16 %v2966
  %v3405 = vunpack.c.l.b16 %v2967
  %v3406 = vunpack.c.h.b16 %v2967
  %v3407 = vunpack.c.l.b16 %v2968
  %v3408 = vunpack.c.h.b16 %v2968
  %v3409 = vunpack.c.l.b16 %v2969
  %v3410 = vunpack.c.h.b16 %v2969
  %v3411 = vunpack.c.l.b16 %v2970
  %v3412 = vunpack.c.h.b16 %v2970
  %v3413 = vunpack.c.l.b16 %v2971
  %v3414 = vunpack.c.h.b16 %v2971
  %v3415 = vunpack.c.l.b16 %v2972
  %v3416 = vunpack.c.h.b16 %v2972
  %v3417 = vunpack.c.l.b16 %v2973
  %v3418 = vunpack.c.h.b16 %v2973
  %v3419 = vunpack.c.l.b16 %v2974
  %v3420 = vunpack.c.h.b16 %v2974
  %v3421 = vunpack.c.l.b16 %v2975
  %v3422 = vunpack.c.h.b16 %v2975
  %v3423 = vunpack.c.l.b16 %v2976
  %v3424 = vunpack.c.h.b16 %v2976
  %v3425 = vunpack.c.l.b16 %v2977
  %v3426 = vunpack.c.h.b16 %v2977
  %v3427 = vunpack.c.l.b16 %v2978
  %v3428 = vunpack.c.h.b16 %v2978
  %v3429 = vunpack.c.l.b16 %v2979
  %v3430 = vunpack.c.h.b16 %v2979
  %v3431 = vunpack.c.l.b16 %v2980
  %v3432 = vunpack.c.h.b16 %v2980
  %v3433 = vunpack.c.l.b16 %v2981
  %v3434 = vunpack.c.h.b16 %v2981
  %v3435 = vunpack.c.l.b16 %v2982
  %v3436 = vunpack.c.h.b16 %v2982
  %v3437 = vunpack.c.l.b16 %v2983
  %v3438 = vunpack.c.h.b16 %v2983
  %v3439 = vunpack.c.l.b16 %v2984
  %v3440 = vunpack.c.h.b16 %v2984
  %v3441 = vunpack.c.l.b16 %v2985
  %v3442 = vunpack.c.h.b16 %v2985
  %v3443 = vunpack.c.l.b16 %v2986
  %v3444 = vunpack.c.h.b16 %v2986
  %v3445 = vunpack.c.l.b16 %v2987
  %v3446 = vunpack.c.h.b16 %v2987
  %v3447 = vunpack.c.l.b16 %v2988
  %v3448 = vunpack.c.h.b16 %v2988
  %v3449 = vunpack.c.l.b16 %v2989
  %v3450 = vunpack.c.h.b16 %v2989
  %v3451 = vunpack.c.l.b16 %v2990
  %v3452 = vunpack.c.h.b16 %v2990
  %v3453 = vunpack.c.l.b16 %v2991
  %v3454 = vunpack.c.h.b16 %v2991
  %v3455 = vunpack.c.l.b16 %v2992
  %v3456 = vunpack.c.h.b16 %v2992
  %v3457 = vunpack.c.l.b16 %v2993
  %v3458 = vunpack.c.h.b16 %v2993
  %v3459 = vunpack.c.l.b16 %v2994
  %v3460 = vunpack.c.h.b16 %v2994
  %v3461 = vunpack.c.l.b16 %v2995
  %v3462 = vunpack.c.h.b16 %v2995
  %v3463 = vunpack.c.l.b16 %v2996
  %v3464 = vunpack.c.h.b16 %v2996
  %v3465 = vunpack.c.l.b16 %v2997
  %v3466 = vunpack.c.h.b16 %v2997
  %v3467 = vunpack.c.l.b16 %v2998
  %v3468 = vunpack.c.h.b16 %v2998
  %v3469 = vunpack.c.l.b16 %v2999
  %v3470 = vunpack.c.h.b16 %v2999
  %v3471 = vunpack.c.l.b16 %v3000
  %v3472 = vunpack.c.h.b16 %v3000
  %v3473 = vunpack.c.l.b16 %v3001
  %v3474 = vunpack.c.h.b16 %v3001
  %v3475 = vunpack.c.l.b16 %v3002
  %v3476 = vunpack.c.h.b16 %v3002
  %v3477 = vunpack.c.l.b16 %v3003
  %v3478 = vunpack.c.h.b16 %v3003
  %v3479 = vunpack.c.l.b16 %v3004
  %v3480 = vunpack.c.h.b16 %v3004
  %v3481 = vunpack.c.l.b16 %v3005
  %v3482 = vunpack.c.h.b16 %v3005
  %v3483 = vunpack.c.l.b16 %v3006
  %v3484 = vunpack.c.h.b16 %v3006
  %v3485 = vunpack.c.l.b16 %v3007
  %v3486 = vunpack.c.h.b16 %v3007
  %v3487 = vunpack.c.l.b16 %v3008
  %v3488 = vunpack.c.h.b16 %v3008
  %v3489 = vunpack.c.l.b16 %v3009
  %v3490 = vunpack.c.h.b16 %v3009
  %v3491 = vunpack.c.l.b16 %v3010
  %v3492 = vunpack.c.h.b16 %v3010
  %v3493 = vunpack.c.l.b16 %v3011
  %v3494 = vunpack.c.h.b16 %v3011
  %v3495 = vunpack.c.l.b16 %v3012
  %v3496 = vunpack.c.h.b16 %v3012
  %v3497 = vunpack.c.l.b16 %v3013
  %v3498 = vunpack.c.h.b16 %v3013
  %v3499 = vunpack.c.l.b16 %v3014
  %v3500 = vunpack.c.h.b16 %v3014
  %v3501 = vunpack.c.l.b16 %v3015
  %v3502 = vunpack.c.h.b16 %v3015
  %v3503 = vunpack.c.l.b16 %v3016
  %v3504 = vunpack.c.h.b16 %v3016
  %v3505 = vunpack.c.l.b16 %v3017
  %v3506 = vunpack.c.h.b16 %v3017
  %v3507 = vunpack.c.l.b16 %v3018
  %v3508 = vunpack.c.h.b16 %v3018
  %v3509 = vunpack.c.l.b16 %v3019
  %v3510 = vunpack.c.h.b16 %v3019
  %v3511 = vunpack.c.l.b16 %v3020
  %v3512 = vunpack.c.h.b16 %v3020
  %v3513 = vunpack.c.l.b16 %v3021
  %v3514 = vunpack.c.h.b16 %v3021
  %v3515 = vunpack.c.l.b16 %v3022
  %v3516 = vunpack.c.h.b16 %v3022
  %v3517 = vunpack.c.l.b16 %v3023
  %v3518 = vunpack.c.h.b16 %v3023
  %v3519 = vunpack.c.l.b16 %v3024
  %v3520 = vunpack.c.h.b16 %v3024
  %v3521 = vunpack.c.l.b16 %v3025
  %v3522 = vunpack.c.h.b16 %v3025
  %v3523 = vunpack.c.l.b16 %v3026
  %v3524 = vunpack.c.h.b16 %v3026
  %v3525 = vunpack.c.l.b16 %v3027
  %v3526 = vunpack.c.h.b16 %v3027
  %v3527 = vunpack.c.l.b16 %v3028
  %v3528 = vunpack.c.h.b16 %v3028
  %v3529 = vunpack.c.l.b16 %v3029
  %v3530 = vunpack.c.h.b16 %v3029
  %v3531 = vunpack.c.l.b16 %v3030
  %v3532 = vunpack.c.h.b16 %v3030
  %v3533 = vunpack.c.l.b16 %v3031
  %v3534 = vunpack.c.h.b16 %v3031
  %v3535 = vunpack.c.l.b16 %v3032
  %v3536 = vunpack.c.h.b16 %v3032
  %v3537 = vunpack.c.l.b16 %v3033
  %v3538 = vunpack.c.h.b16 %v3033
  %v3539 = vunpack.c.l.b16 %v3034
  %v3540 = vunpack.c.h.b16 %v3034
  %v3541 = vunpack.c.l.b16 %v3035
  %v3542 = vunpack.c.h.b16 %v3035
  %v3543 = vunpack.c.l.b16 %v3036
  %v3544 = vunpack.c.h.b16 %v3036
  %v3545 = vunpack.c.l.b16 %v3037
  %v3546 = vunpack.c.h.b16 %v3037
  %v3547 = vunpack.c.l.b16 %v3038
  %v3548 = vunpack.c.h.b16 %v3038
  %v3549 = vunpack.c.l.b16 %v3039
  %v3550 = vunpack.c.h.b16 %v3039
  %v3551 = vunpack.c.l.b16 %v3040
  %v3552 = vunpack.c.h.b16 %v3040
  %v3553 = vunpack.c.l.b16 %v3041
  %v3554 = vunpack.c.h.b16 %v3041
  %v3555 = vunpack.c.l.b16 %v3042
  %v3556 = vunpack.c.h.b16 %v3042
  %v3557 = vunpack.c.l.b16 %v3043
  %v3558 = vunpack.c.h.b16 %v3043
  %v3559 = vunpack.c.l.b16 %v3044
  %v3560 = vunpack.c.h.b16 %v3044
  %v3561 = vunpack.c.l.b16 %v3045
  %v3562 = vunpack.c.h.b16 %v3045
  %v3563 = vunpack.c.l.b16 %v3046
  %v3564 = vunpack.c.h.b16 %v3046
  %v3565 = vunpack.c.l.b16 %v3047
  %v3566 = vunpack.c.h.b16 %v3047
  %v3567 = vunpack.c.l.b16 %v3048
  %v3568 = vunpack.c.h.b16 %v3048
  %v3569 = vunpack.c.l.b16 %v3049
  %v3570 = vunpack.c.h.b16 %v3049
  %v3571 = vunpack.c.l.b16 %v3050
  %v3572 = vunpack.c.h.b16 %v3050
  %v3573 = vunpack.c.l.b16 %v3051
  %v3574 = vunpack.c.h.b16 %v3051
  %v3575 = vunpack.c.l.b16 %v3052
  %v3576 = vunpack.c.h.b16 %v3052
  %v3577 = vunpack.c.l.b16 %v3053
  %v3578 = vunpack.c.h.b16 %v3053
  %v3579 = vunpack.c.l.b16 %v3054
  %v3580 = vunpack.c.h.b16 %v3054
  %v3581 = vunpack.c.l.b16 %v3055
  %v3582 = vunpack.c.h.b16 %v3055
  %v3583 = vunpack.c.l.b16 %v3056
  %v3584 = vunpack.c.h.b16 %v3056
  %v3585 = vunpack.c.l.b16 %v3057
  %v3586 = vunpack.c.h.b16 %v3057
  %v3587 = vunpack.c.l.b16 %v3058
  %v3588 = vunpack.c.h.b16 %v3058
  %v3589 = vunpack.c.l.b16 %v3059
  %v3590 = vunpack.c.h.b16 %v3059
  %v3591 = vunpack.c.l.b16 %v3060
  %v3592 = vunpack.c.h.b16 %v3060
  %v3593 = vunpack.c.l.b16 %v3061
  %v3594 = vunpack.c.h.b16 %v3061
  %v3595 = vunpack.c.l.b16 %v3062
  %v3596 = vunpack.c.h.b16 %v3062
  %v3597 = vunpack.c.l.b16 %v3063
  %v3598 = vunpack.c.h.b16 %v3063
  %v3599 = vunpack.c.l.b16 %v3064
  %v3600 = vunpack.c.h.b16 %v3064
  %v3601 = vunpack.c.l.b16 %v3065
  %v3602 = vunpack.c.h.b16 %v3065
  %v3603 = vunpack.c.l.b16 %v3066
  %v3604 = vunpack.c.h.b16 %v3066
  %v3605 = vunpack.c.l.b16 %v3067
  %v3606 = vunpack.c.h.b16 %v3067
  %v3607 = vunpack.c.l.b16 %v3068
  %v3608 = vunpack.c.h.b16 %v3068
  %v3609 = vunpack.c.l.b16 %v3069
  %v3610 = vunpack.c.h.b16 %v3069
  %v3611 = vunpack.c.l.b16 %v3070
  %v3612 = vunpack.c.h.b16 %v3070
  %v3613 = vunpack.c.l.b16 %v3071
  %v3614 = vunpack.c.h.b16 %v3071
  %v3615 = vunpack.c.l.b16 %v3072
  %v3616 = vunpack.c.h.b16 %v3072
  %v3617 = vunpack.c.l.b16 %v3073
  %v3618 = vunpack.c.h.b16 %v3073
  %v3619 = vunpack.c.l.b16 %v3074
  %v3620 = vunpack.c.h.b16 %v3074
  %v3621 = vunpack.c.l.b16 %v3075
  %v3622 = vunpack.c.h.b16 %v3075
  %v3623 = vunpack.c.l.b16 %v3076
  %v3624 = vunpack.c.h.b16 %v3076
  %v3625 = vunpack.c.l.b16 %v3077
  %v3626 = vunpack.c.h.b16 %v3077
  %v3627 = vunpack.c.l.b16 %v3078
  %v3628 = vunpack.c.h.b16 %v3078
  %v3629 = vunpack.c.l.b16 %v3079
  %v3630 = vunpack.c.h.b16 %v3079
  %v3631 = vunpack.c.l.b16 %v3080
  %v3632 = vunpack.c.h.b16 %v3080
  %v3633 = vunpack.c.l.b16 %v3081
  %v3634 = vunpack.c.h.b16 %v3081
  %v3635 = vunpack.c.l.b16 %v3082
  %v3636 = vunpack.c.h.b16 %v3082
  %v3637 = vunpack.c.l.b16 %v3083
  %v3638 = vunpack.c.h.b16 %v3083
  %v3639 = vunpack.c.l.b16 %v3084
  %v3640 = vunpack.c.h.b16 %v3084
  %v3641 = vunpack.c.l.b16 %v3085
  %v3642 = vunpack.c.h.b16 %v3085
  %v3643 = vunpack.c.l.b16 %v3086
  %v3644 = vunpack.c.h.b16 %v3086
  %v3645 = vunpack.c.l.b16 %v3087
  %v3646 = vunpack.c.h.b16 %v3087
  %v3647 = vunpack.c.l.b16 %v3088
  %v3648 = vunpack.c.h.b16 %v3088
  %v3649 = vunpack.c.l.b16 %v3089
  %v3650 = vunpack.c.h.b16 %v3089
  %v3651 = vunpack.c.l.b16 %v3090
  %v3652 = vunpack.c.h.b16 %v3090
  %v3653 = vunpack.c.l.b16 %v3091
  %v3654 = vunpack.c.h.b16 %v3091
  %v3655 = vunpack.c.l.b16 %v3092
  %v3656 = vunpack.c.h.b16 %v3092
  %v3657 = vunpack.c.l.b16 %v3093
  %v3658 = vunpack.c.h.b16 %v3093
  %v3659 = vunpack.c.l.b16 %v3094
  %v3660 = vunpack.c.h.b16 %v3094
  %v3661 = vunpack.c.l.b16 %v3095
  %v3662 = vunpack.c.h.b16 %v3095
  %v3663 = vunpack.c.l.b16 %v3096
  %v3664 = vunpack.c.h.b16 %v3096
  %v3665 = vunpack.c.l.b16 %v3097
  %v3666 = vunpack.c.h.b16 %v3097
  %v3667 = vunpack.c.l.b16 %v3098
  %v3668 = vunpack.c.h.b16 %v3098
  %v3669 = vunpack.c.l.b16 %v3099
  %v3670 = vunpack.c.h.b16 %v3099
  %v3671 = vunpack.c.l.b16 %v3100
  %v3672 = vunpack.c.h.b16 %v3100
  %v3673 = vunpack.c.l.b16 %v3101
  %v3674 = vunpack.c.h.b16 %v3101
  %v3675 = vunpack.c.l.b16 %v3102
  %v3676 = vunpack.c.h.b16 %v3102
  %v3677 = vunpack.c.l.b16 %v3103
  %v3678 = vunpack.c.h.b16 %v3103
  %v3679 = vunpack.c.l.b16 %v3104
  %v3680 = vunpack.c.h.b16 %v3104
  %v3681 = vpack.c.b16 %v3301, %v3297
  %v3682 = vpack.c.b16 %v3302, %v3298
  %v3683 = vpack.c.b16 %v3303, %v3299
  %v3684 = vpack.c.b16 %v3304, %v3300
  %v3685 = vpack.c.b16 %v3309, %v3305
  %v3686 = vpack.c.b16 %v3310, %v3306
  %v3687 = vpack.c.b16 %v3311, %v3307
  %v3688 = vpack.c.b16 %v3312, %v3308
  %v3689 = vpack.c.b16 %v3317, %v3313
  %v3690 = vpack.c.b16 %v3318, %v3314
  %v3691 = vpack.c.b16 %v3319, %v3315
  %v3692 = vpack.c.b16 %v3320, %v3316
  %v3693 = vpack.c.b16 %v3325, %v3321
  %v3694 = vpack.c.b16 %v3326, %v3322
  %v3695 = vpack.c.b16 %v3327, %v3323
  %v3696 = vpack.c.b16 %v3328, %v3324
  %v3697 = vpack.c.b16 %v3333, %v3329
  %v3698 = vpack.c.b16 %v3334, %v3330
  %v3699 = vpack.c.b16 %v3335, %v3331
  %v3700 = vpack.c.b16 %v3336, %v3332
  %v3701 = vpack.c.b16 %v3341, %v3337
  %v3702 = vpack.c.b16 %v3342, %v3338
  %v3703 = vpack.c.b16 %v3343, %v3339
  %v3704 = vpack.c.b16 %v3344, %v3340
  %v3705 = vpack.c.b16 %v3349, %v3345
  %v3706 = vpack.c.b16 %v3350, %v3346
  %v3707 = vpack.c.b16 %v3351, %v3347
  %v3708 = vpack.c.b16 %v3352, %v3348
  %v3709 = vpack.c.b16 %v3357, %v3353
  %v3710 = vpack.c.b16 %v3358, %v3354
  %v3711 = vpack.c.b16 %v3359, %v3355
  %v3712 = vpack.c.b16 %v3360, %v3356
  %v3713 = vpack.c.b16 %v3365, %v3361
  %v3714 = vpack.c.b16 %v3366, %v3362
  %v3715 = vpack.c.b16 %v3367, %v3363
  %v3716 = vpack.c.b16 %v3368, %v3364
  %v3717 = vpack.c.b16 %v3373, %v3369
  %v3718 = vpack.c.b16 %v3374, %v3370
  %v3719 = vpack.c.b16 %v3375, %v3371
  %v3720 = vpack.c.b16 %v3376, %v3372
  %v3721 = vpack.c.b16 %v3381, %v3377
  %v3722 = vpack.c.b16 %v3382, %v3378
  %v3723 = vpack.c.b16 %v3383, %v3379
  %v3724 = vpack.c.b16 %v3384, %v3380
  %v3725 = vpack.c.b16 %v3389, %v3385
  %v3726 = vpack.c.b16 %v3390, %v3386
  %v3727 = vpack.c.b16 %v3391, %v3387
  %v3728 = vpack.c.b16 %v3392, %v3388
  %v3729 = vpack.c.b16 %v3397, %v3393
  %v3730 = vpack.c.b16 %v3398, %v3394
  %v3731 = vpack.c.b16 %v3399, %v3395
  %v3732 = vpack.c.b16 %v3400, %v3396
  %v3733 = vpack.c.b16 %v3405, %v3401
  %v3734 = vpack.c.b16 %v3406, %v3402
  %v3735 = vpack.c.b16 %v3407, %v3403
  %v3736 = vpack.c.b16 %v3408, %v3404
  %v3737 = vpack.c.b16 %v3413, %v3409
  %v3738 = vpack.c.b16 %v3414, %v3410
  %v3739 = vpack.c.b16 %v3415, %v3411
  %v3740 = vpack.c.b16 %v3416, %v3412
  %v3741 = vpack.c.b16 %v3421, %v3417
  %v3742 = vpack.c.b16 %v3422, %v3418
  %v3743 = vpack.c.b16 %v3423, %v3419
  %v3744 = vpack.c.b16 %v3424, %v3420
  %v3745 = vpack.c.b16 %v3429, %v3425
  %v3746 = vpack.c.b16 %v3430, %v3426
  %v3747 = vpack.c.b16 %v3431, %v3427
  %v3748 = vpack.c.b16 %v3432, %v3428
  %v3749 = vpack.c.b16 %v3437, %v3433
  %v3750 = vpack.c.b16 %v3438, %v3434
  %v3751 = vpack.c.b16 %v3439, %v3435
  %v3752 = vpack.c.b16 %v3440, %v3436
  %v3753 = vpack.c.b16 %v3445, %v3441
  %v3754 = vpack.c.b16 %v3446, %v3442
  %v3755 = vpack.c.b16 %v3447, %v3443
  %v3756 = vpack.c.b16 %v3448, %v3444
  %v3757 = vpack.c.b16 %v3453, %v3449
  %v3758 = vpack.c.b16 %v3454, %v3450
  %v3759 = vpack.c.b16 %v3455, %v3451
  %v3760 = vpack.c.b16 %v3456, %v3452
  %v3761 = vpack.c.b16 %v3461, %v3457
  %v3762 = vpack.c.b16 %v3462, %v3458
  %v3763 = vpack.c.b16 %v3463, %v3459
  %v3764 = vpack.c.b16 %v3464, %v3460
  %v3765 = vpack.c.b16 %v3469, %v3465
  %v3766 = vpack.c.b16 %v3470, %v3466
  %v3767 = vpack.c.b16 %v3471, %v3467
  %v3768 = vpack.c.b16 %v3472, %v3468
  %v3769 = vpack.c.b16 %v3477, %v3473
  %v3770 = vpack.c.b16 %v3478, %v3474
  %v3771 = vpack.c.b16 %v3479, %v3475
  %v3772 = vpack.c.b16 %v3480, %v3476
  %v3773 = vpack.c.b16 %v3485, %v3481
  %v3774 = vpack.c.b16 %v3486, %v3482
  %v3775 = vpack.c.b16 %v3487, %v3483
  %v3776 = vpack.c.b16 %v3488, %v3484
  %v3777 = vpack.c.b16 %v3493, %v3489
  %v3778 = vpack.c.b16 %v3494, %v3490
  %v3779 = vpack.c.b16 %v3495, %v3491
  %v3780 = vpack.c.b16 %v3496, %v3492
  %v3781 = vpack.c.b16 %v3501, %v3497
  %v3782 = vpack.c.b16 %v3502, %v3498
  %v3783 = vpack.c.b16 %v3503, %v3499
  %v3784 = vpack.c.b16 %v3504, %v3500
  %v3785 = vpack.c.b16 %v3509, %v3505
  %v3786 = vpack.c.b16 %v3510, %v3506
  %v3787 = vpack.c.b16 %v3511, %v3507
  %v3788 = vpack.c.b16 %v3512, %v3508
  %v3789 = vpack.c.b16 %v3517, %v3513
  %v3790 = vpack.c.b16 %v3518, %v3514
  %v3791 = vpack.c.b16 %v3519, %v3515
  %v3792 = vpack.c.b16 %v3520, %v3516
  %v3793 = vpack.c.b16 %v3525, %v3521
  %v3794 = vpack.c.b16 %v3526, %v3522
  %v3795 = vpack.c.b16 %v3527, %v3523
  %v3796 = vpack.c.b16 %v3528, %v3524
  %v3797 = vpack.c.b16 %v3533, %v3529
  %v3798 = vpack.c.b16 %v3534, %v3530
  %v3799 = vpack.c.b16 %v3535, %v3531
  %v3800 = vpack.c.b16 %v3536, %v3532
  %v3801 = vpack.c.b16 %v3541, %v3537
  %v3802 = vpack.c.b16 %v3542, %v3538
  %v3803 = vpack.c.b16 %v3543, %v3539
  %v3804 = vpack.c.b16 %v3544, %v3540
  %v3805 = vpack.c.b16 %v3549, %v3545
  %v3806 = vpack.c.b16 %v3550, %v3546
  %v3807 = vpack.c.b16 %v3551, %v3547
  %v3808 = vpack.c.b16 %v3552, %v3548
  %v3809 = vpack.c.b16 %v3557, %v3553
  %v3810 = vpack.c.b16 %v3558, %v3554
  %v3811 = vpack.c.b16 %v3559, %v3555
  %v3812 = vpack.c.b16 %v3560, %v3556
  %v3813 = vpack.c.b16 %v3565, %v3561
  %v3814 = vpack.c.b16 %v3566, %v3562
  %v3815 = vpack.c.b16 %v3567, %v3563
  %v3816 = vpack.c.b16 %v3568, %v3564
  %v3817 = vpack.c.b16 %v3573, %v3569
  %v3818 = vpack.c.b16 %v3574, %v3570
  %v3819 = vpack.c.b16 %v3575, %v3571
  %v3820 = vpack.c.b16 %v3576, %v3572
  %v3821 = vpack.c.b16 %v3581, %v3577
  %v3822 = vpack.c.b16 %v3582, %v3578
  %v3823 = vpack.c.b16 %v3583, %v3579
  %v3824 = vpack.c.b16 %v3584, %v3580
  %v3825 = vpack.c.b16 %v3589, %v3585
  %v3826 = vpack.c.b16 %v3590, %v3586
  %v3827 = vpack.c.b16 %v3591, %v3587
  %v3828 = vpack.c.b16 %v3592, %v3588
  %v3829 = vpack.c.b16 %v3597, %v3593
  %v3830 = vpack.c.b16 %v3598, %v3594
  %v3831 = vpack.c.b16 %v3599, %v3595
  %v3832 = vpack.c.b16 %v3600, %v3596
  %v3833 = vpack.c.b16 %v3605, %v3601
  %v3834 = vpack.c.b16 %v3606, %v3602
  %v3835 = vpack.c.b16 %v3607, %v3603
  %v3836 = vpack.c.b16 %v3608, %v3604
  %v3837 = vpack.c.b16 %v3613, %v3609
  %v3838 = vpack.c.b16 %v3614, %v3610
  %v3839 = vpack.c.b16 %v3615, %v3611
  %v3840 = vpack.c.b16 %v3616, %v3612
  %v3841 = vpack.c.b16 %v3621, %v3617
  %v3842 = vpack.c.b16 %v3622, %v3618
  %v3843 = vpack.c.b16 %v3623, %v3619
  %v3844 = vpack.c.b16 %v3624, %v3620
  %v3845 = vpack.c.b16 %v3629, %v3625
  %v3846 = vpack.c.b16 %v3630, %v3626
  %v3847 = vpack.c.b16 %v3631, %v3627
  %v3848 = vpack.c.b16 %v3632, %v3628
  %v3849 = vpack.c.b16 %v3637, %v3633
  %v3850 = vpack.c.b16 %v3638, %v3634
  %v3851 = vpack.c.b16 %v3639, %v3635
  %v3852 = vpack.c.b16 %v3640, %v3636
  %v3853 = vpack.c.b16 %v3645, %v3641
  %v3854 = vpack.c.b16 %v3646, %v3642
  %v3855 = vpack.c.b16 %v3647, %v3643
  %v3856 = vpack.c.b16 %v3648, %v3644
  %v3857 = vpack.c.b16 %v3653, %v3649
  %v3858 = vpack.c.b16 %v3654, %v3650
  %v3859 = vpack.c.b16 %v3655, %v3651
  %v3860 = vpack.c.b16 %v3656, %v3652
  %v3861 = vpack.c.b16 %v3661, %v3657
  %v3862 = vpack.c.b16 %v3662, %v3658
  %v3863 = vpack.c.b16 %v3663, %v3659
  %v3864 = vpack.c.b16 %v3664, %v3660
  %v3865 = vpack.c.b16 %v3669, %v3665
  %v3866 = vpack.c.b16 %v3670, %v3666
  %v3867 = vpack.c.b16 %v3671, %v3667
  %v3868 = vpack.c.b16 %v3672, %v3668
  %v3869 = vpack.c.b16 %v3677, %v3673
  %v3870 = vpack.c.b16 %v3678, %v3674
  %v3871 = vpack.c.b16 %v3679, %v3675
  %v3872 = vpack.c.b16 %v3680, %v3676
  %4065 = vmatprep.subr.bf16.mxu0 %v3682
  %4066 = vmatpush1.bf16.msra.mxu0 %v3681
  %4067 = vmatprep.subr.bf16.mxu0 %v3686
  %4068 = vmatpush1.bf16.msra.mxu0 %v3685
  %4069 = vmatprep.subr.bf16.mxu0 %v3690
  %4070 = vmatpush1.bf16.msra.mxu0 %v3689
  %4071 = vmatprep.subr.bf16.mxu0 %v3694
  %4072 = vmatpush1.bf16.msra.mxu0 %v3693
  %4073 = vmatprep.subr.bf16.mxu0 %v3698
  %4074 = vmatpush1.bf16.msra.mxu0 %v3697
  %4075 = vmatprep.subr.bf16.mxu0 %v3702
  %4076 = vmatpush1.bf16.msra.mxu0 %v3701
  %4077 = vmatprep.subr.bf16.mxu0 %v3706
  %4078 = vmatpush1.bf16.msra.mxu0 %v3705
  %4079 = vmatprep.subr.bf16.mxu0 %v3710
  %4080 = vmatpush1.bf16.msra.mxu0 %v3709
  %4081 = vmatprep.subr.bf16.mxu0 %v3714
  %4082 = vmatpush1.bf16.msra.mxu0 %v3713
  %4083 = vmatprep.subr.bf16.mxu0 %v3718
  %4084 = vmatpush1.bf16.msra.mxu0 %v3717
  %4085 = vmatprep.subr.bf16.mxu0 %v3722
  %4086 = vmatpush1.bf16.msra.mxu0 %v3721
  %4087 = vmatprep.subr.bf16.mxu0 %v3726
  %4088 = vmatpush1.bf16.msra.mxu0 %v3725
  %4089 = vmatprep.subr.bf16.mxu0 %v3730
  %4090 = vmatpush1.bf16.msra.mxu0 %v3729
  %4091 = vmatprep.subr.bf16.mxu0 %v3734
  %4092 = vmatpush1.bf16.msra.mxu0 %v3733
  %4093 = vmatprep.subr.bf16.mxu0 %v3738
  %4094 = vmatpush1.bf16.msra.mxu0 %v3737
  %4095 = vmatprep.subr.bf16.mxu0 %v3742
  %4096 = vmatpush1.bf16.msra.mxu0 %v3741
  %4097 = vmatprep.mubr.bf16.mxu0 %v603
  %4098 = vmatmul.mubr.bf16.gmra.mrb[0].mxu0 %v602
  %v4099 = vpop.f32.mrb[0].mxu0
  %v4100 = vadd.f32 0.0, %v4099
  %v4101 = vpop.f32.mrb[0].mxu0
  %v4102 = vadd.f32 0.0, %v4101
  %v4103 = vpop.f32.mrb[0].mxu0
  %v4104 = vadd.f32 0.0, %v4103
  %v4105 = vpop.f32.mrb[0].mxu0
  %v4106 = vadd.f32 0.0, %v4105
  %4107 = vmatprep.mubr.bf16.mxu0 %v609
  %4108 = vmatmul.mubr.bf16.gmra.mrb[0].mxu0 %v608
  %v4109 = vpop.f32.mrb[0].mxu0
  %v4110 = vadd.f32 0.0, %v4109
  %v4111 = vpop.f32.mrb[0].mxu0
  %v4112 = vadd.f32 0.0, %v4111
  %v4113 = vpop.f32.mrb[0].mxu0
  %v4114 = vadd.f32 0.0, %v4113
  %v4115 = vpop.f32.mrb[0].mxu0
  %v4116 = vadd.f32 0.0, %v4115
  %4117 = vmatprep.mubr.bf16.mxu0 %v615
  %4118 = vmatmul.mubr.bf16.gmra.mrb[0].mxu0 %v614
  %v4119 = vpop.f32.mrb[0].mxu0
  %v4120 = vadd.f32 0.0, %v4119
  %v4121 = vpop.f32.mrb[0].mxu0
  %v4122 = vadd.f32 0.0, %v4121
  %v4123 = vpop.f32.mrb[0].mxu0
  %v4124 = vadd.f32 0.0, %v4123
  %v4125 = vpop.f32.mrb[0].mxu0
  %v4126 = vadd.f32 0.0, %v4125
  %4127 = vmatprep.mubr.bf16.mxu0 %v621
  %4128 = vmatmul.mubr.bf16.gmra.mrb[0].mxu0 %v620
  %v4129 = vpop.f32.mrb[0].mxu0
  %v4130 = vadd.f32 0.0, %v4129
  %v4131 = vpop.f32.mrb[0].mxu0
  %v4132 = vadd.f32 0.0, %v4131
  %v4133 = vpop.f32.mrb[0].mxu0
  %v4134 = vadd.f32 0.0, %v4133
  %v4135 = vpop.f32.mrb[0].mxu0
  %v4136 = vadd.f32 0.0, %v4135
  %4137 = vmatprep.mubr.bf16.mxu0 %v627
  %4138 = vmatmul.mubr.bf16.gmra.mrb[0].mxu0 %v626
  %v4139 = vpop.f32.mrb[0].mxu0
  %v4140 = vadd.f32 0.0, %v4139
  %v4141 = vpop.f32.mrb[0].mxu0
  %v4142 = vadd.f32 0.0, %v4141
  %v4143 = vpop.f32.mrb[0].mxu0
  %v4144 = vadd.f32 0.0, %v4143
  %v4145 = vpop.f32.mrb[0].mxu0
  %v4146 = vadd.f32 0.0, %v4145
  %4147 = vmatprep.mubr.bf16.mxu0 %v633
  %4148 = vmatmul.mubr.bf16.gmra.mrb[0].mxu0 %v632
  %v4149 = vpop.f32.mrb[0].mxu0
  %v4150 = vadd.f32 0.0, %v4149
  %v4151 = vpop.f32.mrb[0].mxu0
  %v4152 = vadd.f32 0.0, %v4151
  %v4153 = vpop.f32.mrb[0].mxu0
  %v4154 = vadd.f32 0.0, %v4153
  %v4155 = vpop.f32.mrb[0].mxu0
  %v4156 = vadd.f32 0.0, %v4155
  %4157 = vmatprep.mubr.bf16.mxu0 %v639
  %4158 = vmatmul.mubr.bf16.gmra.mrb[0].mxu0 %v638
  %v4159 = vpop.f32.mrb[0].mxu0
  %v4160 = vadd.f32 0.0, %v4159
  %v4161 = vpop.f32.mrb[0].mxu0
  %v4162 = vadd.f32 0.0, %v4161
  %v4163 = vpop.f32.mrb[0].mxu0
  %v4164 = vadd.f32 0.0, %v4163
  %v4165 = vpop.f32.mrb[0].mxu0
  %v4166 = vadd.f32 0.0, %v4165
  %4167 = vmatprep.mubr.bf16.mxu0 %v645
  %4168 = vmatmul.mubr.bf16.gmra.mrb[0].mxu0 %v644
  %v4169 = vpop.f32.mrb[0].mxu0
  %v4170 = vadd.f32 0.0, %v4169
  %v4171 = vpop.f32.mrb[0].mxu0
  %v4172 = vadd.f32 0.0, %v4171
  %v4173 = vpop.f32.mrb[0].mxu0
  %v4174 = vadd.f32 0.0, %v4173
  %v4175 = vpop.f32.mrb[0].mxu0
  %v4176 = vadd.f32 0.0, %v4175
  %4177 = vmatprep.mubr.bf16.mxu0 %v651
  %4178 = vmatmul.mubr.bf16.gmra.mrb[0].mxu0 %v650
  %v4179 = vpop.f32.mrb[0].mxu0
  %v4180 = vadd.f32 0.0, %v4179
  %v4181 = vpop.f32.mrb[0].mxu0
  %v4182 = vadd.f32 0.0, %v4181
  %v4183 = vpop.f32.mrb[0].mxu0
  %v4184 = vadd.f32 0.0, %v4183
  %v4185 = vpop.f32.mrb[0].mxu0
  %v4186 = vadd.f32 0.0, %v4185
  %4187 = vmatprep.mubr.bf16.mxu0 %v657
  %4188 = vmatmul.mubr.bf16.gmra.mrb[0].mxu0 %v656
  %v4189 = vpop.f32.mrb[0].mxu0
  %v4190 = vadd.f32 0.0, %v4189
  %v4191 = vpop.f32.mrb[0].mxu0
  %v4192 = vadd.f32 0.0, %v4191
  %v4193 = vpop.f32.mrb[0].mxu0
  %v4194 = vadd.f32 0.0, %v4193
  %v4195 = vpop.f32.mrb[0].mxu0
  %v4196 = vadd.f32 0.0, %v4195
  %4197 = vmatprep.mubr.bf16.mxu0 %v663
  %4198 = vmatmul.mubr.bf16.gmra.mrb[0].mxu0 %v662
  %v4199 = vpop.f32.mrb[0].mxu0
  %v4200 = vadd.f32 0.0, %v4199
  %v4201 = vpop.f32.mrb[0].mxu0
  %v4202 = vadd.f32 0.0, %v4201
  %v4203 = vpop.f32.mrb[0].mxu0
  %v4204 = vadd.f32 0.0, %v4203
  %v4205 = vpop.f32.mrb[0].mxu0
  %v4206 = vadd.f32 0.0, %v4205
  %4207 = vmatprep.mubr.bf16.mxu0 %v669
  %4208 = vmatmul.mubr.bf16.gmra.mrb[0].mxu0 %v668
  %v4209 = vpop.f32.mrb[0].mxu0
  %v4210 = vadd.f32 0.0, %v4209
  %v4211 = vpop.f32.mrb[0].mxu0
  %v4212 = vadd.f32 0.0, %v4211
  %v4213 = vpop.f32.mrb[0].mxu0
  %v4214 = vadd.f32 0.0, %v4213
  %v4215 = vpop.f32.mrb[0].mxu0
  %v4216 = vadd.f32 0.0, %v4215
  %4217 = vmatprep.mubr.bf16.mxu0 %v675
  %4218 = vmatmul.mubr.bf16.gmra.mrb[0].mxu0 %v674
  %v4219 = vpop.f32.mrb[0].mxu0
  %v4220 = vadd.f32 0.0, %v4219
  %v4221 = vpop.f32.mrb[0].mxu0
  %v4222 = vadd.f32 0.0, %v4221
  %v4223 = vpop.f32.mrb[0].mxu0
  %v4224 = vadd.f32 0.0, %v4223
  %v4225 = vpop.f32.mrb[0].mxu0
  %v4226 = vadd.f32 0.0, %v4225
  %4227 = vmatprep.mubr.bf16.mxu0 %v681
  %4228 = vmatmul.mubr.bf16.gmra.mrb[0].mxu0 %v680
  %v4229 = vpop.f32.mrb[0].mxu0
  %v4230 = vadd.f32 0.0, %v4229
  %v4231 = vpop.f32.mrb[0].mxu0
  %v4232 = vadd.f32 0.0, %v4231
  %v4233 = vpop.f32.mrb[0].mxu0
  %v4234 = vadd.f32 0.0, %v4233
  %v4235 = vpop.f32.mrb[0].mxu0
  %v4236 = vadd.f32 0.0, %v4235
  %4237 = vmatprep.mubr.bf16.mxu0 %v687
  %4238 = vmatmul.mubr.bf16.gmra.mrb[0].mxu0 %v686
  %v4239 = vpop.f32.mrb[0].mxu0
  %v4240 = vadd.f32 0.0, %v4239
  %v4241 = vpop.f32.mrb[0].mxu0
  %v4242 = vadd.f32 0.0, %v4241
  %v4243 = vpop.f32.mrb[0].mxu0
  %v4244 = vadd.f32 0.0, %v4243
  %v4245 = vpop.f32.mrb[0].mxu0
  %v4246 = vadd.f32 0.0, %v4245
  %4247 = vmatprep.mubr.bf16.mxu0 %v693
  %4248 = vmatmul.mubr.bf16.gmra.mrb[0].mxu0 %v692
  %v4249 = vpop.f32.mrb[0].mxu0
  %v4250 = vadd.f32 0.0, %v4249
  %v4251 = vpop.f32.mrb[0].mxu0
  %v4252 = vadd.f32 0.0, %v4251
  %v4253 = vpop.f32.mrb[0].mxu0
  %v4254 = vadd.f32 0.0, %v4253
  %v4255 = vpop.f32.mrb[0].mxu0
  %v4256 = vadd.f32 0.0, %v4255
  %4257 = vdwg.mxu0
  %4258 = vmatprep.subr.bf16.mxu0 %v3746
  %4259 = vmatpush1.bf16.msra.mxu0 %v3745
  %4260 = vmatprep.subr.bf16.mxu0 %v3750
  %4261 = vmatpush1.bf16.msra.mxu0 %v3749
  %4262 = vmatprep.subr.bf16.mxu0 %v3754
  %4263 = vmatpush1.bf16.msra.mxu0 %v3753
  %4264 = vmatprep.subr.bf16.mxu0 %v3758
  %4265 = vmatpush1.bf16.msra.mxu0 %v3757
  %4266 = vmatprep.subr.bf16.mxu0 %v3762
  %4267 = vmatpush1.bf16.msra.mxu0 %v3761
  %4268 = vmatprep.subr.bf16.mxu0 %v3766
  %4269 = vmatpush1.bf16.msra.mxu0 %v3765
  %4270 = vmatprep.subr.bf16.mxu0 %v3770
  %4271 = vmatpush1.bf16.msra.mxu0 %v3769
  %4272 = vmatprep.subr.bf16.mxu0 %v3774
  %4273 = vmatpush1.bf16.msra.mxu0 %v3773
  %4274 = vmatprep.subr.bf16.mxu0 %v3778
  %4275 = vmatpush1.bf16.msra.mxu0 %v3777
  %4276 = vmatprep.subr.bf16.mxu0 %v3782
  %4277 = vmatpush1.bf16.msra.mxu0 %v3781
  %4278 = vmatprep.subr.bf16.mxu0 %v3786
  %4279 = vmatpush1.bf16.msra.mxu0 %v3785
  %4280 = vmatprep.subr.bf16.mxu0 %v3790
  %4281 = vmatpush1.bf16.msra.mxu0 %v3789
  %4282 = vmatprep.subr.bf16.mxu0 %v3794
  %4283 = vmatpush1.bf16.msra.mxu0 %v3793
  %4284 = vmatprep.subr.bf16.mxu0 %v3798
  %4285 = vmatpush1.bf16.msra.mxu0 %v3797
  %4286 = vmatprep.subr.bf16.mxu0 %v3802
  %4287 = vmatpush1.bf16.msra.mxu0 %v3801
  %4288 = vmatprep.subr.bf16.mxu0 %v3806
  %4289 = vmatpush1.bf16.msra.mxu0 %v3805
  %4290 = vmatprep.mubr.bf16.mxu0 %v605
  %4291 = vmatmul.mubr.bf16.gmra.mrb[0].mxu0 %v604
  %v4292 = vpop.f32.mrb[0].mxu0
  %v4293 = vadd.f32 %v4100, %v4292
  %v4294 = vpop.f32.mrb[0].mxu0
  %v4295 = vadd.f32 %v4102, %v4294
  %v4296 = vpop.f32.mrb[0].mxu0
  %v4297 = vadd.f32 %v4104, %v4296
  %v4298 = vpop.f32.mrb[0].mxu0
  %v4299 = vadd.f32 %v4106, %v4298
  %4300 = vmatprep.mubr.bf16.mxu0 %v611
  %4301 = vmatmul.mubr.bf16.gmra.mrb[0].mxu0 %v610
  %v4302 = vpop.f32.mrb[0].mxu0
  %v4303 = vadd.f32 %v4110, %v4302
  %v4304 = vpop.f32.mrb[0].mxu0
  %v4305 = vadd.f32 %v4112, %v4304
  %v4306 = vpop.f32.mrb[0].mxu0
  %v4307 = vadd.f32 %v4114, %v4306
  %v4308 = vpop.f32.mrb[0].mxu0
  %v4309 = vadd.f32 %v4116, %v4308
  %4310 = vmatprep.mubr.bf16.mxu0 %v617
  %4311 = vmatmul.mubr.bf16.gmra.mrb[0].mxu0 %v616
  %v4312 = vpop.f32.mrb[0].mxu0
  %v4313 = vadd.f32 %v4120, %v4312
  %v4314 = vpop.f32.mrb[0].mxu0
  %v4315 = vadd.f32 %v4122, %v4314
  %v4316 = vpop.f32.mrb[0].mxu0
  %v4317 = vadd.f32 %v4124, %v4316
  %v4318 = vpop.f32.mrb[0].mxu0
  %v4319 = vadd.f32 %v4126, %v4318
  %4320 = vmatprep.mubr.bf16.mxu0 %v623
  %4321 = vmatmul.mubr.bf16.gmra.mrb[0].mxu0 %v622
  %v4322 = vpop.f32.mrb[0].mxu0
  %v4323 = vadd.f32 %v4130, %v4322
  %v4324 = vpop.f32.mrb[0].mxu0
  %v4325 = vadd.f32 %v4132, %v4324
  %v4326 = vpop.f32.mrb[0].mxu0
  %v4327 = vadd.f32 %v4134, %v4326
  %v4328 = vpop.f32.mrb[0].mxu0
  %v4329 = vadd.f32 %v4136, %v4328
  %4330 = vmatprep.mubr.bf16.mxu0 %v629
  %4331 = vmatmul.mubr.bf16.gmra.mrb[0].mxu0 %v628
  %v4332 = vpop.f32.mrb[0].mxu0
  %v4333 = vadd.f32 %v4140, %v4332
  %v4334 = vpop.f32.mrb[0].mxu0
  %v4335 = vadd.f32 %v4142, %v4334
  %v4336 = vpop.f32.mrb[0].mxu0
  %v4337 = vadd.f32 %v4144, %v4336
  %v4338 = vpop.f32.mrb[0].mxu0
  %v4339 = vadd.f32 %v4146, %v4338
  %4340 = vmatprep.mubr.bf16.mxu0 %v635
  %4341 = vmatmul.mubr.bf16.gmra.mrb[0].mxu0 %v634
  %v4342 = vpop.f32.mrb[0].mxu0
  %v4343 = vadd.f32 %v4150, %v4342
  %v4344 = vpop.f32.mrb[0].mxu0
  %v4345 = vadd.f32 %v4152, %v4344
  %v4346 = vpop.f32.mrb[0].mxu0
  %v4347 = vadd.f32 %v4154, %v4346
  %v4348 = vpop.f32.mrb[0].mxu0
  %v4349 = vadd.f32 %v4156, %v4348
  %4350 = vmatprep.mubr.bf16.mxu0 %v641
  %4351 = vmatmul.mubr.bf16.gmra.mrb[0].mxu0 %v640
  %v4352 = vpop.f32.mrb[0].mxu0
  %v4353 = vadd.f32 %v4160, %v4352
  %v4354 = vpop.f32.mrb[0].mxu0
  %v4355 = vadd.f32 %v4162, %v4354
  %v4356 = vpop.f32.mrb[0].mxu0
  %v4357 = vadd.f32 %v4164, %v4356
  %v4358 = vpop.f32.mrb[0].mxu0
  %v4359 = vadd.f32 %v4166, %v4358
  %4360 = vmatprep.mubr.bf16.mxu0 %v647
  %4361 = vmatmul.mubr.bf16.gmra.mrb[0].mxu0 %v646
  %v4362 = vpop.f32.mrb[0].mxu0
  %v4363 = vadd.f32 %v4170, %v4362
  %v4364 = vpop.f32.mrb[0].mxu0
  %v4365 = vadd.f32 %v4172, %v4364
  %v4366 = vpop.f32.mrb[0].mxu0
  %v4367 = vadd.f32 %v4174, %v4366
  %v4368 = vpop.f32.mrb[0].mxu0
  %v4369 = vadd.f32 %v4176, %v4368
  %4370 = vmatprep.mubr.bf16.mxu0 %v653
  %4371 = vmatmul.mubr.bf16.gmra.mrb[0].mxu0 %v652
  %v4372 = vpop.f32.mrb[0].mxu0
  %v4373 = vadd.f32 %v4180, %v4372
  %v4374 = vpop.f32.mrb[0].mxu0
  %v4375 = vadd.f32 %v4182, %v4374
  %v4376 = vpop.f32.mrb[0].mxu0
  %v4377 = vadd.f32 %v4184, %v4376
  %v4378 = vpop.f32.mrb[0].mxu0
  %v4379 = vadd.f32 %v4186, %v4378
  %4380 = vmatprep.mubr.bf16.mxu0 %v659
  %4381 = vmatmul.mubr.bf16.gmra.mrb[0].mxu0 %v658
  %v4382 = vpop.f32.mrb[0].mxu0
  %v4383 = vadd.f32 %v4190, %v4382
  %v4384 = vpop.f32.mrb[0].mxu0
  %v4385 = vadd.f32 %v4192, %v4384
  %v4386 = vpop.f32.mrb[0].mxu0
  %v4387 = vadd.f32 %v4194, %v4386
  %v4388 = vpop.f32.mrb[0].mxu0
  %v4389 = vadd.f32 %v4196, %v4388
  %4390 = vmatprep.mubr.bf16.mxu0 %v665
  %4391 = vmatmul.mubr.bf16.gmra.mrb[0].mxu0 %v664
  %v4392 = vpop.f32.mrb[0].mxu0
  %v4393 = vadd.f32 %v4200, %v4392
  %v4394 = vpop.f32.mrb[0].mxu0
  %v4395 = vadd.f32 %v4202, %v4394
  %v4396 = vpop.f32.mrb[0].mxu0
  %v4397 = vadd.f32 %v4204, %v4396
  %v4398 = vpop.f32.mrb[0].mxu0
  %v4399 = vadd.f32 %v4206, %v4398
  %4400 = vmatprep.mubr.bf16.mxu0 %v671
  %4401 = vmatmul.mubr.bf16.gmra.mrb[0].mxu0 %v670
  %v4402 = vpop.f32.mrb[0].mxu0
  %v4403 = vadd.f32 %v4210, %v4402
  %v4404 = vpop.f32.mrb[0].mxu0
  %v4405 = vadd.f32 %v4212, %v4404
  %v4406 = vpop.f32.mrb[0].mxu0
  %v4407 = vadd.f32 %v4214, %v4406
  %v4408 = vpop.f32.mrb[0].mxu0
  %v4409 = vadd.f32 %v4216, %v4408
  %4410 = vmatprep.mubr.bf16.mxu0 %v677
  %4411 = vmatmul.mubr.bf16.gmra.mrb[0].mxu0 %v676
  %v4412 = vpop.f32.mrb[0].mxu0
  %v4413 = vadd.f32 %v4220, %v4412
  %v4414 = vpop.f32.mrb[0].mxu0
  %v4415 = vadd.f32 %v4222, %v4414
  %v4416 = vpop.f32.mrb[0].mxu0
  %v4417 = vadd.f32 %v4224, %v4416
  %v4418 = vpop.f32.mrb[0].mxu0
  %v4419 = vadd.f32 %v4226, %v4418
  %4420 = vmatprep.mubr.bf16.mxu0 %v683
  %4421 = vmatmul.mubr.bf16.gmra.mrb[0].mxu0 %v682
  %v4422 = vpop.f32.mrb[0].mxu0
  %v4423 = vadd.f32 %v4230, %v4422
  %v4424 = vpop.f32.mrb[0].mxu0
  %v4425 = vadd.f32 %v4232, %v4424
  %v4426 = vpop.f32.mrb[0].mxu0
  %v4427 = vadd.f32 %v4234, %v4426
  %v4428 = vpop.f32.mrb[0].mxu0
  %v4429 = vadd.f32 %v4236, %v4428
  %4430 = vmatprep.mubr.bf16.mxu0 %v689
  %4431 = vmatmul.mubr.bf16.gmra.mrb[0].mxu0 %v688
  %v4432 = vpop.f32.mrb[0].mxu0
  %v4433 = vadd.f32 %v4240, %v4432
  %v4434 = vpop.f32.mrb[0].mxu0
  %v4435 = vadd.f32 %v4242, %v4434
  %v4436 = vpop.f32.mrb[0].mxu0
  %v4437 = vadd.f32 %v4244, %v4436
  %v4438 = vpop.f32.mrb[0].mxu0
  %v4439 = vadd.f32 %v4246, %v4438
  %4440 = vmatprep.mubr.bf16.mxu0 %v695
  %4441 = vmatmul.mubr.bf16.gmra.mrb[0].mxu0 %v694
  %v4442 = vpop.f32.mrb[0].mxu0
  %v4443 = vadd.f32 %v4250, %v4442
  %v4444 = vpop.f32.mrb[0].mxu0
  %v4445 = vadd.f32 %v4252, %v4444
  %v4446 = vpop.f32.mrb[0].mxu0
  %v4447 = vadd.f32 %v4254, %v4446
  %v4448 = vpop.f32.mrb[0].mxu0
  %v4449 = vadd.f32 %v4256, %v4448
  %4450 = vdwg.mxu0
  %4451 = vmatprep.subr.bf16.mxu0 %v3810
  %4452 = vmatpush1.bf16.msra.mxu0 %v3809
  %4453 = vmatprep.subr.bf16.mxu0 %v3814
  %4454 = vmatpush1.bf16.msra.mxu0 %v3813
  %4455 = vmatprep.subr.bf16.mxu0 %v3818
  %4456 = vmatpush1.bf16.msra.mxu0 %v3817
  %4457 = vmatprep.subr.bf16.mxu0 %v3822
  %4458 = vmatpush1.bf16.msra.mxu0 %v3821
  %4459 = vmatprep.subr.bf16.mxu0 %v3826
  %4460 = vmatpush1.bf16.msra.mxu0 %v3825
  %4461 = vmatprep.subr.bf16.mxu0 %v3830
  %4462 = vmatpush1.bf16.msra.mxu0 %v3829
  %4463 = vmatprep.subr.bf16.mxu0 %v3834
  %4464 = vmatpush1.bf16.msra.mxu0 %v3833
  %4465 = vmatprep.subr.bf16.mxu0 %v3838
  %4466 = vmatpush1.bf16.msra.mxu0 %v3837
  %4467 = vmatprep.subr.bf16.mxu0 %v3842
  %4468 = vmatpush1.bf16.msra.mxu0 %v3841
  %4469 = vmatprep.subr.bf16.mxu0 %v3846
  %4470 = vmatpush1.bf16.msra.mxu0 %v3845
  %4471 = vmatprep.subr.bf16.mxu0 %v3850
  %4472 = vmatpush1.bf16.msra.mxu0 %v3849
  %4473 = vmatprep.subr.bf16.mxu0 %v3854
  %4474 = vmatpush1.bf16.msra.mxu0 %v3853
  %4475 = vmatprep.subr.bf16.mxu0 %v3858
  %4476 = vmatpush1.bf16.msra.mxu0 %v3857
  %4477 = vmatprep.subr.bf16.mxu0 %v3862
  %4478 = vmatpush1.bf16.msra.mxu0 %v3861
  %4479 = vmatprep.subr.bf16.mxu0 %v3866
  %4480 = vmatpush1.bf16.msra.mxu0 %v3865
  %4481 = vmatprep.subr.bf16.mxu0 %v3870
  %4482 = vmatpush1.bf16.msra.mxu0 %v3869
  %4483 = vmatprep.mubr.bf16.mxu0 %v607
  %4484 = vmatmul.mubr.bf16.gmra.mrb[0].mxu0 %v606
  %v4485 = vpop.f32.mrb[0].mxu0
  %v4486 = vadd.f32 %v4293, %v4485
  %v4487 = vpop.f32.mrb[0].mxu0
  %v4488 = vadd.f32 %v4295, %v4487
  %v4489 = vpop.f32.mrb[0].mxu0
  %v4490 = vadd.f32 %v4297, %v4489
  %v4491 = vpop.f32.mrb[0].mxu0
  %v4492 = vadd.f32 %v4299, %v4491
  %4493 = vmatprep.mubr.bf16.mxu0 %v613
  %4494 = vmatmul.mubr.bf16.gmra.mrb[0].mxu0 %v612
  %v4495 = vpop.f32.mrb[0].mxu0
  %v4496 = vadd.f32 %v4303, %v4495
  %v4497 = vpop.f32.mrb[0].mxu0
  %v4498 = vadd.f32 %v4305, %v4497
  %v4499 = vpop.f32.mrb[0].mxu0
  %v4500 = vadd.f32 %v4307, %v4499
  %v4501 = vpop.f32.mrb[0].mxu0
  %v4502 = vadd.f32 %v4309, %v4501
  %4503 = vmatprep.mubr.bf16.mxu0 %v619
  %4504 = vmatmul.mubr.bf16.gmra.mrb[0].mxu0 %v618
  %v4505 = vpop.f32.mrb[0].mxu0
  %v4506 = vadd.f32 %v4313, %v4505
  %v4507 = vpop.f32.mrb[0].mxu0
  %v4508 = vadd.f32 %v4315, %v4507
  %v4509 = vpop.f32.mrb[0].mxu0
  %v4510 = vadd.f32 %v4317, %v4509
  %v4511 = vpop.f32.mrb[0].mxu0
  %v4512 = vadd.f32 %v4319, %v4511
  %4513 = vmatprep.mubr.bf16.mxu0 %v625
  %4514 = vmatmul.mubr.bf16.gmra.mrb[0].mxu0 %v624
  %v4515 = vpop.f32.mrb[0].mxu0
  %v4516 = vadd.f32 %v4323, %v4515
  %v4517 = vpop.f32.mrb[0].mxu0
  %v4518 = vadd.f32 %v4325, %v4517
  %v4519 = vpop.f32.mrb[0].mxu0
  %v4520 = vadd.f32 %v4327, %v4519
  %v4521 = vpop.f32.mrb[0].mxu0
  %v4522 = vadd.f32 %v4329, %v4521
  %4523 = vmatprep.mubr.bf16.mxu0 %v631
  %4524 = vmatmul.mubr.bf16.gmra.mrb[0].mxu0 %v630
  %v4525 = vpop.f32.mrb[0].mxu0
  %v4526 = vadd.f32 %v4333, %v4525
  %v4527 = vpop.f32.mrb[0].mxu0
  %v4528 = vadd.f32 %v4335, %v4527
  %v4529 = vpop.f32.mrb[0].mxu0
  %v4530 = vadd.f32 %v4337, %v4529
  %v4531 = vpop.f32.mrb[0].mxu0
  %v4532 = vadd.f32 %v4339, %v4531
  %4533 = vmatprep.mubr.bf16.mxu0 %v637
  %4534 = vmatmul.mubr.bf16.gmra.mrb[0].mxu0 %v636
  %v4535 = vpop.f32.mrb[0].mxu0
  %v4536 = vadd.f32 %v4343, %v4535
  %v4537 = vpop.f32.mrb[0].mxu0
  %v4538 = vadd.f32 %v4345, %v4537
  %v4539 = vpop.f32.mrb[0].mxu0
  %v4540 = vadd.f32 %v4347, %v4539
  %v4541 = vpop.f32.mrb[0].mxu0
  %v4542 = vadd.f32 %v4349, %v4541
  %4543 = vmatprep.mubr.bf16.mxu0 %v643
  %4544 = vmatmul.mubr.bf16.gmra.mrb[0].mxu0 %v642
  %v4545 = vpop.f32.mrb[0].mxu0
  %v4546 = vadd.f32 %v4353, %v4545
  %v4547 = vpop.f32.mrb[0].mxu0
  %v4548 = vadd.f32 %v4355, %v4547
  %v4549 = vpop.f32.mrb[0].mxu0
  %v4550 = vadd.f32 %v4357, %v4549
  %v4551 = vpop.f32.mrb[0].mxu0
  %v4552 = vadd.f32 %v4359, %v4551
  %4553 = vmatprep.mubr.bf16.mxu0 %v649
  %4554 = vmatmul.mubr.bf16.gmra.mrb[0].mxu0 %v648
  %v4555 = vpop.f32.mrb[0].mxu0
  %v4556 = vadd.f32 %v4363, %v4555
  %v4557 = vpop.f32.mrb[0].mxu0
  %v4558 = vadd.f32 %v4365, %v4557
  %v4559 = vpop.f32.mrb[0].mxu0
  %v4560 = vadd.f32 %v4367, %v4559
  %v4561 = vpop.f32.mrb[0].mxu0
  %v4562 = vadd.f32 %v4369, %v4561
  %4563 = vmatprep.mubr.bf16.mxu0 %v655
  %4564 = vmatmul.mubr.bf16.gmra.mrb[0].mxu0 %v654
  %v4565 = vpop.f32.mrb[0].mxu0
  %v4566 = vadd.f32 %v4373, %v4565
  %v4567 = vpop.f32.mrb[0].mxu0
  %v4568 = vadd.f32 %v4375, %v4567
  %v4569 = vpop.f32.mrb[0].mxu0
  %v4570 = vadd.f32 %v4377, %v4569
  %v4571 = vpop.f32.mrb[0].mxu0
  %v4572 = vadd.f32 %v4379, %v4571
  %4573 = vmatprep.mubr.bf16.mxu0 %v661
  %4574 = vmatmul.mubr.bf16.gmra.mrb[0].mxu0 %v660
  %v4575 = vpop.f32.mrb[0].mxu0
  %v4576 = vadd.f32 %v4383, %v4575
  %v4577 = vpop.f32.mrb[0].mxu0
  %v4578 = vadd.f32 %v4385, %v4577
  %v4579 = vpop.f32.mrb[0].mxu0
  %v4580 = vadd.f32 %v4387, %v4579
  %v4581 = vpop.f32.mrb[0].mxu0
  %v4582 = vadd.f32 %v4389, %v4581
  %4583 = vmatprep.mubr.bf16.mxu0 %v667
  %4584 = vmatmul.mubr.bf16.gmra.mrb[0].mxu0 %v666
  %v4585 = vpop.f32.mrb[0].mxu0
  %v4586 = vadd.f32 %v4393, %v4585
  %v4587 = vpop.f32.mrb[0].mxu0
  %v4588 = vadd.f32 %v4395, %v4587
  %v4589 = vpop.f32.mrb[0].mxu0
  %v4590 = vadd.f32 %v4397, %v4589
  %v4591 = vpop.f32.mrb[0].mxu0
  %v4592 = vadd.f32 %v4399, %v4591
  %4593 = vmatprep.mubr.bf16.mxu0 %v673
  %4594 = vmatmul.mubr.bf16.gmra.mrb[0].mxu0 %v672
  %v4595 = vpop.f32.mrb[0].mxu0
  %v4596 = vadd.f32 %v4403, %v4595
  %v4597 = vpop.f32.mrb[0].mxu0
  %v4598 = vadd.f32 %v4405, %v4597
  %v4599 = vpop.f32.mrb[0].mxu0
  %v4600 = vadd.f32 %v4407, %v4599
  %v4601 = vpop.f32.mrb[0].mxu0
  %v4602 = vadd.f32 %v4409, %v4601
  %4603 = vmatprep.mubr.bf16.mxu0 %v679
  %4604 = vmatmul.mubr.bf16.gmra.mrb[0].mxu0 %v678
  %v4605 = vpop.f32.mrb[0].mxu0
  %v4606 = vadd.f32 %v4413, %v4605
  %v4607 = vpop.f32.mrb[0].mxu0
  %v4608 = vadd.f32 %v4415, %v4607
  %v4609 = vpop.f32.mrb[0].mxu0
  %v4610 = vadd.f32 %v4417, %v4609
  %v4611 = vpop.f32.mrb[0].mxu0
  %v4612 = vadd.f32 %v4419, %v4611
  %4613 = vmatprep.mubr.bf16.mxu0 %v685
  %4614 = vmatmul.mubr.bf16.gmra.mrb[0].mxu0 %v684
  %v4615 = vpop.f32.mrb[0].mxu0
  %v4616 = vadd.f32 %v4423, %v4615
  %v4617 = vpop.f32.mrb[0].mxu0
  %v4618 = vadd.f32 %v4425, %v4617
  %v4619 = vpop.f32.mrb[0].mxu0
  %v4620 = vadd.f32 %v4427, %v4619
  %v4621 = vpop.f32.mrb[0].mxu0
  %v4622 = vadd.f32 %v4429, %v4621
  %4623 = vmatprep.mubr.bf16.mxu0 %v691
  %4624 = vmatmul.mubr.bf16.gmra.mrb[0].mxu0 %v690
  %v4625 = vpop.f32.mrb[0].mxu0
  %v4626 = vadd.f32 %v4433, %v4625
  %v4627 = vpop.f32.mrb[0].mxu0
  %v4628 = vadd.f32 %v4435, %v4627
  %v4629 = vpop.f32.mrb[0].mxu0
  %v4630 = vadd.f32 %v4437, %v4629
  %v4631 = vpop.f32.mrb[0].mxu0
  %v4632 = vadd.f32 %v4439, %v4631
  %4633 = vmatprep.mubr.bf16.mxu0 %v697
  %4634 = vmatmul.mubr.bf16.gmra.mrb[0].mxu0 %v696
  %v4635 = vpop.f32.mrb[0].mxu0
  %v4636 = vadd.f32 %v4443, %v4635
  %v4637 = vpop.f32.mrb[0].mxu0
  %v4638 = vadd.f32 %v4445, %v4637
  %v4639 = vpop.f32.mrb[0].mxu0
  %v4640 = vadd.f32 %v4447, %v4639
  %v4641 = vpop.f32.mrb[0].mxu0
  %v4642 = vadd.f32 %v4449, %v4641
  %4643 = vdwg.mxu0
  %4644 = vmatprep.subr.bf16.mxu0 %v3684
  %4645 = vmatpush1.bf16.msra.mxu0 %v3683
  %4646 = vmatprep.subr.bf16.mxu0 %v3688
  %4647 = vmatpush1.bf16.msra.mxu0 %v3687
  %4648 = vmatprep.subr.bf16.mxu0 %v3692
  %4649 = vmatpush1.bf16.msra.mxu0 %v3691
  %4650 = vmatprep.subr.bf16.mxu0 %v3696
  %4651 = vmatpush1.bf16.msra.mxu0 %v3695
  %4652 = vmatprep.subr.bf16.mxu0 %v3700
  %4653 = vmatpush1.bf16.msra.mxu0 %v3699
  %4654 = vmatprep.subr.bf16.mxu0 %v3704
  %4655 = vmatpush1.bf16.msra.mxu0 %v3703
  %4656 = vmatprep.subr.bf16.mxu0 %v3708
  %4657 = vmatpush1.bf16.msra.mxu0 %v3707
  %4658 = vmatprep.subr.bf16.mxu0 %v3712
  %4659 = vmatpush1.bf16.msra.mxu0 %v3711
  %4660 = vmatprep.subr.bf16.mxu0 %v3716
  %4661 = vmatpush1.bf16.msra.mxu0 %v3715
  %4662 = vmatprep.subr.bf16.mxu0 %v3720
  %4663 = vmatpush1.bf16.msra.mxu0 %v3719
  %4664 = vmatprep.subr.bf16.mxu0 %v3724
  %4665 = vmatpush1.bf16.msra.mxu0 %v3723
  %4666 = vmatprep.subr.bf16.mxu0 %v3728
  %4667 = vmatpush1.bf16.msra.mxu0 %v3727
  %4668 = vmatprep.subr.bf16.mxu0 %v3732
  %4669 = vmatpush1.bf16.msra.mxu0 %v3731
  %4670 = vmatprep.subr.bf16.mxu0 %v3736
  %4671 = vmatpush1.bf16.msra.mxu0 %v3735
  %4672 = vmatprep.subr.bf16.mxu0 %v3740
  %4673 = vmatpush1.bf16.msra.mxu0 %v3739
  %4674 = vmatprep.subr.bf16.mxu0 %v3744
  %4675 = vmatpush1.bf16.msra.mxu0 %v3743
  %4676 = vmatprep.mubr.bf16.mxu0 %v603
  %4677 = vmatmul.mubr.bf16.gmra.mrb[0].mxu0 %v602
  %v4678 = vpop.f32.mrb[0].mxu0
  %v4679 = vadd.f32 0.0, %v4678
  %v4680 = vpop.f32.mrb[0].mxu0
  %v4681 = vadd.f32 0.0, %v4680
  %v4682 = vpop.f32.mrb[0].mxu0
  %v4683 = vadd.f32 0.0, %v4682
  %v4684 = vpop.f32.mrb[0].mxu0
  %v4685 = vadd.f32 0.0, %v4684
  %4686 = vmatprep.mubr.bf16.mxu0 %v609
  %4687 = vmatmul.mubr.bf16.gmra.mrb[0].mxu0 %v608
  %v4688 = vpop.f32.mrb[0].mxu0
  %v4689 = vadd.f32 0.0, %v4688
  %v4690 = vpop.f32.mrb[0].mxu0
  %v4691 = vadd.f32 0.0, %v4690
  %v4692 = vpop.f32.mrb[0].mxu0
  %v4693 = vadd.f32 0.0, %v4692
  %v4694 = vpop.f32.mrb[0].mxu0
  %v4695 = vadd.f32 0.0, %v4694
  %4696 = vmatprep.mubr.bf16.mxu0 %v615
  %4697 = vmatmul.mubr.bf16.gmra.mrb[0].mxu0 %v614
  %v4698 = vpop.f32.mrb[0].mxu0
  %v4699 = vadd.f32 0.0, %v4698
  %v4700 = vpop.f32.mrb[0].mxu0
  %v4701 = vadd.f32 0.0, %v4700
  %v4702 = vpop.f32.mrb[0].mxu0
  %v4703 = vadd.f32 0.0, %v4702
  %v4704 = vpop.f32.mrb[0].mxu0
  %v4705 = vadd.f32 0.0, %v4704
  %4706 = vmatprep.mubr.bf16.mxu0 %v621
  %4707 = vmatmul.mubr.bf16.gmra.mrb[0].mxu0 %v620
  %v4708 = vpop.f32.mrb[0].mxu0
  %v4709 = vadd.f32 0.0, %v4708
  %v4710 = vpop.f32.mrb[0].mxu0
  %v4711 = vadd.f32 0.0, %v4710
  %v4712 = vpop.f32.mrb[0].mxu0
  %v4713 = vadd.f32 0.0, %v4712
  %v4714 = vpop.f32.mrb[0].mxu0
  %v4715 = vadd.f32 0.0, %v4714
  %4716 = vmatprep.mubr.bf16.mxu0 %v627
  %4717 = vmatmul.mubr.bf16.gmra.mrb[0].mxu0 %v626
  %v4718 = vpop.f32.mrb[0].mxu0
  %v4719 = vadd.f32 0.0, %v4718
  %v4720 = vpop.f32.mrb[0].mxu0
  %v4721 = vadd.f32 0.0, %v4720
  %v4722 = vpop.f32.mrb[0].mxu0
  %v4723 = vadd.f32 0.0, %v4722
  %v4724 = vpop.f32.mrb[0].mxu0
  %v4725 = vadd.f32 0.0, %v4724
  %4726 = vmatprep.mubr.bf16.mxu0 %v633
  %4727 = vmatmul.mubr.bf16.gmra.mrb[0].mxu0 %v632
  %v4728 = vpop.f32.mrb[0].mxu0
  %v4729 = vadd.f32 0.0, %v4728
  %v4730 = vpop.f32.mrb[0].mxu0
  %v4731 = vadd.f32 0.0, %v4730
  %v4732 = vpop.f32.mrb[0].mxu0
  %v4733 = vadd.f32 0.0, %v4732
  %v4734 = vpop.f32.mrb[0].mxu0
  %v4735 = vadd.f32 0.0, %v4734
  %4736 = vmatprep.mubr.bf16.mxu0 %v639
  %4737 = vmatmul.mubr.bf16.gmra.mrb[0].mxu0 %v638
  %v4738 = vpop.f32.mrb[0].mxu0
  %v4739 = vadd.f32 0.0, %v4738
  %v4740 = vpop.f32.mrb[0].mxu0
  %v4741 = vadd.f32 0.0, %v4740
  %v4742 = vpop.f32.mrb[0].mxu0
  %v4743 = vadd.f32 0.0, %v4742
  %v4744 = vpop.f32.mrb[0].mxu0
  %v4745 = vadd.f32 0.0, %v4744
  %4746 = vmatprep.mubr.bf16.mxu0 %v645
  %4747 = vmatmul.mubr.bf16.gmra.mrb[0].mxu0 %v644
  %v4748 = vpop.f32.mrb[0].mxu0
  %v4749 = vadd.f32 0.0, %v4748
  %v4750 = vpop.f32.mrb[0].mxu0
  %v4751 = vadd.f32 0.0, %v4750
  %v4752 = vpop.f32.mrb[0].mxu0
  %v4753 = vadd.f32 0.0, %v4752
  %v4754 = vpop.f32.mrb[0].mxu0
  %v4755 = vadd.f32 0.0, %v4754
  %4756 = vmatprep.mubr.bf16.mxu0 %v651
  %4757 = vmatmul.mubr.bf16.gmra.mrb[0].mxu0 %v650
  %v4758 = vpop.f32.mrb[0].mxu0
  %v4759 = vadd.f32 0.0, %v4758
  %v4760 = vpop.f32.mrb[0].mxu0
  %v4761 = vadd.f32 0.0, %v4760
  %v4762 = vpop.f32.mrb[0].mxu0
  %v4763 = vadd.f32 0.0, %v4762
  %v4764 = vpop.f32.mrb[0].mxu0
  %v4765 = vadd.f32 0.0, %v4764
  %4766 = vmatprep.mubr.bf16.mxu0 %v657
  %4767 = vmatmul.mubr.bf16.gmra.mrb[0].mxu0 %v656
  %v4768 = vpop.f32.mrb[0].mxu0
  %v4769 = vadd.f32 0.0, %v4768
  %v4770 = vpop.f32.mrb[0].mxu0
  %v4771 = vadd.f32 0.0, %v4770
  %v4772 = vpop.f32.mrb[0].mxu0
  %v4773 = vadd.f32 0.0, %v4772
  %v4774 = vpop.f32.mrb[0].mxu0
  %v4775 = vadd.f32 0.0, %v4774
  %4776 = vmatprep.mubr.bf16.mxu0 %v663
  %4777 = vmatmul.mubr.bf16.gmra.mrb[0].mxu0 %v662
  %v4778 = vpop.f32.mrb[0].mxu0
  %v4779 = vadd.f32 0.0, %v4778
  %v4780 = vpop.f32.mrb[0].mxu0
  %v4781 = vadd.f32 0.0, %v4780
  %v4782 = vpop.f32.mrb[0].mxu0
  %v4783 = vadd.f32 0.0, %v4782
  %v4784 = vpop.f32.mrb[0].mxu0
  %v4785 = vadd.f32 0.0, %v4784
  %4786 = vmatprep.mubr.bf16.mxu0 %v669
  %4787 = vmatmul.mubr.bf16.gmra.mrb[0].mxu0 %v668
  %v4788 = vpop.f32.mrb[0].mxu0
  %v4789 = vadd.f32 0.0, %v4788
  %v4790 = vpop.f32.mrb[0].mxu0
  %v4791 = vadd.f32 0.0, %v4790
  %v4792 = vpop.f32.mrb[0].mxu0
  %v4793 = vadd.f32 0.0, %v4792
  %v4794 = vpop.f32.mrb[0].mxu0
  %v4795 = vadd.f32 0.0, %v4794
  %4796 = vmatprep.mubr.bf16.mxu0 %v675
  %4797 = vmatmul.mubr.bf16.gmra.mrb[0].mxu0 %v674
  %v4798 = vpop.f32.mrb[0].mxu0
  %v4799 = vadd.f32 0.0, %v4798
  %v4800 = vpop.f32.mrb[0].mxu0
  %v4801 = vadd.f32 0.0, %v4800
  %v4802 = vpop.f32.mrb[0].mxu0
  %v4803 = vadd.f32 0.0, %v4802
  %v4804 = vpop.f32.mrb[0].mxu0
  %v4805 = vadd.f32 0.0, %v4804
  %4806 = vmatprep.mubr.bf16.mxu0 %v681
  %4807 = vmatmul.mubr.bf16.gmra.mrb[0].mxu0 %v680
  %v4808 = vpop.f32.mrb[0].mxu0
  %v4809 = vadd.f32 0.0, %v4808
  %v4810 = vpop.f32.mrb[0].mxu0
  %v4811 = vadd.f32 0.0, %v4810
  %v4812 = vpop.f32.mrb[0].mxu0
  %v4813 = vadd.f32 0.0, %v4812
  %v4814 = vpop.f32.mrb[0].mxu0
  %v4815 = vadd.f32 0.0, %v4814
  %4816 = vmatprep.mubr.bf16.mxu0 %v687
  %4817 = vmatmul.mubr.bf16.gmra.mrb[0].mxu0 %v686
  %v4818 = vpop.f32.mrb[0].mxu0
  %v4819 = vadd.f32 0.0, %v4818
  %v4820 = vpop.f32.mrb[0].mxu0
  %v4821 = vadd.f32 0.0, %v4820
  %v4822 = vpop.f32.mrb[0].mxu0
  %v4823 = vadd.f32 0.0, %v4822
  %v4824 = vpop.f32.mrb[0].mxu0
  %v4825 = vadd.f32 0.0, %v4824
  %4826 = vmatprep.mubr.bf16.mxu0 %v693
  %4827 = vmatmul.mubr.bf16.gmra.mrb[0].mxu0 %v692
  %v4828 = vpop.f32.mrb[0].mxu0
  %v4829 = vadd.f32 0.0, %v4828
  %v4830 = vpop.f32.mrb[0].mxu0
  %v4831 = vadd.f32 0.0, %v4830
  %v4832 = vpop.f32.mrb[0].mxu0
  %v4833 = vadd.f32 0.0, %v4832
  %v4834 = vpop.f32.mrb[0].mxu0
  %v4835 = vadd.f32 0.0, %v4834
  %4836 = vdwg.mxu0
  %4837 = vmatprep.subr.bf16.mxu0 %v3748
  %4838 = vmatpush1.bf16.msra.mxu0 %v3747
  %4839 = vmatprep.subr.bf16.mxu0 %v3752
  %4840 = vmatpush1.bf16.msra.mxu0 %v3751
  %4841 = vmatprep.subr.bf16.mxu0 %v3756
  %4842 = vmatpush1.bf16.msra.mxu0 %v3755
  %4843 = vmatprep.subr.bf16.mxu0 %v3760
  %4844 = vmatpush1.bf16.msra.mxu0 %v3759
  %4845 = vmatprep.subr.bf16.mxu0 %v3764
  %4846 = vmatpush1.bf16.msra.mxu0 %v3763
  %4847 = vmatprep.subr.bf16.mxu0 %v3768
  %4848 = vmatpush1.bf16.msra.mxu0 %v3767
  %4849 = vmatprep.subr.bf16.mxu0 %v3772
  %4850 = vmatpush1.bf16.msra.mxu0 %v3771
  %4851 = vmatprep.subr.bf16.mxu0 %v3776
  %4852 = vmatpush1.bf16.msra.mxu0 %v3775
  %4853 = vmatprep.subr.bf16.mxu0 %v3780
  %4854 = vmatpush1.bf16.msra.mxu0 %v3779
  %4855 = vmatprep.subr.bf16.mxu0 %v3784
  %4856 = vmatpush1.bf16.msra.mxu0 %v3783
  %4857 = vmatprep.subr.bf16.mxu0 %v3788
  %4858 = vmatpush1.bf16.msra.mxu0 %v3787
  %4859 = vmatprep.subr.bf16.mxu0 %v3792
  %4860 = vmatpush1.bf16.msra.mxu0 %v3791
  %4861 = vmatprep.subr.bf16.mxu0 %v3796
  %4862 = vmatpush1.bf16.msra.mxu0 %v3795
  %4863 = vmatprep.subr.bf16.mxu0 %v3800
  %4864 = vmatpush1.bf16.msra.mxu0 %v3799
  %4865 = vmatprep.subr.bf16.mxu0 %v3804
  %4866 = vmatpush1.bf16.msra.mxu0 %v3803
  %4867 = vmatprep.subr.bf16.mxu0 %v3808
  %4868 = vmatpush1.bf16.msra.mxu0 %v3807
  %4869 = vmatprep.mubr.bf16.mxu0 %v605
  %4870 = vmatmul.mubr.bf16.gmra.mrb[0].mxu0 %v604
  %v4871 = vpop.f32.mrb[0].mxu0
  %v4872 = vadd.f32 %v4679, %v4871
  %v4873 = vpop.f32.mrb[0].mxu0
  %v4874 = vadd.f32 %v4681, %v4873
  %v4875 = vpop.f32.mrb[0].mxu0
  %v4876 = vadd.f32 %v4683, %v4875
  %v4877 = vpop.f32.mrb[0].mxu0
  %v4878 = vadd.f32 %v4685, %v4877
  %4879 = vmatprep.mubr.bf16.mxu0 %v611
  %4880 = vmatmul.mubr.bf16.gmra.mrb[0].mxu0 %v610
  %v4881 = vpop.f32.mrb[0].mxu0
  %v4882 = vadd.f32 %v4689, %v4881
  %v4883 = vpop.f32.mrb[0].mxu0
  %v4884 = vadd.f32 %v4691, %v4883
  %v4885 = vpop.f32.mrb[0].mxu0
  %v4886 = vadd.f32 %v4693, %v4885
  %v4887 = vpop.f32.mrb[0].mxu0
  %v4888 = vadd.f32 %v4695, %v4887
  %4889 = vmatprep.mubr.bf16.mxu0 %v617
  %4890 = vmatmul.mubr.bf16.gmra.mrb[0].mxu0 %v616
  %v4891 = vpop.f32.mrb[0].mxu0
  %v4892 = vadd.f32 %v4699, %v4891
  %v4893 = vpop.f32.mrb[0].mxu0
  %v4894 = vadd.f32 %v4701, %v4893
  %v4895 = vpop.f32.mrb[0].mxu0
  %v4896 = vadd.f32 %v4703, %v4895
  %v4897 = vpop.f32.mrb[0].mxu0
  %v4898 = vadd.f32 %v4705, %v4897
  %4899 = vmatprep.mubr.bf16.mxu0 %v623
  %4900 = vmatmul.mubr.bf16.gmra.mrb[0].mxu0 %v622
  %v4901 = vpop.f32.mrb[0].mxu0
  %v4902 = vadd.f32 %v4709, %v4901
  %v4903 = vpop.f32.mrb[0].mxu0
  %v4904 = vadd.f32 %v4711, %v4903
  %v4905 = vpop.f32.mrb[0].mxu0
  %v4906 = vadd.f32 %v4713, %v4905
  %v4907 = vpop.f32.mrb[0].mxu0
  %v4908 = vadd.f32 %v4715, %v4907
  %4909 = vmatprep.mubr.bf16.mxu0 %v629
  %4910 = vmatmul.mubr.bf16.gmra.mrb[0].mxu0 %v628
  %v4911 = vpop.f32.mrb[0].mxu0
  %v4912 = vadd.f32 %v4719, %v4911
  %v4913 = vpop.f32.mrb[0].mxu0
  %v4914 = vadd.f32 %v4721, %v4913
  %v4915 = vpop.f32.mrb[0].mxu0
  %v4916 = vadd.f32 %v4723, %v4915
  %v4917 = vpop.f32.mrb[0].mxu0
  %v4918 = vadd.f32 %v4725, %v4917
  %4919 = vmatprep.mubr.bf16.mxu0 %v635
  %4920 = vmatmul.mubr.bf16.gmra.mrb[0].mxu0 %v634
  %v4921 = vpop.f32.mrb[0].mxu0
  %v4922 = vadd.f32 %v4729, %v4921
  %v4923 = vpop.f32.mrb[0].mxu0
  %v4924 = vadd.f32 %v4731, %v4923
  %v4925 = vpop.f32.mrb[0].mxu0
  %v4926 = vadd.f32 %v4733, %v4925
  %v4927 = vpop.f32.mrb[0].mxu0
  %v4928 = vadd.f32 %v4735, %v4927
  %4929 = vmatprep.mubr.bf16.mxu0 %v641
  %4930 = vmatmul.mubr.bf16.gmra.mrb[0].mxu0 %v640
  %v4931 = vpop.f32.mrb[0].mxu0
  %v4932 = vadd.f32 %v4739, %v4931
  %v4933 = vpop.f32.mrb[0].mxu0
  %v4934 = vadd.f32 %v4741, %v4933
  %v4935 = vpop.f32.mrb[0].mxu0
  %v4936 = vadd.f32 %v4743, %v4935
  %v4937 = vpop.f32.mrb[0].mxu0
  %v4938 = vadd.f32 %v4745, %v4937
  %4939 = vmatprep.mubr.bf16.mxu0 %v647
  %4940 = vmatmul.mubr.bf16.gmra.mrb[0].mxu0 %v646
  %v4941 = vpop.f32.mrb[0].mxu0
  %v4942 = vadd.f32 %v4749, %v4941
  %v4943 = vpop.f32.mrb[0].mxu0
  %v4944 = vadd.f32 %v4751, %v4943
  %v4945 = vpop.f32.mrb[0].mxu0
  %v4946 = vadd.f32 %v4753, %v4945
  %v4947 = vpop.f32.mrb[0].mxu0
  %v4948 = vadd.f32 %v4755, %v4947
  %4949 = vmatprep.mubr.bf16.mxu0 %v653
  %4950 = vmatmul.mubr.bf16.gmra.mrb[0].mxu0 %v652
  %v4951 = vpop.f32.mrb[0].mxu0
  %v4952 = vadd.f32 %v4759, %v4951
  %v4953 = vpop.f32.mrb[0].mxu0
  %v4954 = vadd.f32 %v4761, %v4953
  %v4955 = vpop.f32.mrb[0].mxu0
  %v4956 = vadd.f32 %v4763, %v4955
  %v4957 = vpop.f32.mrb[0].mxu0
  %v4958 = vadd.f32 %v4765, %v4957
  %4959 = vmatprep.mubr.bf16.mxu0 %v659
  %4960 = vmatmul.mubr.bf16.gmra.mrb[0].mxu0 %v658
  %v4961 = vpop.f32.mrb[0].mxu0
  %v4962 = vadd.f32 %v4769, %v4961
  %v4963 = vpop.f32.mrb[0].mxu0
  %v4964 = vadd.f32 %v4771, %v4963
  %v4965 = vpop.f32.mrb[0].mxu0
  %v4966 = vadd.f32 %v4773, %v4965
  %v4967 = vpop.f32.mrb[0].mxu0
  %v4968 = vadd.f32 %v4775, %v4967
  %4969 = vmatprep.mubr.bf16.mxu0 %v665
  %4970 = vmatmul.mubr.bf16.gmra.mrb[0].mxu0 %v664
  %v4971 = vpop.f32.mrb[0].mxu0
  %v4972 = vadd.f32 %v4779, %v4971
  %v4973 = vpop.f32.mrb[0].mxu0
  %v4974 = vadd.f32 %v4781, %v4973
  %v4975 = vpop.f32.mrb[0].mxu0
  %v4976 = vadd.f32 %v4783, %v4975
  %v4977 = vpop.f32.mrb[0].mxu0
  %v4978 = vadd.f32 %v4785, %v4977
  %4979 = vmatprep.mubr.bf16.mxu0 %v671
  %4980 = vmatmul.mubr.bf16.gmra.mrb[0].mxu0 %v670
  %v4981 = vpop.f32.mrb[0].mxu0
  %v4982 = vadd.f32 %v4789, %v4981
  %v4983 = vpop.f32.mrb[0].mxu0
  %v4984 = vadd.f32 %v4791, %v4983
  %v4985 = vpop.f32.mrb[0].mxu0
  %v4986 = vadd.f32 %v4793, %v4985
  %v4987 = vpop.f32.mrb[0].mxu0
  %v4988 = vadd.f32 %v4795, %v4987
  %4989 = vmatprep.mubr.bf16.mxu0 %v677
  %4990 = vmatmul.mubr.bf16.gmra.mrb[0].mxu0 %v676
  %v4991 = vpop.f32.mrb[0].mxu0
  %v4992 = vadd.f32 %v4799, %v4991
  %v4993 = vpop.f32.mrb[0].mxu0
  %v4994 = vadd.f32 %v4801, %v4993
  %v4995 = vpop.f32.mrb[0].mxu0
  %v4996 = vadd.f32 %v4803, %v4995
  %v4997 = vpop.f32.mrb[0].mxu0
  %v4998 = vadd.f32 %v4805, %v4997
  %4999 = vmatprep.mubr.bf16.mxu0 %v683
  %5000 = vmatmul.mubr.bf16.gmra.mrb[0].mxu0 %v682
  %v5001 = vpop.f32.mrb[0].mxu0
  %v5002 = vadd.f32 %v4809, %v5001
  %v5003 = vpop.f32.mrb[0].mxu0
  %v5004 = vadd.f32 %v4811, %v5003
  %v5005 = vpop.f32.mrb[0].mxu0
  %v5006 = vadd.f32 %v4813, %v5005
  %v5007 = vpop.f32.mrb[0].mxu0
  %v5008 = vadd.f32 %v4815, %v5007
  %5009 = vmatprep.mubr.bf16.mxu0 %v689
  %5010 = vmatmul.mubr.bf16.gmra.mrb[0].mxu0 %v688
  %v5011 = vpop.f32.mrb[0].mxu0
  %v5012 = vadd.f32 %v4819, %v5011
  %v5013 = vpop.f32.mrb[0].mxu0
  %v5014 = vadd.f32 %v4821, %v5013
  %v5015 = vpop.f32.mrb[0].mxu0
  %v5016 = vadd.f32 %v4823, %v5015
  %v5017 = vpop.f32.mrb[0].mxu0
  %v5018 = vadd.f32 %v4825, %v5017
  %5019 = vmatprep.mubr.bf16.mxu0 %v695
  %5020 = vmatmul.mubr.bf16.gmra.mrb[0].mxu0 %v694
  %v5021 = vpop.f32.mrb[0].mxu0
  %v5022 = vadd.f32 %v4829, %v5021
  %v5023 = vpop.f32.mrb[0].mxu0
  %v5024 = vadd.f32 %v4831, %v5023
  %v5025 = vpop.f32.mrb[0].mxu0
  %v5026 = vadd.f32 %v4833, %v5025
  %v5027 = vpop.f32.mrb[0].mxu0
  %v5028 = vadd.f32 %v4835, %v5027
  %5029 = vdwg.mxu0
  %5030 = vmatprep.subr.bf16.mxu0 %v3812
  %5031 = vmatpush1.bf16.msra.mxu0 %v3811
  %5032 = vmatprep.subr.bf16.mxu0 %v3816
  %5033 = vmatpush1.bf16.msra.mxu0 %v3815
  %5034 = vmatprep.subr.bf16.mxu0 %v3820
  %5035 = vmatpush1.bf16.msra.mxu0 %v3819
  %5036 = vmatprep.subr.bf16.mxu0 %v3824
  %5037 = vmatpush1.bf16.msra.mxu0 %v3823
  %5038 = vmatprep.subr.bf16.mxu0 %v3828
  %5039 = vmatpush1.bf16.msra.mxu0 %v3827
  %5040 = vmatprep.subr.bf16.mxu0 %v3832
  %5041 = vmatpush1.bf16.msra.mxu0 %v3831
  %5042 = vmatprep.subr.bf16.mxu0 %v3836
  %5043 = vmatpush1.bf16.msra.mxu0 %v3835
  %5044 = vmatprep.subr.bf16.mxu0 %v3840
  %5045 = vmatpush1.bf16.msra.mxu0 %v3839
  %5046 = vmatprep.subr.bf16.mxu0 %v3844
  %5047 = vmatpush1.bf16.msra.mxu0 %v3843
  %5048 = vmatprep.subr.bf16.mxu0 %v3848
  %5049 = vmatpush1.bf16.msra.mxu0 %v3847
  %5050 = vmatprep.subr.bf16.mxu0 %v3852
  %5051 = vmatpush1.bf16.msra.mxu0 %v3851
  %5052 = vmatprep.subr.bf16.mxu0 %v3856
  %5053 = vmatpush1.bf16.msra.mxu0 %v3855
  %5054 = vmatprep.subr.bf16.mxu0 %v3860
  %5055 = vmatpush1.bf16.msra.mxu0 %v3859
  %5056 = vmatprep.subr.bf16.mxu0 %v3864
  %5057 = vmatpush1.bf16.msra.mxu0 %v3863
  %5058 = vmatprep.subr.bf16.mxu0 %v3868
  %5059 = vmatpush1.bf16.msra.mxu0 %v3867
  %5060 = vmatprep.subr.bf16.mxu0 %v3872
  %5061 = vmatpush1.bf16.msra.mxu0 %v3871
  %5062 = vmatprep.mubr.bf16.mxu0 %v607
  %5063 = vmatmul.mubr.bf16.gmra.mrb[0].mxu0 %v606
  %v5064 = vpop.f32.mrb[0].mxu0
  %v5065 = vadd.f32 %v4872, %v5064
  %v5066 = vpop.f32.mrb[0].mxu0
  %v5067 = vadd.f32 %v4874, %v5066
  %v5068 = vpop.f32.mrb[0].mxu0
  %v5069 = vadd.f32 %v4876, %v5068
  %v5070 = vpop.f32.mrb[0].mxu0
  %v5071 = vadd.f32 %v4878, %v5070
  %5072 = vmatprep.mubr.bf16.mxu0 %v613
  %5073 = vmatmul.mubr.bf16.gmra.mrb[0].mxu0 %v612
  %v5074 = vpop.f32.mrb[0].mxu0
  %v5075 = vadd.f32 %v4882, %v5074
  %v5076 = vpop.f32.mrb[0].mxu0
  %v5077 = vadd.f32 %v4884, %v5076
  %v5078 = vpop.f32.mrb[0].mxu0
  %v5079 = vadd.f32 %v4886, %v5078
  %v5080 = vpop.f32.mrb[0].mxu0
  %v5081 = vadd.f32 %v4888, %v5080
  %5082 = vmatprep.mubr.bf16.mxu0 %v619
  %5083 = vmatmul.mubr.bf16.gmra.mrb[0].mxu0 %v618
  %v5084 = vpop.f32.mrb[0].mxu0
  %v5085 = vadd.f32 %v4892, %v5084
  %v5086 = vpop.f32.mrb[0].mxu0
  %v5087 = vadd.f32 %v4894, %v5086
  %v5088 = vpop.f32.mrb[0].mxu0
  %v5089 = vadd.f32 %v4896, %v5088
  %v5090 = vpop.f32.mrb[0].mxu0
  %v5091 = vadd.f32 %v4898, %v5090
  %5092 = vmatprep.mubr.bf16.mxu0 %v625
  %5093 = vmatmul.mubr.bf16.gmra.mrb[0].mxu0 %v624
  %v5094 = vpop.f32.mrb[0].mxu0
  %v5095 = vadd.f32 %v4902, %v5094
  %v5096 = vpop.f32.mrb[0].mxu0
  %v5097 = vadd.f32 %v4904, %v5096
  %v5098 = vpop.f32.mrb[0].mxu0
  %v5099 = vadd.f32 %v4906, %v5098
  %v5100 = vpop.f32.mrb[0].mxu0
  %v5101 = vadd.f32 %v4908, %v5100
  %5102 = vmatprep.mubr.bf16.mxu0 %v631
  %5103 = vmatmul.mubr.bf16.gmra.mrb[0].mxu0 %v630
  %v5104 = vpop.f32.mrb[0].mxu0
  %v5105 = vadd.f32 %v4912, %v5104
  %v5106 = vpop.f32.mrb[0].mxu0
  %v5107 = vadd.f32 %v4914, %v5106
  %v5108 = vpop.f32.mrb[0].mxu0
  %v5109 = vadd.f32 %v4916, %v5108
  %v5110 = vpop.f32.mrb[0].mxu0
  %v5111 = vadd.f32 %v4918, %v5110
  %5112 = vmatprep.mubr.bf16.mxu0 %v637
  %5113 = vmatmul.mubr.bf16.gmra.mrb[0].mxu0 %v636
  %v5114 = vpop.f32.mrb[0].mxu0
  %v5115 = vadd.f32 %v4922, %v5114
  %v5116 = vpop.f32.mrb[0].mxu0
  %v5117 = vadd.f32 %v4924, %v5116
  %v5118 = vpop.f32.mrb[0].mxu0
  %v5119 = vadd.f32 %v4926, %v5118
  %v5120 = vpop.f32.mrb[0].mxu0
  %v5121 = vadd.f32 %v4928, %v5120
  %5122 = vmatprep.mubr.bf16.mxu0 %v643
  %5123 = vmatmul.mubr.bf16.gmra.mrb[0].mxu0 %v642
  %v5124 = vpop.f32.mrb[0].mxu0
  %v5125 = vadd.f32 %v4932, %v5124
  %v5126 = vpop.f32.mrb[0].mxu0
  %v5127 = vadd.f32 %v4934, %v5126
  %v5128 = vpop.f32.mrb[0].mxu0
  %v5129 = vadd.f32 %v4936, %v5128
  %v5130 = vpop.f32.mrb[0].mxu0
  %v5131 = vadd.f32 %v4938, %v5130
  %5132 = vmatprep.mubr.bf16.mxu0 %v649
  %5133 = vmatmul.mubr.bf16.gmra.mrb[0].mxu0 %v648
  %v5134 = vpop.f32.mrb[0].mxu0
  %v5135 = vadd.f32 %v4942, %v5134
  %v5136 = vpop.f32.mrb[0].mxu0
  %v5137 = vadd.f32 %v4944, %v5136
  %v5138 = vpop.f32.mrb[0].mxu0
  %v5139 = vadd.f32 %v4946, %v5138
  %v5140 = vpop.f32.mrb[0].mxu0
  %v5141 = vadd.f32 %v4948, %v5140
  %5142 = vmatprep.mubr.bf16.mxu0 %v655
  %5143 = vmatmul.mubr.bf16.gmra.mrb[0].mxu0 %v654
  %v5144 = vpop.f32.mrb[0].mxu0
  %v5145 = vadd.f32 %v4952, %v5144
  %v5146 = vpop.f32.mrb[0].mxu0
  %v5147 = vadd.f32 %v4954, %v5146
  %v5148 = vpop.f32.mrb[0].mxu0
  %v5149 = vadd.f32 %v4956, %v5148
  %v5150 = vpop.f32.mrb[0].mxu0
  %v5151 = vadd.f32 %v4958, %v5150
  %5152 = vmatprep.mubr.bf16.mxu0 %v661
  %5153 = vmatmul.mubr.bf16.gmra.mrb[0].mxu0 %v660
  %v5154 = vpop.f32.mrb[0].mxu0
  %v5155 = vadd.f32 %v4962, %v5154
  %v5156 = vpop.f32.mrb[0].mxu0
  %v5157 = vadd.f32 %v4964, %v5156
  %v5158 = vpop.f32.mrb[0].mxu0
  %v5159 = vadd.f32 %v4966, %v5158
  %v5160 = vpop.f32.mrb[0].mxu0
  %v5161 = vadd.f32 %v4968, %v5160
  %5162 = vmatprep.mubr.bf16.mxu0 %v667
  %5163 = vmatmul.mubr.bf16.gmra.mrb[0].mxu0 %v666
  %v5164 = vpop.f32.mrb[0].mxu0
  %v5165 = vadd.f32 %v4972, %v5164
  %v5166 = vpop.f32.mrb[0].mxu0
  %v5167 = vadd.f32 %v4974, %v5166
  %v5168 = vpop.f32.mrb[0].mxu0
  %v5169 = vadd.f32 %v4976, %v5168
  %v5170 = vpop.f32.mrb[0].mxu0
  %v5171 = vadd.f32 %v4978, %v5170
  %5172 = vmatprep.mubr.bf16.mxu0 %v673
  %5173 = vmatmul.mubr.bf16.gmra.mrb[0].mxu0 %v672
  %v5174 = vpop.f32.mrb[0].mxu0
  %v5175 = vadd.f32 %v4982, %v5174
  %v5176 = vpop.f32.mrb[0].mxu0
  %v5177 = vadd.f32 %v4984, %v5176
  %v5178 = vpop.f32.mrb[0].mxu0
  %v5179 = vadd.f32 %v4986, %v5178
  %v5180 = vpop.f32.mrb[0].mxu0
  %v5181 = vadd.f32 %v4988, %v5180
  %5182 = vmatprep.mubr.bf16.mxu0 %v679
  %5183 = vmatmul.mubr.bf16.gmra.mrb[0].mxu0 %v678
  %v5184 = vpop.f32.mrb[0].mxu0
  %v5185 = vadd.f32 %v4992, %v5184
  %v5186 = vpop.f32.mrb[0].mxu0
  %v5187 = vadd.f32 %v4994, %v5186
  %v5188 = vpop.f32.mrb[0].mxu0
  %v5189 = vadd.f32 %v4996, %v5188
  %v5190 = vpop.f32.mrb[0].mxu0
  %v5191 = vadd.f32 %v4998, %v5190
  %5192 = vmatprep.mubr.bf16.mxu0 %v685
  %5193 = vmatmul.mubr.bf16.gmra.mrb[0].mxu0 %v684
  %v5194 = vpop.f32.mrb[0].mxu0
  %v5195 = vadd.f32 %v5002, %v5194
  %v5196 = vpop.f32.mrb[0].mxu0
  %v5197 = vadd.f32 %v5004, %v5196
  %v5198 = vpop.f32.mrb[0].mxu0
  %v5199 = vadd.f32 %v5006, %v5198
  %v5200 = vpop.f32.mrb[0].mxu0
  %v5201 = vadd.f32 %v5008, %v5200
  %5202 = vmatprep.mubr.bf16.mxu0 %v691
  %5203 = vmatmul.mubr.bf16.gmra.mrb[0].mxu0 %v690
  %v5204 = vpop.f32.mrb[0].mxu0
  %v5205 = vadd.f32 %v5012, %v5204
  %v5206 = vpop.f32.mrb[0].mxu0
  %v5207 = vadd.f32 %v5014, %v5206
  %v5208 = vpop.f32.mrb[0].mxu0
  %v5209 = vadd.f32 %v5016, %v5208
  %v5210 = vpop.f32.mrb[0].mxu0
  %v5211 = vadd.f32 %v5018, %v5210
  %5212 = vmatprep.mubr.bf16.mxu0 %v697
  %5213 = vmatmul.mubr.bf16.gmra.mrb[0].mxu0 %v696
  %v5214 = vpop.f32.mrb[0].mxu0
  %v5215 = vadd.f32 %v5022, %v5214
  %v5216 = vpop.f32.mrb[0].mxu0
  %v5217 = vadd.f32 %v5024, %v5216
  %v5218 = vpop.f32.mrb[0].mxu0
  %v5219 = vadd.f32 %v5026, %v5218
  %v5220 = vpop.f32.mrb[0].mxu0
  %v5221 = vadd.f32 %v5028, %v5220
  %5222 = vdwg.mxu0
  %v5223 = vmax.f32 %v2175, %v4486
  %v5224 = vmax.f32 %v2177, %v4488
  %v5225 = vmax.f32 %v2754, %v5065
  %v5226 = vmax.f32 %v2756, %v5067
  %v5227 = vmax.f32 %v2179, %v4490
  %v5228 = vmax.f32 %v2181, %v4492
  %v5229 = vmax.f32 %v2758, %v5069
  %v5230 = vmax.f32 %v2760, %v5071
  %v5231 = vmax.f32 %v2185, %v4496
  %v5232 = vmax.f32 %v2187, %v4498
  %v5233 = vmax.f32 %v2764, %v5075
  %v5234 = vmax.f32 %v2766, %v5077
  %v5235 = vmax.f32 %v2189, %v4500
  %v5236 = vmax.f32 %v2191, %v4502
  %v5237 = vmax.f32 %v2768, %v5079
  %v5238 = vmax.f32 %v2770, %v5081
  %v5239 = vmax.f32 %v2195, %v4506
  %v5240 = vmax.f32 %v2197, %v4508
  %v5241 = vmax.f32 %v2774, %v5085
  %v5242 = vmax.f32 %v2776, %v5087
  %v5243 = vmax.f32 %v2199, %v4510
  %v5244 = vmax.f32 %v2201, %v4512
  %v5245 = vmax.f32 %v2778, %v5089
  %v5246 = vmax.f32 %v2780, %v5091
  %v5247 = vmax.f32 %v2205, %v4516
  %v5248 = vmax.f32 %v2207, %v4518
  %v5249 = vmax.f32 %v2784, %v5095
  %v5250 = vmax.f32 %v2786, %v5097
  %v5251 = vmax.f32 %v2209, %v4520
  %v5252 = vmax.f32 %v2211, %v4522
  %v5253 = vmax.f32 %v2788, %v5099
  %v5254 = vmax.f32 %v2790, %v5101
  %v5255 = vmax.f32 %v2215, %v4526
  %v5256 = vmax.f32 %v2217, %v4528
  %v5257 = vmax.f32 %v2794, %v5105
  %v5258 = vmax.f32 %v2796, %v5107
  %v5259 = vmax.f32 %v2219, %v4530
  %v5260 = vmax.f32 %v2221, %v4532
  %v5261 = vmax.f32 %v2798, %v5109
  %v5262 = vmax.f32 %v2800, %v5111
  %v5263 = vmax.f32 %v2225, %v4536
  %v5264 = vmax.f32 %v2227, %v4538
  %v5265 = vmax.f32 %v2804, %v5115
  %v5266 = vmax.f32 %v2806, %v5117
  %v5267 = vmax.f32 %v2229, %v4540
  %v5268 = vmax.f32 %v2231, %v4542
  %v5269 = vmax.f32 %v2808, %v5119
  %v5270 = vmax.f32 %v2810, %v5121
  %v5271 = vmax.f32 %v2235, %v4546
  %v5272 = vmax.f32 %v2237, %v4548
  %v5273 = vmax.f32 %v2814, %v5125
  %v5274 = vmax.f32 %v2816, %v5127
  %v5275 = vmax.f32 %v2239, %v4550
  %v5276 = vmax.f32 %v2241, %v4552
  %v5277 = vmax.f32 %v2818, %v5129
  %v5278 = vmax.f32 %v2820, %v5131
  %v5279 = vmax.f32 %v2245, %v4556
  %v5280 = vmax.f32 %v2247, %v4558
  %v5281 = vmax.f32 %v2824, %v5135
  %v5282 = vmax.f32 %v2826, %v5137
  %v5283 = vmax.f32 %v2249, %v4560
  %v5284 = vmax.f32 %v2251, %v4562
  %v5285 = vmax.f32 %v2828, %v5139
  %v5286 = vmax.f32 %v2830, %v5141
  %v5287 = vmax.f32 %v2255, %v4566
  %v5288 = vmax.f32 %v2257, %v4568
  %v5289 = vmax.f32 %v2834, %v5145
  %v5290 = vmax.f32 %v2836, %v5147
  %v5291 = vmax.f32 %v2259, %v4570
  %v5292 = vmax.f32 %v2261, %v4572
  %v5293 = vmax.f32 %v2838, %v5149
  %v5294 = vmax.f32 %v2840, %v5151
  %v5295 = vmax.f32 %v2265, %v4576
  %v5296 = vmax.f32 %v2267, %v4578
  %v5297 = vmax.f32 %v2844, %v5155
  %v5298 = vmax.f32 %v2846, %v5157
  %v5299 = vmax.f32 %v2269, %v4580
  %v5300 = vmax.f32 %v2271, %v4582
  %v5301 = vmax.f32 %v2848, %v5159
  %v5302 = vmax.f32 %v2850, %v5161
  %v5303 = vmax.f32 %v2275, %v4586
  %v5304 = vmax.f32 %v2277, %v4588
  %v5305 = vmax.f32 %v2854, %v5165
  %v5306 = vmax.f32 %v2856, %v5167
  %v5307 = vmax.f32 %v2279, %v4590
  %v5308 = vmax.f32 %v2281, %v4592
  %v5309 = vmax.f32 %v2858, %v5169
  %v5310 = vmax.f32 %v2860, %v5171
  %v5311 = vmax.f32 %v2285, %v4596
  %v5312 = vmax.f32 %v2287, %v4598
  %v5313 = vmax.f32 %v2864, %v5175
  %v5314 = vmax.f32 %v2866, %v5177
  %v5315 = vmax.f32 %v2289, %v4600
  %v5316 = vmax.f32 %v2291, %v4602
  %v5317 = vmax.f32 %v2868, %v5179
  %v5318 = vmax.f32 %v2870, %v5181
  %v5319 = vmax.f32 %v2295, %v4606
  %v5320 = vmax.f32 %v2297, %v4608
  %v5321 = vmax.f32 %v2874, %v5185
  %v5322 = vmax.f32 %v2876, %v5187
  %v5323 = vmax.f32 %v2299, %v4610
  %v5324 = vmax.f32 %v2301, %v4612
  %v5325 = vmax.f32 %v2878, %v5189
  %v5326 = vmax.f32 %v2880, %v5191
  %v5327 = vmax.f32 %v2305, %v4616
  %v5328 = vmax.f32 %v2307, %v4618
  %v5329 = vmax.f32 %v2884, %v5195
  %v5330 = vmax.f32 %v2886, %v5197
  %v5331 = vmax.f32 %v2309, %v4620
  %v5332 = vmax.f32 %v2311, %v4622
  %v5333 = vmax.f32 %v2888, %v5199
  %v5334 = vmax.f32 %v2890, %v5201
  %v5335 = vmax.f32 %v2315, %v4626
  %v5336 = vmax.f32 %v2317, %v4628
  %v5337 = vmax.f32 %v2894, %v5205
  %v5338 = vmax.f32 %v2896, %v5207
  %v5339 = vmax.f32 %v2319, %v4630
  %v5340 = vmax.f32 %v2321, %v4632
  %v5341 = vmax.f32 %v2898, %v5209
  %v5342 = vmax.f32 %v2900, %v5211
  %v5343 = vmax.f32 %v2325, %v4636
  %v5344 = vmax.f32 %v2327, %v4638
  %v5345 = vmax.f32 %v2904, %v5215
  %v5346 = vmax.f32 %v2906, %v5217
  %v5347 = vmax.f32 %v2329, %v4640
  %v5348 = vmax.f32 %v2331, %v4642
  %v5349 = vmax.f32 %v2908, %v5219
  %v5350 = vmax.f32 %v2910, %v5221
  %s5351 = scalar_lea.vmem %s1, 3072
  %v5352 = vld [vmem:[%s5351] sm:$0xff]
  %v5353 = vld [vmem:[%s5351 + $0x8] sm:$0xff]
  %v5354 = vld [vmem:[%s5351 + $0x10] sm:$0xff]
  %v5355 = vld [vmem:[%s5351 + $0x18] sm:$0xff]
  %v5356 = vld [vmem:[%s5351 + $0x20] sm:$0xff]
  %v5357 = vld [vmem:[%s5351 + $0x28] sm:$0xff]
  %v5358 = vld [vmem:[%s5351 + $0x30] sm:$0xff]
  %v5359 = vld [vmem:[%s5351 + $0x38] sm:$0xff]
  %v5360 = vld [vmem:[%s5351 + $0x40] sm:$0xff]
  %v5361 = vld [vmem:[%s5351 + $0x48] sm:$0xff]
  %v5362 = vld [vmem:[%s5351 + $0x50] sm:$0xff]
  %v5363 = vld [vmem:[%s5351 + $0x58] sm:$0xff]
  %v5364 = vld [vmem:[%s5351 + $0x60] sm:$0xff]
  %v5365 = vld [vmem:[%s5351 + $0x68] sm:$0xff]
  %v5366 = vld [vmem:[%s5351 + $0x70] sm:$0xff]
  %v5367 = vld [vmem:[%s5351 + $0x78] sm:$0xff]
  %v5368 = vld [vmem:[%s5351 + $0x80] sm:$0xff]
  %v5369 = vld [vmem:[%s5351 + $0x88] sm:$0xff]
  %v5370 = vld [vmem:[%s5351 + $0x90] sm:$0xff]
  %v5371 = vld [vmem:[%s5351 + $0x98] sm:$0xff]
  %v5372 = vld [vmem:[%s5351 + $0xa0] sm:$0xff]
  %v5373 = vld [vmem:[%s5351 + $0xa8] sm:$0xff]
  %v5374 = vld [vmem:[%s5351 + $0xb0] sm:$0xff]
  %v5375 = vld [vmem:[%s5351 + $0xb8] sm:$0xff]
  %v5376 = vld [vmem:[%s5351 + $0xc0] sm:$0xff]
  %v5377 = vld [vmem:[%s5351 + $0xc8] sm:$0xff]
  %v5378 = vld [vmem:[%s5351 + $0xd0] sm:$0xff]
  %v5379 = vld [vmem:[%s5351 + $0xd8] sm:$0xff]
  %v5380 = vld [vmem:[%s5351 + $0xe0] sm:$0xff]
  %v5381 = vld [vmem:[%s5351 + $0xe8] sm:$0xff]
  %v5382 = vld [vmem:[%s5351 + $0xf0] sm:$0xff]
  %v5383 = vld [vmem:[%s5351 + $0xf8] sm:$0xff]
  %v5384 = vld [vmem:[%s5351 + $0x100] sm:$0xff]
  %v5385 = vld [vmem:[%s5351 + $0x108] sm:$0xff]
  %v5386 = vld [vmem:[%s5351 + $0x110] sm:$0xff]
  %v5387 = vld [vmem:[%s5351 + $0x118] sm:$0xff]
  %v5388 = vld [vmem:[%s5351 + $0x120] sm:$0xff]
  %v5389 = vld [vmem:[%s5351 + $0x128] sm:$0xff]
  %v5390 = vld [vmem:[%s5351 + $0x130] sm:$0xff]
  %v5391 = vld [vmem:[%s5351 + $0x138] sm:$0xff]
  %v5392 = vld [vmem:[%s5351 + $0x140] sm:$0xff]
  %v5393 = vld [vmem:[%s5351 + $0x148] sm:$0xff]
  %v5394 = vld [vmem:[%s5351 + $0x150] sm:$0xff]
  %v5395 = vld [vmem:[%s5351 + $0x158] sm:$0xff]
  %v5396 = vld [vmem:[%s5351 + $0x160] sm:$0xff]
  %v5397 = vld [vmem:[%s5351 + $0x168] sm:$0xff]
  %v5398 = vld [vmem:[%s5351 + $0x170] sm:$0xff]
  %v5399 = vld [vmem:[%s5351 + $0x178] sm:$0xff]
  %v5400 = vld [vmem:[%s5351 + $0x180] sm:$0xff]
  %v5401 = vld [vmem:[%s5351 + $0x188] sm:$0xff]
  %v5402 = vld [vmem:[%s5351 + $0x190] sm:$0xff]
  %v5403 = vld [vmem:[%s5351 + $0x198] sm:$0xff]
  %v5404 = vld [vmem:[%s5351 + $0x1a0] sm:$0xff]
  %v5405 = vld [vmem:[%s5351 + $0x1a8] sm:$0xff]
  %v5406 = vld [vmem:[%s5351 + $0x1b0] sm:$0xff]
  %v5407 = vld [vmem:[%s5351 + $0x1b8] sm:$0xff]
  %v5408 = vld [vmem:[%s5351 + $0x1c0] sm:$0xff]
  %v5409 = vld [vmem:[%s5351 + $0x1c8] sm:$0xff]
  %v5410 = vld [vmem:[%s5351 + $0x1d0] sm:$0xff]
  %v5411 = vld [vmem:[%s5351 + $0x1d8] sm:$0xff]
  %v5412 = vld [vmem:[%s5351 + $0x1e0] sm:$0xff]
  %v5413 = vld [vmem:[%s5351 + $0x1e8] sm:$0xff]
  %v5414 = vld [vmem:[%s5351 + $0x1f0] sm:$0xff]
  %v5415 = vld [vmem:[%s5351 + $0x1f8] sm:$0xff]
  %v5416 = vld [vmem:[%s5351 + $0x200] sm:$0xff]
  %v5417 = vld [vmem:[%s5351 + $0x208] sm:$0xff]
  %v5418 = vld [vmem:[%s5351 + $0x210] sm:$0xff]
  %v5419 = vld [vmem:[%s5351 + $0x218] sm:$0xff]
  %v5420 = vld [vmem:[%s5351 + $0x220] sm:$0xff]
  %v5421 = vld [vmem:[%s5351 + $0x228] sm:$0xff]
  %v5422 = vld [vmem:[%s5351 + $0x230] sm:$0xff]
  %v5423 = vld [vmem:[%s5351 + $0x238] sm:$0xff]
  %v5424 = vld [vmem:[%s5351 + $0x240] sm:$0xff]
  %v5425 = vld [vmem:[%s5351 + $0x248] sm:$0xff]
  %v5426 = vld [vmem:[%s5351 + $0x250] sm:$0xff]
  %v5427 = vld [vmem:[%s5351 + $0x258] sm:$0xff]
  %v5428 = vld [vmem:[%s5351 + $0x260] sm:$0xff]
  %v5429 = vld [vmem:[%s5351 + $0x268] sm:$0xff]
  %v5430 = vld [vmem:[%s5351 + $0x270] sm:$0xff]
  %v5431 = vld [vmem:[%s5351 + $0x278] sm:$0xff]
  %v5432 = vld [vmem:[%s5351 + $0x280] sm:$0xff]
  %v5433 = vld [vmem:[%s5351 + $0x288] sm:$0xff]
  %v5434 = vld [vmem:[%s5351 + $0x290] sm:$0xff]
  %v5435 = vld [vmem:[%s5351 + $0x298] sm:$0xff]
  %v5436 = vld [vmem:[%s5351 + $0x2a0] sm:$0xff]
  %v5437 = vld [vmem:[%s5351 + $0x2a8] sm:$0xff]
  %v5438 = vld [vmem:[%s5351 + $0x2b0] sm:$0xff]
  %v5439 = vld [vmem:[%s5351 + $0x2b8] sm:$0xff]
  %v5440 = vld [vmem:[%s5351 + $0x2c0] sm:$0xff]
  %v5441 = vld [vmem:[%s5351 + $0x2c8] sm:$0xff]
  %v5442 = vld [vmem:[%s5351 + $0x2d0] sm:$0xff]
  %v5443 = vld [vmem:[%s5351 + $0x2d8] sm:$0xff]
  %v5444 = vld [vmem:[%s5351 + $0x2e0] sm:$0xff]
  %v5445 = vld [vmem:[%s5351 + $0x2e8] sm:$0xff]
  %v5446 = vld [vmem:[%s5351 + $0x2f0] sm:$0xff]
  %v5447 = vld [vmem:[%s5351 + $0x2f8] sm:$0xff]
  %v5448 = vld [vmem:[%s5351 + $0x300] sm:$0xff]
  %v5449 = vld [vmem:[%s5351 + $0x308] sm:$0xff]
  %v5450 = vld [vmem:[%s5351 + $0x310] sm:$0xff]
  %v5451 = vld [vmem:[%s5351 + $0x318] sm:$0xff]
  %v5452 = vld [vmem:[%s5351 + $0x320] sm:$0xff]
  %v5453 = vld [vmem:[%s5351 + $0x328] sm:$0xff]
  %v5454 = vld [vmem:[%s5351 + $0x330] sm:$0xff]
  %v5455 = vld [vmem:[%s5351 + $0x338] sm:$0xff]
  %v5456 = vld [vmem:[%s5351 + $0x340] sm:$0xff]
  %v5457 = vld [vmem:[%s5351 + $0x348] sm:$0xff]
  %v5458 = vld [vmem:[%s5351 + $0x350] sm:$0xff]
  %v5459 = vld [vmem:[%s5351 + $0x358] sm:$0xff]
  %v5460 = vld [vmem:[%s5351 + $0x360] sm:$0xff]
  %v5461 = vld [vmem:[%s5351 + $0x368] sm:$0xff]
  %v5462 = vld [vmem:[%s5351 + $0x370] sm:$0xff]
  %v5463 = vld [vmem:[%s5351 + $0x378] sm:$0xff]
  %v5464 = vld [vmem:[%s5351 + $0x380] sm:$0xff]
  %v5465 = vld [vmem:[%s5351 + $0x388] sm:$0xff]
  %v5466 = vld [vmem:[%s5351 + $0x390] sm:$0xff]
  %v5467 = vld [vmem:[%s5351 + $0x398] sm:$0xff]
  %v5468 = vld [vmem:[%s5351 + $0x3a0] sm:$0xff]
  %v5469 = vld [vmem:[%s5351 + $0x3a8] sm:$0xff]
  %v5470 = vld [vmem:[%s5351 + $0x3b0] sm:$0xff]
  %v5471 = vld [vmem:[%s5351 + $0x3b8] sm:$0xff]
  %v5472 = vld [vmem:[%s5351 + $0x3c0] sm:$0xff]
  %v5473 = vld [vmem:[%s5351 + $0x3c8] sm:$0xff]
  %v5474 = vld [vmem:[%s5351 + $0x3d0] sm:$0xff]
  %v5475 = vld [vmem:[%s5351 + $0x3d8] sm:$0xff]
  %v5476 = vld [vmem:[%s5351 + $0x3e0] sm:$0xff]
  %v5477 = vld [vmem:[%s5351 + $0x3e8] sm:$0xff]
  %v5478 = vld [vmem:[%s5351 + $0x3f0] sm:$0xff]
  %v5479 = vld [vmem:[%s5351 + $0x3f8] sm:$0xff]
  %v5480 = vld [vmem:[%s5351 + $0x400] sm:$0xff]
  %v5481 = vld [vmem:[%s5351 + $0x408] sm:$0xff]
  %v5482 = vld [vmem:[%s5351 + $0x410] sm:$0xff]
  %v5483 = vld [vmem:[%s5351 + $0x418] sm:$0xff]
  %v5484 = vld [vmem:[%s5351 + $0x420] sm:$0xff]
  %v5485 = vld [vmem:[%s5351 + $0x428] sm:$0xff]
  %v5486 = vld [vmem:[%s5351 + $0x430] sm:$0xff]
  %v5487 = vld [vmem:[%s5351 + $0x438] sm:$0xff]
  %v5488 = vld [vmem:[%s5351 + $0x440] sm:$0xff]
  %v5489 = vld [vmem:[%s5351 + $0x448] sm:$0xff]
  %v5490 = vld [vmem:[%s5351 + $0x450] sm:$0xff]
  %v5491 = vld [vmem:[%s5351 + $0x458] sm:$0xff]
  %v5492 = vld [vmem:[%s5351 + $0x460] sm:$0xff]
  %v5493 = vld [vmem:[%s5351 + $0x468] sm:$0xff]
  %v5494 = vld [vmem:[%s5351 + $0x470] sm:$0xff]
  %v5495 = vld [vmem:[%s5351 + $0x478] sm:$0xff]
  %v5496 = vld [vmem:[%s5351 + $0x480] sm:$0xff]
  %v5497 = vld [vmem:[%s5351 + $0x488] sm:$0xff]
  %v5498 = vld [vmem:[%s5351 + $0x490] sm:$0xff]
  %v5499 = vld [vmem:[%s5351 + $0x498] sm:$0xff]
  %v5500 = vld [vmem:[%s5351 + $0x4a0] sm:$0xff]
  %v5501 = vld [vmem:[%s5351 + $0x4a8] sm:$0xff]
  %v5502 = vld [vmem:[%s5351 + $0x4b0] sm:$0xff]
  %v5503 = vld [vmem:[%s5351 + $0x4b8] sm:$0xff]
  %v5504 = vld [vmem:[%s5351 + $0x4c0] sm:$0xff]
  %v5505 = vld [vmem:[%s5351 + $0x4c8] sm:$0xff]
  %v5506 = vld [vmem:[%s5351 + $0x4d0] sm:$0xff]
  %v5507 = vld [vmem:[%s5351 + $0x4d8] sm:$0xff]
  %v5508 = vld [vmem:[%s5351 + $0x4e0] sm:$0xff]
  %v5509 = vld [vmem:[%s5351 + $0x4e8] sm:$0xff]
  %v5510 = vld [vmem:[%s5351 + $0x4f0] sm:$0xff]
  %v5511 = vld [vmem:[%s5351 + $0x4f8] sm:$0xff]
  %v5512 = vld [vmem:[%s5351 + $0x500] sm:$0xff]
  %v5513 = vld [vmem:[%s5351 + $0x508] sm:$0xff]
  %v5514 = vld [vmem:[%s5351 + $0x510] sm:$0xff]
  %v5515 = vld [vmem:[%s5351 + $0x518] sm:$0xff]
  %v5516 = vld [vmem:[%s5351 + $0x520] sm:$0xff]
  %v5517 = vld [vmem:[%s5351 + $0x528] sm:$0xff]
  %v5518 = vld [vmem:[%s5351 + $0x530] sm:$0xff]
  %v5519 = vld [vmem:[%s5351 + $0x538] sm:$0xff]
  %v5520 = vld [vmem:[%s5351 + $0x540] sm:$0xff]
  %v5521 = vld [vmem:[%s5351 + $0x548] sm:$0xff]
  %v5522 = vld [vmem:[%s5351 + $0x550] sm:$0xff]
  %v5523 = vld [vmem:[%s5351 + $0x558] sm:$0xff]
  %v5524 = vld [vmem:[%s5351 + $0x560] sm:$0xff]
  %v5525 = vld [vmem:[%s5351 + $0x568] sm:$0xff]
  %v5526 = vld [vmem:[%s5351 + $0x570] sm:$0xff]
  %v5527 = vld [vmem:[%s5351 + $0x578] sm:$0xff]
  %v5528 = vld [vmem:[%s5351 + $0x580] sm:$0xff]
  %v5529 = vld [vmem:[%s5351 + $0x588] sm:$0xff]
  %v5530 = vld [vmem:[%s5351 + $0x590] sm:$0xff]
  %v5531 = vld [vmem:[%s5351 + $0x598] sm:$0xff]
  %v5532 = vld [vmem:[%s5351 + $0x5a0] sm:$0xff]
  %v5533 = vld [vmem:[%s5351 + $0x5a8] sm:$0xff]
  %v5534 = vld [vmem:[%s5351 + $0x5b0] sm:$0xff]
  %v5535 = vld [vmem:[%s5351 + $0x5b8] sm:$0xff]
  %v5536 = vld [vmem:[%s5351 + $0x5c0] sm:$0xff]
  %v5537 = vld [vmem:[%s5351 + $0x5c8] sm:$0xff]
  %v5538 = vld [vmem:[%s5351 + $0x5d0] sm:$0xff]
  %v5539 = vld [vmem:[%s5351 + $0x5d8] sm:$0xff]
  %v5540 = vld [vmem:[%s5351 + $0x5e0] sm:$0xff]
  %v5541 = vld [vmem:[%s5351 + $0x5e8] sm:$0xff]
  %v5542 = vld [vmem:[%s5351 + $0x5f0] sm:$0xff]
  %v5543 = vld [vmem:[%s5351 + $0x5f8] sm:$0xff]
  %v5736 = vunpack.c.l.b16 %v5352
  %v5737 = vunpack.c.h.b16 %v5352
  %v5738 = vunpack.c.l.b16 %v5353
  %v5739 = vunpack.c.h.b16 %v5353
  %v5740 = vunpack.c.l.b16 %v5354
  %v5741 = vunpack.c.h.b16 %v5354
  %v5742 = vunpack.c.l.b16 %v5355
  %v5743 = vunpack.c.h.b16 %v5355
  %v5744 = vunpack.c.l.b16 %v5356
  %v5745 = vunpack.c.h.b16 %v5356
  %v5746 = vunpack.c.l.b16 %v5357
  %v5747 = vunpack.c.h.b16 %v5357
  %v5748 = vunpack.c.l.b16 %v5358
  %v5749 = vunpack.c.h.b16 %v5358
  %v5750 = vunpack.c.l.b16 %v5359
  %v5751 = vunpack.c.h.b16 %v5359
  %v5752 = vunpack.c.l.b16 %v5360
  %v5753 = vunpack.c.h.b16 %v5360
  %v5754 = vunpack.c.l.b16 %v5361
  %v5755 = vunpack.c.h.b16 %v5361
  %v5756 = vunpack.c.l.b16 %v5362
  %v5757 = vunpack.c.h.b16 %v5362
  %v5758 = vunpack.c.l.b16 %v5363
  %v5759 = vunpack.c.h.b16 %v5363
  %v5760 = vunpack.c.l.b16 %v5364
  %v5761 = vunpack.c.h.b16 %v5364
  %v5762 = vunpack.c.l.b16 %v5365
  %v5763 = vunpack.c.h.b16 %v5365
  %v5764 = vunpack.c.l.b16 %v5366
  %v5765 = vunpack.c.h.b16 %v5366
  %v5766 = vunpack.c.l.b16 %v5367
  %v5767 = vunpack.c.h.b16 %v5367
  %v5768 = vunpack.c.l.b16 %v5368
  %v5769 = vunpack.c.h.b16 %v5368
  %v5770 = vunpack.c.l.b16 %v5369
  %v5771 = vunpack.c.h.b16 %v5369
  %v5772 = vunpack.c.l.b16 %v5370
  %v5773 = vunpack.c.h.b16 %v5370
  %v5774 = vunpack.c.l.b16 %v5371
  %v5775 = vunpack.c.h.b16 %v5371
  %v5776 = vunpack.c.l.b16 %v5372
  %v5777 = vunpack.c.h.b16 %v5372
  %v5778 = vunpack.c.l.b16 %v5373
  %v5779 = vunpack.c.h.b16 %v5373
  %v5780 = vunpack.c.l.b16 %v5374
  %v5781 = vunpack.c.h.b16 %v5374
  %v5782 = vunpack.c.l.b16 %v5375
  %v5783 = vunpack.c.h.b16 %v5375
  %v5784 = vunpack.c.l.b16 %v5376
  %v5785 = vunpack.c.h.b16 %v5376
  %v5786 = vunpack.c.l.b16 %v5377
  %v5787 = vunpack.c.h.b16 %v5377
  %v5788 = vunpack.c.l.b16 %v5378
  %v5789 = vunpack.c.h.b16 %v5378
  %v5790 = vunpack.c.l.b16 %v5379
  %v5791 = vunpack.c.h.b16 %v5379
  %v5792 = vunpack.c.l.b16 %v5380
  %v5793 = vunpack.c.h.b16 %v5380
  %v5794 = vunpack.c.l.b16 %v5381
  %v5795 = vunpack.c.h.b16 %v5381
  %v5796 = vunpack.c.l.b16 %v5382
  %v5797 = vunpack.c.h.b16 %v5382
  %v5798 = vunpack.c.l.b16 %v5383
  %v5799 = vunpack.c.h.b16 %v5383
  %v5800 = vunpack.c.l.b16 %v5384
  %v5801 = vunpack.c.h.b16 %v5384
  %v5802 = vunpack.c.l.b16 %v5385
  %v5803 = vunpack.c.h.b16 %v5385
  %v5804 = vunpack.c.l.b16 %v5386
  %v5805 = vunpack.c.h.b16 %v5386
  %v5806 = vunpack.c.l.b16 %v5387
  %v5807 = vunpack.c.h.b16 %v5387
  %v5808 = vunpack.c.l.b16 %v5388
  %v5809 = vunpack.c.h.b16 %v5388
  %v5810 = vunpack.c.l.b16 %v5389
  %v5811 = vunpack.c.h.b16 %v5389
  %v5812 = vunpack.c.l.b16 %v5390
  %v5813 = vunpack.c.h.b16 %v5390
  %v5814 = vunpack.c.l.b16 %v5391
  %v5815 = vunpack.c.h.b16 %v5391
  %v5816 = vunpack.c.l.b16 %v5392
  %v5817 = vunpack.c.h.b16 %v5392
  %v5818 = vunpack.c.l.b16 %v5393
  %v5819 = vunpack.c.h.b16 %v5393
  %v5820 = vunpack.c.l.b16 %v5394
  %v5821 = vunpack.c.h.b16 %v5394
  %v5822 = vunpack.c.l.b16 %v5395
  %v5823 = vunpack.c.h.b16 %v5395
  %v5824 = vunpack.c.l.b16 %v5396
  %v5825 = vunpack.c.h.b16 %v5396
  %v5826 = vunpack.c.l.b16 %v5397
  %v5827 = vunpack.c.h.b16 %v5397
  %v5828 = vunpack.c.l.b16 %v5398
  %v5829 = vunpack.c.h.b16 %v5398
  %v5830 = vunpack.c.l.b16 %v5399
  %v5831 = vunpack.c.h.b16 %v5399
  %v5832 = vunpack.c.l.b16 %v5400
  %v5833 = vunpack.c.h.b16 %v5400
  %v5834 = vunpack.c.l.b16 %v5401
  %v5835 = vunpack.c.h.b16 %v5401
  %v5836 = vunpack.c.l.b16 %v5402
  %v5837 = vunpack.c.h.b16 %v5402
  %v5838 = vunpack.c.l.b16 %v5403
  %v5839 = vunpack.c.h.b16 %v5403
  %v5840 = vunpack.c.l.b16 %v5404
  %v5841 = vunpack.c.h.b16 %v5404
  %v5842 = vunpack.c.l.b16 %v5405
  %v5843 = vunpack.c.h.b16 %v5405
  %v5844 = vunpack.c.l.b16 %v5406
  %v5845 = vunpack.c.h.b16 %v5406
  %v5846 = vunpack.c.l.b16 %v5407
  %v5847 = vunpack.c.h.b16 %v5407
  %v5848 = vunpack.c.l.b16 %v5408
  %v5849 = vunpack.c.h.b16 %v5408
  %v5850 = vunpack.c.l.b16 %v5409
  %v5851 = vunpack.c.h.b16 %v5409
  %v5852 = vunpack.c.l.b16 %v5410
  %v5853 = vunpack.c.h.b16 %v5410
  %v5854 = vunpack.c.l.b16 %v5411
  %v5855 = vunpack.c.h.b16 %v5411
  %v5856 = vunpack.c.l.b16 %v5412
  %v5857 = vunpack.c.h.b16 %v5412
  %v5858 = vunpack.c.l.b16 %v5413
  %v5859 = vunpack.c.h.b16 %v5413
  %v5860 = vunpack.c.l.b16 %v5414
  %v5861 = vunpack.c.h.b16 %v5414
  %v5862 = vunpack.c.l.b16 %v5415
  %v5863 = vunpack.c.h.b16 %v5415
  %v5864 = vunpack.c.l.b16 %v5416
  %v5865 = vunpack.c.h.b16 %v5416
  %v5866 = vunpack.c.l.b16 %v5417
  %v5867 = vunpack.c.h.b16 %v5417
  %v5868 = vunpack.c.l.b16 %v5418
  %v5869 = vunpack.c.h.b16 %v5418
  %v5870 = vunpack.c.l.b16 %v5419
  %v5871 = vunpack.c.h.b16 %v5419
  %v5872 = vunpack.c.l.b16 %v5420
  %v5873 = vunpack.c.h.b16 %v5420
  %v5874 = vunpack.c.l.b16 %v5421
  %v5875 = vunpack.c.h.b16 %v5421
  %v5876 = vunpack.c.l.b16 %v5422
  %v5877 = vunpack.c.h.b16 %v5422
  %v5878 = vunpack.c.l.b16 %v5423
  %v5879 = vunpack.c.h.b16 %v5423
  %v5880 = vunpack.c.l.b16 %v5424
  %v5881 = vunpack.c.h.b16 %v5424
  %v5882 = vunpack.c.l.b16 %v5425
  %v5883 = vunpack.c.h.b16 %v5425
  %v5884 = vunpack.c.l.b16 %v5426
  %v5885 = vunpack.c.h.b16 %v5426
  %v5886 = vunpack.c.l.b16 %v5427
  %v5887 = vunpack.c.h.b16 %v5427
  %v5888 = vunpack.c.l.b16 %v5428
  %v5889 = vunpack.c.h.b16 %v5428
  %v5890 = vunpack.c.l.b16 %v5429
  %v5891 = vunpack.c.h.b16 %v5429
  %v5892 = vunpack.c.l.b16 %v5430
  %v5893 = vunpack.c.h.b16 %v5430
  %v5894 = vunpack.c.l.b16 %v5431
  %v5895 = vunpack.c.h.b16 %v5431
  %v5896 = vunpack.c.l.b16 %v5432
  %v5897 = vunpack.c.h.b16 %v5432
  %v5898 = vunpack.c.l.b16 %v5433
  %v5899 = vunpack.c.h.b16 %v5433
  %v5900 = vunpack.c.l.b16 %v5434
  %v5901 = vunpack.c.h.b16 %v5434
  %v5902 = vunpack.c.l.b16 %v5435
  %v5903 = vunpack.c.h.b16 %v5435
  %v5904 = vunpack.c.l.b16 %v5436
  %v5905 = vunpack.c.h.b16 %v5436
  %v5906 = vunpack.c.l.b16 %v5437
  %v5907 = vunpack.c.h.b16 %v5437
  %v5908 = vunpack.c.l.b16 %v5438
  %v5909 = vunpack.c.h.b16 %v5438
  %v5910 = vunpack.c.l.b16 %v5439
  %v5911 = vunpack.c.h.b16 %v5439
  %v5912 = vunpack.c.l.b16 %v5440
  %v5913 = vunpack.c.h.b16 %v5440
  %v5914 = vunpack.c.l.b16 %v5441
  %v5915 = vunpack.c.h.b16 %v5441
  %v5916 = vunpack.c.l.b16 %v5442
  %v5917 = vunpack.c.h.b16 %v5442
  %v5918 = vunpack.c.l.b16 %v5443
  %v5919 = vunpack.c.h.b16 %v5443
  %v5920 = vunpack.c.l.b16 %v5444
  %v5921 = vunpack.c.h.b16 %v5444
  %v5922 = vunpack.c.l.b16 %v5445
  %v5923 = vunpack.c.h.b16 %v5445
  %v5924 = vunpack.c.l.b16 %v5446
  %v5925 = vunpack.c.h.b16 %v5446
  %v5926 = vunpack.c.l.b16 %v5447
  %v5927 = vunpack.c.h.b16 %v5447
  %v5928 = vunpack.c.l.b16 %v5448
  %v5929 = vunpack.c.h.b16 %v5448
  %v5930 = vunpack.c.l.b16 %v5449
  %v5931 = vunpack.c.h.b16 %v5449
  %v5932 = vunpack.c.l.b16 %v5450
  %v5933 = vunpack.c.h.b16 %v5450
  %v5934 = vunpack.c.l.b16 %v5451
  %v5935 = vunpack.c.h.b16 %v5451
  %v5936 = vunpack.c.l.b16 %v5452
  %v5937 = vunpack.c.h.b16 %v5452
  %v5938 = vunpack.c.l.b16 %v5453
  %v5939 = vunpack.c.h.b16 %v5453
  %v5940 = vunpack.c.l.b16 %v5454
  %v5941 = vunpack.c.h.b16 %v5454
  %v5942 = vunpack.c.l.b16 %v5455
  %v5943 = vunpack.c.h.b16 %v5455
  %v5944 = vunpack.c.l.b16 %v5456
  %v5945 = vunpack.c.h.b16 %v5456
  %v5946 = vunpack.c.l.b16 %v5457
  %v5947 = vunpack.c.h.b16 %v5457
  %v5948 = vunpack.c.l.b16 %v5458
  %v5949 = vunpack.c.h.b16 %v5458
  %v5950 = vunpack.c.l.b16 %v5459
  %v5951 = vunpack.c.h.b16 %v5459
  %v5952 = vunpack.c.l.b16 %v5460
  %v5953 = vunpack.c.h.b16 %v5460
  %v5954 = vunpack.c.l.b16 %v5461
  %v5955 = vunpack.c.h.b16 %v5461
  %v5956 = vunpack.c.l.b16 %v5462
  %v5957 = vunpack.c.h.b16 %v5462
  %v5958 = vunpack.c.l.b16 %v5463
  %v5959 = vunpack.c.h.b16 %v5463
  %v5960 = vunpack.c.l.b16 %v5464
  %v5961 = vunpack.c.h.b16 %v5464
  %v5962 = vunpack.c.l.b16 %v5465
  %v5963 = vunpack.c.h.b16 %v5465
  %v5964 = vunpack.c.l.b16 %v5466
  %v5965 = vunpack.c.h.b16 %v5466
  %v5966 = vunpack.c.l.b16 %v5467
  %v5967 = vunpack.c.h.b16 %v5467
  %v5968 = vunpack.c.l.b16 %v5468
  %v5969 = vunpack.c.h.b16 %v5468
  %v5970 = vunpack.c.l.b16 %v5469
  %v5971 = vunpack.c.h.b16 %v5469
  %v5972 = vunpack.c.l.b16 %v5470
  %v5973 = vunpack.c.h.b16 %v5470
  %v5974 = vunpack.c.l.b16 %v5471
  %v5975 = vunpack.c.h.b16 %v5471
  %v5976 = vunpack.c.l.b16 %v5472
  %v5977 = vunpack.c.h.b16 %v5472
  %v5978 = vunpack.c.l.b16 %v5473
  %v5979 = vunpack.c.h.b16 %v5473
  %v5980 = vunpack.c.l.b16 %v5474
  %v5981 = vunpack.c.h.b16 %v5474
  %v5982 = vunpack.c.l.b16 %v5475
  %v5983 = vunpack.c.h.b16 %v5475
  %v5984 = vunpack.c.l.b16 %v5476
  %v5985 = vunpack.c.h.b16 %v5476
  %v5986 = vunpack.c.l.b16 %v5477
  %v5987 = vunpack.c.h.b16 %v5477
  %v5988 = vunpack.c.l.b16 %v5478
  %v5989 = vunpack.c.h.b16 %v5478
  %v5990 = vunpack.c.l.b16 %v5479
  %v5991 = vunpack.c.h.b16 %v5479
  %v5992 = vunpack.c.l.b16 %v5480
  %v5993 = vunpack.c.h.b16 %v5480
  %v5994 = vunpack.c.l.b16 %v5481
  %v5995 = vunpack.c.h.b16 %v5481
  %v5996 = vunpack.c.l.b16 %v5482
  %v5997 = vunpack.c.h.b16 %v5482
  %v5998 = vunpack.c.l.b16 %v5483
  %v5999 = vunpack.c.h.b16 %v5483
  %v6000 = vunpack.c.l.b16 %v5484
  %v6001 = vunpack.c.h.b16 %v5484
  %v6002 = vunpack.c.l.b16 %v5485
  %v6003 = vunpack.c.h.b16 %v5485
  %v6004 = vunpack.c.l.b16 %v5486
  %v6005 = vunpack.c.h.b16 %v5486
  %v6006 = vunpack.c.l.b16 %v5487
  %v6007 = vunpack.c.h.b16 %v5487
  %v6008 = vunpack.c.l.b16 %v5488
  %v6009 = vunpack.c.h.b16 %v5488
  %v6010 = vunpack.c.l.b16 %v5489
  %v6011 = vunpack.c.h.b16 %v5489
  %v6012 = vunpack.c.l.b16 %v5490
  %v6013 = vunpack.c.h.b16 %v5490
  %v6014 = vunpack.c.l.b16 %v5491
  %v6015 = vunpack.c.h.b16 %v5491
  %v6016 = vunpack.c.l.b16 %v5492
  %v6017 = vunpack.c.h.b16 %v5492
  %v6018 = vunpack.c.l.b16 %v5493
  %v6019 = vunpack.c.h.b16 %v5493
  %v6020 = vunpack.c.l.b16 %v5494
  %v6021 = vunpack.c.h.b16 %v5494
  %v6022 = vunpack.c.l.b16 %v5495
  %v6023 = vunpack.c.h.b16 %v5495
  %v6024 = vunpack.c.l.b16 %v5496
  %v6025 = vunpack.c.h.b16 %v5496
  %v6026 = vunpack.c.l.b16 %v5497
  %v6027 = vunpack.c.h.b16 %v5497
  %v6028 = vunpack.c.l.b16 %v5498
  %v6029 = vunpack.c.h.b16 %v5498
  %v6030 = vunpack.c.l.b16 %v5499
  %v6031 = vunpack.c.h.b16 %v5499
  %v6032 = vunpack.c.l.b16 %v5500
  %v6033 = vunpack.c.h.b16 %v5500
  %v6034 = vunpack.c.l.b16 %v5501
  %v6035 = vunpack.c.h.b16 %v5501
  %v6036 = vunpack.c.l.b16 %v5502
  %v6037 = vunpack.c.h.b16 %v5502
  %v6038 = vunpack.c.l.b16 %v5503
  %v6039 = vunpack.c.h.b16 %v5503
  %v6040 = vunpack.c.l.b16 %v5504
  %v6041 = vunpack.c.h.b16 %v5504
  %v6042 = vunpack.c.l.b16 %v5505
  %v6043 = vunpack.c.h.b16 %v5505
  %v6044 = vunpack.c.l.b16 %v5506
  %v6045 = vunpack.c.h.b16 %v5506
  %v6046 = vunpack.c.l.b16 %v5507
  %v6047 = vunpack.c.h.b16 %v5507
  %v6048 = vunpack.c.l.b16 %v5508
  %v6049 = vunpack.c.h.b16 %v5508
  %v6050 = vunpack.c.l.b16 %v5509
  %v6051 = vunpack.c.h.b16 %v5509
  %v6052 = vunpack.c.l.b16 %v5510
  %v6053 = vunpack.c.h.b16 %v5510
  %v6054 = vunpack.c.l.b16 %v5511
  %v6055 = vunpack.c.h.b16 %v5511
  %v6056 = vunpack.c.l.b16 %v5512
  %v6057 = vunpack.c.h.b16 %v5512
  %v6058 = vunpack.c.l.b16 %v5513
  %v6059 = vunpack.c.h.b16 %v5513
  %v6060 = vunpack.c.l.b16 %v5514
  %v6061 = vunpack.c.h.b16 %v5514
  %v6062 = vunpack.c.l.b16 %v5515
  %v6063 = vunpack.c.h.b16 %v5515
  %v6064 = vunpack.c.l.b16 %v5516
  %v6065 = vunpack.c.h.b16 %v5516
  %v6066 = vunpack.c.l.b16 %v5517
  %v6067 = vunpack.c.h.b16 %v5517
  %v6068 = vunpack.c.l.b16 %v5518
  %v6069 = vunpack.c.h.b16 %v5518
  %v6070 = vunpack.c.l.b16 %v5519
  %v6071 = vunpack.c.h.b16 %v5519
  %v6072 = vunpack.c.l.b16 %v5520
  %v6073 = vunpack.c.h.b16 %v5520
  %v6074 = vunpack.c.l.b16 %v5521
  %v6075 = vunpack.c.h.b16 %v5521
  %v6076 = vunpack.c.l.b16 %v5522
  %v6077 = vunpack.c.h.b16 %v5522
  %v6078 = vunpack.c.l.b16 %v5523
  %v6079 = vunpack.c.h.b16 %v5523
  %v6080 = vunpack.c.l.b16 %v5524
  %v6081 = vunpack.c.h.b16 %v5524
  %v6082 = vunpack.c.l.b16 %v5525
  %v6083 = vunpack.c.h.b16 %v5525
  %v6084 = vunpack.c.l.b16 %v5526
  %v6085 = vunpack.c.h.b16 %v5526
  %v6086 = vunpack.c.l.b16 %v5527
  %v6087 = vunpack.c.h.b16 %v5527
  %v6088 = vunpack.c.l.b16 %v5528
  %v6089 = vunpack.c.h.b16 %v5528
  %v6090 = vunpack.c.l.b16 %v5529
  %v6091 = vunpack.c.h.b16 %v5529
  %v6092 = vunpack.c.l.b16 %v5530
  %v6093 = vunpack.c.h.b16 %v5530
  %v6094 = vunpack.c.l.b16 %v5531
  %v6095 = vunpack.c.h.b16 %v5531
  %v6096 = vunpack.c.l.b16 %v5532
  %v6097 = vunpack.c.h.b16 %v5532
  %v6098 = vunpack.c.l.b16 %v5533
  %v6099 = vunpack.c.h.b16 %v5533
  %v6100 = vunpack.c.l.b16 %v5534
  %v6101 = vunpack.c.h.b16 %v5534
  %v6102 = vunpack.c.l.b16 %v5535
  %v6103 = vunpack.c.h.b16 %v5535
  %v6104 = vunpack.c.l.b16 %v5536
  %v6105 = vunpack.c.h.b16 %v5536
  %v6106 = vunpack.c.l.b16 %v5537
  %v6107 = vunpack.c.h.b16 %v5537
  %v6108 = vunpack.c.l.b16 %v5538
  %v6109 = vunpack.c.h.b16 %v5538
  %v6110 = vunpack.c.l.b16 %v5539
  %v6111 = vunpack.c.h.b16 %v5539
  %v6112 = vunpack.c.l.b16 %v5540
  %v6113 = vunpack.c.h.b16 %v5540
  %v6114 = vunpack.c.l.b16 %v5541
  %v6115 = vunpack.c.h.b16 %v5541
  %v6116 = vunpack.c.l.b16 %v5542
  %v6117 = vunpack.c.h.b16 %v5542
  %v6118 = vunpack.c.l.b16 %v5543
  %v6119 = vunpack.c.h.b16 %v5543
  %v6120 = vpack.c.b16 %v5740, %v5736
  %v6121 = vpack.c.b16 %v5741, %v5737
  %v6122 = vpack.c.b16 %v5742, %v5738
  %v6123 = vpack.c.b16 %v5743, %v5739
  %v6124 = vpack.c.b16 %v5748, %v5744
  %v6125 = vpack.c.b16 %v5749, %v5745
  %v6126 = vpack.c.b16 %v5750, %v5746
  %v6127 = vpack.c.b16 %v5751, %v5747
  %v6128 = vpack.c.b16 %v5756, %v5752
  %v6129 = vpack.c.b16 %v5757, %v5753
  %v6130 = vpack.c.b16 %v5758, %v5754
  %v6131 = vpack.c.b16 %v5759, %v5755
  %v6132 = vpack.c.b16 %v5764, %v5760
  %v6133 = vpack.c.b16 %v5765, %v5761
  %v6134 = vpack.c.b16 %v5766, %v5762
  %v6135 = vpack.c.b16 %v5767, %v5763
  %v6136 = vpack.c.b16 %v5772, %v5768
  %v6137 = vpack.c.b16 %v5773, %v5769
  %v6138 = vpack.c.b16 %v5774, %v5770
  %v6139 = vpack.c.b16 %v5775, %v5771
  %v6140 = vpack.c.b16 %v5780, %v5776
  %v6141 = vpack.c.b16 %v5781, %v5777
  %v6142 = vpack.c.b16 %v5782, %v5778
  %v6143 = vpack.c.b16 %v5783, %v5779
  %v6144 = vpack.c.b16 %v5788, %v5784
  %v6145 = vpack.c.b16 %v5789, %v5785
  %v6146 = vpack.c.b16 %v5790, %v5786
  %v6147 = vpack.c.b16 %v5791, %v5787
  %v6148 = vpack.c.b16 %v5796, %v5792
  %v6149 = vpack.c.b16 %v5797, %v5793
  %v6150 = vpack.c.b16 %v5798, %v5794
  %v6151 = vpack.c.b16 %v5799, %v5795
  %v6152 = vpack.c.b16 %v5804, %v5800
  %v6153 = vpack.c.b16 %v5805, %v5801
  %v6154 = vpack.c.b16 %v5806, %v5802
  %v6155 = vpack.c.b16 %v5807, %v5803
  %v6156 = vpack.c.b16 %v5812, %v5808
  %v6157 = vpack.c.b16 %v5813, %v5809
  %v6158 = vpack.c.b16 %v5814, %v5810
  %v6159 = vpack.c.b16 %v5815, %v5811
  %v6160 = vpack.c.b16 %v5820, %v5816
  %v6161 = vpack.c.b16 %v5821, %v5817
  %v6162 = vpack.c.b16 %v5822, %v5818
  %v6163 = vpack.c.b16 %v5823, %v5819
  %v6164 = vpack.c.b16 %v5828, %v5824
  %v6165 = vpack.c.b16 %v5829, %v5825
  %v6166 = vpack.c.b16 %v5830, %v5826
  %v6167 = vpack.c.b16 %v5831, %v5827
  %v6168 = vpack.c.b16 %v5836, %v5832
  %v6169 = vpack.c.b16 %v5837, %v5833
  %v6170 = vpack.c.b16 %v5838, %v5834
  %v6171 = vpack.c.b16 %v5839, %v5835
  %v6172 = vpack.c.b16 %v5844, %v5840
  %v6173 = vpack.c.b16 %v5845, %v5841
  %v6174 = vpack.c.b16 %v5846, %v5842
  %v6175 = vpack.c.b16 %v5847, %v5843
  %v6176 = vpack.c.b16 %v5852, %v5848
  %v6177 = vpack.c.b16 %v5853, %v5849
  %v6178 = vpack.c.b16 %v5854, %v5850
  %v6179 = vpack.c.b16 %v5855, %v5851
  %v6180 = vpack.c.b16 %v5860, %v5856
  %v6181 = vpack.c.b16 %v5861, %v5857
  %v6182 = vpack.c.b16 %v5862, %v5858
  %v6183 = vpack.c.b16 %v5863, %v5859
  %v6184 = vpack.c.b16 %v5868, %v5864
  %v6185 = vpack.c.b16 %v5869, %v5865
  %v6186 = vpack.c.b16 %v5870, %v5866
  %v6187 = vpack.c.b16 %v5871, %v5867
  %v6188 = vpack.c.b16 %v5876, %v5872
  %v6189 = vpack.c.b16 %v5877, %v5873
  %v6190 = vpack.c.b16 %v5878, %v5874
  %v6191 = vpack.c.b16 %v5879, %v5875
  %v6192 = vpack.c.b16 %v5884, %v5880
  %v6193 = vpack.c.b16 %v5885, %v5881
  %v6194 = vpack.c.b16 %v5886, %v5882
  %v6195 = vpack.c.b16 %v5887, %v5883
  %v6196 = vpack.c.b16 %v5892, %v5888
  %v6197 = vpack.c.b16 %v5893, %v5889
  %v6198 = vpack.c.b16 %v5894, %v5890
  %v6199 = vpack.c.b16 %v5895, %v5891
  %v6200 = vpack.c.b16 %v5900, %v5896
  %v6201 = vpack.c.b16 %v5901, %v5897
  %v6202 = vpack.c.b16 %v5902, %v5898
  %v6203 = vpack.c.b16 %v5903, %v5899
  %v6204 = vpack.c.b16 %v5908, %v5904
  %v6205 = vpack.c.b16 %v5909, %v5905
  %v6206 = vpack.c.b16 %v5910, %v5906
  %v6207 = vpack.c.b16 %v5911, %v5907
  %v6208 = vpack.c.b16 %v5916, %v5912
  %v6209 = vpack.c.b16 %v5917, %v5913
  %v6210 = vpack.c.b16 %v5918, %v5914
  %v6211 = vpack.c.b16 %v5919, %v5915
  %v6212 = vpack.c.b16 %v5924, %v5920
  %v6213 = vpack.c.b16 %v5925, %v5921
  %v6214 = vpack.c.b16 %v5926, %v5922
  %v6215 = vpack.c.b16 %v5927, %v5923
  %v6216 = vpack.c.b16 %v5932, %v5928
  %v6217 = vpack.c.b16 %v5933, %v5929
  %v6218 = vpack.c.b16 %v5934, %v5930
  %v6219 = vpack.c.b16 %v5935, %v5931
  %v6220 = vpack.c.b16 %v5940, %v5936
  %v6221 = vpack.c.b16 %v5941, %v5937
  %v6222 = vpack.c.b16 %v5942, %v5938
  %v6223 = vpack.c.b16 %v5943, %v5939
  %v6224 = vpack.c.b16 %v5948, %v5944
  %v6225 = vpack.c.b16 %v5949, %v5945
  %v6226 = vpack.c.b16 %v5950, %v5946
  %v6227 = vpack.c.b16 %v5951, %v5947
  %v6228 = vpack.c.b16 %v5956, %v5952
  %v6229 = vpack.c.b16 %v5957, %v5953
  %v6230 = vpack.c.b16 %v5958, %v5954
  %v6231 = vpack.c.b16 %v5959, %v5955
  %v6232 = vpack.c.b16 %v5964, %v5960
  %v6233 = vpack.c.b16 %v5965, %v5961
  %v6234 = vpack.c.b16 %v5966, %v5962
  %v6235 = vpack.c.b16 %v5967, %v5963
  %v6236 = vpack.c.b16 %v5972, %v5968
  %v6237 = vpack.c.b16 %v5973, %v5969
  %v6238 = vpack.c.b16 %v5974, %v5970
  %v6239 = vpack.c.b16 %v5975, %v5971
  %v6240 = vpack.c.b16 %v5980, %v5976
  %v6241 = vpack.c.b16 %v5981, %v5977
  %v6242 = vpack.c.b16 %v5982, %v5978
  %v6243 = vpack.c.b16 %v5983, %v5979
  %v6244 = vpack.c.b16 %v5988, %v5984
  %v6245 = vpack.c.b16 %v5989, %v5985
  %v6246 = vpack.c.b16 %v5990, %v5986
  %v6247 = vpack.c.b16 %v5991, %v5987
  %v6248 = vpack.c.b16 %v5996, %v5992
  %v6249 = vpack.c.b16 %v5997, %v5993
  %v6250 = vpack.c.b16 %v5998, %v5994
  %v6251 = vpack.c.b16 %v5999, %v5995
  %v6252 = vpack.c.b16 %v6004, %v6000
  %v6253 = vpack.c.b16 %v6005, %v6001
  %v6254 = vpack.c.b16 %v6006, %v6002
  %v6255 = vpack.c.b16 %v6007, %v6003
  %v6256 = vpack.c.b16 %v6012, %v6008
  %v6257 = vpack.c.b16 %v6013, %v6009
  %v6258 = vpack.c.b16 %v6014, %v6010
  %v6259 = vpack.c.b16 %v6015, %v6011
  %v6260 = vpack.c.b16 %v6020, %v6016
  %v6261 = vpack.c.b16 %v6021, %v6017
  %v6262 = vpack.c.b16 %v6022, %v6018
  %v6263 = vpack.c.b16 %v6023, %v6019
  %v6264 = vpack.c.b16 %v6028, %v6024
  %v6265 = vpack.c.b16 %v6029, %v6025
  %v6266 = vpack.c.b16 %v6030, %v6026
  %v6267 = vpack.c.b16 %v6031, %v6027
  %v6268 = vpack.c.b16 %v6036, %v6032
  %v6269 = vpack.c.b16 %v6037, %v6033
  %v6270 = vpack.c.b16 %v6038, %v6034
  %v6271 = vpack.c.b16 %v6039, %v6035
  %v6272 = vpack.c.b16 %v6044, %v6040
  %v6273 = vpack.c.b16 %v6045, %v6041
  %v6274 = vpack.c.b16 %v6046, %v6042
  %v6275 = vpack.c.b16 %v6047, %v6043
  %v6276 = vpack.c.b16 %v6052, %v6048
  %v6277 = vpack.c.b16 %v6053, %v6049
  %v6278 = vpack.c.b16 %v6054, %v6050
  %v6279 = vpack.c.b16 %v6055, %v6051
  %v6280 = vpack.c.b16 %v6060, %v6056
  %v6281 = vpack.c.b16 %v6061, %v6057
  %v6282 = vpack.c.b16 %v6062, %v6058
  %v6283 = vpack.c.b16 %v6063, %v6059
  %v6284 = vpack.c.b16 %v6068, %v6064
  %v6285 = vpack.c.b16 %v6069, %v6065
  %v6286 = vpack.c.b16 %v6070, %v6066
  %v6287 = vpack.c.b16 %v6071, %v6067
  %v6288 = vpack.c.b16 %v6076, %v6072
  %v6289 = vpack.c.b16 %v6077, %v6073
  %v6290 = vpack.c.b16 %v6078, %v6074
  %v6291 = vpack.c.b16 %v6079, %v6075
  %v6292 = vpack.c.b16 %v6084, %v6080
  %v6293 = vpack.c.b16 %v6085, %v6081
  %v6294 = vpack.c.b16 %v6086, %v6082
  %v6295 = vpack.c.b16 %v6087, %v6083
  %v6296 = vpack.c.b16 %v6092, %v6088
  %v6297 = vpack.c.b16 %v6093, %v6089
  %v6298 = vpack.c.b16 %v6094, %v6090
  %v6299 = vpack.c.b16 %v6095, %v6091
  %v6300 = vpack.c.b16 %v6100, %v6096
  %v6301 = vpack.c.b16 %v6101, %v6097
  %v6302 = vpack.c.b16 %v6102, %v6098
  %v6303 = vpack.c.b16 %v6103, %v6099
  %v6304 = vpack.c.b16 %v6108, %v6104
  %v6305 = vpack.c.b16 %v6109, %v6105
  %v6306 = vpack.c.b16 %v6110, %v6106
  %v6307 = vpack.c.b16 %v6111, %v6107
  %v6308 = vpack.c.b16 %v6116, %v6112
  %v6309 = vpack.c.b16 %v6117, %v6113
  %v6310 = vpack.c.b16 %v6118, %v6114
  %v6311 = vpack.c.b16 %v6119, %v6115
  %6504 = vmatprep.subr.bf16.mxu0 %v6121
  %6505 = vmatpush1.bf16.msra.mxu0 %v6120
  %6506 = vmatprep.subr.bf16.mxu0 %v6125
  %6507 = vmatpush1.bf16.msra.mxu0 %v6124
  %6508 = vmatprep.subr.bf16.mxu0 %v6129
  %6509 = vmatpush1.bf16.msra.mxu0 %v6128
  %6510 = vmatprep.subr.bf16.mxu0 %v6133
  %6511 = vmatpush1.bf16.msra.mxu0 %v6132
  %6512 = vmatprep.subr.bf16.mxu0 %v6137
  %6513 = vmatpush1.bf16.msra.mxu0 %v6136
  %6514 = vmatprep.subr.bf16.mxu0 %v6141
  %6515 = vmatpush1.bf16.msra.mxu0 %v6140
  %6516 = vmatprep.subr.bf16.mxu0 %v6145
  %6517 = vmatpush1.bf16.msra.mxu0 %v6144
  %6518 = vmatprep.subr.bf16.mxu0 %v6149
  %6519 = vmatpush1.bf16.msra.mxu0 %v6148
  %6520 = vmatprep.subr.bf16.mxu0 %v6153
  %6521 = vmatpush1.bf16.msra.mxu0 %v6152
  %6522 = vmatprep.subr.bf16.mxu0 %v6157
  %6523 = vmatpush1.bf16.msra.mxu0 %v6156
  %6524 = vmatprep.subr.bf16.mxu0 %v6161
  %6525 = vmatpush1.bf16.msra.mxu0 %v6160
  %6526 = vmatprep.subr.bf16.mxu0 %v6165
  %6527 = vmatpush1.bf16.msra.mxu0 %v6164
  %6528 = vmatprep.subr.bf16.mxu0 %v6169
  %6529 = vmatpush1.bf16.msra.mxu0 %v6168
  %6530 = vmatprep.subr.bf16.mxu0 %v6173
  %6531 = vmatpush1.bf16.msra.mxu0 %v6172
  %6532 = vmatprep.subr.bf16.mxu0 %v6177
  %6533 = vmatpush1.bf16.msra.mxu0 %v6176
  %6534 = vmatprep.subr.bf16.mxu0 %v6181
  %6535 = vmatpush1.bf16.msra.mxu0 %v6180
  %6536 = vmatprep.mubr.bf16.mxu0 %v603
  %6537 = vmatmul.mubr.bf16.gmra.mrb[0].mxu0 %v602
  %v6538 = vpop.f32.mrb[0].mxu0
  %v6539 = vadd.f32 0.0, %v6538
  %v6540 = vpop.f32.mrb[0].mxu0
  %v6541 = vadd.f32 0.0, %v6540
  %v6542 = vpop.f32.mrb[0].mxu0
  %v6543 = vadd.f32 0.0, %v6542
  %v6544 = vpop.f32.mrb[0].mxu0
  %v6545 = vadd.f32 0.0, %v6544
  %6546 = vmatprep.mubr.bf16.mxu0 %v609
  %6547 = vmatmul.mubr.bf16.gmra.mrb[0].mxu0 %v608
  %v6548 = vpop.f32.mrb[0].mxu0
  %v6549 = vadd.f32 0.0, %v6548
  %v6550 = vpop.f32.mrb[0].mxu0
  %v6551 = vadd.f32 0.0, %v6550
  %v6552 = vpop.f32.mrb[0].mxu0
  %v6553 = vadd.f32 0.0, %v6552
  %v6554 = vpop.f32.mrb[0].mxu0
  %v6555 = vadd.f32 0.0, %v6554
  %6556 = vmatprep.mubr.bf16.mxu0 %v615
  %6557 = vmatmul.mubr.bf16.gmra.mrb[0].mxu0 %v614
  %v6558 = vpop.f32.mrb[0].mxu0
  %v6559 = vadd.f32 0.0, %v6558
  %v6560 = vpop.f32.mrb[0].mxu0
  %v6561 = vadd.f32 0.0, %v6560
  %v6562 = vpop.f32.mrb[0].mxu0
  %v6563 = vadd.f32 0.0, %v6562
  %v6564 = vpop.f32.mrb[0].mxu0
  %v6565 = vadd.f32 0.0, %v6564
  %6566 = vmatprep.mubr.bf16.mxu0 %v621
  %6567 = vmatmul.mubr.bf16.gmra.mrb[0].mxu0 %v620
  %v6568 = vpop.f32.mrb[0].mxu0
  %v6569 = vadd.f32 0.0, %v6568
  %v6570 = vpop.f32.mrb[0].mxu0
  %v6571 = vadd.f32 0.0, %v6570
  %v6572 = vpop.f32.mrb[0].mxu0
  %v6573 = vadd.f32 0.0, %v6572
  %v6574 = vpop.f32.mrb[0].mxu0
  %v6575 = vadd.f32 0.0, %v6574
  %6576 = vmatprep.mubr.bf16.mxu0 %v627
  %6577 = vmatmul.mubr.bf16.gmra.mrb[0].mxu0 %v626
  %v6578 = vpop.f32.mrb[0].mxu0
  %v6579 = vadd.f32 0.0, %v6578
  %v6580 = vpop.f32.mrb[0].mxu0
  %v6581 = vadd.f32 0.0, %v6580
  %v6582 = vpop.f32.mrb[0].mxu0
  %v6583 = vadd.f32 0.0, %v6582
  %v6584 = vpop.f32.mrb[0].mxu0
  %v6585 = vadd.f32 0.0, %v6584
  %6586 = vmatprep.mubr.bf16.mxu0 %v633
  %6587 = vmatmul.mubr.bf16.gmra.mrb[0].mxu0 %v632
  %v6588 = vpop.f32.mrb[0].mxu0
  %v6589 = vadd.f32 0.0, %v6588
  %v6590 = vpop.f32.mrb[0].mxu0
  %v6591 = vadd.f32 0.0, %v6590
  %v6592 = vpop.f32.mrb[0].mxu0
  %v6593 = vadd.f32 0.0, %v6592
  %v6594 = vpop.f32.mrb[0].mxu0
  %v6595 = vadd.f32 0.0, %v6594
  %6596 = vmatprep.mubr.bf16.mxu0 %v639
  %6597 = vmatmul.mubr.bf16.gmra.mrb[0].mxu0 %v638
  %v6598 = vpop.f32.mrb[0].mxu0
  %v6599 = vadd.f32 0.0, %v6598
  %v6600 = vpop.f32.mrb[0].mxu0
  %v6601 = vadd.f32 0.0, %v6600
  %v6602 = vpop.f32.mrb[0].mxu0
  %v6603 = vadd.f32 0.0, %v6602
  %v6604 = vpop.f32.mrb[0].mxu0
  %v6605 = vadd.f32 0.0, %v6604
  %6606 = vmatprep.mubr.bf16.mxu0 %v645
  %6607 = vmatmul.mubr.bf16.gmra.mrb[0].mxu0 %v644
  %v6608 = vpop.f32.mrb[0].mxu0
  %v6609 = vadd.f32 0.0, %v6608
  %v6610 = vpop.f32.mrb[0].mxu0
  %v6611 = vadd.f32 0.0, %v6610
  %v6612 = vpop.f32.mrb[0].mxu0
  %v6613 = vadd.f32 0.0, %v6612
  %v6614 = vpop.f32.mrb[0].mxu0
  %v6615 = vadd.f32 0.0, %v6614
  %6616 = vmatprep.mubr.bf16.mxu0 %v651
  %6617 = vmatmul.mubr.bf16.gmra.mrb[0].mxu0 %v650
  %v6618 = vpop.f32.mrb[0].mxu0
  %v6619 = vadd.f32 0.0, %v6618
  %v6620 = vpop.f32.mrb[0].mxu0
  %v6621 = vadd.f32 0.0, %v6620
  %v6622 = vpop.f32.mrb[0].mxu0
  %v6623 = vadd.f32 0.0, %v6622
  %v6624 = vpop.f32.mrb[0].mxu0
  %v6625 = vadd.f32 0.0, %v6624
  %6626 = vmatprep.mubr.bf16.mxu0 %v657
  %6627 = vmatmul.mubr.bf16.gmra.mrb[0].mxu0 %v656
  %v6628 = vpop.f32.mrb[0].mxu0
  %v6629 = vadd.f32 0.0, %v6628
  %v6630 = vpop.f32.mrb[0].mxu0
  %v6631 = vadd.f32 0.0, %v6630
  %v6632 = vpop.f32.mrb[0].mxu0
  %v6633 = vadd.f32 0.0, %v6632
  %v6634 = vpop.f32.mrb[0].mxu0
  %v6635 = vadd.f32 0.0, %v6634
  %6636 = vmatprep.mubr.bf16.mxu0 %v663
  %6637 = vmatmul.mubr.bf16.gmra.mrb[0].mxu0 %v662
  %v6638 = vpop.f32.mrb[0].mxu0
  %v6639 = vadd.f32 0.0, %v6638
  %v6640 = vpop.f32.mrb[0].mxu0
  %v6641 = vadd.f32 0.0, %v6640
  %v6642 = vpop.f32.mrb[0].mxu0
  %v6643 = vadd.f32 0.0, %v6642
  %v6644 = vpop.f32.mrb[0].mxu0
  %v6645 = vadd.f32 0.0, %v6644
  %6646 = vmatprep.mubr.bf16.mxu0 %v669
  %6647 = vmatmul.mubr.bf16.gmra.mrb[0].mxu0 %v668
  %v6648 = vpop.f32.mrb[0].mxu0
  %v6649 = vadd.f32 0.0, %v6648
  %v6650 = vpop.f32.mrb[0].mxu0
  %v6651 = vadd.f32 0.0, %v6650
  %v6652 = vpop.f32.mrb[0].mxu0
  %v6653 = vadd.f32 0.0, %v6652
  %v6654 = vpop.f32.mrb[0].mxu0
  %v6655 = vadd.f32 0.0, %v6654
  %6656 = vmatprep.mubr.bf16.mxu0 %v675
  %6657 = vmatmul.mubr.bf16.gmra.mrb[0].mxu0 %v674
  %v6658 = vpop.f32.mrb[0].mxu0
  %v6659 = vadd.f32 0.0, %v6658
  %v6660 = vpop.f32.mrb[0].mxu0
  %v6661 = vadd.f32 0.0, %v6660
  %v6662 = vpop.f32.mrb[0].mxu0
  %v6663 = vadd.f32 0.0, %v6662
  %v6664 = vpop.f32.mrb[0].mxu0
  %v6665 = vadd.f32 0.0, %v6664
  %6666 = vmatprep.mubr.bf16.mxu0 %v681
  %6667 = vmatmul.mubr.bf16.gmra.mrb[0].mxu0 %v680
  %v6668 = vpop.f32.mrb[0].mxu0
  %v6669 = vadd.f32 0.0, %v6668
  %v6670 = vpop.f32.mrb[0].mxu0
  %v6671 = vadd.f32 0.0, %v6670
  %v6672 = vpop.f32.mrb[0].mxu0
  %v6673 = vadd.f32 0.0, %v6672
  %v6674 = vpop.f32.mrb[0].mxu0
  %v6675 = vadd.f32 0.0, %v6674
  %6676 = vmatprep.mubr.bf16.mxu0 %v687
  %6677 = vmatmul.mubr.bf16.gmra.mrb[0].mxu0 %v686
  %v6678 = vpop.f32.mrb[0].mxu0
  %v6679 = vadd.f32 0.0, %v6678
  %v6680 = vpop.f32.mrb[0].mxu0
  %v6681 = vadd.f32 0.0, %v6680
  %v6682 = vpop.f32.mrb[0].mxu0
  %v6683 = vadd.f32 0.0, %v6682
  %v6684 = vpop.f32.mrb[0].mxu0
  %v6685 = vadd.f32 0.0, %v6684
  %6686 = vmatprep.mubr.bf16.mxu0 %v693
  %6687 = vmatmul.mubr.bf16.gmra.mrb[0].mxu0 %v692
  %v6688 = vpop.f32.mrb[0].mxu0
  %v6689 = vadd.f32 0.0, %v6688
  %v6690 = vpop.f32.mrb[0].mxu0
  %v6691 = vadd.f32 0.0, %v6690
  %v6692 = vpop.f32.mrb[0].mxu0
  %v6693 = vadd.f32 0.0, %v6692
  %v6694 = vpop.f32.mrb[0].mxu0
  %v6695 = vadd.f32 0.0, %v6694
  %6696 = vdwg.mxu0
  %6697 = vmatprep.subr.bf16.mxu0 %v6185
  %6698 = vmatpush1.bf16.msra.mxu0 %v6184
  %6699 = vmatprep.subr.bf16.mxu0 %v6189
  %6700 = vmatpush1.bf16.msra.mxu0 %v6188
  %6701 = vmatprep.subr.bf16.mxu0 %v6193
  %6702 = vmatpush1.bf16.msra.mxu0 %v6192
  %6703 = vmatprep.subr.bf16.mxu0 %v6197
  %6704 = vmatpush1.bf16.msra.mxu0 %v6196
  %6705 = vmatprep.subr.bf16.mxu0 %v6201
  %6706 = vmatpush1.bf16.msra.mxu0 %v6200
  %6707 = vmatprep.subr.bf16.mxu0 %v6205
  %6708 = vmatpush1.bf16.msra.mxu0 %v6204
  %6709 = vmatprep.subr.bf16.mxu0 %v6209
  %6710 = vmatpush1.bf16.msra.mxu0 %v6208
  %6711 = vmatprep.subr.bf16.mxu0 %v6213
  %6712 = vmatpush1.bf16.msra.mxu0 %v6212
  %6713 = vmatprep.subr.bf16.mxu0 %v6217
  %6714 = vmatpush1.bf16.msra.mxu0 %v6216
  %6715 = vmatprep.subr.bf16.mxu0 %v6221
  %6716 = vmatpush1.bf16.msra.mxu0 %v6220
  %6717 = vmatprep.subr.bf16.mxu0 %v6225
  %6718 = vmatpush1.bf16.msra.mxu0 %v6224
  %6719 = vmatprep.subr.bf16.mxu0 %v6229
  %6720 = vmatpush1.bf16.msra.mxu0 %v6228
  %6721 = vmatprep.subr.bf16.mxu0 %v6233
  %6722 = vmatpush1.bf16.msra.mxu0 %v6232
  %6723 = vmatprep.subr.bf16.mxu0 %v6237
  %6724 = vmatpush1.bf16.msra.mxu0 %v6236
  %6725 = vmatprep.subr.bf16.mxu0 %v6241
  %6726 = vmatpush1.bf16.msra.mxu0 %v6240
  %6727 = vmatprep.subr.bf16.mxu0 %v6245
  %6728 = vmatpush1.bf16.msra.mxu0 %v6244
  %6729 = vmatprep.mubr.bf16.mxu0 %v605
  %6730 = vmatmul.mubr.bf16.gmra.mrb[0].mxu0 %v604
  %v6731 = vpop.f32.mrb[0].mxu0
  %v6732 = vadd.f32 %v6539, %v6731
  %v6733 = vpop.f32.mrb[0].mxu0
  %v6734 = vadd.f32 %v6541, %v6733
  %v6735 = vpop.f32.mrb[0].mxu0
  %v6736 = vadd.f32 %v6543, %v6735
  %v6737 = vpop.f32.mrb[0].mxu0
  %v6738 = vadd.f32 %v6545, %v6737
  %6739 = vmatprep.mubr.bf16.mxu0 %v611
  %6740 = vmatmul.mubr.bf16.gmra.mrb[0].mxu0 %v610
  %v6741 = vpop.f32.mrb[0].mxu0
  %v6742 = vadd.f32 %v6549, %v6741
  %v6743 = vpop.f32.mrb[0].mxu0
  %v6744 = vadd.f32 %v6551, %v6743
  %v6745 = vpop.f32.mrb[0].mxu0
  %v6746 = vadd.f32 %v6553, %v6745
  %v6747 = vpop.f32.mrb[0].mxu0
  %v6748 = vadd.f32 %v6555, %v6747
  %6749 = vmatprep.mubr.bf16.mxu0 %v617
  %6750 = vmatmul.mubr.bf16.gmra.mrb[0].mxu0 %v616
  %v6751 = vpop.f32.mrb[0].mxu0
  %v6752 = vadd.f32 %v6559, %v6751
  %v6753 = vpop.f32.mrb[0].mxu0
  %v6754 = vadd.f32 %v6561, %v6753
  %v6755 = vpop.f32.mrb[0].mxu0
  %v6756 = vadd.f32 %v6563, %v6755
  %v6757 = vpop.f32.mrb[0].mxu0
  %v6758 = vadd.f32 %v6565, %v6757
  %6759 = vmatprep.mubr.bf16.mxu0 %v623
  %6760 = vmatmul.mubr.bf16.gmra.mrb[0].mxu0 %v622
  %v6761 = vpop.f32.mrb[0].mxu0
  %v6762 = vadd.f32 %v6569, %v6761
  %v6763 = vpop.f32.mrb[0].mxu0
  %v6764 = vadd.f32 %v6571, %v6763
  %v6765 = vpop.f32.mrb[0].mxu0
  %v6766 = vadd.f32 %v6573, %v6765
  %v6767 = vpop.f32.mrb[0].mxu0
  %v6768 = vadd.f32 %v6575, %v6767
  %6769 = vmatprep.mubr.bf16.mxu0 %v629
  %6770 = vmatmul.mubr.bf16.gmra.mrb[0].mxu0 %v628
  %v6771 = vpop.f32.mrb[0].mxu0
  %v6772 = vadd.f32 %v6579, %v6771
  %v6773 = vpop.f32.mrb[0].mxu0
  %v6774 = vadd.f32 %v6581, %v6773
  %v6775 = vpop.f32.mrb[0].mxu0
  %v6776 = vadd.f32 %v6583, %v6775
  %v6777 = vpop.f32.mrb[0].mxu0
  %v6778 = vadd.f32 %v6585, %v6777
  %6779 = vmatprep.mubr.bf16.mxu0 %v635
  %6780 = vmatmul.mubr.bf16.gmra.mrb[0].mxu0 %v634
  %v6781 = vpop.f32.mrb[0].mxu0
  %v6782 = vadd.f32 %v6589, %v6781
  %v6783 = vpop.f32.mrb[0].mxu0
  %v6784 = vadd.f32 %v6591, %v6783
  %v6785 = vpop.f32.mrb[0].mxu0
  %v6786 = vadd.f32 %v6593, %v6785
  %v6787 = vpop.f32.mrb[0].mxu0
  %v6788 = vadd.f32 %v6595, %v6787
  %6789 = vmatprep.mubr.bf16.mxu0 %v641
  %6790 = vmatmul.mubr.bf16.gmra.mrb[0].mxu0 %v640
  %v6791 = vpop.f32.mrb[0].mxu0
  %v6792 = vadd.f32 %v6599, %v6791
  %v6793 = vpop.f32.mrb[0].mxu0
  %v6794 = vadd.f32 %v6601, %v6793
  %v6795 = vpop.f32.mrb[0].mxu0
  %v6796 = vadd.f32 %v6603, %v6795
  %v6797 = vpop.f32.mrb[0].mxu0
  %v6798 = vadd.f32 %v6605, %v6797
  %6799 = vmatprep.mubr.bf16.mxu0 %v647
  %6800 = vmatmul.mubr.bf16.gmra.mrb[0].mxu0 %v646
  %v6801 = vpop.f32.mrb[0].mxu0
  %v6802 = vadd.f32 %v6609, %v6801
  %v6803 = vpop.f32.mrb[0].mxu0
  %v6804 = vadd.f32 %v6611, %v6803
  %v6805 = vpop.f32.mrb[0].mxu0
  %v6806 = vadd.f32 %v6613, %v6805
  %v6807 = vpop.f32.mrb[0].mxu0
  %v6808 = vadd.f32 %v6615, %v6807
  %6809 = vmatprep.mubr.bf16.mxu0 %v653
  %6810 = vmatmul.mubr.bf16.gmra.mrb[0].mxu0 %v652
  %v6811 = vpop.f32.mrb[0].mxu0
  %v6812 = vadd.f32 %v6619, %v6811
  %v6813 = vpop.f32.mrb[0].mxu0
  %v6814 = vadd.f32 %v6621, %v6813
  %v6815 = vpop.f32.mrb[0].mxu0
  %v6816 = vadd.f32 %v6623, %v6815
  %v6817 = vpop.f32.mrb[0].mxu0
  %v6818 = vadd.f32 %v6625, %v6817
  %6819 = vmatprep.mubr.bf16.mxu0 %v659
  %6820 = vmatmul.mubr.bf16.gmra.mrb[0].mxu0 %v658
  %v6821 = vpop.f32.mrb[0].mxu0
  %v6822 = vadd.f32 %v6629, %v6821
  %v6823 = vpop.f32.mrb[0].mxu0
  %v6824 = vadd.f32 %v6631, %v6823
  %v6825 = vpop.f32.mrb[0].mxu0
  %v6826 = vadd.f32 %v6633, %v6825
  %v6827 = vpop.f32.mrb[0].mxu0
  %v6828 = vadd.f32 %v6635, %v6827
  %6829 = vmatprep.mubr.bf16.mxu0 %v665
  %6830 = vmatmul.mubr.bf16.gmra.mrb[0].mxu0 %v664
  %v6831 = vpop.f32.mrb[0].mxu0
  %v6832 = vadd.f32 %v6639, %v6831
  %v6833 = vpop.f32.mrb[0].mxu0
  %v6834 = vadd.f32 %v6641, %v6833
  %v6835 = vpop.f32.mrb[0].mxu0
  %v6836 = vadd.f32 %v6643, %v6835
  %v6837 = vpop.f32.mrb[0].mxu0
  %v6838 = vadd.f32 %v6645, %v6837
  %6839 = vmatprep.mubr.bf16.mxu0 %v671
  %6840 = vmatmul.mubr.bf16.gmra.mrb[0].mxu0 %v670
  %v6841 = vpop.f32.mrb[0].mxu0
  %v6842 = vadd.f32 %v6649, %v6841
  %v6843 = vpop.f32.mrb[0].mxu0
  %v6844 = vadd.f32 %v6651, %v6843
  %v6845 = vpop.f32.mrb[0].mxu0
  %v6846 = vadd.f32 %v6653, %v6845
  %v6847 = vpop.f32.mrb[0].mxu0
  %v6848 = vadd.f32 %v6655, %v6847
  %6849 = vmatprep.mubr.bf16.mxu0 %v677
  %6850 = vmatmul.mubr.bf16.gmra.mrb[0].mxu0 %v676
  %v6851 = vpop.f32.mrb[0].mxu0
  %v6852 = vadd.f32 %v6659, %v6851
  %v6853 = vpop.f32.mrb[0].mxu0
  %v6854 = vadd.f32 %v6661, %v6853
  %v6855 = vpop.f32.mrb[0].mxu0
  %v6856 = vadd.f32 %v6663, %v6855
  %v6857 = vpop.f32.mrb[0].mxu0
  %v6858 = vadd.f32 %v6665, %v6857
  %6859 = vmatprep.mubr.bf16.mxu0 %v683
  %6860 = vmatmul.mubr.bf16.gmra.mrb[0].mxu0 %v682
  %v6861 = vpop.f32.mrb[0].mxu0
  %v6862 = vadd.f32 %v6669, %v6861
  %v6863 = vpop.f32.mrb[0].mxu0
  %v6864 = vadd.f32 %v6671, %v6863
  %v6865 = vpop.f32.mrb[0].mxu0
  %v6866 = vadd.f32 %v6673, %v6865
  %v6867 = vpop.f32.mrb[0].mxu0
  %v6868 = vadd.f32 %v6675, %v6867
  %6869 = vmatprep.mubr.bf16.mxu0 %v689
  %6870 = vmatmul.mubr.bf16.gmra.mrb[0].mxu0 %v688
  %v6871 = vpop.f32.mrb[0].mxu0
  %v6872 = vadd.f32 %v6679, %v6871
  %v6873 = vpop.f32.mrb[0].mxu0
  %v6874 = vadd.f32 %v6681, %v6873
  %v6875 = vpop.f32.mrb[0].mxu0
  %v6876 = vadd.f32 %v6683, %v6875
  %v6877 = vpop.f32.mrb[0].mxu0
  %v6878 = vadd.f32 %v6685, %v6877
  %6879 = vmatprep.mubr.bf16.mxu0 %v695
  %6880 = vmatmul.mubr.bf16.gmra.mrb[0].mxu0 %v694
  %v6881 = vpop.f32.mrb[0].mxu0
  %v6882 = vadd.f32 %v6689, %v6881
  %v6883 = vpop.f32.mrb[0].mxu0
  %v6884 = vadd.f32 %v6691, %v6883
  %v6885 = vpop.f32.mrb[0].mxu0
  %v6886 = vadd.f32 %v6693, %v6885
  %v6887 = vpop.f32.mrb[0].mxu0
  %v6888 = vadd.f32 %v6695, %v6887
  %6889 = vdwg.mxu0
  %6890 = vmatprep.subr.bf16.mxu0 %v6249
  %6891 = vmatpush1.bf16.msra.mxu0 %v6248
  %6892 = vmatprep.subr.bf16.mxu0 %v6253
  %6893 = vmatpush1.bf16.msra.mxu0 %v6252
  %6894 = vmatprep.subr.bf16.mxu0 %v6257
  %6895 = vmatpush1.bf16.msra.mxu0 %v6256
  %6896 = vmatprep.subr.bf16.mxu0 %v6261
  %6897 = vmatpush1.bf16.msra.mxu0 %v6260
  %6898 = vmatprep.subr.bf16.mxu0 %v6265
  %6899 = vmatpush1.bf16.msra.mxu0 %v6264
  %6900 = vmatprep.subr.bf16.mxu0 %v6269
  %6901 = vmatpush1.bf16.msra.mxu0 %v6268
  %6902 = vmatprep.subr.bf16.mxu0 %v6273
  %6903 = vmatpush1.bf16.msra.mxu0 %v6272
  %6904 = vmatprep.subr.bf16.mxu0 %v6277
  %6905 = vmatpush1.bf16.msra.mxu0 %v6276
  %6906 = vmatprep.subr.bf16.mxu0 %v6281
  %6907 = vmatpush1.bf16.msra.mxu0 %v6280
  %6908 = vmatprep.subr.bf16.mxu0 %v6285
  %6909 = vmatpush1.bf16.msra.mxu0 %v6284
  %6910 = vmatprep.subr.bf16.mxu0 %v6289
  %6911 = vmatpush1.bf16.msra.mxu0 %v6288
  %6912 = vmatprep.subr.bf16.mxu0 %v6293
  %6913 = vmatpush1.bf16.msra.mxu0 %v6292
  %6914 = vmatprep.subr.bf16.mxu0 %v6297
  %6915 = vmatpush1.bf16.msra.mxu0 %v6296
  %6916 = vmatprep.subr.bf16.mxu0 %v6301
  %6917 = vmatpush1.bf16.msra.mxu0 %v6300
  %6918 = vmatprep.subr.bf16.mxu0 %v6305
  %6919 = vmatpush1.bf16.msra.mxu0 %v6304
  %6920 = vmatprep.subr.bf16.mxu0 %v6309
  %6921 = vmatpush1.bf16.msra.mxu0 %v6308
  %6922 = vmatprep.mubr.bf16.mxu0 %v607
  %6923 = vmatmul.mubr.bf16.gmra.mrb[0].mxu0 %v606
  %v6924 = vpop.f32.mrb[0].mxu0
  %v6925 = vadd.f32 %v6732, %v6924
  %v6926 = vpop.f32.mrb[0].mxu0
  %v6927 = vadd.f32 %v6734, %v6926
  %v6928 = vpop.f32.mrb[0].mxu0
  %v6929 = vadd.f32 %v6736, %v6928
  %v6930 = vpop.f32.mrb[0].mxu0
  %v6931 = vadd.f32 %v6738, %v6930
  %6932 = vmatprep.mubr.bf16.mxu0 %v613
  %6933 = vmatmul.mubr.bf16.gmra.mrb[0].mxu0 %v612
  %v6934 = vpop.f32.mrb[0].mxu0
  %v6935 = vadd.f32 %v6742, %v6934
  %v6936 = vpop.f32.mrb[0].mxu0
  %v6937 = vadd.f32 %v6744, %v6936
  %v6938 = vpop.f32.mrb[0].mxu0
  %v6939 = vadd.f32 %v6746, %v6938
  %v6940 = vpop.f32.mrb[0].mxu0
  %v6941 = vadd.f32 %v6748, %v6940
  %6942 = vmatprep.mubr.bf16.mxu0 %v619
  %6943 = vmatmul.mubr.bf16.gmra.mrb[0].mxu0 %v618
  %v6944 = vpop.f32.mrb[0].mxu0
  %v6945 = vadd.f32 %v6752, %v6944
  %v6946 = vpop.f32.mrb[0].mxu0
  %v6947 = vadd.f32 %v6754, %v6946
  %v6948 = vpop.f32.mrb[0].mxu0
  %v6949 = vadd.f32 %v6756, %v6948
  %v6950 = vpop.f32.mrb[0].mxu0
  %v6951 = vadd.f32 %v6758, %v6950
  %6952 = vmatprep.mubr.bf16.mxu0 %v625
  %6953 = vmatmul.mubr.bf16.gmra.mrb[0].mxu0 %v624
  %v6954 = vpop.f32.mrb[0].mxu0
  %v6955 = vadd.f32 %v6762, %v6954
  %v6956 = vpop.f32.mrb[0].mxu0
  %v6957 = vadd.f32 %v6764, %v6956
  %v6958 = vpop.f32.mrb[0].mxu0
  %v6959 = vadd.f32 %v6766, %v6958
  %v6960 = vpop.f32.mrb[0].mxu0
  %v6961 = vadd.f32 %v6768, %v6960
  %6962 = vmatprep.mubr.bf16.mxu0 %v631
  %6963 = vmatmul.mubr.bf16.gmra.mrb[0].mxu0 %v630
  %v6964 = vpop.f32.mrb[0].mxu0
  %v6965 = vadd.f32 %v6772, %v6964
  %v6966 = vpop.f32.mrb[0].mxu0
  %v6967 = vadd.f32 %v6774, %v6966
  %v6968 = vpop.f32.mrb[0].mxu0
  %v6969 = vadd.f32 %v6776, %v6968
  %v6970 = vpop.f32.mrb[0].mxu0
  %v6971 = vadd.f32 %v6778, %v6970
  %6972 = vmatprep.mubr.bf16.mxu0 %v637
  %6973 = vmatmul.mubr.bf16.gmra.mrb[0].mxu0 %v636
  %v6974 = vpop.f32.mrb[0].mxu0
  %v6975 = vadd.f32 %v6782, %v6974
  %v6976 = vpop.f32.mrb[0].mxu0
  %v6977 = vadd.f32 %v6784, %v6976
  %v6978 = vpop.f32.mrb[0].mxu0
  %v6979 = vadd.f32 %v6786, %v6978
  %v6980 = vpop.f32.mrb[0].mxu0
  %v6981 = vadd.f32 %v6788, %v6980
  %6982 = vmatprep.mubr.bf16.mxu0 %v643
  %6983 = vmatmul.mubr.bf16.gmra.mrb[0].mxu0 %v642
  %v6984 = vpop.f32.mrb[0].mxu0
  %v6985 = vadd.f32 %v6792, %v6984
  %v6986 = vpop.f32.mrb[0].mxu0
  %v6987 = vadd.f32 %v6794, %v6986
  %v6988 = vpop.f32.mrb[0].mxu0
  %v6989 = vadd.f32 %v6796, %v6988
  %v6990 = vpop.f32.mrb[0].mxu0
  %v6991 = vadd.f32 %v6798, %v6990
  %6992 = vmatprep.mubr.bf16.mxu0 %v649
  %6993 = vmatmul.mubr.bf16.gmra.mrb[0].mxu0 %v648
  %v6994 = vpop.f32.mrb[0].mxu0
  %v6995 = vadd.f32 %v6802, %v6994
  %v6996 = vpop.f32.mrb[0].mxu0
  %v6997 = vadd.f32 %v6804, %v6996
  %v6998 = vpop.f32.mrb[0].mxu0
  %v6999 = vadd.f32 %v6806, %v6998
  %v7000 = vpop.f32.mrb[0].mxu0
  %v7001 = vadd.f32 %v6808, %v7000
  %7002 = vmatprep.mubr.bf16.mxu0 %v655
  %7003 = vmatmul.mubr.bf16.gmra.mrb[0].mxu0 %v654
  %v7004 = vpop.f32.mrb[0].mxu0
  %v7005 = vadd.f32 %v6812, %v7004
  %v7006 = vpop.f32.mrb[0].mxu0
  %v7007 = vadd.f32 %v6814, %v7006
  %v7008 = vpop.f32.mrb[0].mxu0
  %v7009 = vadd.f32 %v6816, %v7008
  %v7010 = vpop.f32.mrb[0].mxu0
  %v7011 = vadd.f32 %v6818, %v7010
  %7012 = vmatprep.mubr.bf16.mxu0 %v661
  %7013 = vmatmul.mubr.bf16.gmra.mrb[0].mxu0 %v660
  %v7014 = vpop.f32.mrb[0].mxu0
  %v7015 = vadd.f32 %v6822, %v7014
  %v7016 = vpop.f32.mrb[0].mxu0
  %v7017 = vadd.f32 %v6824, %v7016
  %v7018 = vpop.f32.mrb[0].mxu0
  %v7019 = vadd.f32 %v6826, %v7018
  %v7020 = vpop.f32.mrb[0].mxu0
  %v7021 = vadd.f32 %v6828, %v7020
  %7022 = vmatprep.mubr.bf16.mxu0 %v667
  %7023 = vmatmul.mubr.bf16.gmra.mrb[0].mxu0 %v666
  %v7024 = vpop.f32.mrb[0].mxu0
  %v7025 = vadd.f32 %v6832, %v7024
  %v7026 = vpop.f32.mrb[0].mxu0
  %v7027 = vadd.f32 %v6834, %v7026
  %v7028 = vpop.f32.mrb[0].mxu0
  %v7029 = vadd.f32 %v6836, %v7028
  %v7030 = vpop.f32.mrb[0].mxu0
  %v7031 = vadd.f32 %v6838, %v7030
  %7032 = vmatprep.mubr.bf16.mxu0 %v673
  %7033 = vmatmul.mubr.bf16.gmra.mrb[0].mxu0 %v672
  %v7034 = vpop.f32.mrb[0].mxu0
  %v7035 = vadd.f32 %v6842, %v7034
  %v7036 = vpop.f32.mrb[0].mxu0
  %v7037 = vadd.f32 %v6844, %v7036
  %v7038 = vpop.f32.mrb[0].mxu0
  %v7039 = vadd.f32 %v6846, %v7038
  %v7040 = vpop.f32.mrb[0].mxu0
  %v7041 = vadd.f32 %v6848, %v7040
  %7042 = vmatprep.mubr.bf16.mxu0 %v679
  %7043 = vmatmul.mubr.bf16.gmra.mrb[0].mxu0 %v678
  %v7044 = vpop.f32.mrb[0].mxu0
  %v7045 = vadd.f32 %v6852, %v7044
  %v7046 = vpop.f32.mrb[0].mxu0
  %v7047 = vadd.f32 %v6854, %v7046
  %v7048 = vpop.f32.mrb[0].mxu0
  %v7049 = vadd.f32 %v6856, %v7048
  %v7050 = vpop.f32.mrb[0].mxu0
  %v7051 = vadd.f32 %v6858, %v7050
  %7052 = vmatprep.mubr.bf16.mxu0 %v685
  %7053 = vmatmul.mubr.bf16.gmra.mrb[0].mxu0 %v684
  %v7054 = vpop.f32.mrb[0].mxu0
  %v7055 = vadd.f32 %v6862, %v7054
  %v7056 = vpop.f32.mrb[0].mxu0
  %v7057 = vadd.f32 %v6864, %v7056
  %v7058 = vpop.f32.mrb[0].mxu0
  %v7059 = vadd.f32 %v6866, %v7058
  %v7060 = vpop.f32.mrb[0].mxu0
  %v7061 = vadd.f32 %v6868, %v7060
  %7062 = vmatprep.mubr.bf16.mxu0 %v691
  %7063 = vmatmul.mubr.bf16.gmra.mrb[0].mxu0 %v690
  %v7064 = vpop.f32.mrb[0].mxu0
  %v7065 = vadd.f32 %v6872, %v7064
  %v7066 = vpop.f32.mrb[0].mxu0
  %v7067 = vadd.f32 %v6874, %v7066
  %v7068 = vpop.f32.mrb[0].mxu0
  %v7069 = vadd.f32 %v6876, %v7068
  %v7070 = vpop.f32.mrb[0].mxu0
  %v7071 = vadd.f32 %v6878, %v7070
  %7072 = vmatprep.mubr.bf16.mxu0 %v697
  %7073 = vmatmul.mubr.bf16.gmra.mrb[0].mxu0 %v696
  %v7074 = vpop.f32.mrb[0].mxu0
  %v7075 = vadd.f32 %v6882, %v7074
  %v7076 = vpop.f32.mrb[0].mxu0
  %v7077 = vadd.f32 %v6884, %v7076
  %v7078 = vpop.f32.mrb[0].mxu0
  %v7079 = vadd.f32 %v6886, %v7078
  %v7080 = vpop.f32.mrb[0].mxu0
  %v7081 = vadd.f32 %v6888, %v7080
  %7082 = vdwg.mxu0
  %7083 = vmatprep.subr.bf16.mxu0 %v6123
  %7084 = vmatpush1.bf16.msra.mxu0 %v6122
  %7085 = vmatprep.subr.bf16.mxu0 %v6127
  %7086 = vmatpush1.bf16.msra.mxu0 %v6126
  %7087 = vmatprep.subr.bf16.mxu0 %v6131
  %7088 = vmatpush1.bf16.msra.mxu0 %v6130
  %7089 = vmatprep.subr.bf16.mxu0 %v6135
  %7090 = vmatpush1.bf16.msra.mxu0 %v6134
  %7091 = vmatprep.subr.bf16.mxu0 %v6139
  %7092 = vmatpush1.bf16.msra.mxu0 %v6138
  %7093 = vmatprep.subr.bf16.mxu0 %v6143
  %7094 = vmatpush1.bf16.msra.mxu0 %v6142
  %7095 = vmatprep.subr.bf16.mxu0 %v6147
  %7096 = vmatpush1.bf16.msra.mxu0 %v6146
  %7097 = vmatprep.subr.bf16.mxu0 %v6151
  %7098 = vmatpush1.bf16.msra.mxu0 %v6150
  %7099 = vmatprep.subr.bf16.mxu0 %v6155
  %7100 = vmatpush1.bf16.msra.mxu0 %v6154
  %7101 = vmatprep.subr.bf16.mxu0 %v6159
  %7102 = vmatpush1.bf16.msra.mxu0 %v6158
  %7103 = vmatprep.subr.bf16.mxu0 %v6163
  %7104 = vmatpush1.bf16.msra.mxu0 %v6162
  %7105 = vmatprep.subr.bf16.mxu0 %v6167
  %7106 = vmatpush1.bf16.msra.mxu0 %v6166
  %7107 = vmatprep.subr.bf16.mxu0 %v6171
  %7108 = vmatpush1.bf16.msra.mxu0 %v6170
  %7109 = vmatprep.subr.bf16.mxu0 %v6175
  %7110 = vmatpush1.bf16.msra.mxu0 %v6174
  %7111 = vmatprep.subr.bf16.mxu0 %v6179
  %7112 = vmatpush1.bf16.msra.mxu0 %v6178
  %7113 = vmatprep.subr.bf16.mxu0 %v6183
  %7114 = vmatpush1.bf16.msra.mxu0 %v6182
  %7115 = vmatprep.mubr.bf16.mxu0 %v603
  %7116 = vmatmul.mubr.bf16.gmra.mrb[0].mxu0 %v602
  %v7117 = vpop.f32.mrb[0].mxu0
  %v7118 = vadd.f32 0.0, %v7117
  %v7119 = vpop.f32.mrb[0].mxu0
  %v7120 = vadd.f32 0.0, %v7119
  %v7121 = vpop.f32.mrb[0].mxu0
  %v7122 = vadd.f32 0.0, %v7121
  %v7123 = vpop.f32.mrb[0].mxu0
  %v7124 = vadd.f32 0.0, %v7123
  %7125 = vmatprep.mubr.bf16.mxu0 %v609
  %7126 = vmatmul.mubr.bf16.gmra.mrb[0].mxu0 %v608
  %v7127 = vpop.f32.mrb[0].mxu0
  %v7128 = vadd.f32 0.0, %v7127
  %v7129 = vpop.f32.mrb[0].mxu0
  %v7130 = vadd.f32 0.0, %v7129
  %v7131 = vpop.f32.mrb[0].mxu0
  %v7132 = vadd.f32 0.0, %v7131
  %v7133 = vpop.f32.mrb[0].mxu0
  %v7134 = vadd.f32 0.0, %v7133
  %7135 = vmatprep.mubr.bf16.mxu0 %v615
  %7136 = vmatmul.mubr.bf16.gmra.mrb[0].mxu0 %v614
  %v7137 = vpop.f32.mrb[0].mxu0
  %v7138 = vadd.f32 0.0, %v7137
  %v7139 = vpop.f32.mrb[0].mxu0
  %v7140 = vadd.f32 0.0, %v7139
  %v7141 = vpop.f32.mrb[0].mxu0
  %v7142 = vadd.f32 0.0, %v7141
  %v7143 = vpop.f32.mrb[0].mxu0
  %v7144 = vadd.f32 0.0, %v7143
  %7145 = vmatprep.mubr.bf16.mxu0 %v621
  %7146 = vmatmul.mubr.bf16.gmra.mrb[0].mxu0 %v620
  %v7147 = vpop.f32.mrb[0].mxu0
  %v7148 = vadd.f32 0.0, %v7147
  %v7149 = vpop.f32.mrb[0].mxu0
  %v7150 = vadd.f32 0.0, %v7149
  %v7151 = vpop.f32.mrb[0].mxu0
  %v7152 = vadd.f32 0.0, %v7151
  %v7153 = vpop.f32.mrb[0].mxu0
  %v7154 = vadd.f32 0.0, %v7153
  %7155 = vmatprep.mubr.bf16.mxu0 %v627
  %7156 = vmatmul.mubr.bf16.gmra.mrb[0].mxu0 %v626
  %v7157 = vpop.f32.mrb[0].mxu0
  %v7158 = vadd.f32 0.0, %v7157
  %v7159 = vpop.f32.mrb[0].mxu0
  %v7160 = vadd.f32 0.0, %v7159
  %v7161 = vpop.f32.mrb[0].mxu0
  %v7162 = vadd.f32 0.0, %v7161
  %v7163 = vpop.f32.mrb[0].mxu0
  %v7164 = vadd.f32 0.0, %v7163
  %7165 = vmatprep.mubr.bf16.mxu0 %v633
  %7166 = vmatmul.mubr.bf16.gmra.mrb[0].mxu0 %v632
  %v7167 = vpop.f32.mrb[0].mxu0
  %v7168 = vadd.f32 0.0, %v7167
  %v7169 = vpop.f32.mrb[0].mxu0
  %v7170 = vadd.f32 0.0, %v7169
  %v7171 = vpop.f32.mrb[0].mxu0
  %v7172 = vadd.f32 0.0, %v7171
  %v7173 = vpop.f32.mrb[0].mxu0
  %v7174 = vadd.f32 0.0, %v7173
  %7175 = vmatprep.mubr.bf16.mxu0 %v639
  %7176 = vmatmul.mubr.bf16.gmra.mrb[0].mxu0 %v638
  %v7177 = vpop.f32.mrb[0].mxu0
  %v7178 = vadd.f32 0.0, %v7177
  %v7179 = vpop.f32.mrb[0].mxu0
  %v7180 = vadd.f32 0.0, %v7179
  %v7181 = vpop.f32.mrb[0].mxu0
  %v7182 = vadd.f32 0.0, %v7181
  %v7183 = vpop.f32.mrb[0].mxu0
  %v7184 = vadd.f32 0.0, %v7183
  %7185 = vmatprep.mubr.bf16.mxu0 %v645
  %7186 = vmatmul.mubr.bf16.gmra.mrb[0].mxu0 %v644
  %v7187 = vpop.f32.mrb[0].mxu0
  %v7188 = vadd.f32 0.0, %v7187
  %v7189 = vpop.f32.mrb[0].mxu0
  %v7190 = vadd.f32 0.0, %v7189
  %v7191 = vpop.f32.mrb[0].mxu0
  %v7192 = vadd.f32 0.0, %v7191
  %v7193 = vpop.f32.mrb[0].mxu0
  %v7194 = vadd.f32 0.0, %v7193
  %7195 = vmatprep.mubr.bf16.mxu0 %v651
  %7196 = vmatmul.mubr.bf16.gmra.mrb[0].mxu0 %v650
  %v7197 = vpop.f32.mrb[0].mxu0
  %v7198 = vadd.f32 0.0, %v7197
  %v7199 = vpop.f32.mrb[0].mxu0
  %v7200 = vadd.f32 0.0, %v7199
  %v7201 = vpop.f32.mrb[0].mxu0
  %v7202 = vadd.f32 0.0, %v7201
  %v7203 = vpop.f32.mrb[0].mxu0
  %v7204 = vadd.f32 0.0, %v7203
  %7205 = vmatprep.mubr.bf16.mxu0 %v657
  %7206 = vmatmul.mubr.bf16.gmra.mrb[0].mxu0 %v656
  %v7207 = vpop.f32.mrb[0].mxu0
  %v7208 = vadd.f32 0.0, %v7207
  %v7209 = vpop.f32.mrb[0].mxu0
  %v7210 = vadd.f32 0.0, %v7209
  %v7211 = vpop.f32.mrb[0].mxu0
  %v7212 = vadd.f32 0.0, %v7211
  %v7213 = vpop.f32.mrb[0].mxu0
  %v7214 = vadd.f32 0.0, %v7213
  %7215 = vmatprep.mubr.bf16.mxu0 %v663
  %7216 = vmatmul.mubr.bf16.gmra.mrb[0].mxu0 %v662
  %v7217 = vpop.f32.mrb[0].mxu0
  %v7218 = vadd.f32 0.0, %v7217
  %v7219 = vpop.f32.mrb[0].mxu0
  %v7220 = vadd.f32 0.0, %v7219
  %v7221 = vpop.f32.mrb[0].mxu0
  %v7222 = vadd.f32 0.0, %v7221
  %v7223 = vpop.f32.mrb[0].mxu0
  %v7224 = vadd.f32 0.0, %v7223
  %7225 = vmatprep.mubr.bf16.mxu0 %v669
  %7226 = vmatmul.mubr.bf16.gmra.mrb[0].mxu0 %v668
  %v7227 = vpop.f32.mrb[0].mxu0
  %v7228 = vadd.f32 0.0, %v7227
  %v7229 = vpop.f32.mrb[0].mxu0
  %v7230 = vadd.f32 0.0, %v7229
  %v7231 = vpop.f32.mrb[0].mxu0
  %v7232 = vadd.f32 0.0, %v7231
  %v7233 = vpop.f32.mrb[0].mxu0
  %v7234 = vadd.f32 0.0, %v7233
  %7235 = vmatprep.mubr.bf16.mxu0 %v675
  %7236 = vmatmul.mubr.bf16.gmra.mrb[0].mxu0 %v674
  %v7237 = vpop.f32.mrb[0].mxu0
  %v7238 = vadd.f32 0.0, %v7237
  %v7239 = vpop.f32.mrb[0].mxu0
  %v7240 = vadd.f32 0.0, %v7239
  %v7241 = vpop.f32.mrb[0].mxu0
  %v7242 = vadd.f32 0.0, %v7241
  %v7243 = vpop.f32.mrb[0].mxu0
  %v7244 = vadd.f32 0.0, %v7243
  %7245 = vmatprep.mubr.bf16.mxu0 %v681
  %7246 = vmatmul.mubr.bf16.gmra.mrb[0].mxu0 %v680
  %v7247 = vpop.f32.mrb[0].mxu0
  %v7248 = vadd.f32 0.0, %v7247
  %v7249 = vpop.f32.mrb[0].mxu0
  %v7250 = vadd.f32 0.0, %v7249
  %v7251 = vpop.f32.mrb[0].mxu0
  %v7252 = vadd.f32 0.0, %v7251
  %v7253 = vpop.f32.mrb[0].mxu0
  %v7254 = vadd.f32 0.0, %v7253
  %7255 = vmatprep.mubr.bf16.mxu0 %v687
  %7256 = vmatmul.mubr.bf16.gmra.mrb[0].mxu0 %v686
  %v7257 = vpop.f32.mrb[0].mxu0
  %v7258 = vadd.f32 0.0, %v7257
  %v7259 = vpop.f32.mrb[0].mxu0
  %v7260 = vadd.f32 0.0, %v7259
  %v7261 = vpop.f32.mrb[0].mxu0
  %v7262 = vadd.f32 0.0, %v7261
  %v7263 = vpop.f32.mrb[0].mxu0
  %v7264 = vadd.f32 0.0, %v7263
  %7265 = vmatprep.mubr.bf16.mxu0 %v693
  %7266 = vmatmul.mubr.bf16.gmra.mrb[0].mxu0 %v692
  %v7267 = vpop.f32.mrb[0].mxu0
  %v7268 = vadd.f32 0.0, %v7267
  %v7269 = vpop.f32.mrb[0].mxu0
  %v7270 = vadd.f32 0.0, %v7269
  %v7271 = vpop.f32.mrb[0].mxu0
  %v7272 = vadd.f32 0.0, %v7271
  %v7273 = vpop.f32.mrb[0].mxu0
  %v7274 = vadd.f32 0.0, %v7273
  %7275 = vdwg.mxu0
  %7276 = vmatprep.subr.bf16.mxu0 %v6187
  %7277 = vmatpush1.bf16.msra.mxu0 %v6186
  %7278 = vmatprep.subr.bf16.mxu0 %v6191
  %7279 = vmatpush1.bf16.msra.mxu0 %v6190
  %7280 = vmatprep.subr.bf16.mxu0 %v6195
  %7281 = vmatpush1.bf16.msra.mxu0 %v6194
  %7282 = vmatprep.subr.bf16.mxu0 %v6199
  %7283 = vmatpush1.bf16.msra.mxu0 %v6198
  %7284 = vmatprep.subr.bf16.mxu0 %v6203
  %7285 = vmatpush1.bf16.msra.mxu0 %v6202
  %7286 = vmatprep.subr.bf16.mxu0 %v6207
  %7287 = vmatpush1.bf16.msra.mxu0 %v6206
  %7288 = vmatprep.subr.bf16.mxu0 %v6211
  %7289 = vmatpush1.bf16.msra.mxu0 %v6210
  %7290 = vmatprep.subr.bf16.mxu0 %v6215
  %7291 = vmatpush1.bf16.msra.mxu0 %v6214
  %7292 = vmatprep.subr.bf16.mxu0 %v6219
  %7293 = vmatpush1.bf16.msra.mxu0 %v6218
  %7294 = vmatprep.subr.bf16.mxu0 %v6223
  %7295 = vmatpush1.bf16.msra.mxu0 %v6222
  %7296 = vmatprep.subr.bf16.mxu0 %v6227
  %7297 = vmatpush1.bf16.msra.mxu0 %v6226
  %7298 = vmatprep.subr.bf16.mxu0 %v6231
  %7299 = vmatpush1.bf16.msra.mxu0 %v6230
  %7300 = vmatprep.subr.bf16.mxu0 %v6235
  %7301 = vmatpush1.bf16.msra.mxu0 %v6234
  %7302 = vmatprep.subr.bf16.mxu0 %v6239
  %7303 = vmatpush1.bf16.msra.mxu0 %v6238
  %7304 = vmatprep.subr.bf16.mxu0 %v6243
  %7305 = vmatpush1.bf16.msra.mxu0 %v6242
  %7306 = vmatprep.subr.bf16.mxu0 %v6247
  %7307 = vmatpush1.bf16.msra.mxu0 %v6246
  %7308 = vmatprep.mubr.bf16.mxu0 %v605
  %7309 = vmatmul.mubr.bf16.gmra.mrb[0].mxu0 %v604
  %v7310 = vpop.f32.mrb[0].mxu0
  %v7311 = vadd.f32 %v7118, %v7310
  %v7312 = vpop.f32.mrb[0].mxu0
  %v7313 = vadd.f32 %v7120, %v7312
  %v7314 = vpop.f32.mrb[0].mxu0
  %v7315 = vadd.f32 %v7122, %v7314
  %v7316 = vpop.f32.mrb[0].mxu0
  %v7317 = vadd.f32 %v7124, %v7316
  %7318 = vmatprep.mubr.bf16.mxu0 %v611
  %7319 = vmatmul.mubr.bf16.gmra.mrb[0].mxu0 %v610
  %v7320 = vpop.f32.mrb[0].mxu0
  %v7321 = vadd.f32 %v7128, %v7320
  %v7322 = vpop.f32.mrb[0].mxu0
  %v7323 = vadd.f32 %v7130, %v7322
  %v7324 = vpop.f32.mrb[0].mxu0
  %v7325 = vadd.f32 %v7132, %v7324
  %v7326 = vpop.f32.mrb[0].mxu0
  %v7327 = vadd.f32 %v7134, %v7326
  %7328 = vmatprep.mubr.bf16.mxu0 %v617
  %7329 = vmatmul.mubr.bf16.gmra.mrb[0].mxu0 %v616
  %v7330 = vpop.f32.mrb[0].mxu0
  %v7331 = vadd.f32 %v7138, %v7330
  %v7332 = vpop.f32.mrb[0].mxu0
  %v7333 = vadd.f32 %v7140, %v7332
  %v7334 = vpop.f32.mrb[0].mxu0
  %v7335 = vadd.f32 %v7142, %v7334
  %v7336 = vpop.f32.mrb[0].mxu0
  %v7337 = vadd.f32 %v7144, %v7336
  %7338 = vmatprep.mubr.bf16.mxu0 %v623
  %7339 = vmatmul.mubr.bf16.gmra.mrb[0].mxu0 %v622
  %v7340 = vpop.f32.mrb[0].mxu0
  %v7341 = vadd.f32 %v7148, %v7340
  %v7342 = vpop.f32.mrb[0].mxu0
  %v7343 = vadd.f32 %v7150, %v7342
  %v7344 = vpop.f32.mrb[0].mxu0
  %v7345 = vadd.f32 %v7152, %v7344
  %v7346 = vpop.f32.mrb[0].mxu0
  %v7347 = vadd.f32 %v7154, %v7346
  %7348 = vmatprep.mubr.bf16.mxu0 %v629
  %7349 = vmatmul.mubr.bf16.gmra.mrb[0].mxu0 %v628
  %v7350 = vpop.f32.mrb[0].mxu0
  %v7351 = vadd.f32 %v7158, %v7350
  %v7352 = vpop.f32.mrb[0].mxu0
  %v7353 = vadd.f32 %v7160, %v7352
  %v7354 = vpop.f32.mrb[0].mxu0
  %v7355 = vadd.f32 %v7162, %v7354
  %v7356 = vpop.f32.mrb[0].mxu0
  %v7357 = vadd.f32 %v7164, %v7356
  %7358 = vmatprep.mubr.bf16.mxu0 %v635
  %7359 = vmatmul.mubr.bf16.gmra.mrb[0].mxu0 %v634
  %v7360 = vpop.f32.mrb[0].mxu0
  %v7361 = vadd.f32 %v7168, %v7360
  %v7362 = vpop.f32.mrb[0].mxu0
  %v7363 = vadd.f32 %v7170, %v7362
  %v7364 = vpop.f32.mrb[0].mxu0
  %v7365 = vadd.f32 %v7172, %v7364
  %v7366 = vpop.f32.mrb[0].mxu0
  %v7367 = vadd.f32 %v7174, %v7366
  %7368 = vmatprep.mubr.bf16.mxu0 %v641
  %7369 = vmatmul.mubr.bf16.gmra.mrb[0].mxu0 %v640
  %v7370 = vpop.f32.mrb[0].mxu0
  %v7371 = vadd.f32 %v7178, %v7370
  %v7372 = vpop.f32.mrb[0].mxu0
  %v7373 = vadd.f32 %v7180, %v7372
  %v7374 = vpop.f32.mrb[0].mxu0
  %v7375 = vadd.f32 %v7182, %v7374
  %v7376 = vpop.f32.mrb[0].mxu0
  %v7377 = vadd.f32 %v7184, %v7376
  %7378 = vmatprep.mubr.bf16.mxu0 %v647
  %7379 = vmatmul.mubr.bf16.gmra.mrb[0].mxu0 %v646
  %v7380 = vpop.f32.mrb[0].mxu0
  %v7381 = vadd.f32 %v7188, %v7380
  %v7382 = vpop.f32.mrb[0].mxu0
  %v7383 = vadd.f32 %v7190, %v7382
  %v7384 = vpop.f32.mrb[0].mxu0
  %v7385 = vadd.f32 %v7192, %v7384
  %v7386 = vpop.f32.mrb[0].mxu0
  %v7387 = vadd.f32 %v7194, %v7386
  %7388 = vmatprep.mubr.bf16.mxu0 %v653
  %7389 = vmatmul.mubr.bf16.gmra.mrb[0].mxu0 %v652
  %v7390 = vpop.f32.mrb[0].mxu0
  %v7391 = vadd.f32 %v7198, %v7390
  %v7392 = vpop.f32.mrb[0].mxu0
  %v7393 = vadd.f32 %v7200, %v7392
  %v7394 = vpop.f32.mrb[0].mxu0
  %v7395 = vadd.f32 %v7202, %v7394
  %v7396 = vpop.f32.mrb[0].mxu0
  %v7397 = vadd.f32 %v7204, %v7396
  %7398 = vmatprep.mubr.bf16.mxu0 %v659
  %7399 = vmatmul.mubr.bf16.gmra.mrb[0].mxu0 %v658
  %v7400 = vpop.f32.mrb[0].mxu0
  %v7401 = vadd.f32 %v7208, %v7400
  %v7402 = vpop.f32.mrb[0].mxu0
  %v7403 = vadd.f32 %v7210, %v7402
  %v7404 = vpop.f32.mrb[0].mxu0
  %v7405 = vadd.f32 %v7212, %v7404
  %v7406 = vpop.f32.mrb[0].mxu0
  %v7407 = vadd.f32 %v7214, %v7406
  %7408 = vmatprep.mubr.bf16.mxu0 %v665
  %7409 = vmatmul.mubr.bf16.gmra.mrb[0].mxu0 %v664
  %v7410 = vpop.f32.mrb[0].mxu0
  %v7411 = vadd.f32 %v7218, %v7410
  %v7412 = vpop.f32.mrb[0].mxu0
  %v7413 = vadd.f32 %v7220, %v7412
  %v7414 = vpop.f32.mrb[0].mxu0
  %v7415 = vadd.f32 %v7222, %v7414
  %v7416 = vpop.f32.mrb[0].mxu0
  %v7417 = vadd.f32 %v7224, %v7416
  %7418 = vmatprep.mubr.bf16.mxu0 %v671
  %7419 = vmatmul.mubr.bf16.gmra.mrb[0].mxu0 %v670
  %v7420 = vpop.f32.mrb[0].mxu0
  %v7421 = vadd.f32 %v7228, %v7420
  %v7422 = vpop.f32.mrb[0].mxu0
  %v7423 = vadd.f32 %v7230, %v7422
  %v7424 = vpop.f32.mrb[0].mxu0
  %v7425 = vadd.f32 %v7232, %v7424
  %v7426 = vpop.f32.mrb[0].mxu0
  %v7427 = vadd.f32 %v7234, %v7426
  %7428 = vmatprep.mubr.bf16.mxu0 %v677
  %7429 = vmatmul.mubr.bf16.gmra.mrb[0].mxu0 %v676
  %v7430 = vpop.f32.mrb[0].mxu0
  %v7431 = vadd.f32 %v7238, %v7430
  %v7432 = vpop.f32.mrb[0].mxu0
  %v7433 = vadd.f32 %v7240, %v7432
  %v7434 = vpop.f32.mrb[0].mxu0
  %v7435 = vadd.f32 %v7242, %v7434
  %v7436 = vpop.f32.mrb[0].mxu0
  %v7437 = vadd.f32 %v7244, %v7436
  %7438 = vmatprep.mubr.bf16.mxu0 %v683
  %7439 = vmatmul.mubr.bf16.gmra.mrb[0].mxu0 %v682
  %v7440 = vpop.f32.mrb[0].mxu0
  %v7441 = vadd.f32 %v7248, %v7440
  %v7442 = vpop.f32.mrb[0].mxu0
  %v7443 = vadd.f32 %v7250, %v7442
  %v7444 = vpop.f32.mrb[0].mxu0
  %v7445 = vadd.f32 %v7252, %v7444
  %v7446 = vpop.f32.mrb[0].mxu0
  %v7447 = vadd.f32 %v7254, %v7446
  %7448 = vmatprep.mubr.bf16.mxu0 %v689
  %7449 = vmatmul.mubr.bf16.gmra.mrb[0].mxu0 %v688
  %v7450 = vpop.f32.mrb[0].mxu0
  %v7451 = vadd.f32 %v7258, %v7450
  %v7452 = vpop.f32.mrb[0].mxu0
  %v7453 = vadd.f32 %v7260, %v7452
  %v7454 = vpop.f32.mrb[0].mxu0
  %v7455 = vadd.f32 %v7262, %v7454
  %v7456 = vpop.f32.mrb[0].mxu0
  %v7457 = vadd.f32 %v7264, %v7456
  %7458 = vmatprep.mubr.bf16.mxu0 %v695
  %7459 = vmatmul.mubr.bf16.gmra.mrb[0].mxu0 %v694
  %v7460 = vpop.f32.mrb[0].mxu0
  %v7461 = vadd.f32 %v7268, %v7460
  %v7462 = vpop.f32.mrb[0].mxu0
  %v7463 = vadd.f32 %v7270, %v7462
  %v7464 = vpop.f32.mrb[0].mxu0
  %v7465 = vadd.f32 %v7272, %v7464
  %v7466 = vpop.f32.mrb[0].mxu0
  %v7467 = vadd.f32 %v7274, %v7466
  %7468 = vdwg.mxu0
  %7469 = vmatprep.subr.bf16.mxu0 %v6251
  %7470 = vmatpush1.bf16.msra.mxu0 %v6250
  %7471 = vmatprep.subr.bf16.mxu0 %v6255
  %7472 = vmatpush1.bf16.msra.mxu0 %v6254
  %7473 = vmatprep.subr.bf16.mxu0 %v6259
  %7474 = vmatpush1.bf16.msra.mxu0 %v6258
  %7475 = vmatprep.subr.bf16.mxu0 %v6263
  %7476 = vmatpush1.bf16.msra.mxu0 %v6262
  %7477 = vmatprep.subr.bf16.mxu0 %v6267
  %7478 = vmatpush1.bf16.msra.mxu0 %v6266
  %7479 = vmatprep.subr.bf16.mxu0 %v6271
  %7480 = vmatpush1.bf16.msra.mxu0 %v6270
  %7481 = vmatprep.subr.bf16.mxu0 %v6275
  %7482 = vmatpush1.bf16.msra.mxu0 %v6274
  %7483 = vmatprep.subr.bf16.mxu0 %v6279
  %7484 = vmatpush1.bf16.msra.mxu0 %v6278
  %7485 = vmatprep.subr.bf16.mxu0 %v6283
  %7486 = vmatpush1.bf16.msra.mxu0 %v6282
  %7487 = vmatprep.subr.bf16.mxu0 %v6287
  %7488 = vmatpush1.bf16.msra.mxu0 %v6286
  %7489 = vmatprep.subr.bf16.mxu0 %v6291
  %7490 = vmatpush1.bf16.msra.mxu0 %v6290
  %7491 = vmatprep.subr.bf16.mxu0 %v6295
  %7492 = vmatpush1.bf16.msra.mxu0 %v6294
  %7493 = vmatprep.subr.bf16.mxu0 %v6299
  %7494 = vmatpush1.bf16.msra.mxu0 %v6298
  %7495 = vmatprep.subr.bf16.mxu0 %v6303
  %7496 = vmatpush1.bf16.msra.mxu0 %v6302
  %7497 = vmatprep.subr.bf16.mxu0 %v6307
  %7498 = vmatpush1.bf16.msra.mxu0 %v6306
  %7499 = vmatprep.subr.bf16.mxu0 %v6311
  %7500 = vmatpush1.bf16.msra.mxu0 %v6310
  %7501 = vmatprep.mubr.bf16.mxu0 %v607
  %7502 = vmatmul.mubr.bf16.gmra.mrb[0].mxu0 %v606
  %v7503 = vpop.f32.mrb[0].mxu0
  %v7504 = vadd.f32 %v7311, %v7503
  %v7505 = vpop.f32.mrb[0].mxu0
  %v7506 = vadd.f32 %v7313, %v7505
  %v7507 = vpop.f32.mrb[0].mxu0
  %v7508 = vadd.f32 %v7315, %v7507
  %v7509 = vpop.f32.mrb[0].mxu0
  %v7510 = vadd.f32 %v7317, %v7509
  %7511 = vmatprep.mubr.bf16.mxu0 %v613
  %7512 = vmatmul.mubr.bf16.gmra.mrb[0].mxu0 %v612
  %v7513 = vpop.f32.mrb[0].mxu0
  %v7514 = vadd.f32 %v7321, %v7513
  %v7515 = vpop.f32.mrb[0].mxu0
  %v7516 = vadd.f32 %v7323, %v7515
  %v7517 = vpop.f32.mrb[0].mxu0
  %v7518 = vadd.f32 %v7325, %v7517
  %v7519 = vpop.f32.mrb[0].mxu0
  %v7520 = vadd.f32 %v7327, %v7519
  %7521 = vmatprep.mubr.bf16.mxu0 %v619
  %7522 = vmatmul.mubr.bf16.gmra.mrb[0].mxu0 %v618
  %v7523 = vpop.f32.mrb[0].mxu0
  %v7524 = vadd.f32 %v7331, %v7523
  %v7525 = vpop.f32.mrb[0].mxu0
  %v7526 = vadd.f32 %v7333, %v7525
  %v7527 = vpop.f32.mrb[0].mxu0
  %v7528 = vadd.f32 %v7335, %v7527
  %v7529 = vpop.f32.mrb[0].mxu0
  %v7530 = vadd.f32 %v7337, %v7529
  %7531 = vmatprep.mubr.bf16.mxu0 %v625
  %7532 = vmatmul.mubr.bf16.gmra.mrb[0].mxu0 %v624
  %v7533 = vpop.f32.mrb[0].mxu0
  %v7534 = vadd.f32 %v7341, %v7533
  %v7535 = vpop.f32.mrb[0].mxu0
  %v7536 = vadd.f32 %v7343, %v7535
  %v7537 = vpop.f32.mrb[0].mxu0
  %v7538 = vadd.f32 %v7345, %v7537
  %v7539 = vpop.f32.mrb[0].mxu0
  %v7540 = vadd.f32 %v7347, %v7539
  %7541 = vmatprep.mubr.bf16.mxu0 %v631
  %7542 = vmatmul.mubr.bf16.gmra.mrb[0].mxu0 %v630
  %v7543 = vpop.f32.mrb[0].mxu0
  %v7544 = vadd.f32 %v7351, %v7543
  %v7545 = vpop.f32.mrb[0].mxu0
  %v7546 = vadd.f32 %v7353, %v7545
  %v7547 = vpop.f32.mrb[0].mxu0
  %v7548 = vadd.f32 %v7355, %v7547
  %v7549 = vpop.f32.mrb[0].mxu0
  %v7550 = vadd.f32 %v7357, %v7549
  %7551 = vmatprep.mubr.bf16.mxu0 %v637
  %7552 = vmatmul.mubr.bf16.gmra.mrb[0].mxu0 %v636
  %v7553 = vpop.f32.mrb[0].mxu0
  %v7554 = vadd.f32 %v7361, %v7553
  %v7555 = vpop.f32.mrb[0].mxu0
  %v7556 = vadd.f32 %v7363, %v7555
  %v7557 = vpop.f32.mrb[0].mxu0
  %v7558 = vadd.f32 %v7365, %v7557
  %v7559 = vpop.f32.mrb[0].mxu0
  %v7560 = vadd.f32 %v7367, %v7559
  %7561 = vmatprep.mubr.bf16.mxu0 %v643
  %7562 = vmatmul.mubr.bf16.gmra.mrb[0].mxu0 %v642
  %v7563 = vpop.f32.mrb[0].mxu0
  %v7564 = vadd.f32 %v7371, %v7563
  %v7565 = vpop.f32.mrb[0].mxu0
  %v7566 = vadd.f32 %v7373, %v7565
  %v7567 = vpop.f32.mrb[0].mxu0
  %v7568 = vadd.f32 %v7375, %v7567
  %v7569 = vpop.f32.mrb[0].mxu0
  %v7570 = vadd.f32 %v7377, %v7569
  %7571 = vmatprep.mubr.bf16.mxu0 %v649
  %7572 = vmatmul.mubr.bf16.gmra.mrb[0].mxu0 %v648
  %v7573 = vpop.f32.mrb[0].mxu0
  %v7574 = vadd.f32 %v7381, %v7573
  %v7575 = vpop.f32.mrb[0].mxu0
  %v7576 = vadd.f32 %v7383, %v7575
  %v7577 = vpop.f32.mrb[0].mxu0
  %v7578 = vadd.f32 %v7385, %v7577
  %v7579 = vpop.f32.mrb[0].mxu0
  %v7580 = vadd.f32 %v7387, %v7579
  %7581 = vmatprep.mubr.bf16.mxu0 %v655
  %7582 = vmatmul.mubr.bf16.gmra.mrb[0].mxu0 %v654
  %v7583 = vpop.f32.mrb[0].mxu0
  %v7584 = vadd.f32 %v7391, %v7583
  %v7585 = vpop.f32.mrb[0].mxu0
  %v7586 = vadd.f32 %v7393, %v7585
  %v7587 = vpop.f32.mrb[0].mxu0
  %v7588 = vadd.f32 %v7395, %v7587
  %v7589 = vpop.f32.mrb[0].mxu0
  %v7590 = vadd.f32 %v7397, %v7589
  %7591 = vmatprep.mubr.bf16.mxu0 %v661
  %7592 = vmatmul.mubr.bf16.gmra.mrb[0].mxu0 %v660
  %v7593 = vpop.f32.mrb[0].mxu0
  %v7594 = vadd.f32 %v7401, %v7593
  %v7595 = vpop.f32.mrb[0].mxu0
  %v7596 = vadd.f32 %v7403, %v7595
  %v7597 = vpop.f32.mrb[0].mxu0
  %v7598 = vadd.f32 %v7405, %v7597
  %v7599 = vpop.f32.mrb[0].mxu0
  %v7600 = vadd.f32 %v7407, %v7599
  %7601 = vmatprep.mubr.bf16.mxu0 %v667
  %7602 = vmatmul.mubr.bf16.gmra.mrb[0].mxu0 %v666
  %v7603 = vpop.f32.mrb[0].mxu0
  %v7604 = vadd.f32 %v7411, %v7603
  %v7605 = vpop.f32.mrb[0].mxu0
  %v7606 = vadd.f32 %v7413, %v7605
  %v7607 = vpop.f32.mrb[0].mxu0
  %v7608 = vadd.f32 %v7415, %v7607
  %v7609 = vpop.f32.mrb[0].mxu0
  %v7610 = vadd.f32 %v7417, %v7609
  %7611 = vmatprep.mubr.bf16.mxu0 %v673
  %7612 = vmatmul.mubr.bf16.gmra.mrb[0].mxu0 %v672
  %v7613 = vpop.f32.mrb[0].mxu0
  %v7614 = vadd.f32 %v7421, %v7613
  %v7615 = vpop.f32.mrb[0].mxu0
  %v7616 = vadd.f32 %v7423, %v7615
  %v7617 = vpop.f32.mrb[0].mxu0
  %v7618 = vadd.f32 %v7425, %v7617
  %v7619 = vpop.f32.mrb[0].mxu0
  %v7620 = vadd.f32 %v7427, %v7619
  %7621 = vmatprep.mubr.bf16.mxu0 %v679
  %7622 = vmatmul.mubr.bf16.gmra.mrb[0].mxu0 %v678
  %v7623 = vpop.f32.mrb[0].mxu0
  %v7624 = vadd.f32 %v7431, %v7623
  %v7625 = vpop.f32.mrb[0].mxu0
  %v7626 = vadd.f32 %v7433, %v7625
  %v7627 = vpop.f32.mrb[0].mxu0
  %v7628 = vadd.f32 %v7435, %v7627
  %v7629 = vpop.f32.mrb[0].mxu0
  %v7630 = vadd.f32 %v7437, %v7629
  %7631 = vmatprep.mubr.bf16.mxu0 %v685
  %7632 = vmatmul.mubr.bf16.gmra.mrb[0].mxu0 %v684
  %v7633 = vpop.f32.mrb[0].mxu0
  %v7634 = vadd.f32 %v7441, %v7633
  %v7635 = vpop.f32.mrb[0].mxu0
  %v7636 = vadd.f32 %v7443, %v7635
  %v7637 = vpop.f32.mrb[0].mxu0
  %v7638 = vadd.f32 %v7445, %v7637
  %v7639 = vpop.f32.mrb[0].mxu0
  %v7640 = vadd.f32 %v7447, %v7639
  %7641 = vmatprep.mubr.bf16.mxu0 %v691
  %7642 = vmatmul.mubr.bf16.gmra.mrb[0].mxu0 %v690
  %v7643 = vpop.f32.mrb[0].mxu0
  %v7644 = vadd.f32 %v7451, %v7643
  %v7645 = vpop.f32.mrb[0].mxu0
  %v7646 = vadd.f32 %v7453, %v7645
  %v7647 = vpop.f32.mrb[0].mxu0
  %v7648 = vadd.f32 %v7455, %v7647
  %v7649 = vpop.f32.mrb[0].mxu0
  %v7650 = vadd.f32 %v7457, %v7649
  %7651 = vmatprep.mubr.bf16.mxu0 %v697
  %7652 = vmatmul.mubr.bf16.gmra.mrb[0].mxu0 %v696
  %v7653 = vpop.f32.mrb[0].mxu0
  %v7654 = vadd.f32 %v7461, %v7653
  %v7655 = vpop.f32.mrb[0].mxu0
  %v7656 = vadd.f32 %v7463, %v7655
  %v7657 = vpop.f32.mrb[0].mxu0
  %v7658 = vadd.f32 %v7465, %v7657
  %v7659 = vpop.f32.mrb[0].mxu0
  %v7660 = vadd.f32 %v7467, %v7659
  %7661 = vdwg.mxu0
  %v7662 = vmax.f32 %v5223, %v6925
  %v7663 = vmax.f32 %v5224, %v6927
  %v7664 = vmax.f32 %v5225, %v7504
  %v7665 = vmax.f32 %v5226, %v7506
  %v7666 = vmax.f32 %v5227, %v6929
  %v7667 = vmax.f32 %v5228, %v6931
  %v7668 = vmax.f32 %v5229, %v7508
  %v7669 = vmax.f32 %v5230, %v7510
  %v7670 = vmax.f32 %v5231, %v6935
  %v7671 = vmax.f32 %v5232, %v6937
  %v7672 = vmax.f32 %v5233, %v7514
  %v7673 = vmax.f32 %v5234, %v7516
  %v7674 = vmax.f32 %v5235, %v6939
  %v7675 = vmax.f32 %v5236, %v6941
  %v7676 = vmax.f32 %v5237, %v7518
  %v7677 = vmax.f32 %v5238, %v7520
  %v7678 = vmax.f32 %v5239, %v6945
  %v7679 = vmax.f32 %v5240, %v6947
  %v7680 = vmax.f32 %v5241, %v7524
  %v7681 = vmax.f32 %v5242, %v7526
  %v7682 = vmax.f32 %v5243, %v6949
  %v7683 = vmax.f32 %v5244, %v6951
  %v7684 = vmax.f32 %v5245, %v7528
  %v7685 = vmax.f32 %v5246, %v7530
  %v7686 = vmax.f32 %v5247, %v6955
  %v7687 = vmax.f32 %v5248, %v6957
  %v7688 = vmax.f32 %v5249, %v7534
  %v7689 = vmax.f32 %v5250, %v7536
  %v7690 = vmax.f32 %v5251, %v6959
  %v7691 = vmax.f32 %v5252, %v6961
  %v7692 = vmax.f32 %v5253, %v7538
  %v7693 = vmax.f32 %v5254, %v7540
  %v7694 = vmax.f32 %v5255, %v6965
  %v7695 = vmax.f32 %v5256, %v6967
  %v7696 = vmax.f32 %v5257, %v7544
  %v7697 = vmax.f32 %v5258, %v7546
  %v7698 = vmax.f32 %v5259, %v6969
  %v7699 = vmax.f32 %v5260, %v6971
  %v7700 = vmax.f32 %v5261, %v7548
  %v7701 = vmax.f32 %v5262, %v7550
  %v7702 = vmax.f32 %v5263, %v6975
  %v7703 = vmax.f32 %v5264, %v6977
  %v7704 = vmax.f32 %v5265, %v7554
  %v7705 = vmax.f32 %v5266, %v7556
  %v7706 = vmax.f32 %v5267, %v6979
  %v7707 = vmax.f32 %v5268, %v6981
  %v7708 = vmax.f32 %v5269, %v7558
  %v7709 = vmax.f32 %v5270, %v7560
  %v7710 = vmax.f32 %v5271, %v6985
  %v7711 = vmax.f32 %v5272, %v6987
  %v7712 = vmax.f32 %v5273, %v7564
  %v7713 = vmax.f32 %v5274, %v7566
  %v7714 = vmax.f32 %v5275, %v6989
  %v7715 = vmax.f32 %v5276, %v6991
  %v7716 = vmax.f32 %v5277, %v7568
  %v7717 = vmax.f32 %v5278, %v7570
  %v7718 = vmax.f32 %v5279, %v6995
  %v7719 = vmax.f32 %v5280, %v6997
  %v7720 = vmax.f32 %v5281, %v7574
  %v7721 = vmax.f32 %v5282, %v7576
  %v7722 = vmax.f32 %v5283, %v6999
  %v7723 = vmax.f32 %v5284, %v7001
  %v7724 = vmax.f32 %v5285, %v7578
  %v7725 = vmax.f32 %v5286, %v7580
  %v7726 = vmax.f32 %v5287, %v7005
  %v7727 = vmax.f32 %v5288, %v7007
  %v7728 = vmax.f32 %v5289, %v7584
  %v7729 = vmax.f32 %v5290, %v7586
  %v7730 = vmax.f32 %v5291, %v7009
  %v7731 = vmax.f32 %v5292, %v7011
  %v7732 = vmax.f32 %v5293, %v7588
  %v7733 = vmax.f32 %v5294, %v7590
  %v7734 = vmax.f32 %v5295, %v7015
  %v7735 = vmax.f32 %v5296, %v7017
  %v7736 = vmax.f32 %v5297, %v7594
  %v7737 = vmax.f32 %v5298, %v7596
  %v7738 = vmax.f32 %v5299, %v7019
  %v7739 = vmax.f32 %v5300, %v7021
  %v7740 = vmax.f32 %v5301, %v7598
  %v7741 = vmax.f32 %v5302, %v7600
  %v7742 = vmax.f32 %v5303, %v7025
  %v7743 = vmax.f32 %v5304, %v7027
  %v7744 = vmax.f32 %v5305, %v7604
  %v7745 = vmax.f32 %v5306, %v7606
  %v7746 = vmax.f32 %v5307, %v7029
  %v7747 = vmax.f32 %v5308, %v7031
  %v7748 = vmax.f32 %v5309, %v7608
  %v7749 = vmax.f32 %v5310, %v7610
  %v7750 = vmax.f32 %v5311, %v7035
  %v7751 = vmax.f32 %v5312, %v7037
  %v7752 = vmax.f32 %v5313, %v7614
  %v7753 = vmax.f32 %v5314, %v7616
  %v7754 = vmax.f32 %v5315, %v7039
  %v7755 = vmax.f32 %v5316, %v7041
  %v7756 = vmax.f32 %v5317, %v7618
  %v7757 = vmax.f32 %v5318, %v7620
  %v7758 = vmax.f32 %v5319, %v7045
  %v7759 = vmax.f32 %v5320, %v7047
  %v7760 = vmax.f32 %v5321, %v7624
  %v7761 = vmax.f32 %v5322, %v7626
  %v7762 = vmax.f32 %v5323, %v7049
  %v7763 = vmax.f32 %v5324, %v7051
  %v7764 = vmax.f32 %v5325, %v7628
  %v7765 = vmax.f32 %v5326, %v7630
  %v7766 = vmax.f32 %v5327, %v7055
  %v7767 = vmax.f32 %v5328, %v7057
  %v7768 = vmax.f32 %v5329, %v7634
  %v7769 = vmax.f32 %v5330, %v7636
  %v7770 = vmax.f32 %v5331, %v7059
  %v7771 = vmax.f32 %v5332, %v7061
  %v7772 = vmax.f32 %v5333, %v7638
  %v7773 = vmax.f32 %v5334, %v7640
  %v7774 = vmax.f32 %v5335, %v7065
  %v7775 = vmax.f32 %v5336, %v7067
  %v7776 = vmax.f32 %v5337, %v7644
  %v7777 = vmax.f32 %v5338, %v7646
  %v7778 = vmax.f32 %v5339, %v7069
  %v7779 = vmax.f32 %v5340, %v7071
  %v7780 = vmax.f32 %v5341, %v7648
  %v7781 = vmax.f32 %v5342, %v7650
  %v7782 = vmax.f32 %v5343, %v7075
  %v7783 = vmax.f32 %v5344, %v7077
  %v7784 = vmax.f32 %v5345, %v7654
  %v7785 = vmax.f32 %v5346, %v7656
  %v7786 = vmax.f32 %v5347, %v7079
  %v7787 = vmax.f32 %v5348, %v7081
  %v7788 = vmax.f32 %v5349, %v7658
  %v7789 = vmax.f32 %v5350, %v7660
  %s7790 = scalar_lea.vmem %s1, 4608
  %v7791 = vld [vmem:[%s7790] sm:$0xff]
  %v7792 = vld [vmem:[%s7790 + $0x8] sm:$0xff]
  %v7793 = vld [vmem:[%s7790 + $0x10] sm:$0xff]
  %v7794 = vld [vmem:[%s7790 + $0x18] sm:$0xff]
  %v7795 = vld [vmem:[%s7790 + $0x20] sm:$0xff]
  %v7796 = vld [vmem:[%s7790 + $0x28] sm:$0xff]
  %v7797 = vld [vmem:[%s7790 + $0x30] sm:$0xff]
  %v7798 = vld [vmem:[%s7790 + $0x38] sm:$0xff]
  %v7799 = vld [vmem:[%s7790 + $0x40] sm:$0xff]
  %v7800 = vld [vmem:[%s7790 + $0x48] sm:$0xff]
  %v7801 = vld [vmem:[%s7790 + $0x50] sm:$0xff]
  %v7802 = vld [vmem:[%s7790 + $0x58] sm:$0xff]
  %v7803 = vld [vmem:[%s7790 + $0x60] sm:$0xff]
  %v7804 = vld [vmem:[%s7790 + $0x68] sm:$0xff]
  %v7805 = vld [vmem:[%s7790 + $0x70] sm:$0xff]
  %v7806 = vld [vmem:[%s7790 + $0x78] sm:$0xff]
  %v7807 = vld [vmem:[%s7790 + $0x80] sm:$0xff]
  %v7808 = vld [vmem:[%s7790 + $0x88] sm:$0xff]
  %v7809 = vld [vmem:[%s7790 + $0x90] sm:$0xff]
  %v7810 = vld [vmem:[%s7790 + $0x98] sm:$0xff]
  %v7811 = vld [vmem:[%s7790 + $0xa0] sm:$0xff]
  %v7812 = vld [vmem:[%s7790 + $0xa8] sm:$0xff]
  %v7813 = vld [vmem:[%s7790 + $0xb0] sm:$0xff]
  %v7814 = vld [vmem:[%s7790 + $0xb8] sm:$0xff]
  %v7815 = vld [vmem:[%s7790 + $0xc0] sm:$0xff]
  %v7816 = vld [vmem:[%s7790 + $0xc8] sm:$0xff]
  %v7817 = vld [vmem:[%s7790 + $0xd0] sm:$0xff]
  %v7818 = vld [vmem:[%s7790 + $0xd8] sm:$0xff]
  %v7819 = vld [vmem:[%s7790 + $0xe0] sm:$0xff]
  %v7820 = vld [vmem:[%s7790 + $0xe8] sm:$0xff]
  %v7821 = vld [vmem:[%s7790 + $0xf0] sm:$0xff]
  %v7822 = vld [vmem:[%s7790 + $0xf8] sm:$0xff]
  %v7823 = vld [vmem:[%s7790 + $0x100] sm:$0xff]
  %v7824 = vld [vmem:[%s7790 + $0x108] sm:$0xff]
  %v7825 = vld [vmem:[%s7790 + $0x110] sm:$0xff]
  %v7826 = vld [vmem:[%s7790 + $0x118] sm:$0xff]
  %v7827 = vld [vmem:[%s7790 + $0x120] sm:$0xff]
  %v7828 = vld [vmem:[%s7790 + $0x128] sm:$0xff]
  %v7829 = vld [vmem:[%s7790 + $0x130] sm:$0xff]
  %v7830 = vld [vmem:[%s7790 + $0x138] sm:$0xff]
  %v7831 = vld [vmem:[%s7790 + $0x140] sm:$0xff]
  %v7832 = vld [vmem:[%s7790 + $0x148] sm:$0xff]
  %v7833 = vld [vmem:[%s7790 + $0x150] sm:$0xff]
  %v7834 = vld [vmem:[%s7790 + $0x158] sm:$0xff]
  %v7835 = vld [vmem:[%s7790 + $0x160] sm:$0xff]
  %v7836 = vld [vmem:[%s7790 + $0x168] sm:$0xff]
  %v7837 = vld [vmem:[%s7790 + $0x170] sm:$0xff]
  %v7838 = vld [vmem:[%s7790 + $0x178] sm:$0xff]
  %v7839 = vld [vmem:[%s7790 + $0x180] sm:$0xff]
  %v7840 = vld [vmem:[%s7790 + $0x188] sm:$0xff]
  %v7841 = vld [vmem:[%s7790 + $0x190] sm:$0xff]
  %v7842 = vld [vmem:[%s7790 + $0x198] sm:$0xff]
  %v7843 = vld [vmem:[%s7790 + $0x1a0] sm:$0xff]
  %v7844 = vld [vmem:[%s7790 + $0x1a8] sm:$0xff]
  %v7845 = vld [vmem:[%s7790 + $0x1b0] sm:$0xff]
  %v7846 = vld [vmem:[%s7790 + $0x1b8] sm:$0xff]
  %v7847 = vld [vmem:[%s7790 + $0x1c0] sm:$0xff]
  %v7848 = vld [vmem:[%s7790 + $0x1c8] sm:$0xff]
  %v7849 = vld [vmem:[%s7790 + $0x1d0] sm:$0xff]
  %v7850 = vld [vmem:[%s7790 + $0x1d8] sm:$0xff]
  %v7851 = vld [vmem:[%s7790 + $0x1e0] sm:$0xff]
  %v7852 = vld [vmem:[%s7790 + $0x1e8] sm:$0xff]
  %v7853 = vld [vmem:[%s7790 + $0x1f0] sm:$0xff]
  %v7854 = vld [vmem:[%s7790 + $0x1f8] sm:$0xff]
  %v7855 = vld [vmem:[%s7790 + $0x200] sm:$0xff]
  %v7856 = vld [vmem:[%s7790 + $0x208] sm:$0xff]
  %v7857 = vld [vmem:[%s7790 + $0x210] sm:$0xff]
  %v7858 = vld [vmem:[%s7790 + $0x218] sm:$0xff]
  %v7859 = vld [vmem:[%s7790 + $0x220] sm:$0xff]
  %v7860 = vld [vmem:[%s7790 + $0x228] sm:$0xff]
  %v7861 = vld [vmem:[%s7790 + $0x230] sm:$0xff]
  %v7862 = vld [vmem:[%s7790 + $0x238] sm:$0xff]
  %v7863 = vld [vmem:[%s7790 + $0x240] sm:$0xff]
  %v7864 = vld [vmem:[%s7790 + $0x248] sm:$0xff]
  %v7865 = vld [vmem:[%s7790 + $0x250] sm:$0xff]
  %v7866 = vld [vmem:[%s7790 + $0x258] sm:$0xff]
  %v7867 = vld [vmem:[%s7790 + $0x260] sm:$0xff]
  %v7868 = vld [vmem:[%s7790 + $0x268] sm:$0xff]
  %v7869 = vld [vmem:[%s7790 + $0x270] sm:$0xff]
  %v7870 = vld [vmem:[%s7790 + $0x278] sm:$0xff]
  %v7871 = vld [vmem:[%s7790 + $0x280] sm:$0xff]
  %v7872 = vld [vmem:[%s7790 + $0x288] sm:$0xff]
  %v7873 = vld [vmem:[%s7790 + $0x290] sm:$0xff]
  %v7874 = vld [vmem:[%s7790 + $0x298] sm:$0xff]
  %v7875 = vld [vmem:[%s7790 + $0x2a0] sm:$0xff]
  %v7876 = vld [vmem:[%s7790 + $0x2a8] sm:$0xff]
  %v7877 = vld [vmem:[%s7790 + $0x2b0] sm:$0xff]
  %v7878 = vld [vmem:[%s7790 + $0x2b8] sm:$0xff]
  %v7879 = vld [vmem:[%s7790 + $0x2c0] sm:$0xff]
  %v7880 = vld [vmem:[%s7790 + $0x2c8] sm:$0xff]
  %v7881 = vld [vmem:[%s7790 + $0x2d0] sm:$0xff]
  %v7882 = vld [vmem:[%s7790 + $0x2d8] sm:$0xff]
  %v7883 = vld [vmem:[%s7790 + $0x2e0] sm:$0xff]
  %v7884 = vld [vmem:[%s7790 + $0x2e8] sm:$0xff]
  %v7885 = vld [vmem:[%s7790 + $0x2f0] sm:$0xff]
  %v7886 = vld [vmem:[%s7790 + $0x2f8] sm:$0xff]
  %v7887 = vld [vmem:[%s7790 + $0x300] sm:$0xff]
  %v7888 = vld [vmem:[%s7790 + $0x308] sm:$0xff]
  %v7889 = vld [vmem:[%s7790 + $0x310] sm:$0xff]
  %v7890 = vld [vmem:[%s7790 + $0x318] sm:$0xff]
  %v7891 = vld [vmem:[%s7790 + $0x320] sm:$0xff]
  %v7892 = vld [vmem:[%s7790 + $0x328] sm:$0xff]
  %v7893 = vld [vmem:[%s7790 + $0x330] sm:$0xff]
  %v7894 = vld [vmem:[%s7790 + $0x338] sm:$0xff]
  %v7895 = vld [vmem:[%s7790 + $0x340] sm:$0xff]
  %v7896 = vld [vmem:[%s7790 + $0x348] sm:$0xff]
  %v7897 = vld [vmem:[%s7790 + $0x350] sm:$0xff]
  %v7898 = vld [vmem:[%s7790 + $0x358] sm:$0xff]
  %v7899 = vld [vmem:[%s7790 + $0x360] sm:$0xff]
  %v7900 = vld [vmem:[%s7790 + $0x368] sm:$0xff]
  %v7901 = vld [vmem:[%s7790 + $0x370] sm:$0xff]
  %v7902 = vld [vmem:[%s7790 + $0x378] sm:$0xff]
  %v7903 = vld [vmem:[%s7790 + $0x380] sm:$0xff]
  %v7904 = vld [vmem:[%s7790 + $0x388] sm:$0xff]
  %v7905 = vld [vmem:[%s7790 + $0x390] sm:$0xff]
  %v7906 = vld [vmem:[%s7790 + $0x398] sm:$0xff]
  %v7907 = vld [vmem:[%s7790 + $0x3a0] sm:$0xff]
  %v7908 = vld [vmem:[%s7790 + $0x3a8] sm:$0xff]
  %v7909 = vld [vmem:[%s7790 + $0x3b0] sm:$0xff]
  %v7910 = vld [vmem:[%s7790 + $0x3b8] sm:$0xff]
  %v7911 = vld [vmem:[%s7790 + $0x3c0] sm:$0xff]
  %v7912 = vld [vmem:[%s7790 + $0x3c8] sm:$0xff]
  %v7913 = vld [vmem:[%s7790 + $0x3d0] sm:$0xff]
  %v7914 = vld [vmem:[%s7790 + $0x3d8] sm:$0xff]
  %v7915 = vld [vmem:[%s7790 + $0x3e0] sm:$0xff]
  %v7916 = vld [vmem:[%s7790 + $0x3e8] sm:$0xff]
  %v7917 = vld [vmem:[%s7790 + $0x3f0] sm:$0xff]
  %v7918 = vld [vmem:[%s7790 + $0x3f8] sm:$0xff]
  %v7919 = vld [vmem:[%s7790 + $0x400] sm:$0xff]
  %v7920 = vld [vmem:[%s7790 + $0x408] sm:$0xff]
  %v7921 = vld [vmem:[%s7790 + $0x410] sm:$0xff]
  %v7922 = vld [vmem:[%s7790 + $0x418] sm:$0xff]
  %v7923 = vld [vmem:[%s7790 + $0x420] sm:$0xff]
  %v7924 = vld [vmem:[%s7790 + $0x428] sm:$0xff]
  %v7925 = vld [vmem:[%s7790 + $0x430] sm:$0xff]
  %v7926 = vld [vmem:[%s7790 + $0x438] sm:$0xff]
  %v7927 = vld [vmem:[%s7790 + $0x440] sm:$0xff]
  %v7928 = vld [vmem:[%s7790 + $0x448] sm:$0xff]
  %v7929 = vld [vmem:[%s7790 + $0x450] sm:$0xff]
  %v7930 = vld [vmem:[%s7790 + $0x458] sm:$0xff]
  %v7931 = vld [vmem:[%s7790 + $0x460] sm:$0xff]
  %v7932 = vld [vmem:[%s7790 + $0x468] sm:$0xff]
  %v7933 = vld [vmem:[%s7790 + $0x470] sm:$0xff]
  %v7934 = vld [vmem:[%s7790 + $0x478] sm:$0xff]
  %v7935 = vld [vmem:[%s7790 + $0x480] sm:$0xff]
  %v7936 = vld [vmem:[%s7790 + $0x488] sm:$0xff]
  %v7937 = vld [vmem:[%s7790 + $0x490] sm:$0xff]
  %v7938 = vld [vmem:[%s7790 + $0x498] sm:$0xff]
  %v7939 = vld [vmem:[%s7790 + $0x4a0] sm:$0xff]
  %v7940 = vld [vmem:[%s7790 + $0x4a8] sm:$0xff]
  %v7941 = vld [vmem:[%s7790 + $0x4b0] sm:$0xff]
  %v7942 = vld [vmem:[%s7790 + $0x4b8] sm:$0xff]
  %v7943 = vld [vmem:[%s7790 + $0x4c0] sm:$0xff]
  %v7944 = vld [vmem:[%s7790 + $0x4c8] sm:$0xff]
  %v7945 = vld [vmem:[%s7790 + $0x4d0] sm:$0xff]
  %v7946 = vld [vmem:[%s7790 + $0x4d8] sm:$0xff]
  %v7947 = vld [vmem:[%s7790 + $0x4e0] sm:$0xff]
  %v7948 = vld [vmem:[%s7790 + $0x4e8] sm:$0xff]
  %v7949 = vld [vmem:[%s7790 + $0x4f0] sm:$0xff]
  %v7950 = vld [vmem:[%s7790 + $0x4f8] sm:$0xff]
  %v7951 = vld [vmem:[%s7790 + $0x500] sm:$0xff]
  %v7952 = vld [vmem:[%s7790 + $0x508] sm:$0xff]
  %v7953 = vld [vmem:[%s7790 + $0x510] sm:$0xff]
  %v7954 = vld [vmem:[%s7790 + $0x518] sm:$0xff]
  %v7955 = vld [vmem:[%s7790 + $0x520] sm:$0xff]
  %v7956 = vld [vmem:[%s7790 + $0x528] sm:$0xff]
  %v7957 = vld [vmem:[%s7790 + $0x530] sm:$0xff]
  %v7958 = vld [vmem:[%s7790 + $0x538] sm:$0xff]
  %v7959 = vld [vmem:[%s7790 + $0x540] sm:$0xff]
  %v7960 = vld [vmem:[%s7790 + $0x548] sm:$0xff]
  %v7961 = vld [vmem:[%s7790 + $0x550] sm:$0xff]
  %v7962 = vld [vmem:[%s7790 + $0x558] sm:$0xff]
  %v7963 = vld [vmem:[%s7790 + $0x560] sm:$0xff]
  %v7964 = vld [vmem:[%s7790 + $0x568] sm:$0xff]
  %v7965 = vld [vmem:[%s7790 + $0x570] sm:$0xff]
  %v7966 = vld [vmem:[%s7790 + $0x578] sm:$0xff]
  %v7967 = vld [vmem:[%s7790 + $0x580] sm:$0xff]
  %v7968 = vld [vmem:[%s7790 + $0x588] sm:$0xff]
  %v7969 = vld [vmem:[%s7790 + $0x590] sm:$0xff]
  %v7970 = vld [vmem:[%s7790 + $0x598] sm:$0xff]
  %v7971 = vld [vmem:[%s7790 + $0x5a0] sm:$0xff]
  %v7972 = vld [vmem:[%s7790 + $0x5a8] sm:$0xff]
  %v7973 = vld [vmem:[%s7790 + $0x5b0] sm:$0xff]
  %v7974 = vld [vmem:[%s7790 + $0x5b8] sm:$0xff]
  %v7975 = vld [vmem:[%s7790 + $0x5c0] sm:$0xff]
  %v7976 = vld [vmem:[%s7790 + $0x5c8] sm:$0xff]
  %v7977 = vld [vmem:[%s7790 + $0x5d0] sm:$0xff]
  %v7978 = vld [vmem:[%s7790 + $0x5d8] sm:$0xff]
  %v7979 = vld [vmem:[%s7790 + $0x5e0] sm:$0xff]
  %v7980 = vld [vmem:[%s7790 + $0x5e8] sm:$0xff]
  %v7981 = vld [vmem:[%s7790 + $0x5f0] sm:$0xff]
  %v7982 = vld [vmem:[%s7790 + $0x5f8] sm:$0xff]
  %v8175 = vunpack.c.l.b16 %v7791
  %v8176 = vunpack.c.h.b16 %v7791
  %v8177 = vunpack.c.l.b16 %v7792
  %v8178 = vunpack.c.h.b16 %v7792
  %v8179 = vunpack.c.l.b16 %v7793
  %v8180 = vunpack.c.h.b16 %v7793
  %v8181 = vunpack.c.l.b16 %v7794
  %v8182 = vunpack.c.h.b16 %v7794
  %v8183 = vunpack.c.l.b16 %v7795
  %v8184 = vunpack.c.h.b16 %v7795
  %v8185 = vunpack.c.l.b16 %v7796
  %v8186 = vunpack.c.h.b16 %v7796
  %v8187 = vunpack.c.l.b16 %v7797
  %v8188 = vunpack.c.h.b16 %v7797
  %v8189 = vunpack.c.l.b16 %v7798
  %v8190 = vunpack.c.h.b16 %v7798
  %v8191 = vunpack.c.l.b16 %v7799
  %v8192 = vunpack.c.h.b16 %v7799
  %v8193 = vunpack.c.l.b16 %v7800
  %v8194 = vunpack.c.h.b16 %v7800
  %v8195 = vunpack.c.l.b16 %v7801
  %v8196 = vunpack.c.h.b16 %v7801
  %v8197 = vunpack.c.l.b16 %v7802
  %v8198 = vunpack.c.h.b16 %v7802
  %v8199 = vunpack.c.l.b16 %v7803
  %v8200 = vunpack.c.h.b16 %v7803
  %v8201 = vunpack.c.l.b16 %v7804
  %v8202 = vunpack.c.h.b16 %v7804
  %v8203 = vunpack.c.l.b16 %v7805
  %v8204 = vunpack.c.h.b16 %v7805
  %v8205 = vunpack.c.l.b16 %v7806
  %v8206 = vunpack.c.h.b16 %v7806
  %v8207 = vunpack.c.l.b16 %v7807
  %v8208 = vunpack.c.h.b16 %v7807
  %v8209 = vunpack.c.l.b16 %v7808
  %v8210 = vunpack.c.h.b16 %v7808
  %v8211 = vunpack.c.l.b16 %v7809
  %v8212 = vunpack.c.h.b16 %v7809
  %v8213 = vunpack.c.l.b16 %v7810
  %v8214 = vunpack.c.h.b16 %v7810
  %v8215 = vunpack.c.l.b16 %v7811
  %v8216 = vunpack.c.h.b16 %v7811
  %v8217 = vunpack.c.l.b16 %v7812
  %v8218 = vunpack.c.h.b16 %v7812
  %v8219 = vunpack.c.l.b16 %v7813
  %v8220 = vunpack.c.h.b16 %v7813
  %v8221 = vunpack.c.l.b16 %v7814
  %v8222 = vunpack.c.h.b16 %v7814
  %v8223 = vunpack.c.l.b16 %v7815
  %v8224 = vunpack.c.h.b16 %v7815
  %v8225 = vunpack.c.l.b16 %v7816
  %v8226 = vunpack.c.h.b16 %v7816
  %v8227 = vunpack.c.l.b16 %v7817
  %v8228 = vunpack.c.h.b16 %v7817
  %v8229 = vunpack.c.l.b16 %v7818
  %v8230 = vunpack.c.h.b16 %v7818
  %v8231 = vunpack.c.l.b16 %v7819
  %v8232 = vunpack.c.h.b16 %v7819
  %v8233 = vunpack.c.l.b16 %v7820
  %v8234 = vunpack.c.h.b16 %v7820
  %v8235 = vunpack.c.l.b16 %v7821
  %v8236 = vunpack.c.h.b16 %v7821
  %v8237 = vunpack.c.l.b16 %v7822
  %v8238 = vunpack.c.h.b16 %v7822
  %v8239 = vunpack.c.l.b16 %v7823
  %v8240 = vunpack.c.h.b16 %v7823
  %v8241 = vunpack.c.l.b16 %v7824
  %v8242 = vunpack.c.h.b16 %v7824
  %v8243 = vunpack.c.l.b16 %v7825
  %v8244 = vunpack.c.h.b16 %v7825
  %v8245 = vunpack.c.l.b16 %v7826
  %v8246 = vunpack.c.h.b16 %v7826
  %v8247 = vunpack.c.l.b16 %v7827
  %v8248 = vunpack.c.h.b16 %v7827
  %v8249 = vunpack.c.l.b16 %v7828
  %v8250 = vunpack.c.h.b16 %v7828
  %v8251 = vunpack.c.l.b16 %v7829
  %v8252 = vunpack.c.h.b16 %v7829
  %v8253 = vunpack.c.l.b16 %v7830
  %v8254 = vunpack.c.h.b16 %v7830
  %v8255 = vunpack.c.l.b16 %v7831
  %v8256 = vunpack.c.h.b16 %v7831
  %v8257 = vunpack.c.l.b16 %v7832
  %v8258 = vunpack.c.h.b16 %v7832
  %v8259 = vunpack.c.l.b16 %v7833
  %v8260 = vunpack.c.h.b16 %v7833
  %v8261 = vunpack.c.l.b16 %v7834
  %v8262 = vunpack.c.h.b16 %v7834
  %v8263 = vunpack.c.l.b16 %v7835
  %v8264 = vunpack.c.h.b16 %v7835
  %v8265 = vunpack.c.l.b16 %v7836
  %v8266 = vunpack.c.h.b16 %v7836
  %v8267 = vunpack.c.l.b16 %v7837
  %v8268 = vunpack.c.h.b16 %v7837
  %v8269 = vunpack.c.l.b16 %v7838
  %v8270 = vunpack.c.h.b16 %v7838
  %v8271 = vunpack.c.l.b16 %v7839
  %v8272 = vunpack.c.h.b16 %v7839
  %v8273 = vunpack.c.l.b16 %v7840
  %v8274 = vunpack.c.h.b16 %v7840
  %v8275 = vunpack.c.l.b16 %v7841
  %v8276 = vunpack.c.h.b16 %v7841
  %v8277 = vunpack.c.l.b16 %v7842
  %v8278 = vunpack.c.h.b16 %v7842
  %v8279 = vunpack.c.l.b16 %v7843
  %v8280 = vunpack.c.h.b16 %v7843
  %v8281 = vunpack.c.l.b16 %v7844
  %v8282 = vunpack.c.h.b16 %v7844
  %v8283 = vunpack.c.l.b16 %v7845
  %v8284 = vunpack.c.h.b16 %v7845
  %v8285 = vunpack.c.l.b16 %v7846
  %v8286 = vunpack.c.h.b16 %v7846
  %v8287 = vunpack.c.l.b16 %v7847
  %v8288 = vunpack.c.h.b16 %v7847
  %v8289 = vunpack.c.l.b16 %v7848
  %v8290 = vunpack.c.h.b16 %v7848
  %v8291 = vunpack.c.l.b16 %v7849
  %v8292 = vunpack.c.h.b16 %v7849
  %v8293 = vunpack.c.l.b16 %v7850
  %v8294 = vunpack.c.h.b16 %v7850
  %v8295 = vunpack.c.l.b16 %v7851
  %v8296 = vunpack.c.h.b16 %v7851
  %v8297 = vunpack.c.l.b16 %v7852
  %v8298 = vunpack.c.h.b16 %v7852
  %v8299 = vunpack.c.l.b16 %v7853
  %v8300 = vunpack.c.h.b16 %v7853
  %v8301 = vunpack.c.l.b16 %v7854
  %v8302 = vunpack.c.h.b16 %v7854
  %v8303 = vunpack.c.l.b16 %v7855
  %v8304 = vunpack.c.h.b16 %v7855
  %v8305 = vunpack.c.l.b16 %v7856
  %v8306 = vunpack.c.h.b16 %v7856
  %v8307 = vunpack.c.l.b16 %v7857
  %v8308 = vunpack.c.h.b16 %v7857
  %v8309 = vunpack.c.l.b16 %v7858
  %v8310 = vunpack.c.h.b16 %v7858
  %v8311 = vunpack.c.l.b16 %v7859
  %v8312 = vunpack.c.h.b16 %v7859
  %v8313 = vunpack.c.l.b16 %v7860
  %v8314 = vunpack.c.h.b16 %v7860
  %v8315 = vunpack.c.l.b16 %v7861
  %v8316 = vunpack.c.h.b16 %v7861
  %v8317 = vunpack.c.l.b16 %v7862
  %v8318 = vunpack.c.h.b16 %v7862
  %v8319 = vunpack.c.l.b16 %v7863
  %v8320 = vunpack.c.h.b16 %v7863
  %v8321 = vunpack.c.l.b16 %v7864
  %v8322 = vunpack.c.h.b16 %v7864
  %v8323 = vunpack.c.l.b16 %v7865
  %v8324 = vunpack.c.h.b16 %v7865
  %v8325 = vunpack.c.l.b16 %v7866
  %v8326 = vunpack.c.h.b16 %v7866
  %v8327 = vunpack.c.l.b16 %v7867
  %v8328 = vunpack.c.h.b16 %v7867
  %v8329 = vunpack.c.l.b16 %v7868
  %v8330 = vunpack.c.h.b16 %v7868
  %v8331 = vunpack.c.l.b16 %v7869
  %v8332 = vunpack.c.h.b16 %v7869
  %v8333 = vunpack.c.l.b16 %v7870
  %v8334 = vunpack.c.h.b16 %v7870
  %v8335 = vunpack.c.l.b16 %v7871
  %v8336 = vunpack.c.h.b16 %v7871
  %v8337 = vunpack.c.l.b16 %v7872
  %v8338 = vunpack.c.h.b16 %v7872
  %v8339 = vunpack.c.l.b16 %v7873
  %v8340 = vunpack.c.h.b16 %v7873
  %v8341 = vunpack.c.l.b16 %v7874
  %v8342 = vunpack.c.h.b16 %v7874
  %v8343 = vunpack.c.l.b16 %v7875
  %v8344 = vunpack.c.h.b16 %v7875
  %v8345 = vunpack.c.l.b16 %v7876
  %v8346 = vunpack.c.h.b16 %v7876
  %v8347 = vunpack.c.l.b16 %v7877
  %v8348 = vunpack.c.h.b16 %v7877
  %v8349 = vunpack.c.l.b16 %v7878
  %v8350 = vunpack.c.h.b16 %v7878
  %v8351 = vunpack.c.l.b16 %v7879
  %v8352 = vunpack.c.h.b16 %v7879
  %v8353 = vunpack.c.l.b16 %v7880
  %v8354 = vunpack.c.h.b16 %v7880
  %v8355 = vunpack.c.l.b16 %v7881
  %v8356 = vunpack.c.h.b16 %v7881
  %v8357 = vunpack.c.l.b16 %v7882
  %v8358 = vunpack.c.h.b16 %v7882
  %v8359 = vunpack.c.l.b16 %v7883
  %v8360 = vunpack.c.h.b16 %v7883
  %v8361 = vunpack.c.l.b16 %v7884
  %v8362 = vunpack.c.h.b16 %v7884
  %v8363 = vunpack.c.l.b16 %v7885
  %v8364 = vunpack.c.h.b16 %v7885
  %v8365 = vunpack.c.l.b16 %v7886
  %v8366 = vunpack.c.h.b16 %v7886
  %v8367 = vunpack.c.l.b16 %v7887
  %v8368 = vunpack.c.h.b16 %v7887
  %v8369 = vunpack.c.l.b16 %v7888
  %v8370 = vunpack.c.h.b16 %v7888
  %v8371 = vunpack.c.l.b16 %v7889
  %v8372 = vunpack.c.h.b16 %v7889
  %v8373 = vunpack.c.l.b16 %v7890
  %v8374 = vunpack.c.h.b16 %v7890
  %v8375 = vunpack.c.l.b16 %v7891
  %v8376 = vunpack.c.h.b16 %v7891
  %v8377 = vunpack.c.l.b16 %v7892
  %v8378 = vunpack.c.h.b16 %v7892
  %v8379 = vunpack.c.l.b16 %v7893
  %v8380 = vunpack.c.h.b16 %v7893
  %v8381 = vunpack.c.l.b16 %v7894
  %v8382 = vunpack.c.h.b16 %v7894
  %v8383 = vunpack.c.l.b16 %v7895
  %v8384 = vunpack.c.h.b16 %v7895
  %v8385 = vunpack.c.l.b16 %v7896
  %v8386 = vunpack.c.h.b16 %v7896
  %v8387 = vunpack.c.l.b16 %v7897
  %v8388 = vunpack.c.h.b16 %v7897
  %v8389 = vunpack.c.l.b16 %v7898
  %v8390 = vunpack.c.h.b16 %v7898
  %v8391 = vunpack.c.l.b16 %v7899
  %v8392 = vunpack.c.h.b16 %v7899
  %v8393 = vunpack.c.l.b16 %v7900
  %v8394 = vunpack.c.h.b16 %v7900
  %v8395 = vunpack.c.l.b16 %v7901
  %v8396 = vunpack.c.h.b16 %v7901
  %v8397 = vunpack.c.l.b16 %v7902
  %v8398 = vunpack.c.h.b16 %v7902
  %v8399 = vunpack.c.l.b16 %v7903
  %v8400 = vunpack.c.h.b16 %v7903
  %v8401 = vunpack.c.l.b16 %v7904
  %v8402 = vunpack.c.h.b16 %v7904
  %v8403 = vunpack.c.l.b16 %v7905
  %v8404 = vunpack.c.h.b16 %v7905
  %v8405 = vunpack.c.l.b16 %v7906
  %v8406 = vunpack.c.h.b16 %v7906
  %v8407 = vunpack.c.l.b16 %v7907
  %v8408 = vunpack.c.h.b16 %v7907
  %v8409 = vunpack.c.l.b16 %v7908
  %v8410 = vunpack.c.h.b16 %v7908
  %v8411 = vunpack.c.l.b16 %v7909
  %v8412 = vunpack.c.h.b16 %v7909
  %v8413 = vunpack.c.l.b16 %v7910
  %v8414 = vunpack.c.h.b16 %v7910
  %v8415 = vunpack.c.l.b16 %v7911
  %v8416 = vunpack.c.h.b16 %v7911
  %v8417 = vunpack.c.l.b16 %v7912
  %v8418 = vunpack.c.h.b16 %v7912
  %v8419 = vunpack.c.l.b16 %v7913
  %v8420 = vunpack.c.h.b16 %v7913
  %v8421 = vunpack.c.l.b16 %v7914
  %v8422 = vunpack.c.h.b16 %v7914
  %v8423 = vunpack.c.l.b16 %v7915
  %v8424 = vunpack.c.h.b16 %v7915
  %v8425 = vunpack.c.l.b16 %v7916
  %v8426 = vunpack.c.h.b16 %v7916
  %v8427 = vunpack.c.l.b16 %v7917
  %v8428 = vunpack.c.h.b16 %v7917
  %v8429 = vunpack.c.l.b16 %v7918
  %v8430 = vunpack.c.h.b16 %v7918
  %v8431 = vunpack.c.l.b16 %v7919
  %v8432 = vunpack.c.h.b16 %v7919
  %v8433 = vunpack.c.l.b16 %v7920
  %v8434 = vunpack.c.h.b16 %v7920
  %v8435 = vunpack.c.l.b16 %v7921
  %v8436 = vunpack.c.h.b16 %v7921
  %v8437 = vunpack.c.l.b16 %v7922
  %v8438 = vunpack.c.h.b16 %v7922
  %v8439 = vunpack.c.l.b16 %v7923
  %v8440 = vunpack.c.h.b16 %v7923
  %v8441 = vunpack.c.l.b16 %v7924
  %v8442 = vunpack.c.h.b16 %v7924
  %v8443 = vunpack.c.l.b16 %v7925
  %v8444 = vunpack.c.h.b16 %v7925
  %v8445 = vunpack.c.l.b16 %v7926
  %v8446 = vunpack.c.h.b16 %v7926
  %v8447 = vunpack.c.l.b16 %v7927
  %v8448 = vunpack.c.h.b16 %v7927
  %v8449 = vunpack.c.l.b16 %v7928
  %v8450 = vunpack.c.h.b16 %v7928
  %v8451 = vunpack.c.l.b16 %v7929
  %v8452 = vunpack.c.h.b16 %v7929
  %v8453 = vunpack.c.l.b16 %v7930
  %v8454 = vunpack.c.h.b16 %v7930
  %v8455 = vunpack.c.l.b16 %v7931
  %v8456 = vunpack.c.h.b16 %v7931
  %v8457 = vunpack.c.l.b16 %v7932
  %v8458 = vunpack.c.h.b16 %v7932
  %v8459 = vunpack.c.l.b16 %v7933
  %v8460 = vunpack.c.h.b16 %v7933
  %v8461 = vunpack.c.l.b16 %v7934
  %v8462 = vunpack.c.h.b16 %v7934
  %v8463 = vunpack.c.l.b16 %v7935
  %v8464 = vunpack.c.h.b16 %v7935
  %v8465 = vunpack.c.l.b16 %v7936
  %v8466 = vunpack.c.h.b16 %v7936
  %v8467 = vunpack.c.l.b16 %v7937
  %v8468 = vunpack.c.h.b16 %v7937
  %v8469 = vunpack.c.l.b16 %v7938
  %v8470 = vunpack.c.h.b16 %v7938
  %v8471 = vunpack.c.l.b16 %v7939
  %v8472 = vunpack.c.h.b16 %v7939
  %v8473 = vunpack.c.l.b16 %v7940
  %v8474 = vunpack.c.h.b16 %v7940
  %v8475 = vunpack.c.l.b16 %v7941
  %v8476 = vunpack.c.h.b16 %v7941
  %v8477 = vunpack.c.l.b16 %v7942
  %v8478 = vunpack.c.h.b16 %v7942
  %v8479 = vunpack.c.l.b16 %v7943
  %v8480 = vunpack.c.h.b16 %v7943
  %v8481 = vunpack.c.l.b16 %v7944
  %v8482 = vunpack.c.h.b16 %v7944
  %v8483 = vunpack.c.l.b16 %v7945
  %v8484 = vunpack.c.h.b16 %v7945
  %v8485 = vunpack.c.l.b16 %v7946
  %v8486 = vunpack.c.h.b16 %v7946
  %v8487 = vunpack.c.l.b16 %v7947
  %v8488 = vunpack.c.h.b16 %v7947
  %v8489 = vunpack.c.l.b16 %v7948
  %v8490 = vunpack.c.h.b16 %v7948
  %v8491 = vunpack.c.l.b16 %v7949
  %v8492 = vunpack.c.h.b16 %v7949
  %v8493 = vunpack.c.l.b16 %v7950
  %v8494 = vunpack.c.h.b16 %v7950
  %v8495 = vunpack.c.l.b16 %v7951
  %v8496 = vunpack.c.h.b16 %v7951
  %v8497 = vunpack.c.l.b16 %v7952
  %v8498 = vunpack.c.h.b16 %v7952
  %v8499 = vunpack.c.l.b16 %v7953
  %v8500 = vunpack.c.h.b16 %v7953
  %v8501 = vunpack.c.l.b16 %v7954
  %v8502 = vunpack.c.h.b16 %v7954
  %v8503 = vunpack.c.l.b16 %v7955
  %v8504 = vunpack.c.h.b16 %v7955
  %v8505 = vunpack.c.l.b16 %v7956
  %v8506 = vunpack.c.h.b16 %v7956
  %v8507 = vunpack.c.l.b16 %v7957
  %v8508 = vunpack.c.h.b16 %v7957
  %v8509 = vunpack.c.l.b16 %v7958
  %v8510 = vunpack.c.h.b16 %v7958
  %v8511 = vunpack.c.l.b16 %v7959
  %v8512 = vunpack.c.h.b16 %v7959
  %v8513 = vunpack.c.l.b16 %v7960
  %v8514 = vunpack.c.h.b16 %v7960
  %v8515 = vunpack.c.l.b16 %v7961
  %v8516 = vunpack.c.h.b16 %v7961
  %v8517 = vunpack.c.l.b16 %v7962
  %v8518 = vunpack.c.h.b16 %v7962
  %v8519 = vunpack.c.l.b16 %v7963
  %v8520 = vunpack.c.h.b16 %v7963
  %v8521 = vunpack.c.l.b16 %v7964
  %v8522 = vunpack.c.h.b16 %v7964
  %v8523 = vunpack.c.l.b16 %v7965
  %v8524 = vunpack.c.h.b16 %v7965
  %v8525 = vunpack.c.l.b16 %v7966
  %v8526 = vunpack.c.h.b16 %v7966
  %v8527 = vunpack.c.l.b16 %v7967
  %v8528 = vunpack.c.h.b16 %v7967
  %v8529 = vunpack.c.l.b16 %v7968
  %v8530 = vunpack.c.h.b16 %v7968
  %v8531 = vunpack.c.l.b16 %v7969
  %v8532 = vunpack.c.h.b16 %v7969
  %v8533 = vunpack.c.l.b16 %v7970
  %v8534 = vunpack.c.h.b16 %v7970
  %v8535 = vunpack.c.l.b16 %v7971
  %v8536 = vunpack.c.h.b16 %v7971
  %v8537 = vunpack.c.l.b16 %v7972
  %v8538 = vunpack.c.h.b16 %v7972
  %v8539 = vunpack.c.l.b16 %v7973
  %v8540 = vunpack.c.h.b16 %v7973
  %v8541 = vunpack.c.l.b16 %v7974
  %v8542 = vunpack.c.h.b16 %v7974
  %v8543 = vunpack.c.l.b16 %v7975
  %v8544 = vunpack.c.h.b16 %v7975
  %v8545 = vunpack.c.l.b16 %v7976
  %v8546 = vunpack.c.h.b16 %v7976
  %v8547 = vunpack.c.l.b16 %v7977
  %v8548 = vunpack.c.h.b16 %v7977
  %v8549 = vunpack.c.l.b16 %v7978
  %v8550 = vunpack.c.h.b16 %v7978
  %v8551 = vunpack.c.l.b16 %v7979
  %v8552 = vunpack.c.h.b16 %v7979
  %v8553 = vunpack.c.l.b16 %v7980
  %v8554 = vunpack.c.h.b16 %v7980
  %v8555 = vunpack.c.l.b16 %v7981
  %v8556 = vunpack.c.h.b16 %v7981
  %v8557 = vunpack.c.l.b16 %v7982
  %v8558 = vunpack.c.h.b16 %v7982
  %v8559 = vpack.c.b16 %v8179, %v8175
  %v8560 = vpack.c.b16 %v8180, %v8176
  %v8561 = vpack.c.b16 %v8181, %v8177
  %v8562 = vpack.c.b16 %v8182, %v8178
  %v8563 = vpack.c.b16 %v8187, %v8183
  %v8564 = vpack.c.b16 %v8188, %v8184
  %v8565 = vpack.c.b16 %v8189, %v8185
  %v8566 = vpack.c.b16 %v8190, %v8186
  %v8567 = vpack.c.b16 %v8195, %v8191
  %v8568 = vpack.c.b16 %v8196, %v8192
  %v8569 = vpack.c.b16 %v8197, %v8193
  %v8570 = vpack.c.b16 %v8198, %v8194
  %v8571 = vpack.c.b16 %v8203, %v8199
  %v8572 = vpack.c.b16 %v8204, %v8200
  %v8573 = vpack.c.b16 %v8205, %v8201
  %v8574 = vpack.c.b16 %v8206, %v8202
  %v8575 = vpack.c.b16 %v8211, %v8207
  %v8576 = vpack.c.b16 %v8212, %v8208
  %v8577 = vpack.c.b16 %v8213, %v8209
  %v8578 = vpack.c.b16 %v8214, %v8210
  %v8579 = vpack.c.b16 %v8219, %v8215
  %v8580 = vpack.c.b16 %v8220, %v8216
  %v8581 = vpack.c.b16 %v8221, %v8217
  %v8582 = vpack.c.b16 %v8222, %v8218
  %v8583 = vpack.c.b16 %v8227, %v8223
  %v8584 = vpack.c.b16 %v8228, %v8224
  %v8585 = vpack.c.b16 %v8229, %v8225
  %v8586 = vpack.c.b16 %v8230, %v8226
  %v8587 = vpack.c.b16 %v8235, %v8231
  %v8588 = vpack.c.b16 %v8236, %v8232
  %v8589 = vpack.c.b16 %v8237, %v8233
  %v8590 = vpack.c.b16 %v8238, %v8234
  %v8591 = vpack.c.b16 %v8243, %v8239
  %v8592 = vpack.c.b16 %v8244, %v8240
  %v8593 = vpack.c.b16 %v8245, %v8241
  %v8594 = vpack.c.b16 %v8246, %v8242
  %v8595 = vpack.c.b16 %v8251, %v8247
  %v8596 = vpack.c.b16 %v8252, %v8248
  %v8597 = vpack.c.b16 %v8253, %v8249
  %v8598 = vpack.c.b16 %v8254, %v8250
  %v8599 = vpack.c.b16 %v8259, %v8255
  %v8600 = vpack.c.b16 %v8260, %v8256
  %v8601 = vpack.c.b16 %v8261, %v8257
  %v8602 = vpack.c.b16 %v8262, %v8258
  %v8603 = vpack.c.b16 %v8267, %v8263
  %v8604 = vpack.c.b16 %v8268, %v8264
  %v8605 = vpack.c.b16 %v8269, %v8265
  %v8606 = vpack.c.b16 %v8270, %v8266
  %v8607 = vpack.c.b16 %v8275, %v8271
  %v8608 = vpack.c.b16 %v8276, %v8272
  %v8609 = vpack.c.b16 %v8277, %v8273
  %v8610 = vpack.c.b16 %v8278, %v8274
  %v8611 = vpack.c.b16 %v8283, %v8279
  %v8612 = vpack.c.b16 %v8284, %v8280
  %v8613 = vpack.c.b16 %v8285, %v8281
  %v8614 = vpack.c.b16 %v8286, %v8282
  %v8615 = vpack.c.b16 %v8291, %v8287
  %v8616 = vpack.c.b16 %v8292, %v8288
  %v8617 = vpack.c.b16 %v8293, %v8289
  %v8618 = vpack.c.b16 %v8294, %v8290
  %v8619 = vpack.c.b16 %v8299, %v8295
  %v8620 = vpack.c.b16 %v8300, %v8296
  %v8621 = vpack.c.b16 %v8301, %v8297
  %v8622 = vpack.c.b16 %v8302, %v8298
  %v8623 = vpack.c.b16 %v8307, %v8303
  %v8624 = vpack.c.b16 %v8308, %v8304
  %v8625 = vpack.c.b16 %v8309, %v8305
  %v8626 = vpack.c.b16 %v8310, %v8306
  %v8627 = vpack.c.b16 %v8315, %v8311
  %v8628 = vpack.c.b16 %v8316, %v8312
  %v8629 = vpack.c.b16 %v8317, %v8313
  %v8630 = vpack.c.b16 %v8318, %v8314
  %v8631 = vpack.c.b16 %v8323, %v8319
  %v8632 = vpack.c.b16 %v8324, %v8320
  %v8633 = vpack.c.b16 %v8325, %v8321
  %v8634 = vpack.c.b16 %v8326, %v8322
  %v8635 = vpack.c.b16 %v8331, %v8327
  %v8636 = vpack.c.b16 %v8332, %v8328
  %v8637 = vpack.c.b16 %v8333, %v8329
  %v8638 = vpack.c.b16 %v8334, %v8330
  %v8639 = vpack.c.b16 %v8339, %v8335
  %v8640 = vpack.c.b16 %v8340, %v8336
  %v8641 = vpack.c.b16 %v8341, %v8337
  %v8642 = vpack.c.b16 %v8342, %v8338
  %v8643 = vpack.c.b16 %v8347, %v8343
  %v8644 = vpack.c.b16 %v8348, %v8344
  %v8645 = vpack.c.b16 %v8349, %v8345
  %v8646 = vpack.c.b16 %v8350, %v8346
  %v8647 = vpack.c.b16 %v8355, %v8351
  %v8648 = vpack.c.b16 %v8356, %v8352
  %v8649 = vpack.c.b16 %v8357, %v8353
  %v8650 = vpack.c.b16 %v8358, %v8354
  %v8651 = vpack.c.b16 %v8363, %v8359
  %v8652 = vpack.c.b16 %v8364, %v8360
  %v8653 = vpack.c.b16 %v8365, %v8361
  %v8654 = vpack.c.b16 %v8366, %v8362
  %v8655 = vpack.c.b16 %v8371, %v8367
  %v8656 = vpack.c.b16 %v8372, %v8368
  %v8657 = vpack.c.b16 %v8373, %v8369
  %v8658 = vpack.c.b16 %v8374, %v8370
  %v8659 = vpack.c.b16 %v8379, %v8375
  %v8660 = vpack.c.b16 %v8380, %v8376
  %v8661 = vpack.c.b16 %v8381, %v8377
  %v8662 = vpack.c.b16 %v8382, %v8378
  %v8663 = vpack.c.b16 %v8387, %v8383
  %v8664 = vpack.c.b16 %v8388, %v8384
  %v8665 = vpack.c.b16 %v8389, %v8385
  %v8666 = vpack.c.b16 %v8390, %v8386
  %v8667 = vpack.c.b16 %v8395, %v8391
  %v8668 = vpack.c.b16 %v8396, %v8392
  %v8669 = vpack.c.b16 %v8397, %v8393
  %v8670 = vpack.c.b16 %v8398, %v8394
  %v8671 = vpack.c.b16 %v8403, %v8399
  %v8672 = vpack.c.b16 %v8404, %v8400
  %v8673 = vpack.c.b16 %v8405, %v8401
  %v8674 = vpack.c.b16 %v8406, %v8402
  %v8675 = vpack.c.b16 %v8411, %v8407
  %v8676 = vpack.c.b16 %v8412, %v8408
  %v8677 = vpack.c.b16 %v8413, %v8409
  %v8678 = vpack.c.b16 %v8414, %v8410
  %v8679 = vpack.c.b16 %v8419, %v8415
  %v8680 = vpack.c.b16 %v8420, %v8416
  %v8681 = vpack.c.b16 %v8421, %v8417
  %v8682 = vpack.c.b16 %v8422, %v8418
  %v8683 = vpack.c.b16 %v8427, %v8423
  %v8684 = vpack.c.b16 %v8428, %v8424
  %v8685 = vpack.c.b16 %v8429, %v8425
  %v8686 = vpack.c.b16 %v8430, %v8426
  %v8687 = vpack.c.b16 %v8435, %v8431
  %v8688 = vpack.c.b16 %v8436, %v8432
  %v8689 = vpack.c.b16 %v8437, %v8433
  %v8690 = vpack.c.b16 %v8438, %v8434
  %v8691 = vpack.c.b16 %v8443, %v8439
  %v8692 = vpack.c.b16 %v8444, %v8440
  %v8693 = vpack.c.b16 %v8445, %v8441
  %v8694 = vpack.c.b16 %v8446, %v8442
  %v8695 = vpack.c.b16 %v8451, %v8447
  %v8696 = vpack.c.b16 %v8452, %v8448
  %v8697 = vpack.c.b16 %v8453, %v8449
  %v8698 = vpack.c.b16 %v8454, %v8450
  %v8699 = vpack.c.b16 %v8459, %v8455
  %v8700 = vpack.c.b16 %v8460, %v8456
  %v8701 = vpack.c.b16 %v8461, %v8457
  %v8702 = vpack.c.b16 %v8462, %v8458
  %v8703 = vpack.c.b16 %v8467, %v8463
  %v8704 = vpack.c.b16 %v8468, %v8464
  %v8705 = vpack.c.b16 %v8469, %v8465
  %v8706 = vpack.c.b16 %v8470, %v8466
  %v8707 = vpack.c.b16 %v8475, %v8471
  %v8708 = vpack.c.b16 %v8476, %v8472
  %v8709 = vpack.c.b16 %v8477, %v8473
  %v8710 = vpack.c.b16 %v8478, %v8474
  %v8711 = vpack.c.b16 %v8483, %v8479
  %v8712 = vpack.c.b16 %v8484, %v8480
  %v8713 = vpack.c.b16 %v8485, %v8481
  %v8714 = vpack.c.b16 %v8486, %v8482
  %v8715 = vpack.c.b16 %v8491, %v8487
  %v8716 = vpack.c.b16 %v8492, %v8488
  %v8717 = vpack.c.b16 %v8493, %v8489
  %v8718 = vpack.c.b16 %v8494, %v8490
  %v8719 = vpack.c.b16 %v8499, %v8495
  %v8720 = vpack.c.b16 %v8500, %v8496
  %v8721 = vpack.c.b16 %v8501, %v8497
  %v8722 = vpack.c.b16 %v8502, %v8498
  %v8723 = vpack.c.b16 %v8507, %v8503
  %v8724 = vpack.c.b16 %v8508, %v8504
  %v8725 = vpack.c.b16 %v8509, %v8505
  %v8726 = vpack.c.b16 %v8510, %v8506
  %v8727 = vpack.c.b16 %v8515, %v8511
  %v8728 = vpack.c.b16 %v8516, %v8512
  %v8729 = vpack.c.b16 %v8517, %v8513
  %v8730 = vpack.c.b16 %v8518, %v8514
  %v8731 = vpack.c.b16 %v8523, %v8519
  %v8732 = vpack.c.b16 %v8524, %v8520
  %v8733 = vpack.c.b16 %v8525, %v8521
  %v8734 = vpack.c.b16 %v8526, %v8522
  %v8735 = vpack.c.b16 %v8531, %v8527
  %v8736 = vpack.c.b16 %v8532, %v8528
  %v8737 = vpack.c.b16 %v8533, %v8529
  %v8738 = vpack.c.b16 %v8534, %v8530
  %v8739 = vpack.c.b16 %v8539, %v8535
  %v8740 = vpack.c.b16 %v8540, %v8536
  %v8741 = vpack.c.b16 %v8541, %v8537
  %v8742 = vpack.c.b16 %v8542, %v8538
  %v8743 = vpack.c.b16 %v8547, %v8543
  %v8744 = vpack.c.b16 %v8548, %v8544
  %v8745 = vpack.c.b16 %v8549, %v8545
  %v8746 = vpack.c.b16 %v8550, %v8546
  %v8747 = vpack.c.b16 %v8555, %v8551
  %v8748 = vpack.c.b16 %v8556, %v8552
  %v8749 = vpack.c.b16 %v8557, %v8553
  %v8750 = vpack.c.b16 %v8558, %v8554
  %8943 = vmatprep.subr.bf16.mxu0 %v8560
  %8944 = vmatpush1.bf16.msra.mxu0 %v8559
  %8945 = vmatprep.subr.bf16.mxu0 %v8564
  %8946 = vmatpush1.bf16.msra.mxu0 %v8563
  %8947 = vmatprep.subr.bf16.mxu0 %v8568
  %8948 = vmatpush1.bf16.msra.mxu0 %v8567
  %8949 = vmatprep.subr.bf16.mxu0 %v8572
  %8950 = vmatpush1.bf16.msra.mxu0 %v8571
  %8951 = vmatprep.subr.bf16.mxu0 %v8576
  %8952 = vmatpush1.bf16.msra.mxu0 %v8575
  %8953 = vmatprep.subr.bf16.mxu0 %v8580
  %8954 = vmatpush1.bf16.msra.mxu0 %v8579
  %8955 = vmatprep.subr.bf16.mxu0 %v8584
  %8956 = vmatpush1.bf16.msra.mxu0 %v8583
  %8957 = vmatprep.subr.bf16.mxu0 %v8588
  %8958 = vmatpush1.bf16.msra.mxu0 %v8587
  %8959 = vmatprep.subr.bf16.mxu0 %v8592
  %8960 = vmatpush1.bf16.msra.mxu0 %v8591
  %8961 = vmatprep.subr.bf16.mxu0 %v8596
  %8962 = vmatpush1.bf16.msra.mxu0 %v8595
  %8963 = vmatprep.subr.bf16.mxu0 %v8600
  %8964 = vmatpush1.bf16.msra.mxu0 %v8599
  %8965 = vmatprep.subr.bf16.mxu0 %v8604
  %8966 = vmatpush1.bf16.msra.mxu0 %v8603
  %8967 = vmatprep.subr.bf16.mxu0 %v8608
  %8968 = vmatpush1.bf16.msra.mxu0 %v8607
  %8969 = vmatprep.subr.bf16.mxu0 %v8612
  %8970 = vmatpush1.bf16.msra.mxu0 %v8611
  %8971 = vmatprep.subr.bf16.mxu0 %v8616
  %8972 = vmatpush1.bf16.msra.mxu0 %v8615
  %8973 = vmatprep.subr.bf16.mxu0 %v8620
  %8974 = vmatpush1.bf16.msra.mxu0 %v8619
  %8975 = vmatprep.mubr.bf16.mxu0 %v603
  %8976 = vmatmul.mubr.bf16.gmra.mrb[0].mxu0 %v602
  %v8977 = vpop.f32.mrb[0].mxu0
  %v8978 = vadd.f32 0.0, %v8977
  %v8979 = vpop.f32.mrb[0].mxu0
  %v8980 = vadd.f32 0.0, %v8979
  %v8981 = vpop.f32.mrb[0].mxu0
  %v8982 = vadd.f32 0.0, %v8981
  %v8983 = vpop.f32.mrb[0].mxu0
  %v8984 = vadd.f32 0.0, %v8983
  %8985 = vmatprep.mubr.bf16.mxu0 %v609
  %8986 = vmatmul.mubr.bf16.gmra.mrb[0].mxu0 %v608
  %v8987 = vpop.f32.mrb[0].mxu0
  %v8988 = vadd.f32 0.0, %v8987
  %v8989 = vpop.f32.mrb[0].mxu0
  %v8990 = vadd.f32 0.0, %v8989
  %v8991 = vpop.f32.mrb[0].mxu0
  %v8992 = vadd.f32 0.0, %v8991
  %v8993 = vpop.f32.mrb[0].mxu0
  %v8994 = vadd.f32 0.0, %v8993
  %8995 = vmatprep.mubr.bf16.mxu0 %v615
  %8996 = vmatmul.mubr.bf16.gmra.mrb[0].mxu0 %v614
  %v8997 = vpop.f32.mrb[0].mxu0
  %v8998 = vadd.f32 0.0, %v8997
  %v8999 = vpop.f32.mrb[0].mxu0
  %v9000 = vadd.f32 0.0, %v8999
  %v9001 = vpop.f32.mrb[0].mxu0
  %v9002 = vadd.f32 0.0, %v9001
  %v9003 = vpop.f32.mrb[0].mxu0
  %v9004 = vadd.f32 0.0, %v9003
  %9005 = vmatprep.mubr.bf16.mxu0 %v621
  %9006 = vmatmul.mubr.bf16.gmra.mrb[0].mxu0 %v620
  %v9007 = vpop.f32.mrb[0].mxu0
  %v9008 = vadd.f32 0.0, %v9007
  %v9009 = vpop.f32.mrb[0].mxu0
  %v9010 = vadd.f32 0.0, %v9009
  %v9011 = vpop.f32.mrb[0].mxu0
  %v9012 = vadd.f32 0.0, %v9011
  %v9013 = vpop.f32.mrb[0].mxu0
  %v9014 = vadd.f32 0.0, %v9013
  %9015 = vmatprep.mubr.bf16.mxu0 %v627
  %9016 = vmatmul.mubr.bf16.gmra.mrb[0].mxu0 %v626
  %v9017 = vpop.f32.mrb[0].mxu0
  %v9018 = vadd.f32 0.0, %v9017
  %v9019 = vpop.f32.mrb[0].mxu0
  %v9020 = vadd.f32 0.0, %v9019
  %v9021 = vpop.f32.mrb[0].mxu0
  %v9022 = vadd.f32 0.0, %v9021
  %v9023 = vpop.f32.mrb[0].mxu0
  %v9024 = vadd.f32 0.0, %v9023
  %9025 = vmatprep.mubr.bf16.mxu0 %v633
  %9026 = vmatmul.mubr.bf16.gmra.mrb[0].mxu0 %v632
  %v9027 = vpop.f32.mrb[0].mxu0
  %v9028 = vadd.f32 0.0, %v9027
  %v9029 = vpop.f32.mrb[0].mxu0
  %v9030 = vadd.f32 0.0, %v9029
  %v9031 = vpop.f32.mrb[0].mxu0
  %v9032 = vadd.f32 0.0, %v9031
  %v9033 = vpop.f32.mrb[0].mxu0
  %v9034 = vadd.f32 0.0, %v9033
  %9035 = vmatprep.mubr.bf16.mxu0 %v639
  %9036 = vmatmul.mubr.bf16.gmra.mrb[0].mxu0 %v638
  %v9037 = vpop.f32.mrb[0].mxu0
  %v9038 = vadd.f32 0.0, %v9037
  %v9039 = vpop.f32.mrb[0].mxu0
  %v9040 = vadd.f32 0.0, %v9039
  %v9041 = vpop.f32.mrb[0].mxu0
  %v9042 = vadd.f32 0.0, %v9041
  %v9043 = vpop.f32.mrb[0].mxu0
  %v9044 = vadd.f32 0.0, %v9043
  %9045 = vmatprep.mubr.bf16.mxu0 %v645
  %9046 = vmatmul.mubr.bf16.gmra.mrb[0].mxu0 %v644
  %v9047 = vpop.f32.mrb[0].mxu0
  %v9048 = vadd.f32 0.0, %v9047
  %v9049 = vpop.f32.mrb[0].mxu0
  %v9050 = vadd.f32 0.0, %v9049
  %v9051 = vpop.f32.mrb[0].mxu0
  %v9052 = vadd.f32 0.0, %v9051
  %v9053 = vpop.f32.mrb[0].mxu0
  %v9054 = vadd.f32 0.0, %v9053
  %9055 = vmatprep.mubr.bf16.mxu0 %v651
  %9056 = vmatmul.mubr.bf16.gmra.mrb[0].mxu0 %v650
  %v9057 = vpop.f32.mrb[0].mxu0
  %v9058 = vadd.f32 0.0, %v9057
  %v9059 = vpop.f32.mrb[0].mxu0
  %v9060 = vadd.f32 0.0, %v9059
  %v9061 = vpop.f32.mrb[0].mxu0
  %v9062 = vadd.f32 0.0, %v9061
  %v9063 = vpop.f32.mrb[0].mxu0
  %v9064 = vadd.f32 0.0, %v9063
  %9065 = vmatprep.mubr.bf16.mxu0 %v657
  %9066 = vmatmul.mubr.bf16.gmra.mrb[0].mxu0 %v656
  %v9067 = vpop.f32.mrb[0].mxu0
  %v9068 = vadd.f32 0.0, %v9067
  %v9069 = vpop.f32.mrb[0].mxu0
  %v9070 = vadd.f32 0.0, %v9069
  %v9071 = vpop.f32.mrb[0].mxu0
  %v9072 = vadd.f32 0.0, %v9071
  %v9073 = vpop.f32.mrb[0].mxu0
  %v9074 = vadd.f32 0.0, %v9073
  %9075 = vmatprep.mubr.bf16.mxu0 %v663
  %9076 = vmatmul.mubr.bf16.gmra.mrb[0].mxu0 %v662
  %v9077 = vpop.f32.mrb[0].mxu0
  %v9078 = vadd.f32 0.0, %v9077
  %v9079 = vpop.f32.mrb[0].mxu0
  %v9080 = vadd.f32 0.0, %v9079
  %v9081 = vpop.f32.mrb[0].mxu0
  %v9082 = vadd.f32 0.0, %v9081
  %v9083 = vpop.f32.mrb[0].mxu0
  %v9084 = vadd.f32 0.0, %v9083
  %9085 = vmatprep.mubr.bf16.mxu0 %v669
  %9086 = vmatmul.mubr.bf16.gmra.mrb[0].mxu0 %v668
  %v9087 = vpop.f32.mrb[0].mxu0
  %v9088 = vadd.f32 0.0, %v9087
  %v9089 = vpop.f32.mrb[0].mxu0
  %v9090 = vadd.f32 0.0, %v9089
  %v9091 = vpop.f32.mrb[0].mxu0
  %v9092 = vadd.f32 0.0, %v9091
  %v9093 = vpop.f32.mrb[0].mxu0
  %v9094 = vadd.f32 0.0, %v9093
  %9095 = vmatprep.mubr.bf16.mxu0 %v675
  %9096 = vmatmul.mubr.bf16.gmra.mrb[0].mxu0 %v674
  %v9097 = vpop.f32.mrb[0].mxu0
  %v9098 = vadd.f32 0.0, %v9097
  %v9099 = vpop.f32.mrb[0].mxu0
  %v9100 = vadd.f32 0.0, %v9099
  %v9101 = vpop.f32.mrb[0].mxu0
  %v9102 = vadd.f32 0.0, %v9101
  %v9103 = vpop.f32.mrb[0].mxu0
  %v9104 = vadd.f32 0.0, %v9103
  %9105 = vmatprep.mubr.bf16.mxu0 %v681
  %9106 = vmatmul.mubr.bf16.gmra.mrb[0].mxu0 %v680
  %v9107 = vpop.f32.mrb[0].mxu0
  %v9108 = vadd.f32 0.0, %v9107
  %v9109 = vpop.f32.mrb[0].mxu0
  %v9110 = vadd.f32 0.0, %v9109
  %v9111 = vpop.f32.mrb[0].mxu0
  %v9112 = vadd.f32 0.0, %v9111
  %v9113 = vpop.f32.mrb[0].mxu0
  %v9114 = vadd.f32 0.0, %v9113
  %9115 = vmatprep.mubr.bf16.mxu0 %v687
  %9116 = vmatmul.mubr.bf16.gmra.mrb[0].mxu0 %v686
  %v9117 = vpop.f32.mrb[0].mxu0
  %v9118 = vadd.f32 0.0, %v9117
  %v9119 = vpop.f32.mrb[0].mxu0
  %v9120 = vadd.f32 0.0, %v9119
  %v9121 = vpop.f32.mrb[0].mxu0
  %v9122 = vadd.f32 0.0, %v9121
  %v9123 = vpop.f32.mrb[0].mxu0
  %v9124 = vadd.f32 0.0, %v9123
  %9125 = vmatprep.mubr.bf16.mxu0 %v693
  %9126 = vmatmul.mubr.bf16.gmra.mrb[0].mxu0 %v692
  %v9127 = vpop.f32.mrb[0].mxu0
  %v9128 = vadd.f32 0.0, %v9127
  %v9129 = vpop.f32.mrb[0].mxu0
  %v9130 = vadd.f32 0.0, %v9129
  %v9131 = vpop.f32.mrb[0].mxu0
  %v9132 = vadd.f32 0.0, %v9131
  %v9133 = vpop.f32.mrb[0].mxu0
  %v9134 = vadd.f32 0.0, %v9133
  %9135 = vdwg.mxu0
  %9136 = vmatprep.subr.bf16.mxu0 %v8624
  %9137 = vmatpush1.bf16.msra.mxu0 %v8623
  %9138 = vmatprep.subr.bf16.mxu0 %v8628
  %9139 = vmatpush1.bf16.msra.mxu0 %v8627
  %9140 = vmatprep.subr.bf16.mxu0 %v8632
  %9141 = vmatpush1.bf16.msra.mxu0 %v8631
  %9142 = vmatprep.subr.bf16.mxu0 %v8636
  %9143 = vmatpush1.bf16.msra.mxu0 %v8635
  %9144 = vmatprep.subr.bf16.mxu0 %v8640
  %9145 = vmatpush1.bf16.msra.mxu0 %v8639
  %9146 = vmatprep.subr.bf16.mxu0 %v8644
  %9147 = vmatpush1.bf16.msra.mxu0 %v8643
  %9148 = vmatprep.subr.bf16.mxu0 %v8648
  %9149 = vmatpush1.bf16.msra.mxu0 %v8647
  %9150 = vmatprep.subr.bf16.mxu0 %v8652
  %9151 = vmatpush1.bf16.msra.mxu0 %v8651
  %9152 = vmatprep.subr.bf16.mxu0 %v8656
  %9153 = vmatpush1.bf16.msra.mxu0 %v8655
  %9154 = vmatprep.subr.bf16.mxu0 %v8660
  %9155 = vmatpush1.bf16.msra.mxu0 %v8659
  %9156 = vmatprep.subr.bf16.mxu0 %v8664
  %9157 = vmatpush1.bf16.msra.mxu0 %v8663
  %9158 = vmatprep.subr.bf16.mxu0 %v8668
  %9159 = vmatpush1.bf16.msra.mxu0 %v8667
  %9160 = vmatprep.subr.bf16.mxu0 %v8672
  %9161 = vmatpush1.bf16.msra.mxu0 %v8671
  %9162 = vmatprep.subr.bf16.mxu0 %v8676
  %9163 = vmatpush1.bf16.msra.mxu0 %v8675
  %9164 = vmatprep.subr.bf16.mxu0 %v8680
  %9165 = vmatpush1.bf16.msra.mxu0 %v8679
  %9166 = vmatprep.subr.bf16.mxu0 %v8684
  %9167 = vmatpush1.bf16.msra.mxu0 %v8683
  %9168 = vmatprep.mubr.bf16.mxu0 %v605
  %9169 = vmatmul.mubr.bf16.gmra.mrb[0].mxu0 %v604
  %v9170 = vpop.f32.mrb[0].mxu0
  %v9171 = vadd.f32 %v8978, %v9170
  %v9172 = vpop.f32.mrb[0].mxu0
  %v9173 = vadd.f32 %v8980, %v9172
  %v9174 = vpop.f32.mrb[0].mxu0
  %v9175 = vadd.f32 %v8982, %v9174
  %v9176 = vpop.f32.mrb[0].mxu0
  %v9177 = vadd.f32 %v8984, %v9176
  %9178 = vmatprep.mubr.bf16.mxu0 %v611
  %9179 = vmatmul.mubr.bf16.gmra.mrb[0].mxu0 %v610
  %v9180 = vpop.f32.mrb[0].mxu0
  %v9181 = vadd.f32 %v8988, %v9180
  %v9182 = vpop.f32.mrb[0].mxu0
  %v9183 = vadd.f32 %v8990, %v9182
  %v9184 = vpop.f32.mrb[0].mxu0
  %v9185 = vadd.f32 %v8992, %v9184
  %v9186 = vpop.f32.mrb[0].mxu0
  %v9187 = vadd.f32 %v8994, %v9186
  %9188 = vmatprep.mubr.bf16.mxu0 %v617
  %9189 = vmatmul.mubr.bf16.gmra.mrb[0].mxu0 %v616
  %v9190 = vpop.f32.mrb[0].mxu0
  %v9191 = vadd.f32 %v8998, %v9190
  %v9192 = vpop.f32.mrb[0].mxu0
  %v9193 = vadd.f32 %v9000, %v9192
  %v9194 = vpop.f32.mrb[0].mxu0
  %v9195 = vadd.f32 %v9002, %v9194
  %v9196 = vpop.f32.mrb[0].mxu0
  %v9197 = vadd.f32 %v9004, %v9196
  %9198 = vmatprep.mubr.bf16.mxu0 %v623
  %9199 = vmatmul.mubr.bf16.gmra.mrb[0].mxu0 %v622
  %v9200 = vpop.f32.mrb[0].mxu0
  %v9201 = vadd.f32 %v9008, %v9200
  %v9202 = vpop.f32.mrb[0].mxu0
  %v9203 = vadd.f32 %v9010, %v9202
  %v9204 = vpop.f32.mrb[0].mxu0
  %v9205 = vadd.f32 %v9012, %v9204
  %v9206 = vpop.f32.mrb[0].mxu0
  %v9207 = vadd.f32 %v9014, %v9206
  %9208 = vmatprep.mubr.bf16.mxu0 %v629
  %9209 = vmatmul.mubr.bf16.gmra.mrb[0].mxu0 %v628
  %v9210 = vpop.f32.mrb[0].mxu0
  %v9211 = vadd.f32 %v9018, %v9210
  %v9212 = vpop.f32.mrb[0].mxu0
  %v9213 = vadd.f32 %v9020, %v9212
  %v9214 = vpop.f32.mrb[0].mxu0
  %v9215 = vadd.f32 %v9022, %v9214
  %v9216 = vpop.f32.mrb[0].mxu0
  %v9217 = vadd.f32 %v9024, %v9216
  %9218 = vmatprep.mubr.bf16.mxu0 %v635
  %9219 = vmatmul.mubr.bf16.gmra.mrb[0].mxu0 %v634
  %v9220 = vpop.f32.mrb[0].mxu0
  %v9221 = vadd.f32 %v9028, %v9220
  %v9222 = vpop.f32.mrb[0].mxu0
  %v9223 = vadd.f32 %v9030, %v9222
  %v9224 = vpop.f32.mrb[0].mxu0
  %v9225 = vadd.f32 %v9032, %v9224
  %v9226 = vpop.f32.mrb[0].mxu0
  %v9227 = vadd.f32 %v9034, %v9226
  %9228 = vmatprep.mubr.bf16.mxu0 %v641
  %9229 = vmatmul.mubr.bf16.gmra.mrb[0].mxu0 %v640
  %v9230 = vpop.f32.mrb[0].mxu0
  %v9231 = vadd.f32 %v9038, %v9230
  %v9232 = vpop.f32.mrb[0].mxu0
  %v9233 = vadd.f32 %v9040, %v9232
  %v9234 = vpop.f32.mrb[0].mxu0
  %v9235 = vadd.f32 %v9042, %v9234
  %v9236 = vpop.f32.mrb[0].mxu0
  %v9237 = vadd.f32 %v9044, %v9236
  %9238 = vmatprep.mubr.bf16.mxu0 %v647
  %9239 = vmatmul.mubr.bf16.gmra.mrb[0].mxu0 %v646
  %v9240 = vpop.f32.mrb[0].mxu0
  %v9241 = vadd.f32 %v9048, %v9240
  %v9242 = vpop.f32.mrb[0].mxu0
  %v9243 = vadd.f32 %v9050, %v9242
  %v9244 = vpop.f32.mrb[0].mxu0
  %v9245 = vadd.f32 %v9052, %v9244
  %v9246 = vpop.f32.mrb[0].mxu0
  %v9247 = vadd.f32 %v9054, %v9246
  %9248 = vmatprep.mubr.bf16.mxu0 %v653
  %9249 = vmatmul.mubr.bf16.gmra.mrb[0].mxu0 %v652
  %v9250 = vpop.f32.mrb[0].mxu0
  %v9251 = vadd.f32 %v9058, %v9250
  %v9252 = vpop.f32.mrb[0].mxu0
  %v9253 = vadd.f32 %v9060, %v9252
  %v9254 = vpop.f32.mrb[0].mxu0
  %v9255 = vadd.f32 %v9062, %v9254
  %v9256 = vpop.f32.mrb[0].mxu0
  %v9257 = vadd.f32 %v9064, %v9256
  %9258 = vmatprep.mubr.bf16.mxu0 %v659
  %9259 = vmatmul.mubr.bf16.gmra.mrb[0].mxu0 %v658
  %v9260 = vpop.f32.mrb[0].mxu0
  %v9261 = vadd.f32 %v9068, %v9260
  %v9262 = vpop.f32.mrb[0].mxu0
  %v9263 = vadd.f32 %v9070, %v9262
  %v9264 = vpop.f32.mrb[0].mxu0
  %v9265 = vadd.f32 %v9072, %v9264
  %v9266 = vpop.f32.mrb[0].mxu0
  %v9267 = vadd.f32 %v9074, %v9266
  %9268 = vmatprep.mubr.bf16.mxu0 %v665
  %9269 = vmatmul.mubr.bf16.gmra.mrb[0].mxu0 %v664
  %v9270 = vpop.f32.mrb[0].mxu0
  %v9271 = vadd.f32 %v9078, %v9270
  %v9272 = vpop.f32.mrb[0].mxu0
  %v9273 = vadd.f32 %v9080, %v9272
  %v9274 = vpop.f32.mrb[0].mxu0
  %v9275 = vadd.f32 %v9082, %v9274
  %v9276 = vpop.f32.mrb[0].mxu0
  %v9277 = vadd.f32 %v9084, %v9276
  %9278 = vmatprep.mubr.bf16.mxu0 %v671
  %9279 = vmatmul.mubr.bf16.gmra.mrb[0].mxu0 %v670
  %v9280 = vpop.f32.mrb[0].mxu0
  %v9281 = vadd.f32 %v9088, %v9280
  %v9282 = vpop.f32.mrb[0].mxu0
  %v9283 = vadd.f32 %v9090, %v9282
  %v9284 = vpop.f32.mrb[0].mxu0
  %v9285 = vadd.f32 %v9092, %v9284
  %v9286 = vpop.f32.mrb[0].mxu0
  %v9287 = vadd.f32 %v9094, %v9286
  %9288 = vmatprep.mubr.bf16.mxu0 %v677
  %9289 = vmatmul.mubr.bf16.gmra.mrb[0].mxu0 %v676
  %v9290 = vpop.f32.mrb[0].mxu0
  %v9291 = vadd.f32 %v9098, %v9290
  %v9292 = vpop.f32.mrb[0].mxu0
  %v9293 = vadd.f32 %v9100, %v9292
  %v9294 = vpop.f32.mrb[0].mxu0
  %v9295 = vadd.f32 %v9102, %v9294
  %v9296 = vpop.f32.mrb[0].mxu0
  %v9297 = vadd.f32 %v9104, %v9296
  %9298 = vmatprep.mubr.bf16.mxu0 %v683
  %9299 = vmatmul.mubr.bf16.gmra.mrb[0].mxu0 %v682
  %v9300 = vpop.f32.mrb[0].mxu0
  %v9301 = vadd.f32 %v9108, %v9300
  %v9302 = vpop.f32.mrb[0].mxu0
  %v9303 = vadd.f32 %v9110, %v9302
  %v9304 = vpop.f32.mrb[0].mxu0
  %v9305 = vadd.f32 %v9112, %v9304
  %v9306 = vpop.f32.mrb[0].mxu0
  %v9307 = vadd.f32 %v9114, %v9306
  %9308 = vmatprep.mubr.bf16.mxu0 %v689
  %9309 = vmatmul.mubr.bf16.gmra.mrb[0].mxu0 %v688
  %v9310 = vpop.f32.mrb[0].mxu0
  %v9311 = vadd.f32 %v9118, %v9310
  %v9312 = vpop.f32.mrb[0].mxu0
  %v9313 = vadd.f32 %v9120, %v9312
  %v9314 = vpop.f32.mrb[0].mxu0
  %v9315 = vadd.f32 %v9122, %v9314
  %v9316 = vpop.f32.mrb[0].mxu0
  %v9317 = vadd.f32 %v9124, %v9316
  %9318 = vmatprep.mubr.bf16.mxu0 %v695
  %9319 = vmatmul.mubr.bf16.gmra.mrb[0].mxu0 %v694
  %v9320 = vpop.f32.mrb[0].mxu0
  %v9321 = vadd.f32 %v9128, %v9320
  %v9322 = vpop.f32.mrb[0].mxu0
  %v9323 = vadd.f32 %v9130, %v9322
  %v9324 = vpop.f32.mrb[0].mxu0
  %v9325 = vadd.f32 %v9132, %v9324
  %v9326 = vpop.f32.mrb[0].mxu0
  %v9327 = vadd.f32 %v9134, %v9326
  %9328 = vdwg.mxu0
  %9329 = vmatprep.subr.bf16.mxu0 %v8688
  %9330 = vmatpush1.bf16.msra.mxu0 %v8687
  %9331 = vmatprep.subr.bf16.mxu0 %v8692
  %9332 = vmatpush1.bf16.msra.mxu0 %v8691
  %9333 = vmatprep.subr.bf16.mxu0 %v8696
  %9334 = vmatpush1.bf16.msra.mxu0 %v8695
  %9335 = vmatprep.subr.bf16.mxu0 %v8700
  %9336 = vmatpush1.bf16.msra.mxu0 %v8699
  %9337 = vmatprep.subr.bf16.mxu0 %v8704
  %9338 = vmatpush1.bf16.msra.mxu0 %v8703
  %9339 = vmatprep.subr.bf16.mxu0 %v8708
  %9340 = vmatpush1.bf16.msra.mxu0 %v8707
  %9341 = vmatprep.subr.bf16.mxu0 %v8712
  %9342 = vmatpush1.bf16.msra.mxu0 %v8711
  %9343 = vmatprep.subr.bf16.mxu0 %v8716
  %9344 = vmatpush1.bf16.msra.mxu0 %v8715
  %9345 = vmatprep.subr.bf16.mxu0 %v8720
  %9346 = vmatpush1.bf16.msra.mxu0 %v8719
  %9347 = vmatprep.subr.bf16.mxu0 %v8724
  %9348 = vmatpush1.bf16.msra.mxu0 %v8723
  %9349 = vmatprep.subr.bf16.mxu0 %v8728
  %9350 = vmatpush1.bf16.msra.mxu0 %v8727
  %9351 = vmatprep.subr.bf16.mxu0 %v8732
  %9352 = vmatpush1.bf16.msra.mxu0 %v8731
  %9353 = vmatprep.subr.bf16.mxu0 %v8736
  %9354 = vmatpush1.bf16.msra.mxu0 %v8735
  %9355 = vmatprep.subr.bf16.mxu0 %v8740
  %9356 = vmatpush1.bf16.msra.mxu0 %v8739
  %9357 = vmatprep.subr.bf16.mxu0 %v8744
  %9358 = vmatpush1.bf16.msra.mxu0 %v8743
  %9359 = vmatprep.subr.bf16.mxu0 %v8748
  %9360 = vmatpush1.bf16.msra.mxu0 %v8747
  %9361 = vmatprep.mubr.bf16.mxu0 %v607
  %9362 = vmatmul.mubr.bf16.gmra.mrb[0].mxu0 %v606
  %v9363 = vpop.f32.mrb[0].mxu0
  %v9364 = vadd.f32 %v9171, %v9363
  %v9365 = vpop.f32.mrb[0].mxu0
  %v9366 = vadd.f32 %v9173, %v9365
  %v9367 = vpop.f32.mrb[0].mxu0
  %v9368 = vadd.f32 %v9175, %v9367
  %v9369 = vpop.f32.mrb[0].mxu0
  %v9370 = vadd.f32 %v9177, %v9369
  %9371 = vmatprep.mubr.bf16.mxu0 %v613
  %9372 = vmatmul.mubr.bf16.gmra.mrb[0].mxu0 %v612
  %v9373 = vpop.f32.mrb[0].mxu0
  %v9374 = vadd.f32 %v9181, %v9373
  %v9375 = vpop.f32.mrb[0].mxu0
  %v9376 = vadd.f32 %v9183, %v9375
  %v9377 = vpop.f32.mrb[0].mxu0
  %v9378 = vadd.f32 %v9185, %v9377
  %v9379 = vpop.f32.mrb[0].mxu0
  %v9380 = vadd.f32 %v9187, %v9379
  %9381 = vmatprep.mubr.bf16.mxu0 %v619
  %9382 = vmatmul.mubr.bf16.gmra.mrb[0].mxu0 %v618
  %v9383 = vpop.f32.mrb[0].mxu0
  %v9384 = vadd.f32 %v9191, %v9383
  %v9385 = vpop.f32.mrb[0].mxu0
  %v9386 = vadd.f32 %v9193, %v9385
  %v9387 = vpop.f32.mrb[0].mxu0
  %v9388 = vadd.f32 %v9195, %v9387
  %v9389 = vpop.f32.mrb[0].mxu0
  %v9390 = vadd.f32 %v9197, %v9389
  %9391 = vmatprep.mubr.bf16.mxu0 %v625
  %9392 = vmatmul.mubr.bf16.gmra.mrb[0].mxu0 %v624
  %v9393 = vpop.f32.mrb[0].mxu0
  %v9394 = vadd.f32 %v9201, %v9393
  %v9395 = vpop.f32.mrb[0].mxu0
  %v9396 = vadd.f32 %v9203, %v9395
  %v9397 = vpop.f32.mrb[0].mxu0
  %v9398 = vadd.f32 %v9205, %v9397
  %v9399 = vpop.f32.mrb[0].mxu0
  %v9400 = vadd.f32 %v9207, %v9399
  %9401 = vmatprep.mubr.bf16.mxu0 %v631
  %9402 = vmatmul.mubr.bf16.gmra.mrb[0].mxu0 %v630
  %v9403 = vpop.f32.mrb[0].mxu0
  %v9404 = vadd.f32 %v9211, %v9403
  %v9405 = vpop.f32.mrb[0].mxu0
  %v9406 = vadd.f32 %v9213, %v9405
  %v9407 = vpop.f32.mrb[0].mxu0
  %v9408 = vadd.f32 %v9215, %v9407
  %v9409 = vpop.f32.mrb[0].mxu0
  %v9410 = vadd.f32 %v9217, %v9409
  %9411 = vmatprep.mubr.bf16.mxu0 %v637
  %9412 = vmatmul.mubr.bf16.gmra.mrb[0].mxu0 %v636
  %v9413 = vpop.f32.mrb[0].mxu0
  %v9414 = vadd.f32 %v9221, %v9413
  %v9415 = vpop.f32.mrb[0].mxu0
  %v9416 = vadd.f32 %v9223, %v9415
  %v9417 = vpop.f32.mrb[0].mxu0
  %v9418 = vadd.f32 %v9225, %v9417
  %v9419 = vpop.f32.mrb[0].mxu0
  %v9420 = vadd.f32 %v9227, %v9419
  %9421 = vmatprep.mubr.bf16.mxu0 %v643
  %9422 = vmatmul.mubr.bf16.gmra.mrb[0].mxu0 %v642
  %v9423 = vpop.f32.mrb[0].mxu0
  %v9424 = vadd.f32 %v9231, %v9423
  %v9425 = vpop.f32.mrb[0].mxu0
  %v9426 = vadd.f32 %v9233, %v9425
  %v9427 = vpop.f32.mrb[0].mxu0
  %v9428 = vadd.f32 %v9235, %v9427
  %v9429 = vpop.f32.mrb[0].mxu0
  %v9430 = vadd.f32 %v9237, %v9429
  %9431 = vmatprep.mubr.bf16.mxu0 %v649
  %9432 = vmatmul.mubr.bf16.gmra.mrb[0].mxu0 %v648
  %v9433 = vpop.f32.mrb[0].mxu0
  %v9434 = vadd.f32 %v9241, %v9433
  %v9435 = vpop.f32.mrb[0].mxu0
  %v9436 = vadd.f32 %v9243, %v9435
  %v9437 = vpop.f32.mrb[0].mxu0
  %v9438 = vadd.f32 %v9245, %v9437
  %v9439 = vpop.f32.mrb[0].mxu0
  %v9440 = vadd.f32 %v9247, %v9439
  %9441 = vmatprep.mubr.bf16.mxu0 %v655
  %9442 = vmatmul.mubr.bf16.gmra.mrb[0].mxu0 %v654
  %v9443 = vpop.f32.mrb[0].mxu0
  %v9444 = vadd.f32 %v9251, %v9443
  %v9445 = vpop.f32.mrb[0].mxu0
  %v9446 = vadd.f32 %v9253, %v9445
  %v9447 = vpop.f32.mrb[0].mxu0
  %v9448 = vadd.f32 %v9255, %v9447
  %v9449 = vpop.f32.mrb[0].mxu0
  %v9450 = vadd.f32 %v9257, %v9449
  %9451 = vmatprep.mubr.bf16.mxu0 %v661
  %9452 = vmatmul.mubr.bf16.gmra.mrb[0].mxu0 %v660
  %v9453 = vpop.f32.mrb[0].mxu0
  %v9454 = vadd.f32 %v9261, %v9453
  %v9455 = vpop.f32.mrb[0].mxu0
  %v9456 = vadd.f32 %v9263, %v9455
  %v9457 = vpop.f32.mrb[0].mxu0
  %v9458 = vadd.f32 %v9265, %v9457
  %v9459 = vpop.f32.mrb[0].mxu0
  %v9460 = vadd.f32 %v9267, %v9459
  %9461 = vmatprep.mubr.bf16.mxu0 %v667
  %9462 = vmatmul.mubr.bf16.gmra.mrb[0].mxu0 %v666
  %v9463 = vpop.f32.mrb[0].mxu0
  %v9464 = vadd.f32 %v9271, %v9463
  %v9465 = vpop.f32.mrb[0].mxu0
  %v9466 = vadd.f32 %v9273, %v9465
  %v9467 = vpop.f32.mrb[0].mxu0
  %v9468 = vadd.f32 %v9275, %v9467
  %v9469 = vpop.f32.mrb[0].mxu0
  %v9470 = vadd.f32 %v9277, %v9469
  %9471 = vmatprep.mubr.bf16.mxu0 %v673
  %9472 = vmatmul.mubr.bf16.gmra.mrb[0].mxu0 %v672
  %v9473 = vpop.f32.mrb[0].mxu0
  %v9474 = vadd.f32 %v9281, %v9473
  %v9475 = vpop.f32.mrb[0].mxu0
  %v9476 = vadd.f32 %v9283, %v9475
  %v9477 = vpop.f32.mrb[0].mxu0
  %v9478 = vadd.f32 %v9285, %v9477
  %v9479 = vpop.f32.mrb[0].mxu0
  %v9480 = vadd.f32 %v9287, %v9479
  %9481 = vmatprep.mubr.bf16.mxu0 %v679
  %9482 = vmatmul.mubr.bf16.gmra.mrb[0].mxu0 %v678
  %v9483 = vpop.f32.mrb[0].mxu0
  %v9484 = vadd.f32 %v9291, %v9483
  %v9485 = vpop.f32.mrb[0].mxu0
  %v9486 = vadd.f32 %v9293, %v9485
  %v9487 = vpop.f32.mrb[0].mxu0
  %v9488 = vadd.f32 %v9295, %v9487
  %v9489 = vpop.f32.mrb[0].mxu0
  %v9490 = vadd.f32 %v9297, %v9489
  %9491 = vmatprep.mubr.bf16.mxu0 %v685
  %9492 = vmatmul.mubr.bf16.gmra.mrb[0].mxu0 %v684
  %v9493 = vpop.f32.mrb[0].mxu0
  %v9494 = vadd.f32 %v9301, %v9493
  %v9495 = vpop.f32.mrb[0].mxu0
  %v9496 = vadd.f32 %v9303, %v9495
  %v9497 = vpop.f32.mrb[0].mxu0
  %v9498 = vadd.f32 %v9305, %v9497
  %v9499 = vpop.f32.mrb[0].mxu0
  %v9500 = vadd.f32 %v9307, %v9499
  %9501 = vmatprep.mubr.bf16.mxu0 %v691
  %9502 = vmatmul.mubr.bf16.gmra.mrb[0].mxu0 %v690
  %v9503 = vpop.f32.mrb[0].mxu0
  %v9504 = vadd.f32 %v9311, %v9503
  %v9505 = vpop.f32.mrb[0].mxu0
  %v9506 = vadd.f32 %v9313, %v9505
  %v9507 = vpop.f32.mrb[0].mxu0
  %v9508 = vadd.f32 %v9315, %v9507
  %v9509 = vpop.f32.mrb[0].mxu0
  %v9510 = vadd.f32 %v9317, %v9509
  %9511 = vmatprep.mubr.bf16.mxu0 %v697
  %9512 = vmatmul.mubr.bf16.gmra.mrb[0].mxu0 %v696
  %v9513 = vpop.f32.mrb[0].mxu0
  %v9514 = vadd.f32 %v9321, %v9513
  %v9515 = vpop.f32.mrb[0].mxu0
  %v9516 = vadd.f32 %v9323, %v9515
  %v9517 = vpop.f32.mrb[0].mxu0
  %v9518 = vadd.f32 %v9325, %v9517
  %v9519 = vpop.f32.mrb[0].mxu0
  %v9520 = vadd.f32 %v9327, %v9519
  %9521 = vdwg.mxu0
  %9522 = vmatprep.subr.bf16.mxu0 %v8562
  %9523 = vmatpush1.bf16.msra.mxu0 %v8561
  %9524 = vmatprep.subr.bf16.mxu0 %v8566
  %9525 = vmatpush1.bf16.msra.mxu0 %v8565
  %9526 = vmatprep.subr.bf16.mxu0 %v8570
  %9527 = vmatpush1.bf16.msra.mxu0 %v8569
  %9528 = vmatprep.subr.bf16.mxu0 %v8574
  %9529 = vmatpush1.bf16.msra.mxu0 %v8573
  %9530 = vmatprep.subr.bf16.mxu0 %v8578
  %9531 = vmatpush1.bf16.msra.mxu0 %v8577
  %9532 = vmatprep.subr.bf16.mxu0 %v8582
  %9533 = vmatpush1.bf16.msra.mxu0 %v8581
  %9534 = vmatprep.subr.bf16.mxu0 %v8586
  %9535 = vmatpush1.bf16.msra.mxu0 %v8585
  %9536 = vmatprep.subr.bf16.mxu0 %v8590
  %9537 = vmatpush1.bf16.msra.mxu0 %v8589
  %9538 = vmatprep.subr.bf16.mxu0 %v8594
  %9539 = vmatpush1.bf16.msra.mxu0 %v8593
  %9540 = vmatprep.subr.bf16.mxu0 %v8598
  %9541 = vmatpush1.bf16.msra.mxu0 %v8597
  %9542 = vmatprep.subr.bf16.mxu0 %v8602
  %9543 = vmatpush1.bf16.msra.mxu0 %v8601
  %9544 = vmatprep.subr.bf16.mxu0 %v8606
  %9545 = vmatpush1.bf16.msra.mxu0 %v8605
  %9546 = vmatprep.subr.bf16.mxu0 %v8610
  %9547 = vmatpush1.bf16.msra.mxu0 %v8609
  %9548 = vmatprep.subr.bf16.mxu0 %v8614
  %9549 = vmatpush1.bf16.msra.mxu0 %v8613
  %9550 = vmatprep.subr.bf16.mxu0 %v8618
  %9551 = vmatpush1.bf16.msra.mxu0 %v8617
  %9552 = vmatprep.subr.bf16.mxu0 %v8622
  %9553 = vmatpush1.bf16.msra.mxu0 %v8621
  %9554 = vmatprep.mubr.bf16.mxu0 %v603
  %9555 = vmatmul.mubr.bf16.gmra.mrb[0].mxu0 %v602
  %v9556 = vpop.f32.mrb[0].mxu0
  %v9557 = vadd.f32 0.0, %v9556
  %v9558 = vpop.f32.mrb[0].mxu0
  %v9559 = vadd.f32 0.0, %v9558
  %v9560 = vpop.f32.mrb[0].mxu0
  %v9561 = vadd.f32 0.0, %v9560
  %v9562 = vpop.f32.mrb[0].mxu0
  %v9563 = vadd.f32 0.0, %v9562
  %9564 = vmatprep.mubr.bf16.mxu0 %v609
  %9565 = vmatmul.mubr.bf16.gmra.mrb[0].mxu0 %v608
  %v9566 = vpop.f32.mrb[0].mxu0
  %v9567 = vadd.f32 0.0, %v9566
  %v9568 = vpop.f32.mrb[0].mxu0
  %v9569 = vadd.f32 0.0, %v9568
  %v9570 = vpop.f32.mrb[0].mxu0
  %v9571 = vadd.f32 0.0, %v9570
  %v9572 = vpop.f32.mrb[0].mxu0
  %v9573 = vadd.f32 0.0, %v9572
  %9574 = vmatprep.mubr.bf16.mxu0 %v615
  %9575 = vmatmul.mubr.bf16.gmra.mrb[0].mxu0 %v614
  %v9576 = vpop.f32.mrb[0].mxu0
  %v9577 = vadd.f32 0.0, %v9576
  %v9578 = vpop.f32.mrb[0].mxu0
  %v9579 = vadd.f32 0.0, %v9578
  %v9580 = vpop.f32.mrb[0].mxu0
  %v9581 = vadd.f32 0.0, %v9580
  %v9582 = vpop.f32.mrb[0].mxu0
  %v9583 = vadd.f32 0.0, %v9582
  %9584 = vmatprep.mubr.bf16.mxu0 %v621
  %9585 = vmatmul.mubr.bf16.gmra.mrb[0].mxu0 %v620
  %v9586 = vpop.f32.mrb[0].mxu0
  %v9587 = vadd.f32 0.0, %v9586
  %v9588 = vpop.f32.mrb[0].mxu0
  %v9589 = vadd.f32 0.0, %v9588
  %v9590 = vpop.f32.mrb[0].mxu0
  %v9591 = vadd.f32 0.0, %v9590
  %v9592 = vpop.f32.mrb[0].mxu0
  %v9593 = vadd.f32 0.0, %v9592
  %9594 = vmatprep.mubr.bf16.mxu0 %v627
  %9595 = vmatmul.mubr.bf16.gmra.mrb[0].mxu0 %v626
  %v9596 = vpop.f32.mrb[0].mxu0
  %v9597 = vadd.f32 0.0, %v9596
  %v9598 = vpop.f32.mrb[0].mxu0
  %v9599 = vadd.f32 0.0, %v9598
  %v9600 = vpop.f32.mrb[0].mxu0
  %v9601 = vadd.f32 0.0, %v9600
  %v9602 = vpop.f32.mrb[0].mxu0
  %v9603 = vadd.f32 0.0, %v9602
  %9604 = vmatprep.mubr.bf16.mxu0 %v633
  %9605 = vmatmul.mubr.bf16.gmra.mrb[0].mxu0 %v632
  %v9606 = vpop.f32.mrb[0].mxu0
  %v9607 = vadd.f32 0.0, %v9606
  %v9608 = vpop.f32.mrb[0].mxu0
  %v9609 = vadd.f32 0.0, %v9608
  %v9610 = vpop.f32.mrb[0].mxu0
  %v9611 = vadd.f32 0.0, %v9610
  %v9612 = vpop.f32.mrb[0].mxu0
  %v9613 = vadd.f32 0.0, %v9612
  %9614 = vmatprep.mubr.bf16.mxu0 %v639
  %9615 = vmatmul.mubr.bf16.gmra.mrb[0].mxu0 %v638
  %v9616 = vpop.f32.mrb[0].mxu0
  %v9617 = vadd.f32 0.0, %v9616
  %v9618 = vpop.f32.mrb[0].mxu0
  %v9619 = vadd.f32 0.0, %v9618
  %v9620 = vpop.f32.mrb[0].mxu0
  %v9621 = vadd.f32 0.0, %v9620
  %v9622 = vpop.f32.mrb[0].mxu0
  %v9623 = vadd.f32 0.0, %v9622
  %9624 = vmatprep.mubr.bf16.mxu0 %v645
  %9625 = vmatmul.mubr.bf16.gmra.mrb[0].mxu0 %v644
  %v9626 = vpop.f32.mrb[0].mxu0
  %v9627 = vadd.f32 0.0, %v9626
  %v9628 = vpop.f32.mrb[0].mxu0
  %v9629 = vadd.f32 0.0, %v9628
  %v9630 = vpop.f32.mrb[0].mxu0
  %v9631 = vadd.f32 0.0, %v9630
  %v9632 = vpop.f32.mrb[0].mxu0
  %v9633 = vadd.f32 0.0, %v9632
  %9634 = vmatprep.mubr.bf16.mxu0 %v651
  %9635 = vmatmul.mubr.bf16.gmra.mrb[0].mxu0 %v650
  %v9636 = vpop.f32.mrb[0].mxu0
  %v9637 = vadd.f32 0.0, %v9636
  %v9638 = vpop.f32.mrb[0].mxu0
  %v9639 = vadd.f32 0.0, %v9638
  %v9640 = vpop.f32.mrb[0].mxu0
  %v9641 = vadd.f32 0.0, %v9640
  %v9642 = vpop.f32.mrb[0].mxu0
  %v9643 = vadd.f32 0.0, %v9642
  %9644 = vmatprep.mubr.bf16.mxu0 %v657
  %9645 = vmatmul.mubr.bf16.gmra.mrb[0].mxu0 %v656
  %v9646 = vpop.f32.mrb[0].mxu0
  %v9647 = vadd.f32 0.0, %v9646
  %v9648 = vpop.f32.mrb[0].mxu0
  %v9649 = vadd.f32 0.0, %v9648
  %v9650 = vpop.f32.mrb[0].mxu0
  %v9651 = vadd.f32 0.0, %v9650
  %v9652 = vpop.f32.mrb[0].mxu0
  %v9653 = vadd.f32 0.0, %v9652
  %9654 = vmatprep.mubr.bf16.mxu0 %v663
  %9655 = vmatmul.mubr.bf16.gmra.mrb[0].mxu0 %v662
  %v9656 = vpop.f32.mrb[0].mxu0
  %v9657 = vadd.f32 0.0, %v9656
  %v9658 = vpop.f32.mrb[0].mxu0
  %v9659 = vadd.f32 0.0, %v9658
  %v9660 = vpop.f32.mrb[0].mxu0
  %v9661 = vadd.f32 0.0, %v9660
  %v9662 = vpop.f32.mrb[0].mxu0
  %v9663 = vadd.f32 0.0, %v9662
  %9664 = vmatprep.mubr.bf16.mxu0 %v669
  %9665 = vmatmul.mubr.bf16.gmra.mrb[0].mxu0 %v668
  %v9666 = vpop.f32.mrb[0].mxu0
  %v9667 = vadd.f32 0.0, %v9666
  %v9668 = vpop.f32.mrb[0].mxu0
  %v9669 = vadd.f32 0.0, %v9668
  %v9670 = vpop.f32.mrb[0].mxu0
  %v9671 = vadd.f32 0.0, %v9670
  %v9672 = vpop.f32.mrb[0].mxu0
  %v9673 = vadd.f32 0.0, %v9672
  %9674 = vmatprep.mubr.bf16.mxu0 %v675
  %9675 = vmatmul.mubr.bf16.gmra.mrb[0].mxu0 %v674
  %v9676 = vpop.f32.mrb[0].mxu0
  %v9677 = vadd.f32 0.0, %v9676
  %v9678 = vpop.f32.mrb[0].mxu0
  %v9679 = vadd.f32 0.0, %v9678
  %v9680 = vpop.f32.mrb[0].mxu0
  %v9681 = vadd.f32 0.0, %v9680
  %v9682 = vpop.f32.mrb[0].mxu0
  %v9683 = vadd.f32 0.0, %v9682
  %9684 = vmatprep.mubr.bf16.mxu0 %v681
  %9685 = vmatmul.mubr.bf16.gmra.mrb[0].mxu0 %v680
  %v9686 = vpop.f32.mrb[0].mxu0
  %v9687 = vadd.f32 0.0, %v9686
  %v9688 = vpop.f32.mrb[0].mxu0
  %v9689 = vadd.f32 0.0, %v9688
  %v9690 = vpop.f32.mrb[0].mxu0
  %v9691 = vadd.f32 0.0, %v9690
  %v9692 = vpop.f32.mrb[0].mxu0
  %v9693 = vadd.f32 0.0, %v9692
  %9694 = vmatprep.mubr.bf16.mxu0 %v687
  %9695 = vmatmul.mubr.bf16.gmra.mrb[0].mxu0 %v686
  %v9696 = vpop.f32.mrb[0].mxu0
  %v9697 = vadd.f32 0.0, %v9696
  %v9698 = vpop.f32.mrb[0].mxu0
  %v9699 = vadd.f32 0.0, %v9698
  %v9700 = vpop.f32.mrb[0].mxu0
  %v9701 = vadd.f32 0.0, %v9700
  %v9702 = vpop.f32.mrb[0].mxu0
  %v9703 = vadd.f32 0.0, %v9702
  %9704 = vmatprep.mubr.bf16.mxu0 %v693
  %9705 = vmatmul.mubr.bf16.gmra.mrb[0].mxu0 %v692
  %v9706 = vpop.f32.mrb[0].mxu0
  %v9707 = vadd.f32 0.0, %v9706
  %v9708 = vpop.f32.mrb[0].mxu0
  %v9709 = vadd.f32 0.0, %v9708
  %v9710 = vpop.f32.mrb[0].mxu0
  %v9711 = vadd.f32 0.0, %v9710
  %v9712 = vpop.f32.mrb[0].mxu0
  %v9713 = vadd.f32 0.0, %v9712
  %9714 = vdwg.mxu0
  %9715 = vmatprep.subr.bf16.mxu0 %v8626
  %9716 = vmatpush1.bf16.msra.mxu0 %v8625
  %9717 = vmatprep.subr.bf16.mxu0 %v8630
  %9718 = vmatpush1.bf16.msra.mxu0 %v8629
  %9719 = vmatprep.subr.bf16.mxu0 %v8634
  %9720 = vmatpush1.bf16.msra.mxu0 %v8633
  %9721 = vmatprep.subr.bf16.mxu0 %v8638
  %9722 = vmatpush1.bf16.msra.mxu0 %v8637
  %9723 = vmatprep.subr.bf16.mxu0 %v8642
  %9724 = vmatpush1.bf16.msra.mxu0 %v8641
  %9725 = vmatprep.subr.bf16.mxu0 %v8646
  %9726 = vmatpush1.bf16.msra.mxu0 %v8645
  %9727 = vmatprep.subr.bf16.mxu0 %v8650
  %9728 = vmatpush1.bf16.msra.mxu0 %v8649
  %9729 = vmatprep.subr.bf16.mxu0 %v8654
  %9730 = vmatpush1.bf16.msra.mxu0 %v8653
  %9731 = vmatprep.subr.bf16.mxu0 %v8658
  %9732 = vmatpush1.bf16.msra.mxu0 %v8657
  %9733 = vmatprep.subr.bf16.mxu0 %v8662
  %9734 = vmatpush1.bf16.msra.mxu0 %v8661
  %9735 = vmatprep.subr.bf16.mxu0 %v8666
  %9736 = vmatpush1.bf16.msra.mxu0 %v8665
  %9737 = vmatprep.subr.bf16.mxu0 %v8670
  %9738 = vmatpush1.bf16.msra.mxu0 %v8669
  %9739 = vmatprep.subr.bf16.mxu0 %v8674
  %9740 = vmatpush1.bf16.msra.mxu0 %v8673
  %9741 = vmatprep.subr.bf16.mxu0 %v8678
  %9742 = vmatpush1.bf16.msra.mxu0 %v8677
  %9743 = vmatprep.subr.bf16.mxu0 %v8682
  %9744 = vmatpush1.bf16.msra.mxu0 %v8681
  %9745 = vmatprep.subr.bf16.mxu0 %v8686
  %9746 = vmatpush1.bf16.msra.mxu0 %v8685
  %9747 = vmatprep.mubr.bf16.mxu0 %v605
  %9748 = vmatmul.mubr.bf16.gmra.mrb[0].mxu0 %v604
  %v9749 = vpop.f32.mrb[0].mxu0
  %v9750 = vadd.f32 %v9557, %v9749
  %v9751 = vpop.f32.mrb[0].mxu0
  %v9752 = vadd.f32 %v9559, %v9751
  %v9753 = vpop.f32.mrb[0].mxu0
  %v9754 = vadd.f32 %v9561, %v9753
  %v9755 = vpop.f32.mrb[0].mxu0
  %v9756 = vadd.f32 %v9563, %v9755
  %9757 = vmatprep.mubr.bf16.mxu0 %v611
  %9758 = vmatmul.mubr.bf16.gmra.mrb[0].mxu0 %v610
  %v9759 = vpop.f32.mrb[0].mxu0
  %v9760 = vadd.f32 %v9567, %v9759
  %v9761 = vpop.f32.mrb[0].mxu0
  %v9762 = vadd.f32 %v9569, %v9761
  %v9763 = vpop.f32.mrb[0].mxu0
  %v9764 = vadd.f32 %v9571, %v9763
  %v9765 = vpop.f32.mrb[0].mxu0
  %v9766 = vadd.f32 %v9573, %v9765
  %9767 = vmatprep.mubr.bf16.mxu0 %v617
  %9768 = vmatmul.mubr.bf16.gmra.mrb[0].mxu0 %v616
  %v9769 = vpop.f32.mrb[0].mxu0
  %v9770 = vadd.f32 %v9577, %v9769
  %v9771 = vpop.f32.mrb[0].mxu0
  %v9772 = vadd.f32 %v9579, %v9771
  %v9773 = vpop.f32.mrb[0].mxu0
  %v9774 = vadd.f32 %v9581, %v9773
  %v9775 = vpop.f32.mrb[0].mxu0
  %v9776 = vadd.f32 %v9583, %v9775
  %9777 = vmatprep.mubr.bf16.mxu0 %v623
  %9778 = vmatmul.mubr.bf16.gmra.mrb[0].mxu0 %v622
  %v9779 = vpop.f32.mrb[0].mxu0
  %v9780 = vadd.f32 %v9587, %v9779
  %v9781 = vpop.f32.mrb[0].mxu0
  %v9782 = vadd.f32 %v9589, %v9781
  %v9783 = vpop.f32.mrb[0].mxu0
  %v9784 = vadd.f32 %v9591, %v9783
  %v9785 = vpop.f32.mrb[0].mxu0
  %v9786 = vadd.f32 %v9593, %v9785
  %9787 = vmatprep.mubr.bf16.mxu0 %v629
  %9788 = vmatmul.mubr.bf16.gmra.mrb[0].mxu0 %v628
  %v9789 = vpop.f32.mrb[0].mxu0
  %v9790 = vadd.f32 %v9597, %v9789
  %v9791 = vpop.f32.mrb[0].mxu0
  %v9792 = vadd.f32 %v9599, %v9791
  %v9793 = vpop.f32.mrb[0].mxu0
  %v9794 = vadd.f32 %v9601, %v9793
  %v9795 = vpop.f32.mrb[0].mxu0
  %v9796 = vadd.f32 %v9603, %v9795
  %9797 = vmatprep.mubr.bf16.mxu0 %v635
  %9798 = vmatmul.mubr.bf16.gmra.mrb[0].mxu0 %v634
  %v9799 = vpop.f32.mrb[0].mxu0
  %v9800 = vadd.f32 %v9607, %v9799
  %v9801 = vpop.f32.mrb[0].mxu0
  %v9802 = vadd.f32 %v9609, %v9801
  %v9803 = vpop.f32.mrb[0].mxu0
  %v9804 = vadd.f32 %v9611, %v9803
  %v9805 = vpop.f32.mrb[0].mxu0
  %v9806 = vadd.f32 %v9613, %v9805
  %9807 = vmatprep.mubr.bf16.mxu0 %v641
  %9808 = vmatmul.mubr.bf16.gmra.mrb[0].mxu0 %v640
  %v9809 = vpop.f32.mrb[0].mxu0
  %v9810 = vadd.f32 %v9617, %v9809
  %v9811 = vpop.f32.mrb[0].mxu0
  %v9812 = vadd.f32 %v9619, %v9811
  %v9813 = vpop.f32.mrb[0].mxu0
  %v9814 = vadd.f32 %v9621, %v9813
  %v9815 = vpop.f32.mrb[0].mxu0
  %v9816 = vadd.f32 %v9623, %v9815
  %9817 = vmatprep.mubr.bf16.mxu0 %v647
  %9818 = vmatmul.mubr.bf16.gmra.mrb[0].mxu0 %v646
  %v9819 = vpop.f32.mrb[0].mxu0
  %v9820 = vadd.f32 %v9627, %v9819
  %v9821 = vpop.f32.mrb[0].mxu0
  %v9822 = vadd.f32 %v9629, %v9821
  %v9823 = vpop.f32.mrb[0].mxu0
  %v9824 = vadd.f32 %v9631, %v9823
  %v9825 = vpop.f32.mrb[0].mxu0
  %v9826 = vadd.f32 %v9633, %v9825
  %9827 = vmatprep.mubr.bf16.mxu0 %v653
  %9828 = vmatmul.mubr.bf16.gmra.mrb[0].mxu0 %v652
  %v9829 = vpop.f32.mrb[0].mxu0
  %v9830 = vadd.f32 %v9637, %v9829
  %v9831 = vpop.f32.mrb[0].mxu0
  %v9832 = vadd.f32 %v9639, %v9831
  %v9833 = vpop.f32.mrb[0].mxu0
  %v9834 = vadd.f32 %v9641, %v9833
  %v9835 = vpop.f32.mrb[0].mxu0
  %v9836 = vadd.f32 %v9643, %v9835
  %9837 = vmatprep.mubr.bf16.mxu0 %v659
  %9838 = vmatmul.mubr.bf16.gmra.mrb[0].mxu0 %v658
  %v9839 = vpop.f32.mrb[0].mxu0
  %v9840 = vadd.f32 %v9647, %v9839
  %v9841 = vpop.f32.mrb[0].mxu0
  %v9842 = vadd.f32 %v9649, %v9841
  %v9843 = vpop.f32.mrb[0].mxu0
  %v9844 = vadd.f32 %v9651, %v9843
  %v9845 = vpop.f32.mrb[0].mxu0
  %v9846 = vadd.f32 %v9653, %v9845
  %9847 = vmatprep.mubr.bf16.mxu0 %v665
  %9848 = vmatmul.mubr.bf16.gmra.mrb[0].mxu0 %v664
  %v9849 = vpop.f32.mrb[0].mxu0
  %v9850 = vadd.f32 %v9657, %v9849
  %v9851 = vpop.f32.mrb[0].mxu0
  %v9852 = vadd.f32 %v9659, %v9851
  %v9853 = vpop.f32.mrb[0].mxu0
  %v9854 = vadd.f32 %v9661, %v9853
  %v9855 = vpop.f32.mrb[0].mxu0
  %v9856 = vadd.f32 %v9663, %v9855
  %9857 = vmatprep.mubr.bf16.mxu0 %v671
  %9858 = vmatmul.mubr.bf16.gmra.mrb[0].mxu0 %v670
  %v9859 = vpop.f32.mrb[0].mxu0
  %v9860 = vadd.f32 %v9667, %v9859
  %v9861 = vpop.f32.mrb[0].mxu0
  %v9862 = vadd.f32 %v9669, %v9861
  %v9863 = vpop.f32.mrb[0].mxu0
  %v9864 = vadd.f32 %v9671, %v9863
  %v9865 = vpop.f32.mrb[0].mxu0
  %v9866 = vadd.f32 %v9673, %v9865
  %9867 = vmatprep.mubr.bf16.mxu0 %v677
  %9868 = vmatmul.mubr.bf16.gmra.mrb[0].mxu0 %v676
  %v9869 = vpop.f32.mrb[0].mxu0
  %v9870 = vadd.f32 %v9677, %v9869
  %v9871 = vpop.f32.mrb[0].mxu0
  %v9872 = vadd.f32 %v9679, %v9871
  %v9873 = vpop.f32.mrb[0].mxu0
  %v9874 = vadd.f32 %v9681, %v9873
  %v9875 = vpop.f32.mrb[0].mxu0
  %v9876 = vadd.f32 %v9683, %v9875
  %9877 = vmatprep.mubr.bf16.mxu0 %v683
  %9878 = vmatmul.mubr.bf16.gmra.mrb[0].mxu0 %v682
  %v9879 = vpop.f32.mrb[0].mxu0
  %v9880 = vadd.f32 %v9687, %v9879
  %v9881 = vpop.f32.mrb[0].mxu0
  %v9882 = vadd.f32 %v9689, %v9881
  %v9883 = vpop.f32.mrb[0].mxu0
  %v9884 = vadd.f32 %v9691, %v9883
  %v9885 = vpop.f32.mrb[0].mxu0
  %v9886 = vadd.f32 %v9693, %v9885
  %9887 = vmatprep.mubr.bf16.mxu0 %v689
  %9888 = vmatmul.mubr.bf16.gmra.mrb[0].mxu0 %v688
  %v9889 = vpop.f32.mrb[0].mxu0
  %v9890 = vadd.f32 %v9697, %v9889
  %v9891 = vpop.f32.mrb[0].mxu0
  %v9892 = vadd.f32 %v9699, %v9891
  %v9893 = vpop.f32.mrb[0].mxu0
  %v9894 = vadd.f32 %v9701, %v9893
  %v9895 = vpop.f32.mrb[0].mxu0
  %v9896 = vadd.f32 %v9703, %v9895
  %9897 = vmatprep.mubr.bf16.mxu0 %v695
  %9898 = vmatmul.mubr.bf16.gmra.mrb[0].mxu0 %v694
  %v9899 = vpop.f32.mrb[0].mxu0
  %v9900 = vadd.f32 %v9707, %v9899
  %v9901 = vpop.f32.mrb[0].mxu0
  %v9902 = vadd.f32 %v9709, %v9901
  %v9903 = vpop.f32.mrb[0].mxu0
  %v9904 = vadd.f32 %v9711, %v9903
  %v9905 = vpop.f32.mrb[0].mxu0
  %v9906 = vadd.f32 %v9713, %v9905
  %9907 = vdwg.mxu0
  %9908 = vmatprep.subr.bf16.mxu0 %v8690
  %9909 = vmatpush1.bf16.msra.mxu0 %v8689
  %9910 = vmatprep.subr.bf16.mxu0 %v8694
  %9911 = vmatpush1.bf16.msra.mxu0 %v8693
  %9912 = vmatprep.subr.bf16.mxu0 %v8698
  %9913 = vmatpush1.bf16.msra.mxu0 %v8697
  %9914 = vmatprep.subr.bf16.mxu0 %v8702
  %9915 = vmatpush1.bf16.msra.mxu0 %v8701
  %9916 = vmatprep.subr.bf16.mxu0 %v8706
  %9917 = vmatpush1.bf16.msra.mxu0 %v8705
  %9918 = vmatprep.subr.bf16.mxu0 %v8710
  %9919 = vmatpush1.bf16.msra.mxu0 %v8709
  %9920 = vmatprep.subr.bf16.mxu0 %v8714
  %9921 = vmatpush1.bf16.msra.mxu0 %v8713
  %9922 = vmatprep.subr.bf16.mxu0 %v8718
  %9923 = vmatpush1.bf16.msra.mxu0 %v8717
  %9924 = vmatprep.subr.bf16.mxu0 %v8722
  %9925 = vmatpush1.bf16.msra.mxu0 %v8721
  %9926 = vmatprep.subr.bf16.mxu0 %v8726
  %9927 = vmatpush1.bf16.msra.mxu0 %v8725
  %9928 = vmatprep.subr.bf16.mxu0 %v8730
  %9929 = vmatpush1.bf16.msra.mxu0 %v8729
  %9930 = vmatprep.subr.bf16.mxu0 %v8734
  %9931 = vmatpush1.bf16.msra.mxu0 %v8733
  %9932 = vmatprep.subr.bf16.mxu0 %v8738
  %9933 = vmatpush1.bf16.msra.mxu0 %v8737
  %9934 = vmatprep.subr.bf16.mxu0 %v8742
  %9935 = vmatpush1.bf16.msra.mxu0 %v8741
  %9936 = vmatprep.subr.bf16.mxu0 %v8746
  %9937 = vmatpush1.bf16.msra.mxu0 %v8745
  %9938 = vmatprep.subr.bf16.mxu0 %v8750
  %9939 = vmatpush1.bf16.msra.mxu0 %v8749
  %9940 = vmatprep.mubr.bf16.mxu0 %v607
  %9941 = vmatmul.mubr.bf16.gmra.mrb[0].mxu0 %v606
  %v9942 = vpop.f32.mrb[0].mxu0
  %v9943 = vadd.f32 %v9750, %v9942
  %v9944 = vpop.f32.mrb[0].mxu0
  %v9945 = vadd.f32 %v9752, %v9944
  %v9946 = vpop.f32.mrb[0].mxu0
  %v9947 = vadd.f32 %v9754, %v9946
  %v9948 = vpop.f32.mrb[0].mxu0
  %v9949 = vadd.f32 %v9756, %v9948
  %9950 = vmatprep.mubr.bf16.mxu0 %v613
  %9951 = vmatmul.mubr.bf16.gmra.mrb[0].mxu0 %v612
  %v9952 = vpop.f32.mrb[0].mxu0
  %v9953 = vadd.f32 %v9760, %v9952
  %v9954 = vpop.f32.mrb[0].mxu0
  %v9955 = vadd.f32 %v9762, %v9954
  %v9956 = vpop.f32.mrb[0].mxu0
  %v9957 = vadd.f32 %v9764, %v9956
  %v9958 = vpop.f32.mrb[0].mxu0
  %v9959 = vadd.f32 %v9766, %v9958
  %9960 = vmatprep.mubr.bf16.mxu0 %v619
  %9961 = vmatmul.mubr.bf16.gmra.mrb[0].mxu0 %v618
  %v9962 = vpop.f32.mrb[0].mxu0
  %v9963 = vadd.f32 %v9770, %v9962
  %v9964 = vpop.f32.mrb[0].mxu0
  %v9965 = vadd.f32 %v9772, %v9964
  %v9966 = vpop.f32.mrb[0].mxu0
  %v9967 = vadd.f32 %v9774, %v9966
  %v9968 = vpop.f32.mrb[0].mxu0
  %v9969 = vadd.f32 %v9776, %v9968
  %9970 = vmatprep.mubr.bf16.mxu0 %v625
  %9971 = vmatmul.mubr.bf16.gmra.mrb[0].mxu0 %v624
  %v9972 = vpop.f32.mrb[0].mxu0
  %v9973 = vadd.f32 %v9780, %v9972
  %v9974 = vpop.f32.mrb[0].mxu0
  %v9975 = vadd.f32 %v9782, %v9974
  %v9976 = vpop.f32.mrb[0].mxu0
  %v9977 = vadd.f32 %v9784, %v9976
  %v9978 = vpop.f32.mrb[0].mxu0
  %v9979 = vadd.f32 %v9786, %v9978
  %9980 = vmatprep.mubr.bf16.mxu0 %v631
  %9981 = vmatmul.mubr.bf16.gmra.mrb[0].mxu0 %v630
  %v9982 = vpop.f32.mrb[0].mxu0
  %v9983 = vadd.f32 %v9790, %v9982
  %v9984 = vpop.f32.mrb[0].mxu0
  %v9985 = vadd.f32 %v9792, %v9984
  %v9986 = vpop.f32.mrb[0].mxu0
  %v9987 = vadd.f32 %v9794, %v9986
  %v9988 = vpop.f32.mrb[0].mxu0
  %v9989 = vadd.f32 %v9796, %v9988
  %9990 = vmatprep.mubr.bf16.mxu0 %v637
  %9991 = vmatmul.mubr.bf16.gmra.mrb[0].mxu0 %v636
  %v9992 = vpop.f32.mrb[0].mxu0
  %v9993 = vadd.f32 %v9800, %v9992
  %v9994 = vpop.f32.mrb[0].mxu0
  %v9995 = vadd.f32 %v9802, %v9994
  %v9996 = vpop.f32.mrb[0].mxu0
  %v9997 = vadd.f32 %v9804, %v9996
  %v9998 = vpop.f32.mrb[0].mxu0
  %v9999 = vadd.f32 %v9806, %v9998
  %10000 = vmatprep.mubr.bf16.mxu0 %v643
  %10001 = vmatmul.mubr.bf16.gmra.mrb[0].mxu0 %v642
  %v10002 = vpop.f32.mrb[0].mxu0
  %v10003 = vadd.f32 %v9810, %v10002
  %v10004 = vpop.f32.mrb[0].mxu0
  %v10005 = vadd.f32 %v9812, %v10004
  %v10006 = vpop.f32.mrb[0].mxu0
  %v10007 = vadd.f32 %v9814, %v10006
  %v10008 = vpop.f32.mrb[0].mxu0
  %v10009 = vadd.f32 %v9816, %v10008
  %10010 = vmatprep.mubr.bf16.mxu0 %v649
  %10011 = vmatmul.mubr.bf16.gmra.mrb[0].mxu0 %v648
  %v10012 = vpop.f32.mrb[0].mxu0
  %v10013 = vadd.f32 %v9820, %v10012
  %v10014 = vpop.f32.mrb[0].mxu0
  %v10015 = vadd.f32 %v9822, %v10014
  %v10016 = vpop.f32.mrb[0].mxu0
  %v10017 = vadd.f32 %v9824, %v10016
  %v10018 = vpop.f32.mrb[0].mxu0
  %v10019 = vadd.f32 %v9826, %v10018
  %10020 = vmatprep.mubr.bf16.mxu0 %v655
  %10021 = vmatmul.mubr.bf16.gmra.mrb[0].mxu0 %v654
  %v10022 = vpop.f32.mrb[0].mxu0
  %v10023 = vadd.f32 %v9830, %v10022
  %v10024 = vpop.f32.mrb[0].mxu0
  %v10025 = vadd.f32 %v9832, %v10024
  %v10026 = vpop.f32.mrb[0].mxu0
  %v10027 = vadd.f32 %v9834, %v10026
  %v10028 = vpop.f32.mrb[0].mxu0
  %v10029 = vadd.f32 %v9836, %v10028
  %10030 = vmatprep.mubr.bf16.mxu0 %v661
  %10031 = vmatmul.mubr.bf16.gmra.mrb[0].mxu0 %v660
  %v10032 = vpop.f32.mrb[0].mxu0
  %v10033 = vadd.f32 %v9840, %v10032
  %v10034 = vpop.f32.mrb[0].mxu0
  %v10035 = vadd.f32 %v9842, %v10034
  %v10036 = vpop.f32.mrb[0].mxu0
  %v10037 = vadd.f32 %v9844, %v10036
  %v10038 = vpop.f32.mrb[0].mxu0
  %v10039 = vadd.f32 %v9846, %v10038
  %10040 = vmatprep.mubr.bf16.mxu0 %v667
  %10041 = vmatmul.mubr.bf16.gmra.mrb[0].mxu0 %v666
  %v10042 = vpop.f32.mrb[0].mxu0
  %v10043 = vadd.f32 %v9850, %v10042
  %v10044 = vpop.f32.mrb[0].mxu0
  %v10045 = vadd.f32 %v9852, %v10044
  %v10046 = vpop.f32.mrb[0].mxu0
  %v10047 = vadd.f32 %v9854, %v10046
  %v10048 = vpop.f32.mrb[0].mxu0
  %v10049 = vadd.f32 %v9856, %v10048
  %10050 = vmatprep.mubr.bf16.mxu0 %v673
  %10051 = vmatmul.mubr.bf16.gmra.mrb[0].mxu0 %v672
  %v10052 = vpop.f32.mrb[0].mxu0
  %v10053 = vadd.f32 %v9860, %v10052
  %v10054 = vpop.f32.mrb[0].mxu0
  %v10055 = vadd.f32 %v9862, %v10054
  %v10056 = vpop.f32.mrb[0].mxu0
  %v10057 = vadd.f32 %v9864, %v10056
  %v10058 = vpop.f32.mrb[0].mxu0
  %v10059 = vadd.f32 %v9866, %v10058
  %10060 = vmatprep.mubr.bf16.mxu0 %v679
  %10061 = vmatmul.mubr.bf16.gmra.mrb[0].mxu0 %v678
  %v10062 = vpop.f32.mrb[0].mxu0
  %v10063 = vadd.f32 %v9870, %v10062
  %v10064 = vpop.f32.mrb[0].mxu0
  %v10065 = vadd.f32 %v9872, %v10064
  %v10066 = vpop.f32.mrb[0].mxu0
  %v10067 = vadd.f32 %v9874, %v10066
  %v10068 = vpop.f32.mrb[0].mxu0
  %v10069 = vadd.f32 %v9876, %v10068
  %10070 = vmatprep.mubr.bf16.mxu0 %v685
  %10071 = vmatmul.mubr.bf16.gmra.mrb[0].mxu0 %v684
  %v10072 = vpop.f32.mrb[0].mxu0
  %v10073 = vadd.f32 %v9880, %v10072
  %v10074 = vpop.f32.mrb[0].mxu0
  %v10075 = vadd.f32 %v9882, %v10074
  %v10076 = vpop.f32.mrb[0].mxu0
  %v10077 = vadd.f32 %v9884, %v10076
  %v10078 = vpop.f32.mrb[0].mxu0
  %v10079 = vadd.f32 %v9886, %v10078
  %10080 = vmatprep.mubr.bf16.mxu0 %v691
  %10081 = vmatmul.mubr.bf16.gmra.mrb[0].mxu0 %v690
  %v10082 = vpop.f32.mrb[0].mxu0
  %v10083 = vadd.f32 %v9890, %v10082
  %v10084 = vpop.f32.mrb[0].mxu0
  %v10085 = vadd.f32 %v9892, %v10084
  %v10086 = vpop.f32.mrb[0].mxu0
  %v10087 = vadd.f32 %v9894, %v10086
  %v10088 = vpop.f32.mrb[0].mxu0
  %v10089 = vadd.f32 %v9896, %v10088
  %10090 = vmatprep.mubr.bf16.mxu0 %v697
  %10091 = vmatmul.mubr.bf16.gmra.mrb[0].mxu0 %v696
  %v10092 = vpop.f32.mrb[0].mxu0
  %v10093 = vadd.f32 %v9900, %v10092
  %v10094 = vpop.f32.mrb[0].mxu0
  %v10095 = vadd.f32 %v9902, %v10094
  %v10096 = vpop.f32.mrb[0].mxu0
  %v10097 = vadd.f32 %v9904, %v10096
  %v10098 = vpop.f32.mrb[0].mxu0
  %v10099 = vadd.f32 %v9906, %v10098
  %10100 = vdwg.mxu0
  %v10101 = vmax.f32 %v7662, %v9364
  %v10102 = vmax.f32 %v7663, %v9366
  %v10103 = vmax.f32 %v7664, %v9943
  %v10104 = vmax.f32 %v7665, %v9945
  %v10105 = vmax.f32 %v7666, %v9368
  %v10106 = vmax.f32 %v7667, %v9370
  %v10107 = vmax.f32 %v7668, %v9947
  %v10108 = vmax.f32 %v7669, %v9949
  %v10109 = vmax.f32 %v7670, %v9374
  %v10110 = vmax.f32 %v7671, %v9376
  %v10111 = vmax.f32 %v7672, %v9953
  %v10112 = vmax.f32 %v7673, %v9955
  %v10113 = vmax.f32 %v7674, %v9378
  %v10114 = vmax.f32 %v7675, %v9380
  %v10115 = vmax.f32 %v7676, %v9957
  %v10116 = vmax.f32 %v7677, %v9959
  %v10117 = vmax.f32 %v7678, %v9384
  %v10118 = vmax.f32 %v7679, %v9386
  %v10119 = vmax.f32 %v7680, %v9963
  %v10120 = vmax.f32 %v7681, %v9965
  %v10121 = vmax.f32 %v7682, %v9388
  %v10122 = vmax.f32 %v7683, %v9390
  %v10123 = vmax.f32 %v7684, %v9967
  %v10124 = vmax.f32 %v7685, %v9969
  %v10125 = vmax.f32 %v7686, %v9394
  %v10126 = vmax.f32 %v7687, %v9396
  %v10127 = vmax.f32 %v7688, %v9973
  %v10128 = vmax.f32 %v7689, %v9975
  %v10129 = vmax.f32 %v7690, %v9398
  %v10130 = vmax.f32 %v7691, %v9400
  %v10131 = vmax.f32 %v7692, %v9977
  %v10132 = vmax.f32 %v7693, %v9979
  %v10133 = vmax.f32 %v7694, %v9404
  %v10134 = vmax.f32 %v7695, %v9406
  %v10135 = vmax.f32 %v7696, %v9983
  %v10136 = vmax.f32 %v7697, %v9985
  %v10137 = vmax.f32 %v7698, %v9408
  %v10138 = vmax.f32 %v7699, %v9410
  %v10139 = vmax.f32 %v7700, %v9987
  %v10140 = vmax.f32 %v7701, %v9989
  %v10141 = vmax.f32 %v7702, %v9414
  %v10142 = vmax.f32 %v7703, %v9416
  %v10143 = vmax.f32 %v7704, %v9993
  %v10144 = vmax.f32 %v7705, %v9995
  %v10145 = vmax.f32 %v7706, %v9418
  %v10146 = vmax.f32 %v7707, %v9420
  %v10147 = vmax.f32 %v7708, %v9997
  %v10148 = vmax.f32 %v7709, %v9999
  %v10149 = vmax.f32 %v7710, %v9424
  %v10150 = vmax.f32 %v7711, %v9426
  %v10151 = vmax.f32 %v7712, %v10003
  %v10152 = vmax.f32 %v7713, %v10005
  %v10153 = vmax.f32 %v7714, %v9428
  %v10154 = vmax.f32 %v7715, %v9430
  %v10155 = vmax.f32 %v7716, %v10007
  %v10156 = vmax.f32 %v7717, %v10009
  %v10157 = vmax.f32 %v7718, %v9434
  %v10158 = vmax.f32 %v7719, %v9436
  %v10159 = vmax.f32 %v7720, %v10013
  %v10160 = vmax.f32 %v7721, %v10015
  %v10161 = vmax.f32 %v7722, %v9438
  %v10162 = vmax.f32 %v7723, %v9440
  %v10163 = vmax.f32 %v7724, %v10017
  %v10164 = vmax.f32 %v7725, %v10019
  %v10165 = vmax.f32 %v7726, %v9444
  %v10166 = vmax.f32 %v7727, %v9446
  %v10167 = vmax.f32 %v7728, %v10023
  %v10168 = vmax.f32 %v7729, %v10025
  %v10169 = vmax.f32 %v7730, %v9448
  %v10170 = vmax.f32 %v7731, %v9450
  %v10171 = vmax.f32 %v7732, %v10027
  %v10172 = vmax.f32 %v7733, %v10029
  %v10173 = vmax.f32 %v7734, %v9454
  %v10174 = vmax.f32 %v7735, %v9456
  %v10175 = vmax.f32 %v7736, %v10033
  %v10176 = vmax.f32 %v7737, %v10035
  %v10177 = vmax.f32 %v7738, %v9458
  %v10178 = vmax.f32 %v7739, %v9460
  %v10179 = vmax.f32 %v7740, %v10037
  %v10180 = vmax.f32 %v7741, %v10039
  %v10181 = vmax.f32 %v7742, %v9464
  %v10182 = vmax.f32 %v7743, %v9466
  %v10183 = vmax.f32 %v7744, %v10043
  %v10184 = vmax.f32 %v7745, %v10045
  %v10185 = vmax.f32 %v7746, %v9468
  %v10186 = vmax.f32 %v7747, %v9470
  %v10187 = vmax.f32 %v7748, %v10047
  %v10188 = vmax.f32 %v7749, %v10049
  %v10189 = vmax.f32 %v7750, %v9474
  %v10190 = vmax.f32 %v7751, %v9476
  %v10191 = vmax.f32 %v7752, %v10053
  %v10192 = vmax.f32 %v7753, %v10055
  %v10193 = vmax.f32 %v7754, %v9478
  %v10194 = vmax.f32 %v7755, %v9480
  %v10195 = vmax.f32 %v7756, %v10057
  %v10196 = vmax.f32 %v7757, %v10059
  %v10197 = vmax.f32 %v7758, %v9484
  %v10198 = vmax.f32 %v7759, %v9486
  %v10199 = vmax.f32 %v7760, %v10063
  %v10200 = vmax.f32 %v7761, %v10065
  %v10201 = vmax.f32 %v7762, %v9488
  %v10202 = vmax.f32 %v7763, %v9490
  %v10203 = vmax.f32 %v7764, %v10067
  %v10204 = vmax.f32 %v7765, %v10069
  %v10205 = vmax.f32 %v7766, %v9494
  %v10206 = vmax.f32 %v7767, %v9496
  %v10207 = vmax.f32 %v7768, %v10073
  %v10208 = vmax.f32 %v7769, %v10075
  %v10209 = vmax.f32 %v7770, %v9498
  %v10210 = vmax.f32 %v7771, %v9500
  %v10211 = vmax.f32 %v7772, %v10077
  %v10212 = vmax.f32 %v7773, %v10079
  %v10213 = vmax.f32 %v7774, %v9504
  %v10214 = vmax.f32 %v7775, %v9506
  %v10215 = vmax.f32 %v7776, %v10083
  %v10216 = vmax.f32 %v7777, %v10085
  %v10217 = vmax.f32 %v7778, %v9508
  %v10218 = vmax.f32 %v7779, %v9510
  %v10219 = vmax.f32 %v7780, %v10087
  %v10220 = vmax.f32 %v7781, %v10089
  %v10221 = vmax.f32 %v7782, %v9514
  %v10222 = vmax.f32 %v7783, %v9516
  %v10223 = vmax.f32 %v7784, %v10093
  %v10224 = vmax.f32 %v7785, %v10095
  %v10225 = vmax.f32 %v7786, %v9518
  %v10226 = vmax.f32 %v7787, %v9520
  %v10227 = vmax.f32 %v7788, %v10097
  %v10228 = vmax.f32 %v7789, %v10099
  %v10229 = vld [vmem:[%s2] sm:$0xf]
  %v10231 = vlaneseq
  %v10232 = vshrl.u32 %v10231, 7
  %v10233 = vsub.s32 0, %v10232
  %v10234 = vrot.slane %v10229, %v10233
  %v10235 = vlaneseq
  %v10236 = vshrl.u32 %v10235, 7
  %v10237 = vsub.s32 1, %v10236
  %v10238 = vrot.slane %v10229, %v10237
  %v10239 = vlaneseq
  %v10240 = vshrl.u32 %v10239, 7
  %v10241 = vsub.s32 2, %v10240
  %v10242 = vrot.slane %v10229, %v10241
  %v10243 = vlaneseq
  %v10244 = vshrl.u32 %v10243, 7
  %v10245 = vsub.s32 3, %v10244
  %v10246 = vrot.slane %v10229, %v10245
  %v10251 = vadd.f32 %v10101, %v10234
  %v10252 = vadd.f32 %v10102, %v10238
  %v10253 = vadd.f32 %v10103, %v10242
  %v10254 = vadd.f32 %v10104, %v10246
  %v10255 = vadd.f32 %v10105, %v10234
  %v10256 = vadd.f32 %v10106, %v10238
  %v10257 = vadd.f32 %v10107, %v10242
  %v10258 = vadd.f32 %v10108, %v10246
  %v10259 = vadd.f32 %v10109, %v10234
  %v10260 = vadd.f32 %v10110, %v10238
  %v10261 = vadd.f32 %v10111, %v10242
  %v10262 = vadd.f32 %v10112, %v10246
  %v10263 = vadd.f32 %v10113, %v10234
  %v10264 = vadd.f32 %v10114, %v10238
  %v10265 = vadd.f32 %v10115, %v10242
  %v10266 = vadd.f32 %v10116, %v10246
  %v10267 = vadd.f32 %v10117, %v10234
  %v10268 = vadd.f32 %v10118, %v10238
  %v10269 = vadd.f32 %v10119, %v10242
  %v10270 = vadd.f32 %v10120, %v10246
  %v10271 = vadd.f32 %v10121, %v10234
  %v10272 = vadd.f32 %v10122, %v10238
  %v10273 = vadd.f32 %v10123, %v10242
  %v10274 = vadd.f32 %v10124, %v10246
  %v10275 = vadd.f32 %v10125, %v10234
  %v10276 = vadd.f32 %v10126, %v10238
  %v10277 = vadd.f32 %v10127, %v10242
  %v10278 = vadd.f32 %v10128, %v10246
  %v10279 = vadd.f32 %v10129, %v10234
  %v10280 = vadd.f32 %v10130, %v10238
  %v10281 = vadd.f32 %v10131, %v10242
  %v10282 = vadd.f32 %v10132, %v10246
  %v10283 = vadd.f32 %v10133, %v10234
  %v10284 = vadd.f32 %v10134, %v10238
  %v10285 = vadd.f32 %v10135, %v10242
  %v10286 = vadd.f32 %v10136, %v10246
  %v10287 = vadd.f32 %v10137, %v10234
  %v10288 = vadd.f32 %v10138, %v10238
  %v10289 = vadd.f32 %v10139, %v10242
  %v10290 = vadd.f32 %v10140, %v10246
  %v10291 = vadd.f32 %v10141, %v10234
  %v10292 = vadd.f32 %v10142, %v10238
  %v10293 = vadd.f32 %v10143, %v10242
  %v10294 = vadd.f32 %v10144, %v10246
  %v10295 = vadd.f32 %v10145, %v10234
  %v10296 = vadd.f32 %v10146, %v10238
  %v10297 = vadd.f32 %v10147, %v10242
  %v10298 = vadd.f32 %v10148, %v10246
  %v10299 = vadd.f32 %v10149, %v10234
  %v10300 = vadd.f32 %v10150, %v10238
  %v10301 = vadd.f32 %v10151, %v10242
  %v10302 = vadd.f32 %v10152, %v10246
  %v10303 = vadd.f32 %v10153, %v10234
  %v10304 = vadd.f32 %v10154, %v10238
  %v10305 = vadd.f32 %v10155, %v10242
  %v10306 = vadd.f32 %v10156, %v10246
  %v10307 = vadd.f32 %v10157, %v10234
  %v10308 = vadd.f32 %v10158, %v10238
  %v10309 = vadd.f32 %v10159, %v10242
  %v10310 = vadd.f32 %v10160, %v10246
  %v10311 = vadd.f32 %v10161, %v10234
  %v10312 = vadd.f32 %v10162, %v10238
  %v10313 = vadd.f32 %v10163, %v10242
  %v10314 = vadd.f32 %v10164, %v10246
  %v10315 = vadd.f32 %v10165, %v10234
  %v10316 = vadd.f32 %v10166, %v10238
  %v10317 = vadd.f32 %v10167, %v10242
  %v10318 = vadd.f32 %v10168, %v10246
  %v10319 = vadd.f32 %v10169, %v10234
  %v10320 = vadd.f32 %v10170, %v10238
  %v10321 = vadd.f32 %v10171, %v10242
  %v10322 = vadd.f32 %v10172, %v10246
  %v10323 = vadd.f32 %v10173, %v10234
  %v10324 = vadd.f32 %v10174, %v10238
  %v10325 = vadd.f32 %v10175, %v10242
  %v10326 = vadd.f32 %v10176, %v10246
  %v10327 = vadd.f32 %v10177, %v10234
  %v10328 = vadd.f32 %v10178, %v10238
  %v10329 = vadd.f32 %v10179, %v10242
  %v10330 = vadd.f32 %v10180, %v10246
  %v10331 = vadd.f32 %v10181, %v10234
  %v10332 = vadd.f32 %v10182, %v10238
  %v10333 = vadd.f32 %v10183, %v10242
  %v10334 = vadd.f32 %v10184, %v10246
  %v10335 = vadd.f32 %v10185, %v10234
  %v10336 = vadd.f32 %v10186, %v10238
  %v10337 = vadd.f32 %v10187, %v10242
  %v10338 = vadd.f32 %v10188, %v10246
  %v10339 = vadd.f32 %v10189, %v10234
  %v10340 = vadd.f32 %v10190, %v10238
  %v10341 = vadd.f32 %v10191, %v10242
  %v10342 = vadd.f32 %v10192, %v10246
  %v10343 = vadd.f32 %v10193, %v10234
  %v10344 = vadd.f32 %v10194, %v10238
  %v10345 = vadd.f32 %v10195, %v10242
  %v10346 = vadd.f32 %v10196, %v10246
  %v10347 = vadd.f32 %v10197, %v10234
  %v10348 = vadd.f32 %v10198, %v10238
  %v10349 = vadd.f32 %v10199, %v10242
  %v10350 = vadd.f32 %v10200, %v10246
  %v10351 = vadd.f32 %v10201, %v10234
  %v10352 = vadd.f32 %v10202, %v10238
  %v10353 = vadd.f32 %v10203, %v10242
  %v10354 = vadd.f32 %v10204, %v10246
  %v10355 = vadd.f32 %v10205, %v10234
  %v10356 = vadd.f32 %v10206, %v10238
  %v10357 = vadd.f32 %v10207, %v10242
  %v10358 = vadd.f32 %v10208, %v10246
  %v10359 = vadd.f32 %v10209, %v10234
  %v10360 = vadd.f32 %v10210, %v10238
  %v10361 = vadd.f32 %v10211, %v10242
  %v10362 = vadd.f32 %v10212, %v10246
  %v10363 = vadd.f32 %v10213, %v10234
  %v10364 = vadd.f32 %v10214, %v10238
  %v10365 = vadd.f32 %v10215, %v10242
  %v10366 = vadd.f32 %v10216, %v10246
  %v10367 = vadd.f32 %v10217, %v10234
  %v10368 = vadd.f32 %v10218, %v10238
  %v10369 = vadd.f32 %v10219, %v10242
  %v10370 = vadd.f32 %v10220, %v10246
  %v10371 = vadd.f32 %v10221, %v10234
  %v10372 = vadd.f32 %v10222, %v10238
  %v10373 = vadd.f32 %v10223, %v10242
  %v10374 = vadd.f32 %v10224, %v10246
  %v10375 = vadd.f32 %v10225, %v10234
  %v10376 = vadd.f32 %v10226, %v10238
  %v10377 = vadd.f32 %v10227, %v10242
  %v10378 = vadd.f32 %v10228, %v10246
  %v10379 = vmax.f32 %v10251, 0.0
  %v10380 = vmax.f32 %v10252, 0.0
  %v10381 = vmax.f32 %v10253, 0.0
  %v10382 = vmax.f32 %v10254, 0.0
  %v10383 = vmax.f32 %v10255, 0.0
  %v10384 = vmax.f32 %v10256, 0.0
  %v10385 = vmax.f32 %v10257, 0.0
  %v10386 = vmax.f32 %v10258, 0.0
  %v10387 = vmax.f32 %v10259, 0.0
  %v10388 = vmax.f32 %v10260, 0.0
  %v10389 = vmax.f32 %v10261, 0.0
  %v10390 = vmax.f32 %v10262, 0.0
  %v10391 = vmax.f32 %v10263, 0.0
  %v10392 = vmax.f32 %v10264, 0.0
  %v10393 = vmax.f32 %v10265, 0.0
  %v10394 = vmax.f32 %v10266, 0.0
  %v10395 = vmax.f32 %v10267, 0.0
  %v10396 = vmax.f32 %v10268, 0.0
  %v10397 = vmax.f32 %v10269, 0.0
  %v10398 = vmax.f32 %v10270, 0.0
  %v10399 = vmax.f32 %v10271, 0.0
  %v10400 = vmax.f32 %v10272, 0.0
  %v10401 = vmax.f32 %v10273, 0.0
  %v10402 = vmax.f32 %v10274, 0.0
  %v10403 = vmax.f32 %v10275, 0.0
  %v10404 = vmax.f32 %v10276, 0.0
  %v10405 = vmax.f32 %v10277, 0.0
  %v10406 = vmax.f32 %v10278, 0.0
  %v10407 = vmax.f32 %v10279, 0.0
  %v10408 = vmax.f32 %v10280, 0.0
  %v10409 = vmax.f32 %v10281, 0.0
  %v10410 = vmax.f32 %v10282, 0.0
  %v10411 = vmax.f32 %v10283, 0.0
  %v10412 = vmax.f32 %v10284, 0.0
  %v10413 = vmax.f32 %v10285, 0.0
  %v10414 = vmax.f32 %v10286, 0.0
  %v10415 = vmax.f32 %v10287, 0.0
  %v10416 = vmax.f32 %v10288, 0.0
  %v10417 = vmax.f32 %v10289, 0.0
  %v10418 = vmax.f32 %v10290, 0.0
  %v10419 = vmax.f32 %v10291, 0.0
  %v10420 = vmax.f32 %v10292, 0.0
  %v10421 = vmax.f32 %v10293, 0.0
  %v10422 = vmax.f32 %v10294, 0.0
  %v10423 = vmax.f32 %v10295, 0.0
  %v10424 = vmax.f32 %v10296, 0.0
  %v10425 = vmax.f32 %v10297, 0.0
  %v10426 = vmax.f32 %v10298, 0.0
  %v10427 = vmax.f32 %v10299, 0.0
  %v10428 = vmax.f32 %v10300, 0.0
  %v10429 = vmax.f32 %v10301, 0.0
  %v10430 = vmax.f32 %v10302, 0.0
  %v10431 = vmax.f32 %v10303, 0.0
  %v10432 = vmax.f32 %v10304, 0.0
  %v10433 = vmax.f32 %v10305, 0.0
  %v10434 = vmax.f32 %v10306, 0.0
  %v10435 = vmax.f32 %v10307, 0.0
  %v10436 = vmax.f32 %v10308, 0.0
  %v10437 = vmax.f32 %v10309, 0.0
  %v10438 = vmax.f32 %v10310, 0.0
  %v10439 = vmax.f32 %v10311, 0.0
  %v10440 = vmax.f32 %v10312, 0.0
  %v10441 = vmax.f32 %v10313, 0.0
  %v10442 = vmax.f32 %v10314, 0.0
  %v10443 = vmax.f32 %v10315, 0.0
  %v10444 = vmax.f32 %v10316, 0.0
  %v10445 = vmax.f32 %v10317, 0.0
  %v10446 = vmax.f32 %v10318, 0.0
  %v10447 = vmax.f32 %v10319, 0.0
  %v10448 = vmax.f32 %v10320, 0.0
  %v10449 = vmax.f32 %v10321, 0.0
  %v10450 = vmax.f32 %v10322, 0.0
  %v10451 = vmax.f32 %v10323, 0.0
  %v10452 = vmax.f32 %v10324, 0.0
  %v10453 = vmax.f32 %v10325, 0.0
  %v10454 = vmax.f32 %v10326, 0.0
  %v10455 = vmax.f32 %v10327, 0.0
  %v10456 = vmax.f32 %v10328, 0.0
  %v10457 = vmax.f32 %v10329, 0.0
  %v10458 = vmax.f32 %v10330, 0.0
  %v10459 = vmax.f32 %v10331, 0.0
  %v10460 = vmax.f32 %v10332, 0.0
  %v10461 = vmax.f32 %v10333, 0.0
  %v10462 = vmax.f32 %v10334, 0.0
  %v10463 = vmax.f32 %v10335, 0.0
  %v10464 = vmax.f32 %v10336, 0.0
  %v10465 = vmax.f32 %v10337, 0.0
  %v10466 = vmax.f32 %v10338, 0.0
  %v10467 = vmax.f32 %v10339, 0.0
  %v10468 = vmax.f32 %v10340, 0.0
  %v10469 = vmax.f32 %v10341, 0.0
  %v10470 = vmax.f32 %v10342, 0.0
  %v10471 = vmax.f32 %v10343, 0.0
  %v10472 = vmax.f32 %v10344, 0.0
  %v10473 = vmax.f32 %v10345, 0.0
  %v10474 = vmax.f32 %v10346, 0.0
  %v10475 = vmax.f32 %v10347, 0.0
  %v10476 = vmax.f32 %v10348, 0.0
  %v10477 = vmax.f32 %v10349, 0.0
  %v10478 = vmax.f32 %v10350, 0.0
  %v10479 = vmax.f32 %v10351, 0.0
  %v10480 = vmax.f32 %v10352, 0.0
  %v10481 = vmax.f32 %v10353, 0.0
  %v10482 = vmax.f32 %v10354, 0.0
  %v10483 = vmax.f32 %v10355, 0.0
  %v10484 = vmax.f32 %v10356, 0.0
  %v10485 = vmax.f32 %v10357, 0.0
  %v10486 = vmax.f32 %v10358, 0.0
  %v10487 = vmax.f32 %v10359, 0.0
  %v10488 = vmax.f32 %v10360, 0.0
  %v10489 = vmax.f32 %v10361, 0.0
  %v10490 = vmax.f32 %v10362, 0.0
  %v10491 = vmax.f32 %v10363, 0.0
  %v10492 = vmax.f32 %v10364, 0.0
  %v10493 = vmax.f32 %v10365, 0.0
  %v10494 = vmax.f32 %v10366, 0.0
  %v10495 = vmax.f32 %v10367, 0.0
  %v10496 = vmax.f32 %v10368, 0.0
  %v10497 = vmax.f32 %v10369, 0.0
  %v10498 = vmax.f32 %v10370, 0.0
  %v10499 = vmax.f32 %v10371, 0.0
  %v10500 = vmax.f32 %v10372, 0.0
  %v10501 = vmax.f32 %v10373, 0.0
  %v10502 = vmax.f32 %v10374, 0.0
  %v10503 = vmax.f32 %v10375, 0.0
  %v10504 = vmax.f32 %v10376, 0.0
  %v10505 = vmax.f32 %v10377, 0.0
  %v10506 = vmax.f32 %v10378, 0.0
  %v10507 = vpack.c.bf16 %v10383, %v10379
  %v10508 = vpack.c.bf16 %v10384, %v10380
  %v10509 = vpack.c.bf16 %v10385, %v10381
  %v10510 = vpack.c.bf16 %v10386, %v10382
  %v10511 = vpack.c.bf16 %v10391, %v10387
  %v10512 = vpack.c.bf16 %v10392, %v10388
  %v10513 = vpack.c.bf16 %v10393, %v10389
  %v10514 = vpack.c.bf16 %v10394, %v10390
  %v10515 = vpack.c.bf16 %v10399, %v10395
  %v10516 = vpack.c.bf16 %v10400, %v10396
  %v10517 = vpack.c.bf16 %v10401, %v10397
  %v10518 = vpack.c.bf16 %v10402, %v10398
  %v10519 = vpack.c.bf16 %v10407, %v10403
  %v10520 = vpack.c.bf16 %v10408, %v10404
  %v10521 = vpack.c.bf16 %v10409, %v10405
  %v10522 = vpack.c.bf16 %v10410, %v10406
  %v10523 = vpack.c.bf16 %v10415, %v10411
  %v10524 = vpack.c.bf16 %v10416, %v10412
  %v10525 = vpack.c.bf16 %v10417, %v10413
  %v10526 = vpack.c.bf16 %v10418, %v10414
  %v10527 = vpack.c.bf16 %v10423, %v10419
  %v10528 = vpack.c.bf16 %v10424, %v10420
  %v10529 = vpack.c.bf16 %v10425, %v10421
  %v10530 = vpack.c.bf16 %v10426, %v10422
  %v10531 = vpack.c.bf16 %v10431, %v10427
  %v10532 = vpack.c.bf16 %v10432, %v10428
  %v10533 = vpack.c.bf16 %v10433, %v10429
  %v10534 = vpack.c.bf16 %v10434, %v10430
  %v10535 = vpack.c.bf16 %v10439, %v10435
  %v10536 = vpack.c.bf16 %v10440, %v10436
  %v10537 = vpack.c.bf16 %v10441, %v10437
  %v10538 = vpack.c.bf16 %v10442, %v10438
  %v10539 = vpack.c.bf16 %v10447, %v10443
  %v10540 = vpack.c.bf16 %v10448, %v10444
  %v10541 = vpack.c.bf16 %v10449, %v10445
  %v10542 = vpack.c.bf16 %v10450, %v10446
  %v10543 = vpack.c.bf16 %v10455, %v10451
  %v10544 = vpack.c.bf16 %v10456, %v10452
  %v10545 = vpack.c.bf16 %v10457, %v10453
  %v10546 = vpack.c.bf16 %v10458, %v10454
  %v10547 = vpack.c.bf16 %v10463, %v10459
  %v10548 = vpack.c.bf16 %v10464, %v10460
  %v10549 = vpack.c.bf16 %v10465, %v10461
  %v10550 = vpack.c.bf16 %v10466, %v10462
  %v10551 = vpack.c.bf16 %v10471, %v10467
  %v10552 = vpack.c.bf16 %v10472, %v10468
  %v10553 = vpack.c.bf16 %v10473, %v10469
  %v10554 = vpack.c.bf16 %v10474, %v10470
  %v10555 = vpack.c.bf16 %v10479, %v10475
  %v10556 = vpack.c.bf16 %v10480, %v10476
  %v10557 = vpack.c.bf16 %v10481, %v10477
  %v10558 = vpack.c.bf16 %v10482, %v10478
  %v10559 = vpack.c.bf16 %v10487, %v10483
  %v10560 = vpack.c.bf16 %v10488, %v10484
  %v10561 = vpack.c.bf16 %v10489, %v10485
  %v10562 = vpack.c.bf16 %v10490, %v10486
  %v10563 = vpack.c.bf16 %v10495, %v10491
  %v10564 = vpack.c.bf16 %v10496, %v10492
  %v10565 = vpack.c.bf16 %v10497, %v10493
  %v10566 = vpack.c.bf16 %v10498, %v10494
  %v10567 = vpack.c.bf16 %v10503, %v10499
  %v10568 = vpack.c.bf16 %v10504, %v10500
  %v10569 = vpack.c.bf16 %v10505, %v10501
  %v10570 = vpack.c.bf16 %v10506, %v10502
  %v10571 = vld [vmem:[%s3] sm:$0xff]
  %v10572 = vld [vmem:[%s3 + $0x8] sm:$0xff]
  %v10573 = vld [vmem:[%s3 + $0x10] sm:$0xff]
  %v10574 = vld [vmem:[%s3 + $0x18] sm:$0xff]
  %v10575 = vld [vmem:[%s3 + $0x20] sm:$0xff]
  %v10576 = vld [vmem:[%s3 + $0x28] sm:$0xff]
  %v10577 = vld [vmem:[%s3 + $0x30] sm:$0xff]
  %v10578 = vld [vmem:[%s3 + $0x38] sm:$0xff]
  %v10579 = vld [vmem:[%s3 + $0x40] sm:$0xff]
  %v10580 = vld [vmem:[%s3 + $0x48] sm:$0xff]
  %v10581 = vld [vmem:[%s3 + $0x50] sm:$0xff]
  %v10582 = vld [vmem:[%s3 + $0x58] sm:$0xff]
  %v10583 = vld [vmem:[%s3 + $0x60] sm:$0xff]
  %v10584 = vld [vmem:[%s3 + $0x68] sm:$0xff]
  %v10585 = vld [vmem:[%s3 + $0x70] sm:$0xff]
  %v10586 = vld [vmem:[%s3 + $0x78] sm:$0xff]
  %v10587 = vld [vmem:[%s3 + $0x80] sm:$0xff]
  %v10588 = vld [vmem:[%s3 + $0x88] sm:$0xff]
  %v10589 = vld [vmem:[%s3 + $0x90] sm:$0xff]
  %v10590 = vld [vmem:[%s3 + $0x98] sm:$0xff]
  %v10591 = vld [vmem:[%s3 + $0xa0] sm:$0xff]
  %v10592 = vld [vmem:[%s3 + $0xa8] sm:$0xff]
  %v10593 = vld [vmem:[%s3 + $0xb0] sm:$0xff]
  %v10594 = vld [vmem:[%s3 + $0xb8] sm:$0xff]
  %v10595 = vld [vmem:[%s3 + $0xc0] sm:$0xff]
  %v10596 = vld [vmem:[%s3 + $0xc8] sm:$0xff]
  %v10597 = vld [vmem:[%s3 + $0xd0] sm:$0xff]
  %v10598 = vld [vmem:[%s3 + $0xd8] sm:$0xff]
  %v10599 = vld [vmem:[%s3 + $0xe0] sm:$0xff]
  %v10600 = vld [vmem:[%s3 + $0xe8] sm:$0xff]
  %v10601 = vld [vmem:[%s3 + $0xf0] sm:$0xff]
  %v10602 = vld [vmem:[%s3 + $0xf8] sm:$0xff]
  %v10603 = vld [vmem:[%s3 + $0x100] sm:$0xff]
  %v10604 = vld [vmem:[%s3 + $0x108] sm:$0xff]
  %v10605 = vld [vmem:[%s3 + $0x110] sm:$0xff]
  %v10606 = vld [vmem:[%s3 + $0x118] sm:$0xff]
  %v10607 = vld [vmem:[%s3 + $0x120] sm:$0xff]
  %v10608 = vld [vmem:[%s3 + $0x128] sm:$0xff]
  %v10609 = vld [vmem:[%s3 + $0x130] sm:$0xff]
  %v10610 = vld [vmem:[%s3 + $0x138] sm:$0xff]
  %v10611 = vld [vmem:[%s3 + $0x140] sm:$0xff]
  %v10612 = vld [vmem:[%s3 + $0x148] sm:$0xff]
  %v10613 = vld [vmem:[%s3 + $0x150] sm:$0xff]
  %v10614 = vld [vmem:[%s3 + $0x158] sm:$0xff]
  %v10615 = vld [vmem:[%s3 + $0x160] sm:$0xff]
  %v10616 = vld [vmem:[%s3 + $0x168] sm:$0xff]
  %v10617 = vld [vmem:[%s3 + $0x170] sm:$0xff]
  %v10618 = vld [vmem:[%s3 + $0x178] sm:$0xff]
  %v10619 = vld [vmem:[%s3 + $0x180] sm:$0xff]
  %v10620 = vld [vmem:[%s3 + $0x188] sm:$0xff]
  %v10621 = vld [vmem:[%s3 + $0x190] sm:$0xff]
  %v10622 = vld [vmem:[%s3 + $0x198] sm:$0xff]
  %v10623 = vld [vmem:[%s3 + $0x1a0] sm:$0xff]
  %v10624 = vld [vmem:[%s3 + $0x1a8] sm:$0xff]
  %v10625 = vld [vmem:[%s3 + $0x1b0] sm:$0xff]
  %v10626 = vld [vmem:[%s3 + $0x1b8] sm:$0xff]
  %v10627 = vld [vmem:[%s3 + $0x1c0] sm:$0xff]
  %v10628 = vld [vmem:[%s3 + $0x1c8] sm:$0xff]
  %v10629 = vld [vmem:[%s3 + $0x1d0] sm:$0xff]
  %v10630 = vld [vmem:[%s3 + $0x1d8] sm:$0xff]
  %v10631 = vld [vmem:[%s3 + $0x1e0] sm:$0xff]
  %v10632 = vld [vmem:[%s3 + $0x1e8] sm:$0xff]
  %v10633 = vld [vmem:[%s3 + $0x1f0] sm:$0xff]
  %v10634 = vld [vmem:[%s3 + $0x1f8] sm:$0xff]
  %v10699 = vunpack.c.l.b16 %v10571
  %v10700 = vunpack.c.h.b16 %v10571
  %v10701 = vunpack.c.l.b16 %v10572
  %v10702 = vunpack.c.h.b16 %v10572
  %v10703 = vunpack.c.l.b16 %v10573
  %v10704 = vunpack.c.h.b16 %v10573
  %v10705 = vunpack.c.l.b16 %v10574
  %v10706 = vunpack.c.h.b16 %v10574
  %v10707 = vunpack.c.l.b16 %v10575
  %v10708 = vunpack.c.h.b16 %v10575
  %v10709 = vunpack.c.l.b16 %v10576
  %v10710 = vunpack.c.h.b16 %v10576
  %v10711 = vunpack.c.l.b16 %v10577
  %v10712 = vunpack.c.h.b16 %v10577
  %v10713 = vunpack.c.l.b16 %v10578
  %v10714 = vunpack.c.h.b16 %v10578
  %v10715 = vunpack.c.l.b16 %v10579
  %v10716 = vunpack.c.h.b16 %v10579
  %v10717 = vunpack.c.l.b16 %v10580
  %v10718 = vunpack.c.h.b16 %v10580
  %v10719 = vunpack.c.l.b16 %v10581
  %v10720 = vunpack.c.h.b16 %v10581
  %v10721 = vunpack.c.l.b16 %v10582
  %v10722 = vunpack.c.h.b16 %v10582
  %v10723 = vunpack.c.l.b16 %v10583
  %v10724 = vunpack.c.h.b16 %v10583
  %v10725 = vunpack.c.l.b16 %v10584
  %v10726 = vunpack.c.h.b16 %v10584
  %v10727 = vunpack.c.l.b16 %v10585
  %v10728 = vunpack.c.h.b16 %v10585
  %v10729 = vunpack.c.l.b16 %v10586
  %v10730 = vunpack.c.h.b16 %v10586
  %v10731 = vunpack.c.l.b16 %v10587
  %v10732 = vunpack.c.h.b16 %v10587
  %v10733 = vunpack.c.l.b16 %v10588
  %v10734 = vunpack.c.h.b16 %v10588
  %v10735 = vunpack.c.l.b16 %v10589
  %v10736 = vunpack.c.h.b16 %v10589
  %v10737 = vunpack.c.l.b16 %v10590
  %v10738 = vunpack.c.h.b16 %v10590
  %v10739 = vunpack.c.l.b16 %v10591
  %v10740 = vunpack.c.h.b16 %v10591
  %v10741 = vunpack.c.l.b16 %v10592
  %v10742 = vunpack.c.h.b16 %v10592
  %v10743 = vunpack.c.l.b16 %v10593
  %v10744 = vunpack.c.h.b16 %v10593
  %v10745 = vunpack.c.l.b16 %v10594
  %v10746 = vunpack.c.h.b16 %v10594
  %v10747 = vunpack.c.l.b16 %v10595
  %v10748 = vunpack.c.h.b16 %v10595
  %v10749 = vunpack.c.l.b16 %v10596
  %v10750 = vunpack.c.h.b16 %v10596
  %v10751 = vunpack.c.l.b16 %v10597
  %v10752 = vunpack.c.h.b16 %v10597
  %v10753 = vunpack.c.l.b16 %v10598
  %v10754 = vunpack.c.h.b16 %v10598
  %v10755 = vunpack.c.l.b16 %v10599
  %v10756 = vunpack.c.h.b16 %v10599
  %v10757 = vunpack.c.l.b16 %v10600
  %v10758 = vunpack.c.h.b16 %v10600
  %v10759 = vunpack.c.l.b16 %v10601
  %v10760 = vunpack.c.h.b16 %v10601
  %v10761 = vunpack.c.l.b16 %v10602
  %v10762 = vunpack.c.h.b16 %v10602
  %v10763 = vunpack.c.l.b16 %v10603
  %v10764 = vunpack.c.h.b16 %v10603
  %v10765 = vunpack.c.l.b16 %v10604
  %v10766 = vunpack.c.h.b16 %v10604
  %v10767 = vunpack.c.l.b16 %v10605
  %v10768 = vunpack.c.h.b16 %v10605
  %v10769 = vunpack.c.l.b16 %v10606
  %v10770 = vunpack.c.h.b16 %v10606
  %v10771 = vunpack.c.l.b16 %v10607
  %v10772 = vunpack.c.h.b16 %v10607
  %v10773 = vunpack.c.l.b16 %v10608
  %v10774 = vunpack.c.h.b16 %v10608
  %v10775 = vunpack.c.l.b16 %v10609
  %v10776 = vunpack.c.h.b16 %v10609
  %v10777 = vunpack.c.l.b16 %v10610
  %v10778 = vunpack.c.h.b16 %v10610
  %v10779 = vunpack.c.l.b16 %v10611
  %v10780 = vunpack.c.h.b16 %v10611
  %v10781 = vunpack.c.l.b16 %v10612
  %v10782 = vunpack.c.h.b16 %v10612
  %v10783 = vunpack.c.l.b16 %v10613
  %v10784 = vunpack.c.h.b16 %v10613
  %v10785 = vunpack.c.l.b16 %v10614
  %v10786 = vunpack.c.h.b16 %v10614
  %v10787 = vunpack.c.l.b16 %v10615
  %v10788 = vunpack.c.h.b16 %v10615
  %v10789 = vunpack.c.l.b16 %v10616
  %v10790 = vunpack.c.h.b16 %v10616
  %v10791 = vunpack.c.l.b16 %v10617
  %v10792 = vunpack.c.h.b16 %v10617
  %v10793 = vunpack.c.l.b16 %v10618
  %v10794 = vunpack.c.h.b16 %v10618
  %v10795 = vunpack.c.l.b16 %v10619
  %v10796 = vunpack.c.h.b16 %v10619
  %v10797 = vunpack.c.l.b16 %v10620
  %v10798 = vunpack.c.h.b16 %v10620
  %v10799 = vunpack.c.l.b16 %v10621
  %v10800 = vunpack.c.h.b16 %v10621
  %v10801 = vunpack.c.l.b16 %v10622
  %v10802 = vunpack.c.h.b16 %v10622
  %v10803 = vunpack.c.l.b16 %v10623
  %v10804 = vunpack.c.h.b16 %v10623
  %v10805 = vunpack.c.l.b16 %v10624
  %v10806 = vunpack.c.h.b16 %v10624
  %v10807 = vunpack.c.l.b16 %v10625
  %v10808 = vunpack.c.h.b16 %v10625
  %v10809 = vunpack.c.l.b16 %v10626
  %v10810 = vunpack.c.h.b16 %v10626
  %v10811 = vunpack.c.l.b16 %v10627
  %v10812 = vunpack.c.h.b16 %v10627
  %v10813 = vunpack.c.l.b16 %v10628
  %v10814 = vunpack.c.h.b16 %v10628
  %v10815 = vunpack.c.l.b16 %v10629
  %v10816 = vunpack.c.h.b16 %v10629
  %v10817 = vunpack.c.l.b16 %v10630
  %v10818 = vunpack.c.h.b16 %v10630
  %v10819 = vunpack.c.l.b16 %v10631
  %v10820 = vunpack.c.h.b16 %v10631
  %v10821 = vunpack.c.l.b16 %v10632
  %v10822 = vunpack.c.h.b16 %v10632
  %v10823 = vunpack.c.l.b16 %v10633
  %v10824 = vunpack.c.h.b16 %v10633
  %v10825 = vunpack.c.l.b16 %v10634
  %v10826 = vunpack.c.h.b16 %v10634
  %v10827 = vpack.c.b16 %v10701, %v10699
  %v10828 = vpack.c.b16 %v10702, %v10700
  %v10829 = vpack.c.b16 %v10705, %v10703
  %v10830 = vpack.c.b16 %v10706, %v10704
  %v10831 = vpack.c.b16 %v10709, %v10707
  %v10832 = vpack.c.b16 %v10710, %v10708
  %v10833 = vpack.c.b16 %v10713, %v10711
  %v10834 = vpack.c.b16 %v10714, %v10712
  %v10835 = vpack.c.b16 %v10717, %v10715
  %v10836 = vpack.c.b16 %v10718, %v10716
  %v10837 = vpack.c.b16 %v10721, %v10719
  %v10838 = vpack.c.b16 %v10722, %v10720
  %v10839 = vpack.c.b16 %v10725, %v10723
  %v10840 = vpack.c.b16 %v10726, %v10724
  %v10841 = vpack.c.b16 %v10729, %v10727
  %v10842 = vpack.c.b16 %v10730, %v10728
  %v10843 = vpack.c.b16 %v10733, %v10731
  %v10844 = vpack.c.b16 %v10734, %v10732
  %v10845 = vpack.c.b16 %v10737, %v10735
  %v10846 = vpack.c.b16 %v10738, %v10736
  %v10847 = vpack.c.b16 %v10741, %v10739
  %v10848 = vpack.c.b16 %v10742, %v10740
  %v10849 = vpack.c.b16 %v10745, %v10743
  %v10850 = vpack.c.b16 %v10746, %v10744
  %v10851 = vpack.c.b16 %v10749, %v10747
  %v10852 = vpack.c.b16 %v10750, %v10748
  %v10853 = vpack.c.b16 %v10753, %v10751
  %v10854 = vpack.c.b16 %v10754, %v10752
  %v10855 = vpack.c.b16 %v10757, %v10755
  %v10856 = vpack.c.b16 %v10758, %v10756
  %v10857 = vpack.c.b16 %v10761, %v10759
  %v10858 = vpack.c.b16 %v10762, %v10760
  %v10859 = vpack.c.b16 %v10765, %v10763
  %v10860 = vpack.c.b16 %v10766, %v10764
  %v10861 = vpack.c.b16 %v10769, %v10767
  %v10862 = vpack.c.b16 %v10770, %v10768
  %v10863 = vpack.c.b16 %v10773, %v10771
  %v10864 = vpack.c.b16 %v10774, %v10772
  %v10865 = vpack.c.b16 %v10777, %v10775
  %v10866 = vpack.c.b16 %v10778, %v10776
  %v10867 = vpack.c.b16 %v10781, %v10779
  %v10868 = vpack.c.b16 %v10782, %v10780
  %v10869 = vpack.c.b16 %v10785, %v10783
  %v10870 = vpack.c.b16 %v10786, %v10784
  %v10871 = vpack.c.b16 %v10789, %v10787
  %v10872 = vpack.c.b16 %v10790, %v10788
  %v10873 = vpack.c.b16 %v10793, %v10791
  %v10874 = vpack.c.b16 %v10794, %v10792
  %v10875 = vpack.c.b16 %v10797, %v10795
  %v10876 = vpack.c.b16 %v10798, %v10796
  %v10877 = vpack.c.b16 %v10801, %v10799
  %v10878 = vpack.c.b16 %v10802, %v10800
  %v10879 = vpack.c.b16 %v10805, %v10803
  %v10880 = vpack.c.b16 %v10806, %v10804
  %v10881 = vpack.c.b16 %v10809, %v10807
  %v10882 = vpack.c.b16 %v10810, %v10808
  %v10883 = vpack.c.b16 %v10813, %v10811
  %v10884 = vpack.c.b16 %v10814, %v10812
  %v10885 = vpack.c.b16 %v10817, %v10815
  %v10886 = vpack.c.b16 %v10818, %v10816
  %v10887 = vpack.c.b16 %v10821, %v10819
  %v10888 = vpack.c.b16 %v10822, %v10820
  %v10889 = vpack.c.b16 %v10825, %v10823
  %v10890 = vpack.c.b16 %v10826, %v10824
  %10955 = vmatprep.subr.bf16.mxu0 %v10828
  %10956 = vmatpush1.bf16.msra.mxu0 %v10827
  %10957 = vmatprep.subr.bf16.mxu0 %v10830
  %10958 = vmatpush1.bf16.msra.mxu0 %v10829
  %10959 = vmatprep.subr.bf16.mxu0 %v10832
  %10960 = vmatpush1.bf16.msra.mxu0 %v10831
  %10961 = vmatprep.subr.bf16.mxu0 %v10834
  %10962 = vmatpush1.bf16.msra.mxu0 %v10833
  %10963 = vmatprep.subr.bf16.mxu0 %v10836
  %10964 = vmatpush1.bf16.msra.mxu0 %v10835
  %10965 = vmatprep.subr.bf16.mxu0 %v10838
  %10966 = vmatpush1.bf16.msra.mxu0 %v10837
  %10967 = vmatprep.subr.bf16.mxu0 %v10840
  %10968 = vmatpush1.bf16.msra.mxu0 %v10839
  %10969 = vmatprep.subr.bf16.mxu0 %v10842
  %10970 = vmatpush1.bf16.msra.mxu0 %v10841
  %10971 = vmatprep.subr.bf16.mxu0 %v10844
  %10972 = vmatpush1.bf16.msra.mxu0 %v10843
  %10973 = vmatprep.subr.bf16.mxu0 %v10846
  %10974 = vmatpush1.bf16.msra.mxu0 %v10845
  %10975 = vmatprep.subr.bf16.mxu0 %v10848
  %10976 = vmatpush1.bf16.msra.mxu0 %v10847
  %10977 = vmatprep.subr.bf16.mxu0 %v10850
  %10978 = vmatpush1.bf16.msra.mxu0 %v10849
  %10979 = vmatprep.subr.bf16.mxu0 %v10852
  %10980 = vmatpush1.bf16.msra.mxu0 %v10851
  %10981 = vmatprep.subr.bf16.mxu0 %v10854
  %10982 = vmatpush1.bf16.msra.mxu0 %v10853
  %10983 = vmatprep.subr.bf16.mxu0 %v10856
  %10984 = vmatpush1.bf16.msra.mxu0 %v10855
  %10985 = vmatprep.subr.bf16.mxu0 %v10858
  %10986 = vmatpush1.bf16.msra.mxu0 %v10857
  %10987 = vmatprep.mubr.bf16.mxu0 %v10508
  %10988 = vmatmul.mubr.bf16.gmra.mrb[0].mxu0 %v10507
  %v10989 = vpop.f32.mrb[0].mxu0
  %v10990 = vadd.f32 0.0, %v10989
  %v10991 = vpop.f32.mrb[0].mxu0
  %v10992 = vadd.f32 0.0, %v10991
  %v10993 = vpop.f32.mrb[0].mxu0
  %v10994 = vadd.f32 0.0, %v10993
  %v10995 = vpop.f32.mrb[0].mxu0
  %v10996 = vadd.f32 0.0, %v10995
  %10997 = vmatprep.mubr.bf16.mxu0 %v10512
  %10998 = vmatmul.mubr.bf16.gmra.mrb[0].mxu0 %v10511
  %v10999 = vpop.f32.mrb[0].mxu0
  %v11000 = vadd.f32 0.0, %v10999
  %v11001 = vpop.f32.mrb[0].mxu0
  %v11002 = vadd.f32 0.0, %v11001
  %v11003 = vpop.f32.mrb[0].mxu0
  %v11004 = vadd.f32 0.0, %v11003
  %v11005 = vpop.f32.mrb[0].mxu0
  %v11006 = vadd.f32 0.0, %v11005
  %11007 = vmatprep.mubr.bf16.mxu0 %v10516
  %11008 = vmatmul.mubr.bf16.gmra.mrb[0].mxu0 %v10515
  %v11009 = vpop.f32.mrb[0].mxu0
  %v11010 = vadd.f32 0.0, %v11009
  %v11011 = vpop.f32.mrb[0].mxu0
  %v11012 = vadd.f32 0.0, %v11011
  %v11013 = vpop.f32.mrb[0].mxu0
  %v11014 = vadd.f32 0.0, %v11013
  %v11015 = vpop.f32.mrb[0].mxu0
  %v11016 = vadd.f32 0.0, %v11015
  %11017 = vmatprep.mubr.bf16.mxu0 %v10520
  %11018 = vmatmul.mubr.bf16.gmra.mrb[0].mxu0 %v10519
  %v11019 = vpop.f32.mrb[0].mxu0
  %v11020 = vadd.f32 0.0, %v11019
  %v11021 = vpop.f32.mrb[0].mxu0
  %v11022 = vadd.f32 0.0, %v11021
  %v11023 = vpop.f32.mrb[0].mxu0
  %v11024 = vadd.f32 0.0, %v11023
  %v11025 = vpop.f32.mrb[0].mxu0
  %v11026 = vadd.f32 0.0, %v11025
  %11027 = vmatprep.mubr.bf16.mxu0 %v10524
  %11028 = vmatmul.mubr.bf16.gmra.mrb[0].mxu0 %v10523
  %v11029 = vpop.f32.mrb[0].mxu0
  %v11030 = vadd.f32 0.0, %v11029
  %v11031 = vpop.f32.mrb[0].mxu0
  %v11032 = vadd.f32 0.0, %v11031
  %v11033 = vpop.f32.mrb[0].mxu0
  %v11034 = vadd.f32 0.0, %v11033
  %v11035 = vpop.f32.mrb[0].mxu0
  %v11036 = vadd.f32 0.0, %v11035
  %11037 = vmatprep.mubr.bf16.mxu0 %v10528
  %11038 = vmatmul.mubr.bf16.gmra.mrb[0].mxu0 %v10527
  %v11039 = vpop.f32.mrb[0].mxu0
  %v11040 = vadd.f32 0.0, %v11039
  %v11041 = vpop.f32.mrb[0].mxu0
  %v11042 = vadd.f32 0.0, %v11041
  %v11043 = vpop.f32.mrb[0].mxu0
  %v11044 = vadd.f32 0.0, %v11043
  %v11045 = vpop.f32.mrb[0].mxu0
  %v11046 = vadd.f32 0.0, %v11045
  %11047 = vmatprep.mubr.bf16.mxu0 %v10532
  %11048 = vmatmul.mubr.bf16.gmra.mrb[0].mxu0 %v10531
  %v11049 = vpop.f32.mrb[0].mxu0
  %v11050 = vadd.f32 0.0, %v11049
  %v11051 = vpop.f32.mrb[0].mxu0
  %v11052 = vadd.f32 0.0, %v11051
  %v11053 = vpop.f32.mrb[0].mxu0
  %v11054 = vadd.f32 0.0, %v11053
  %v11055 = vpop.f32.mrb[0].mxu0
  %v11056 = vadd.f32 0.0, %v11055
  %11057 = vmatprep.mubr.bf16.mxu0 %v10536
  %11058 = vmatmul.mubr.bf16.gmra.mrb[0].mxu0 %v10535
  %v11059 = vpop.f32.mrb[0].mxu0
  %v11060 = vadd.f32 0.0, %v11059
  %v11061 = vpop.f32.mrb[0].mxu0
  %v11062 = vadd.f32 0.0, %v11061
  %v11063 = vpop.f32.mrb[0].mxu0
  %v11064 = vadd.f32 0.0, %v11063
  %v11065 = vpop.f32.mrb[0].mxu0
  %v11066 = vadd.f32 0.0, %v11065
  %11067 = vmatprep.mubr.bf16.mxu0 %v10540
  %11068 = vmatmul.mubr.bf16.gmra.mrb[0].mxu0 %v10539
  %v11069 = vpop.f32.mrb[0].mxu0
  %v11070 = vadd.f32 0.0, %v11069
  %v11071 = vpop.f32.mrb[0].mxu0
  %v11072 = vadd.f32 0.0, %v11071
  %v11073 = vpop.f32.mrb[0].mxu0
  %v11074 = vadd.f32 0.0, %v11073
  %v11075 = vpop.f32.mrb[0].mxu0
  %v11076 = vadd.f32 0.0, %v11075
  %11077 = vmatprep.mubr.bf16.mxu0 %v10544
  %11078 = vmatmul.mubr.bf16.gmra.mrb[0].mxu0 %v10543
  %v11079 = vpop.f32.mrb[0].mxu0
  %v11080 = vadd.f32 0.0, %v11079
  %v11081 = vpop.f32.mrb[0].mxu0
  %v11082 = vadd.f32 0.0, %v11081
  %v11083 = vpop.f32.mrb[0].mxu0
  %v11084 = vadd.f32 0.0, %v11083
  %v11085 = vpop.f32.mrb[0].mxu0
  %v11086 = vadd.f32 0.0, %v11085
  %11087 = vmatprep.mubr.bf16.mxu0 %v10548
  %11088 = vmatmul.mubr.bf16.gmra.mrb[0].mxu0 %v10547
  %v11089 = vpop.f32.mrb[0].mxu0
  %v11090 = vadd.f32 0.0, %v11089
  %v11091 = vpop.f32.mrb[0].mxu0
  %v11092 = vadd.f32 0.0, %v11091
  %v11093 = vpop.f32.mrb[0].mxu0
  %v11094 = vadd.f32 0.0, %v11093
  %v11095 = vpop.f32.mrb[0].mxu0
  %v11096 = vadd.f32 0.0, %v11095
  %11097 = vmatprep.mubr.bf16.mxu0 %v10552
  %11098 = vmatmul.mubr.bf16.gmra.mrb[0].mxu0 %v10551
  %v11099 = vpop.f32.mrb[0].mxu0
  %v11100 = vadd.f32 0.0, %v11099
  %v11101 = vpop.f32.mrb[0].mxu0
  %v11102 = vadd.f32 0.0, %v11101
  %v11103 = vpop.f32.mrb[0].mxu0
  %v11104 = vadd.f32 0.0, %v11103
  %v11105 = vpop.f32.mrb[0].mxu0
  %v11106 = vadd.f32 0.0, %v11105
  %11107 = vmatprep.mubr.bf16.mxu0 %v10556
  %11108 = vmatmul.mubr.bf16.gmra.mrb[0].mxu0 %v10555
  %v11109 = vpop.f32.mrb[0].mxu0
  %v11110 = vadd.f32 0.0, %v11109
  %v11111 = vpop.f32.mrb[0].mxu0
  %v11112 = vadd.f32 0.0, %v11111
  %v11113 = vpop.f32.mrb[0].mxu0
  %v11114 = vadd.f32 0.0, %v11113
  %v11115 = vpop.f32.mrb[0].mxu0
  %v11116 = vadd.f32 0.0, %v11115
  %11117 = vmatprep.mubr.bf16.mxu0 %v10560
  %11118 = vmatmul.mubr.bf16.gmra.mrb[0].mxu0 %v10559
  %v11119 = vpop.f32.mrb[0].mxu0
  %v11120 = vadd.f32 0.0, %v11119
  %v11121 = vpop.f32.mrb[0].mxu0
  %v11122 = vadd.f32 0.0, %v11121
  %v11123 = vpop.f32.mrb[0].mxu0
  %v11124 = vadd.f32 0.0, %v11123
  %v11125 = vpop.f32.mrb[0].mxu0
  %v11126 = vadd.f32 0.0, %v11125
  %11127 = vmatprep.mubr.bf16.mxu0 %v10564
  %11128 = vmatmul.mubr.bf16.gmra.mrb[0].mxu0 %v10563
  %v11129 = vpop.f32.mrb[0].mxu0
  %v11130 = vadd.f32 0.0, %v11129
  %v11131 = vpop.f32.mrb[0].mxu0
  %v11132 = vadd.f32 0.0, %v11131
  %v11133 = vpop.f32.mrb[0].mxu0
  %v11134 = vadd.f32 0.0, %v11133
  %v11135 = vpop.f32.mrb[0].mxu0
  %v11136 = vadd.f32 0.0, %v11135
  %11137 = vmatprep.mubr.bf16.mxu0 %v10568
  %11138 = vmatmul.mubr.bf16.gmra.mrb[0].mxu0 %v10567
  %v11139 = vpop.f32.mrb[0].mxu0
  %v11140 = vadd.f32 0.0, %v11139
  %v11141 = vpop.f32.mrb[0].mxu0
  %v11142 = vadd.f32 0.0, %v11141
  %v11143 = vpop.f32.mrb[0].mxu0
  %v11144 = vadd.f32 0.0, %v11143
  %v11145 = vpop.f32.mrb[0].mxu0
  %v11146 = vadd.f32 0.0, %v11145
  %11147 = vdwg.mxu0
  %11148 = vmatprep.subr.bf16.mxu0 %v10860
  %11149 = vmatpush1.bf16.msra.mxu0 %v10859
  %11150 = vmatprep.subr.bf16.mxu0 %v10862
  %11151 = vmatpush1.bf16.msra.mxu0 %v10861
  %11152 = vmatprep.subr.bf16.mxu0 %v10864
  %11153 = vmatpush1.bf16.msra.mxu0 %v10863
  %11154 = vmatprep.subr.bf16.mxu0 %v10866
  %11155 = vmatpush1.bf16.msra.mxu0 %v10865
  %11156 = vmatprep.subr.bf16.mxu0 %v10868
  %11157 = vmatpush1.bf16.msra.mxu0 %v10867
  %11158 = vmatprep.subr.bf16.mxu0 %v10870
  %11159 = vmatpush1.bf16.msra.mxu0 %v10869
  %11160 = vmatprep.subr.bf16.mxu0 %v10872
  %11161 = vmatpush1.bf16.msra.mxu0 %v10871
  %11162 = vmatprep.subr.bf16.mxu0 %v10874
  %11163 = vmatpush1.bf16.msra.mxu0 %v10873
  %11164 = vmatprep.subr.bf16.mxu0 %v10876
  %11165 = vmatpush1.bf16.msra.mxu0 %v10875
  %11166 = vmatprep.subr.bf16.mxu0 %v10878
  %11167 = vmatpush1.bf16.msra.mxu0 %v10877
  %11168 = vmatprep.subr.bf16.mxu0 %v10880
  %11169 = vmatpush1.bf16.msra.mxu0 %v10879
  %11170 = vmatprep.subr.bf16.mxu0 %v10882
  %11171 = vmatpush1.bf16.msra.mxu0 %v10881
  %11172 = vmatprep.subr.bf16.mxu0 %v10884
  %11173 = vmatpush1.bf16.msra.mxu0 %v10883
  %11174 = vmatprep.subr.bf16.mxu0 %v10886
  %11175 = vmatpush1.bf16.msra.mxu0 %v10885
  %11176 = vmatprep.subr.bf16.mxu0 %v10888
  %11177 = vmatpush1.bf16.msra.mxu0 %v10887
  %11178 = vmatprep.subr.bf16.mxu0 %v10890
  %11179 = vmatpush1.bf16.msra.mxu0 %v10889
  %11180 = vmatprep.mubr.bf16.mxu0 %v10510
  %11181 = vmatmul.mubr.bf16.gmra.mrb[0].mxu0 %v10509
  %v11182 = vpop.f32.mrb[0].mxu0
  %v11183 = vadd.f32 %v10990, %v11182
  %v11184 = vpop.f32.mrb[0].mxu0
  %v11185 = vadd.f32 %v10992, %v11184
  %v11186 = vpop.f32.mrb[0].mxu0
  %v11187 = vadd.f32 %v10994, %v11186
  %v11188 = vpop.f32.mrb[0].mxu0
  %v11189 = vadd.f32 %v10996, %v11188
  %11190 = vmatprep.mubr.bf16.mxu0 %v10514
  %11191 = vmatmul.mubr.bf16.gmra.mrb[0].mxu0 %v10513
  %v11192 = vpop.f32.mrb[0].mxu0
  %v11193 = vadd.f32 %v11000, %v11192
  %v11194 = vpop.f32.mrb[0].mxu0
  %v11195 = vadd.f32 %v11002, %v11194
  %v11196 = vpop.f32.mrb[0].mxu0
  %v11197 = vadd.f32 %v11004, %v11196
  %v11198 = vpop.f32.mrb[0].mxu0
  %v11199 = vadd.f32 %v11006, %v11198
  %11200 = vmatprep.mubr.bf16.mxu0 %v10518
  %11201 = vmatmul.mubr.bf16.gmra.mrb[0].mxu0 %v10517
  %v11202 = vpop.f32.mrb[0].mxu0
  %v11203 = vadd.f32 %v11010, %v11202
  %v11204 = vpop.f32.mrb[0].mxu0
  %v11205 = vadd.f32 %v11012, %v11204
  %v11206 = vpop.f32.mrb[0].mxu0
  %v11207 = vadd.f32 %v11014, %v11206
  %v11208 = vpop.f32.mrb[0].mxu0
  %v11209 = vadd.f32 %v11016, %v11208
  %11210 = vmatprep.mubr.bf16.mxu0 %v10522
  %11211 = vmatmul.mubr.bf16.gmra.mrb[0].mxu0 %v10521
  %v11212 = vpop.f32.mrb[0].mxu0
  %v11213 = vadd.f32 %v11020, %v11212
  %v11214 = vpop.f32.mrb[0].mxu0
  %v11215 = vadd.f32 %v11022, %v11214
  %v11216 = vpop.f32.mrb[0].mxu0
  %v11217 = vadd.f32 %v11024, %v11216
  %v11218 = vpop.f32.mrb[0].mxu0
  %v11219 = vadd.f32 %v11026, %v11218
  %11220 = vmatprep.mubr.bf16.mxu0 %v10526
  %11221 = vmatmul.mubr.bf16.gmra.mrb[0].mxu0 %v10525
  %v11222 = vpop.f32.mrb[0].mxu0
  %v11223 = vadd.f32 %v11030, %v11222
  %v11224 = vpop.f32.mrb[0].mxu0
  %v11225 = vadd.f32 %v11032, %v11224
  %v11226 = vpop.f32.mrb[0].mxu0
  %v11227 = vadd.f32 %v11034, %v11226
  %v11228 = vpop.f32.mrb[0].mxu0
  %v11229 = vadd.f32 %v11036, %v11228
  %11230 = vmatprep.mubr.bf16.mxu0 %v10530
  %11231 = vmatmul.mubr.bf16.gmra.mrb[0].mxu0 %v10529
  %v11232 = vpop.f32.mrb[0].mxu0
  %v11233 = vadd.f32 %v11040, %v11232
  %v11234 = vpop.f32.mrb[0].mxu0
  %v11235 = vadd.f32 %v11042, %v11234
  %v11236 = vpop.f32.mrb[0].mxu0
  %v11237 = vadd.f32 %v11044, %v11236
  %v11238 = vpop.f32.mrb[0].mxu0
  %v11239 = vadd.f32 %v11046, %v11238
  %11240 = vmatprep.mubr.bf16.mxu0 %v10534
  %11241 = vmatmul.mubr.bf16.gmra.mrb[0].mxu0 %v10533
  %v11242 = vpop.f32.mrb[0].mxu0
  %v11243 = vadd.f32 %v11050, %v11242
  %v11244 = vpop.f32.mrb[0].mxu0
  %v11245 = vadd.f32 %v11052, %v11244
  %v11246 = vpop.f32.mrb[0].mxu0
  %v11247 = vadd.f32 %v11054, %v11246
  %v11248 = vpop.f32.mrb[0].mxu0
  %v11249 = vadd.f32 %v11056, %v11248
  %11250 = vmatprep.mubr.bf16.mxu0 %v10538
  %11251 = vmatmul.mubr.bf16.gmra.mrb[0].mxu0 %v10537
  %v11252 = vpop.f32.mrb[0].mxu0
  %v11253 = vadd.f32 %v11060, %v11252
  %v11254 = vpop.f32.mrb[0].mxu0
  %v11255 = vadd.f32 %v11062, %v11254
  %v11256 = vpop.f32.mrb[0].mxu0
  %v11257 = vadd.f32 %v11064, %v11256
  %v11258 = vpop.f32.mrb[0].mxu0
  %v11259 = vadd.f32 %v11066, %v11258
  %11260 = vmatprep.mubr.bf16.mxu0 %v10542
  %11261 = vmatmul.mubr.bf16.gmra.mrb[0].mxu0 %v10541
  %v11262 = vpop.f32.mrb[0].mxu0
  %v11263 = vadd.f32 %v11070, %v11262
  %v11264 = vpop.f32.mrb[0].mxu0
  %v11265 = vadd.f32 %v11072, %v11264
  %v11266 = vpop.f32.mrb[0].mxu0
  %v11267 = vadd.f32 %v11074, %v11266
  %v11268 = vpop.f32.mrb[0].mxu0
  %v11269 = vadd.f32 %v11076, %v11268
  %11270 = vmatprep.mubr.bf16.mxu0 %v10546
  %11271 = vmatmul.mubr.bf16.gmra.mrb[0].mxu0 %v10545
  %v11272 = vpop.f32.mrb[0].mxu0
  %v11273 = vadd.f32 %v11080, %v11272
  %v11274 = vpop.f32.mrb[0].mxu0
  %v11275 = vadd.f32 %v11082, %v11274
  %v11276 = vpop.f32.mrb[0].mxu0
  %v11277 = vadd.f32 %v11084, %v11276
  %v11278 = vpop.f32.mrb[0].mxu0
  %v11279 = vadd.f32 %v11086, %v11278
  %11280 = vmatprep.mubr.bf16.mxu0 %v10550
  %11281 = vmatmul.mubr.bf16.gmra.mrb[0].mxu0 %v10549
  %v11282 = vpop.f32.mrb[0].mxu0
  %v11283 = vadd.f32 %v11090, %v11282
  %v11284 = vpop.f32.mrb[0].mxu0
  %v11285 = vadd.f32 %v11092, %v11284
  %v11286 = vpop.f32.mrb[0].mxu0
  %v11287 = vadd.f32 %v11094, %v11286
  %v11288 = vpop.f32.mrb[0].mxu0
  %v11289 = vadd.f32 %v11096, %v11288
  %11290 = vmatprep.mubr.bf16.mxu0 %v10554
  %11291 = vmatmul.mubr.bf16.gmra.mrb[0].mxu0 %v10553
  %v11292 = vpop.f32.mrb[0].mxu0
  %v11293 = vadd.f32 %v11100, %v11292
  %v11294 = vpop.f32.mrb[0].mxu0
  %v11295 = vadd.f32 %v11102, %v11294
  %v11296 = vpop.f32.mrb[0].mxu0
  %v11297 = vadd.f32 %v11104, %v11296
  %v11298 = vpop.f32.mrb[0].mxu0
  %v11299 = vadd.f32 %v11106, %v11298
  %11300 = vmatprep.mubr.bf16.mxu0 %v10558
  %11301 = vmatmul.mubr.bf16.gmra.mrb[0].mxu0 %v10557
  %v11302 = vpop.f32.mrb[0].mxu0
  %v11303 = vadd.f32 %v11110, %v11302
  %v11304 = vpop.f32.mrb[0].mxu0
  %v11305 = vadd.f32 %v11112, %v11304
  %v11306 = vpop.f32.mrb[0].mxu0
  %v11307 = vadd.f32 %v11114, %v11306
  %v11308 = vpop.f32.mrb[0].mxu0
  %v11309 = vadd.f32 %v11116, %v11308
  %11310 = vmatprep.mubr.bf16.mxu0 %v10562
  %11311 = vmatmul.mubr.bf16.gmra.mrb[0].mxu0 %v10561
  %v11312 = vpop.f32.mrb[0].mxu0
  %v11313 = vadd.f32 %v11120, %v11312
  %v11314 = vpop.f32.mrb[0].mxu0
  %v11315 = vadd.f32 %v11122, %v11314
  %v11316 = vpop.f32.mrb[0].mxu0
  %v11317 = vadd.f32 %v11124, %v11316
  %v11318 = vpop.f32.mrb[0].mxu0
  %v11319 = vadd.f32 %v11126, %v11318
  %11320 = vmatprep.mubr.bf16.mxu0 %v10566
  %11321 = vmatmul.mubr.bf16.gmra.mrb[0].mxu0 %v10565
  %v11322 = vpop.f32.mrb[0].mxu0
  %v11323 = vadd.f32 %v11130, %v11322
  %v11324 = vpop.f32.mrb[0].mxu0
  %v11325 = vadd.f32 %v11132, %v11324
  %v11326 = vpop.f32.mrb[0].mxu0
  %v11327 = vadd.f32 %v11134, %v11326
  %v11328 = vpop.f32.mrb[0].mxu0
  %v11329 = vadd.f32 %v11136, %v11328
  %11330 = vmatprep.mubr.bf16.mxu0 %v10570
  %11331 = vmatmul.mubr.bf16.gmra.mrb[0].mxu0 %v10569
  %v11332 = vpop.f32.mrb[0].mxu0
  %v11333 = vadd.f32 %v11140, %v11332
  %v11334 = vpop.f32.mrb[0].mxu0
  %v11335 = vadd.f32 %v11142, %v11334
  %v11336 = vpop.f32.mrb[0].mxu0
  %v11337 = vadd.f32 %v11144, %v11336
  %v11338 = vpop.f32.mrb[0].mxu0
  %v11339 = vadd.f32 %v11146, %v11338
  %11340 = vdwg.mxu0
  %v11341 = vld [vmem:[%s5] sm:$0xff]
  %v11342 = vld [vmem:[%s5 + $0x8] sm:$0xff]
  %v11343 = vld [vmem:[%s5 + $0x10] sm:$0xff]
  %v11344 = vld [vmem:[%s5 + $0x18] sm:$0xff]
  %v11345 = vld [vmem:[%s5 + $0x20] sm:$0xff]
  %v11346 = vld [vmem:[%s5 + $0x28] sm:$0xff]
  %v11347 = vld [vmem:[%s5 + $0x30] sm:$0xff]
  %v11348 = vld [vmem:[%s5 + $0x38] sm:$0xff]
  %v11349 = vld [vmem:[%s5 + $0x40] sm:$0xff]
  %v11350 = vld [vmem:[%s5 + $0x48] sm:$0xff]
  %v11351 = vld [vmem:[%s5 + $0x50] sm:$0xff]
  %v11352 = vld [vmem:[%s5 + $0x58] sm:$0xff]
  %v11353 = vld [vmem:[%s5 + $0x60] sm:$0xff]
  %v11354 = vld [vmem:[%s5 + $0x68] sm:$0xff]
  %v11355 = vld [vmem:[%s5 + $0x70] sm:$0xff]
  %v11356 = vld [vmem:[%s5 + $0x78] sm:$0xff]
  %v11357 = vld [vmem:[%s5 + $0x80] sm:$0xff]
  %v11358 = vld [vmem:[%s5 + $0x88] sm:$0xff]
  %v11359 = vld [vmem:[%s5 + $0x90] sm:$0xff]
  %v11360 = vld [vmem:[%s5 + $0x98] sm:$0xff]
  %v11361 = vld [vmem:[%s5 + $0xa0] sm:$0xff]
  %v11362 = vld [vmem:[%s5 + $0xa8] sm:$0xff]
  %v11363 = vld [vmem:[%s5 + $0xb0] sm:$0xff]
  %v11364 = vld [vmem:[%s5 + $0xb8] sm:$0xff]
  %v11365 = vld [vmem:[%s5 + $0xc0] sm:$0xff]
  %v11366 = vld [vmem:[%s5 + $0xc8] sm:$0xff]
  %v11367 = vld [vmem:[%s5 + $0xd0] sm:$0xff]
  %v11368 = vld [vmem:[%s5 + $0xd8] sm:$0xff]
  %v11369 = vld [vmem:[%s5 + $0xe0] sm:$0xff]
  %v11370 = vld [vmem:[%s5 + $0xe8] sm:$0xff]
  %v11371 = vld [vmem:[%s5 + $0xf0] sm:$0xff]
  %v11372 = vld [vmem:[%s5 + $0xf8] sm:$0xff]
  %v11373 = vld [vmem:[%s5 + $0x100] sm:$0xff]
  %v11374 = vld [vmem:[%s5 + $0x108] sm:$0xff]
  %v11375 = vld [vmem:[%s5 + $0x110] sm:$0xff]
  %v11376 = vld [vmem:[%s5 + $0x118] sm:$0xff]
  %v11377 = vld [vmem:[%s5 + $0x120] sm:$0xff]
  %v11378 = vld [vmem:[%s5 + $0x128] sm:$0xff]
  %v11379 = vld [vmem:[%s5 + $0x130] sm:$0xff]
  %v11380 = vld [vmem:[%s5 + $0x138] sm:$0xff]
  %v11381 = vld [vmem:[%s5 + $0x140] sm:$0xff]
  %v11382 = vld [vmem:[%s5 + $0x148] sm:$0xff]
  %v11383 = vld [vmem:[%s5 + $0x150] sm:$0xff]
  %v11384 = vld [vmem:[%s5 + $0x158] sm:$0xff]
  %v11385 = vld [vmem:[%s5 + $0x160] sm:$0xff]
  %v11386 = vld [vmem:[%s5 + $0x168] sm:$0xff]
  %v11387 = vld [vmem:[%s5 + $0x170] sm:$0xff]
  %v11388 = vld [vmem:[%s5 + $0x178] sm:$0xff]
  %v11389 = vld [vmem:[%s5 + $0x180] sm:$0xff]
  %v11390 = vld [vmem:[%s5 + $0x188] sm:$0xff]
  %v11391 = vld [vmem:[%s5 + $0x190] sm:$0xff]
  %v11392 = vld [vmem:[%s5 + $0x198] sm:$0xff]
  %v11393 = vld [vmem:[%s5 + $0x1a0] sm:$0xff]
  %v11394 = vld [vmem:[%s5 + $0x1a8] sm:$0xff]
  %v11395 = vld [vmem:[%s5 + $0x1b0] sm:$0xff]
  %v11396 = vld [vmem:[%s5 + $0x1b8] sm:$0xff]
  %v11397 = vld [vmem:[%s5 + $0x1c0] sm:$0xff]
  %v11398 = vld [vmem:[%s5 + $0x1c8] sm:$0xff]
  %v11399 = vld [vmem:[%s5 + $0x1d0] sm:$0xff]
  %v11400 = vld [vmem:[%s5 + $0x1d8] sm:$0xff]
  %v11401 = vld [vmem:[%s5 + $0x1e0] sm:$0xff]
  %v11402 = vld [vmem:[%s5 + $0x1e8] sm:$0xff]
  %v11403 = vld [vmem:[%s5 + $0x1f0] sm:$0xff]
  %v11404 = vld [vmem:[%s5 + $0x1f8] sm:$0xff]
  %v11405 = vmul.f32 %v11183, %v11341
  %v11406 = vmul.f32 %v11185, %v11342
  %v11407 = vmul.f32 %v11187, %v11343
  %v11408 = vmul.f32 %v11189, %v11344
  %v11409 = vmul.f32 %v11193, %v11345
  %v11410 = vmul.f32 %v11195, %v11346
  %v11411 = vmul.f32 %v11197, %v11347
  %v11412 = vmul.f32 %v11199, %v11348
  %v11413 = vmul.f32 %v11203, %v11349
  %v11414 = vmul.f32 %v11205, %v11350
  %v11415 = vmul.f32 %v11207, %v11351
  %v11416 = vmul.f32 %v11209, %v11352
  %v11417 = vmul.f32 %v11213, %v11353
  %v11418 = vmul.f32 %v11215, %v11354
  %v11419 = vmul.f32 %v11217, %v11355
  %v11420 = vmul.f32 %v11219, %v11356
  %v11421 = vmul.f32 %v11223, %v11357
  %v11422 = vmul.f32 %v11225, %v11358
  %v11423 = vmul.f32 %v11227, %v11359
  %v11424 = vmul.f32 %v11229, %v11360
  %v11425 = vmul.f32 %v11233, %v11361
  %v11426 = vmul.f32 %v11235, %v11362
  %v11427 = vmul.f32 %v11237, %v11363
  %v11428 = vmul.f32 %v11239, %v11364
  %v11429 = vmul.f32 %v11243, %v11365
  %v11430 = vmul.f32 %v11245, %v11366
  %v11431 = vmul.f32 %v11247, %v11367
  %v11432 = vmul.f32 %v11249, %v11368
  %v11433 = vmul.f32 %v11253, %v11369
  %v11434 = vmul.f32 %v11255, %v11370
  %v11435 = vmul.f32 %v11257, %v11371
  %v11436 = vmul.f32 %v11259, %v11372
  %v11437 = vmul.f32 %v11263, %v11373
  %v11438 = vmul.f32 %v11265, %v11374
  %v11439 = vmul.f32 %v11267, %v11375
  %v11440 = vmul.f32 %v11269, %v11376
  %v11441 = vmul.f32 %v11273, %v11377
  %v11442 = vmul.f32 %v11275, %v11378
  %v11443 = vmul.f32 %v11277, %v11379
  %v11444 = vmul.f32 %v11279, %v11380
  %v11445 = vmul.f32 %v11283, %v11381
  %v11446 = vmul.f32 %v11285, %v11382
  %v11447 = vmul.f32 %v11287, %v11383
  %v11448 = vmul.f32 %v11289, %v11384
  %v11449 = vmul.f32 %v11293, %v11385
  %v11450 = vmul.f32 %v11295, %v11386
  %v11451 = vmul.f32 %v11297, %v11387
  %v11452 = vmul.f32 %v11299, %v11388
  %v11453 = vmul.f32 %v11303, %v11389
  %v11454 = vmul.f32 %v11305, %v11390
  %v11455 = vmul.f32 %v11307, %v11391
  %v11456 = vmul.f32 %v11309, %v11392
  %v11457 = vmul.f32 %v11313, %v11393
  %v11458 = vmul.f32 %v11315, %v11394
  %v11459 = vmul.f32 %v11317, %v11395
  %v11460 = vmul.f32 %v11319, %v11396
  %v11461 = vmul.f32 %v11323, %v11397
  %v11462 = vmul.f32 %v11325, %v11398
  %v11463 = vmul.f32 %v11327, %v11399
  %v11464 = vmul.f32 %v11329, %v11400
  %v11465 = vmul.f32 %v11333, %v11401
  %v11466 = vmul.f32 %v11335, %v11402
  %v11467 = vmul.f32 %v11337, %v11403
  %v11468 = vmul.f32 %v11339, %v11404
  %v11469 = vadd.f32 %v11405, %v11407
  %v11470 = vrot.slane %v11469, 4
  %v11471 = vadd.f32 %v11469, %v11470
  %v11472 = vrot.slane %v11471, 2
  %v11473 = vadd.f32 %v11471, %v11472
  %v11474 = vrot.slane %v11473, 1
  %v11475 = vadd.f32 %v11473, %v11474
  %vm11476 = vcmask 654336
  %v11477 = vsel %vm11476, %v11406, 0.0
  %v11478 = vsel %vm11476, %v11408, 0.0
  %v11479 = vadd.f32 %v11477, %v11478
  %v11480 = vrot.slane %v11479, 4
  %v11481 = vadd.f32 %v11479, %v11480
  %v11482 = vrot.slane %v11481, 2
  %v11483 = vadd.f32 %v11481, %v11482
  %v11484 = vrot.slane %v11483, 1
  %v11485 = vadd.f32 %v11483, %v11484
  %v11486 = vadd.f32 %v11409, %v11411
  %v11487 = vrot.slane %v11486, 4
  %v11488 = vadd.f32 %v11486, %v11487
  %v11489 = vrot.slane %v11488, 2
  %v11490 = vadd.f32 %v11488, %v11489
  %v11491 = vrot.slane %v11490, 1
  %v11492 = vadd.f32 %v11490, %v11491
  %v11493 = vsel %vm11476, %v11410, 0.0
  %v11494 = vsel %vm11476, %v11412, 0.0
  %v11495 = vadd.f32 %v11493, %v11494
  %v11496 = vrot.slane %v11495, 4
  %v11497 = vadd.f32 %v11495, %v11496
  %v11498 = vrot.slane %v11497, 2
  %v11499 = vadd.f32 %v11497, %v11498
  %v11500 = vrot.slane %v11499, 1
  %v11501 = vadd.f32 %v11499, %v11500
  %v11502 = vadd.f32 %v11413, %v11415
  %v11503 = vrot.slane %v11502, 4
  %v11504 = vadd.f32 %v11502, %v11503
  %v11505 = vrot.slane %v11504, 2
  %v11506 = vadd.f32 %v11504, %v11505
  %v11507 = vrot.slane %v11506, 1
  %v11508 = vadd.f32 %v11506, %v11507
  %v11509 = vsel %vm11476, %v11414, 0.0
  %v11510 = vsel %vm11476, %v11416, 0.0
  %v11511 = vadd.f32 %v11509, %v11510
  %v11512 = vrot.slane %v11511, 4
  %v11513 = vadd.f32 %v11511, %v11512
  %v11514 = vrot.slane %v11513, 2
  %v11515 = vadd.f32 %v11513, %v11514
  %v11516 = vrot.slane %v11515, 1
  %v11517 = vadd.f32 %v11515, %v11516
  %v11518 = vadd.f32 %v11417, %v11419
  %v11519 = vrot.slane %v11518, 4
  %v11520 = vadd.f32 %v11518, %v11519
  %v11521 = vrot.slane %v11520, 2
  %v11522 = vadd.f32 %v11520, %v11521
  %v11523 = vrot.slane %v11522, 1
  %v11524 = vadd.f32 %v11522, %v11523
  %v11525 = vsel %vm11476, %v11418, 0.0
  %v11526 = vsel %vm11476, %v11420, 0.0
  %v11527 = vadd.f32 %v11525, %v11526
  %v11528 = vrot.slane %v11527, 4
  %v11529 = vadd.f32 %v11527, %v11528
  %v11530 = vrot.slane %v11529, 2
  %v11531 = vadd.f32 %v11529, %v11530
  %v11532 = vrot.slane %v11531, 1
  %v11533 = vadd.f32 %v11531, %v11532
  %v11534 = vadd.f32 %v11421, %v11423
  %v11535 = vrot.slane %v11534, 4
  %v11536 = vadd.f32 %v11534, %v11535
  %v11537 = vrot.slane %v11536, 2
  %v11538 = vadd.f32 %v11536, %v11537
  %v11539 = vrot.slane %v11538, 1
  %v11540 = vadd.f32 %v11538, %v11539
  %v11541 = vsel %vm11476, %v11422, 0.0
  %v11542 = vsel %vm11476, %v11424, 0.0
  %v11543 = vadd.f32 %v11541, %v11542
  %v11544 = vrot.slane %v11543, 4
  %v11545 = vadd.f32 %v11543, %v11544
  %v11546 = vrot.slane %v11545, 2
  %v11547 = vadd.f32 %v11545, %v11546
  %v11548 = vrot.slane %v11547, 1
  %v11549 = vadd.f32 %v11547, %v11548
  %v11550 = vadd.f32 %v11425, %v11427
  %v11551 = vrot.slane %v11550, 4
  %v11552 = vadd.f32 %v11550, %v11551
  %v11553 = vrot.slane %v11552, 2
  %v11554 = vadd.f32 %v11552, %v11553
  %v11555 = vrot.slane %v11554, 1
  %v11556 = vadd.f32 %v11554, %v11555
  %v11557 = vsel %vm11476, %v11426, 0.0
  %v11558 = vsel %vm11476, %v11428, 0.0
  %v11559 = vadd.f32 %v11557, %v11558
  %v11560 = vrot.slane %v11559, 4
  %v11561 = vadd.f32 %v11559, %v11560
  %v11562 = vrot.slane %v11561, 2
  %v11563 = vadd.f32 %v11561, %v11562
  %v11564 = vrot.slane %v11563, 1
  %v11565 = vadd.f32 %v11563, %v11564
  %v11566 = vadd.f32 %v11429, %v11431
  %v11567 = vrot.slane %v11566, 4
  %v11568 = vadd.f32 %v11566, %v11567
  %v11569 = vrot.slane %v11568, 2
  %v11570 = vadd.f32 %v11568, %v11569
  %v11571 = vrot.slane %v11570, 1
  %v11572 = vadd.f32 %v11570, %v11571
  %v11573 = vsel %vm11476, %v11430, 0.0
  %v11574 = vsel %vm11476, %v11432, 0.0
  %v11575 = vadd.f32 %v11573, %v11574
  %v11576 = vrot.slane %v11575, 4
  %v11577 = vadd.f32 %v11575, %v11576
  %v11578 = vrot.slane %v11577, 2
  %v11579 = vadd.f32 %v11577, %v11578
  %v11580 = vrot.slane %v11579, 1
  %v11581 = vadd.f32 %v11579, %v11580
  %v11582 = vadd.f32 %v11433, %v11435
  %v11583 = vrot.slane %v11582, 4
  %v11584 = vadd.f32 %v11582, %v11583
  %v11585 = vrot.slane %v11584, 2
  %v11586 = vadd.f32 %v11584, %v11585
  %v11587 = vrot.slane %v11586, 1
  %v11588 = vadd.f32 %v11586, %v11587
  %v11589 = vsel %vm11476, %v11434, 0.0
  %v11590 = vsel %vm11476, %v11436, 0.0
  %v11591 = vadd.f32 %v11589, %v11590
  %v11592 = vrot.slane %v11591, 4
  %v11593 = vadd.f32 %v11591, %v11592
  %v11594 = vrot.slane %v11593, 2
  %v11595 = vadd.f32 %v11593, %v11594
  %v11596 = vrot.slane %v11595, 1
  %v11597 = vadd.f32 %v11595, %v11596
  %v11598 = vadd.f32 %v11437, %v11439
  %v11599 = vrot.slane %v11598, 4
  %v11600 = vadd.f32 %v11598, %v11599
  %v11601 = vrot.slane %v11600, 2
  %v11602 = vadd.f32 %v11600, %v11601
  %v11603 = vrot.slane %v11602, 1
  %v11604 = vadd.f32 %v11602, %v11603
  %v11605 = vsel %vm11476, %v11438, 0.0
  %v11606 = vsel %vm11476, %v11440, 0.0
  %v11607 = vadd.f32 %v11605, %v11606
  %v11608 = vrot.slane %v11607, 4
  %v11609 = vadd.f32 %v11607, %v11608
  %v11610 = vrot.slane %v11609, 2
  %v11611 = vadd.f32 %v11609, %v11610
  %v11612 = vrot.slane %v11611, 1
  %v11613 = vadd.f32 %v11611, %v11612
  %v11614 = vadd.f32 %v11441, %v11443
  %v11615 = vrot.slane %v11614, 4
  %v11616 = vadd.f32 %v11614, %v11615
  %v11617 = vrot.slane %v11616, 2
  %v11618 = vadd.f32 %v11616, %v11617
  %v11619 = vrot.slane %v11618, 1
  %v11620 = vadd.f32 %v11618, %v11619
  %v11621 = vsel %vm11476, %v11442, 0.0
  %v11622 = vsel %vm11476, %v11444, 0.0
  %v11623 = vadd.f32 %v11621, %v11622
  %v11624 = vrot.slane %v11623, 4
  %v11625 = vadd.f32 %v11623, %v11624
  %v11626 = vrot.slane %v11625, 2
  %v11627 = vadd.f32 %v11625, %v11626
  %v11628 = vrot.slane %v11627, 1
  %v11629 = vadd.f32 %v11627, %v11628
  %v11630 = vadd.f32 %v11445, %v11447
  %v11631 = vrot.slane %v11630, 4
  %v11632 = vadd.f32 %v11630, %v11631
  %v11633 = vrot.slane %v11632, 2
  %v11634 = vadd.f32 %v11632, %v11633
  %v11635 = vrot.slane %v11634, 1
  %v11636 = vadd.f32 %v11634, %v11635
  %v11637 = vsel %vm11476, %v11446, 0.0
  %v11638 = vsel %vm11476, %v11448, 0.0
  %v11639 = vadd.f32 %v11637, %v11638
  %v11640 = vrot.slane %v11639, 4
  %v11641 = vadd.f32 %v11639, %v11640
  %v11642 = vrot.slane %v11641, 2
  %v11643 = vadd.f32 %v11641, %v11642
  %v11644 = vrot.slane %v11643, 1
  %v11645 = vadd.f32 %v11643, %v11644
  %v11646 = vadd.f32 %v11449, %v11451
  %v11647 = vrot.slane %v11646, 4
  %v11648 = vadd.f32 %v11646, %v11647
  %v11649 = vrot.slane %v11648, 2
  %v11650 = vadd.f32 %v11648, %v11649
  %v11651 = vrot.slane %v11650, 1
  %v11652 = vadd.f32 %v11650, %v11651
  %v11653 = vsel %vm11476, %v11450, 0.0
  %v11654 = vsel %vm11476, %v11452, 0.0
  %v11655 = vadd.f32 %v11653, %v11654
  %v11656 = vrot.slane %v11655, 4
  %v11657 = vadd.f32 %v11655, %v11656
  %v11658 = vrot.slane %v11657, 2
  %v11659 = vadd.f32 %v11657, %v11658
  %v11660 = vrot.slane %v11659, 1
  %v11661 = vadd.f32 %v11659, %v11660
  %v11662 = vadd.f32 %v11453, %v11455
  %v11663 = vrot.slane %v11662, 4
  %v11664 = vadd.f32 %v11662, %v11663
  %v11665 = vrot.slane %v11664, 2
  %v11666 = vadd.f32 %v11664, %v11665
  %v11667 = vrot.slane %v11666, 1
  %v11668 = vadd.f32 %v11666, %v11667
  %v11669 = vsel %vm11476, %v11454, 0.0
  %v11670 = vsel %vm11476, %v11456, 0.0
  %v11671 = vadd.f32 %v11669, %v11670
  %v11672 = vrot.slane %v11671, 4
  %v11673 = vadd.f32 %v11671, %v11672
  %v11674 = vrot.slane %v11673, 2
  %v11675 = vadd.f32 %v11673, %v11674
  %v11676 = vrot.slane %v11675, 1
  %v11677 = vadd.f32 %v11675, %v11676
  %v11678 = vadd.f32 %v11457, %v11459
  %v11679 = vrot.slane %v11678, 4
  %v11680 = vadd.f32 %v11678, %v11679
  %v11681 = vrot.slane %v11680, 2
  %v11682 = vadd.f32 %v11680, %v11681
  %v11683 = vrot.slane %v11682, 1
  %v11684 = vadd.f32 %v11682, %v11683
  %v11685 = vsel %vm11476, %v11458, 0.0
  %v11686 = vsel %vm11476, %v11460, 0.0
  %v11687 = vadd.f32 %v11685, %v11686
  %v11688 = vrot.slane %v11687, 4
  %v11689 = vadd.f32 %v11687, %v11688
  %v11690 = vrot.slane %v11689, 2
  %v11691 = vadd.f32 %v11689, %v11690
  %v11692 = vrot.slane %v11691, 1
  %v11693 = vadd.f32 %v11691, %v11692
  %v11694 = vadd.f32 %v11461, %v11463
  %v11695 = vrot.slane %v11694, 4
  %v11696 = vadd.f32 %v11694, %v11695
  %v11697 = vrot.slane %v11696, 2
  %v11698 = vadd.f32 %v11696, %v11697
  %v11699 = vrot.slane %v11698, 1
  %v11700 = vadd.f32 %v11698, %v11699
  %v11701 = vsel %vm11476, %v11462, 0.0
  %v11702 = vsel %vm11476, %v11464, 0.0
  %v11703 = vadd.f32 %v11701, %v11702
  %v11704 = vrot.slane %v11703, 4
  %v11705 = vadd.f32 %v11703, %v11704
  %v11706 = vrot.slane %v11705, 2
  %v11707 = vadd.f32 %v11705, %v11706
  %v11708 = vrot.slane %v11707, 1
  %v11709 = vadd.f32 %v11707, %v11708
  %v11710 = vadd.f32 %v11465, %v11467
  %v11711 = vrot.slane %v11710, 4
  %v11712 = vadd.f32 %v11710, %v11711
  %v11713 = vrot.slane %v11712, 2
  %v11714 = vadd.f32 %v11712, %v11713
  %v11715 = vrot.slane %v11714, 1
  %v11716 = vadd.f32 %v11714, %v11715
  %v11717 = vsel %vm11476, %v11466, 0.0
  %v11718 = vsel %vm11476, %v11468, 0.0
  %v11719 = vadd.f32 %v11717, %v11718
  %v11720 = vrot.slane %v11719, 4
  %v11721 = vadd.f32 %v11719, %v11720
  %v11722 = vrot.slane %v11721, 2
  %v11723 = vadd.f32 %v11721, %v11722
  %v11724 = vrot.slane %v11723, 1
  %v11725 = vadd.f32 %v11723, %v11724
  %v11726 = vld [vmem:[%s6] sm:$0xff]
  %v11727 = vld [vmem:[%s6 + $0x8] sm:$0xff]
  %v11728 = vld [vmem:[%s6 + $0x10] sm:$0xff]
  %v11729 = vld [vmem:[%s6 + $0x18] sm:$0xff]
  %v11730 = vld [vmem:[%s6 + $0x20] sm:$0xff]
  %v11731 = vld [vmem:[%s6 + $0x28] sm:$0xff]
  %v11732 = vld [vmem:[%s6 + $0x30] sm:$0xff]
  %v11733 = vld [vmem:[%s6 + $0x38] sm:$0xff]
  %v11734 = vld [vmem:[%s6 + $0x40] sm:$0xff]
  %v11735 = vld [vmem:[%s6 + $0x48] sm:$0xff]
  %v11736 = vld [vmem:[%s6 + $0x50] sm:$0xff]
  %v11737 = vld [vmem:[%s6 + $0x58] sm:$0xff]
  %v11738 = vld [vmem:[%s6 + $0x60] sm:$0xff]
  %v11739 = vld [vmem:[%s6 + $0x68] sm:$0xff]
  %v11740 = vld [vmem:[%s6 + $0x70] sm:$0xff]
  %v11741 = vld [vmem:[%s6 + $0x78] sm:$0xff]
  %v11742 = vld [vmem:[%s6 + $0x80] sm:$0xff]
  %v11743 = vld [vmem:[%s6 + $0x88] sm:$0xff]
  %v11744 = vld [vmem:[%s6 + $0x90] sm:$0xff]
  %v11745 = vld [vmem:[%s6 + $0x98] sm:$0xff]
  %v11746 = vld [vmem:[%s6 + $0xa0] sm:$0xff]
  %v11747 = vld [vmem:[%s6 + $0xa8] sm:$0xff]
  %v11748 = vld [vmem:[%s6 + $0xb0] sm:$0xff]
  %v11749 = vld [vmem:[%s6 + $0xb8] sm:$0xff]
  %v11750 = vld [vmem:[%s6 + $0xc0] sm:$0xff]
  %v11751 = vld [vmem:[%s6 + $0xc8] sm:$0xff]
  %v11752 = vld [vmem:[%s4] sm:$0x1]
  %v11754 = vlaneseq
  %v11755 = vshrl.u32 %v11754, 7
  %v11756 = vsub.s32 0, %v11755
  %v11757 = vrot.slane %v11752, %v11756
  %vm11791 = vcmask 1041409
  %v11792 = vsel %vm11791, %v11492, %v11475
  %vm11793 = vcmask 1042434
  %v11794 = vsel %vm11793, %v11508, %v11792
  %vm11795 = vcmask 1043459
  %v11796 = vsel %vm11795, %v11524, %v11794
  %vm11797 = vcmask 1044484
  %v11798 = vsel %vm11797, %v11540, %v11796
  %vm11799 = vcmask 1045509
  %v11800 = vsel %vm11799, %v11556, %v11798
  %vm11801 = vcmask 1046534
  %v11802 = vsel %vm11801, %v11572, %v11800
  %vm11803 = vcmask 1047559
  %v11804 = vsel %vm11803, %v11588, %v11802
  %v11805 = vsel %vm11791, %v11501, %v11485
  %v11806 = vsel %vm11793, %v11517, %v11805
  %v11807 = vsel %vm11795, %v11533, %v11806
  %v11808 = vsel %vm11797, %v11549, %v11807
  %v11809 = vsel %vm11799, %v11565, %v11808
  %v11810 = vsel %vm11801, %v11581, %v11809
  %v11811 = vsel %vm11803, %v11597, %v11810
  %v11812 = vsel %vm11791, %v11620, %v11604
  %v11813 = vsel %vm11793, %v11636, %v11812
  %v11814 = vsel %vm11795, %v11652, %v11813
  %v11815 = vsel %vm11797, %v11668, %v11814
  %v11816 = vsel %vm11799, %v11684, %v11815
  %v11817 = vsel %vm11801, %v11700, %v11816
  %v11818 = vsel %vm11803, %v11716, %v11817
  %v11819 = vsel %vm11791, %v11629, %v11613
  %v11820 = vsel %vm11793, %v11645, %v11819
  %v11821 = vsel %vm11795, %v11661, %v11820
  %v11822 = vsel %vm11797, %v11677, %v11821
  %v11823 = vsel %vm11799, %v11693, %v11822
  %v11824 = vsel %vm11801, %v11709, %v11823
  %v11825 = vsel %vm11803, %v11725, %v11824
  %v11828 = vsel %vm11476, %v11811, 0
  %v11830 = vsel %vm11476, %v11825, 0
  %11832 = vmatprep.subr.mxu0 0.0
  %11833 = vmatpush1.msra.mxu0 %v11726
  %11834 = vmatprep.subr.mxu0 0.0
  %11835 = vmatpush1.msra.mxu0 %v11727
  %11836 = vmatprep.subr.mxu0 0.0
  %11837 = vmatpush1.msra.mxu0 %v11728
  %11838 = vmatprep.subr.mxu0 0.0
  %11839 = vmatpush1.msra.mxu0 %v11729
  %11840 = vmatprep.subr.mxu0 0.0
  %11841 = vmatpush1.msra.mxu0 %v11730
  %11842 = vmatprep.subr.mxu0 0.0
  %11843 = vmatpush1.msra.mxu0 %v11731
  %11844 = vmatprep.subr.mxu0 0.0
  %11845 = vmatpush1.msra.mxu0 %v11732
  %11846 = vmatprep.subr.mxu0 0.0
  %11847 = vmatpush1.msra.mxu0 %v11733
  %11848 = vmatprep.subr.mxu0 0.0
  %11849 = vmatpush1.msra.mxu0 %v11734
  %11850 = vmatprep.subr.mxu0 0.0
  %11851 = vmatpush1.msra.mxu0 %v11735
  %11852 = vmatprep.subr.mxu0 0.0
  %11853 = vmatpush1.msra.mxu0 %v11736
  %11854 = vmatprep.subr.mxu0 0.0
  %11855 = vmatpush1.msra.mxu0 %v11737
  %11856 = vmatprep.subr.mxu0 0.0
  %11857 = vmatpush1.msra.mxu0 %v11738
  %11858 = vmatprep.subr.mxu0 0.0
  %11859 = vmatpush1.msra.mxu0 %v11739
  %11860 = vmatprep.subr.mxu0 0.0
  %11861 = vmatpush1.msra.mxu0 %v11740
  %11862 = vmatprep.subr.mxu0 0.0
  %11863 = vmatpush1.msra.mxu0 %v11741
  %11864 = vmatprep.subr.mxu0 0.0
  %11865 = vmatpush1.msra.mxu0 %v11742
  %11866 = vmatprep.subr.mxu0 0.0
  %11867 = vmatpush1.msra.mxu0 %v11743
  %11868 = vmatprep.subr.mxu0 0.0
  %11869 = vmatpush1.msra.mxu0 %v11744
  %11870 = vmatprep.subr.mxu0 0.0
  %11871 = vmatpush1.msra.mxu0 %v11745
  %11872 = vmatprep.subr.mxu0 0.0
  %11873 = vmatpush1.msra.mxu0 %v11746
  %11874 = vmatprep.subr.mxu0 0.0
  %11875 = vmatpush1.msra.mxu0 %v11747
  %11876 = vmatprep.subr.mxu0 0.0
  %11877 = vmatpush1.msra.mxu0 %v11748
  %11878 = vmatprep.subr.mxu0 0.0
  %11879 = vmatpush1.msra.mxu0 %v11749
  %11880 = vmatprep.subr.mxu0 0.0
  %11881 = vmatpush1.msra.mxu0 %v11750
  %11882 = vmatprep.subr.mxu0 0.0
  %11883 = vmatpush1.msra.mxu0 %v11751
  %11884 = vmatprep.subr.mxu0 0.0
  %11885 = vmatpush1.msra.mxu0 0.0
  %11886 = vmatprep.subr.mxu0 0.0
  %11887 = vmatpush1.msra.mxu0 0.0
  %11888 = vmatprep.subr.mxu0 0.0
  %11889 = vmatpush1.msra.mxu0 0.0
  %11890 = vmatprep.subr.mxu0 0.0
  %11891 = vmatpush1.msra.mxu0 0.0
  %11892 = vmatprep.subr.mxu0 0.0
  %11893 = vmatpush1.msra.mxu0 0.0
  %11894 = vmatprep.subr.mxu0 0.0
  %11895 = vmatpush1.msra.mxu0 0.0
  %11896 = vmatprep.mubr.f32.mxu0 %v11828
  %11897 = vmatmul.mubr.f32.gmra.mrb[0].mxu0 %v11804
  %v11898 = vpop.f32.mrb[0].mxu0
  %v11899 = vadd.f32 %v11757, %v11898
  %v11900 = vpop.f32.mrb[0].mxu0
  %11901 = vmatprep.mubr.f32.mxu0 %v11830
  %11902 = vmatmul.mubr.f32.gmra.mrb[0].mxu0 %v11818
  %v11903 = vpop.f32.mrb[0].mxu0
  %v11904 = vadd.f32 %v11757, %v11903
  %v11905 = vpop.f32.mrb[0].mxu0
  %11906 = vdwg.mxu0
  %11907 = vst [vmem:[%s7] sm:$0xff] %v11899
  %11908 = vst [vmem:[%s7 + $0x8] sm:$0xff] %v11904
  // Predicated region
  $region30: #{vanilla_cnn_forward.1} parent=0 // pred_check
    _
  $region31: #{vanilla_cnn_forward.1} parent=0 // pred_check_branch
    %11910 = sbr.rel (0) target = $region33
  $region32: #{vanilla_cnn_forward.1} parent=0 // pred_region
    _
  $region33: #{vanilla_cnn_forward.1} parent=0 // pred_fallthru
    _
  // Predicated region
  $region34: #{vanilla_cnn_forward.1} parent=0 // pred_check
    _
  $region35: #{vanilla_cnn_forward.1} parent=0 // pred_check_branch
    %11912 = sbr.rel (0) target = $region37
  $region36: #{vanilla_cnn_forward.1} parent=0 // pred_region
    _
  $region37: #{vanilla_cnn_forward.1} parent=0 // pred_fallthru
    _

</llo_original>
